<compile_context>
chip_gen: v7x
topology: tpu7x:2x2x1
jax: 0.10.0
libtpu: 0.0.40
codegen_flags: <defaults>
</compile_context>

<pallas_src>
import functools

import jax
import jax.numpy as jnp
from jax import lax
from jax.experimental import pallas as pl
from jax.experimental.pallas import tpu as pltpu


def _matvec_k_major(mT, v, n_acc=4):
    # mT: (N, N, T) in k-major layout, mT[k, i, p] = M_p[i, k]; v: (N, T).
    # Returns out[i, p] = sum_k M_p[i, k] * v_p[k] = sum_k mT[k, i, p] * v[k, p].
    # v[k:k+1, :] is a sublane broadcast (cheap); accumulation over the leading
    # axis needs no XLU sublane-reduce.  A few independent accumulators keep the
    # dependency chain short without blowing up vreg pressure.
    n = mT.shape[0]
    n_acc = min(n_acc, n)
    accs = [mT[j] * v[j:j + 1, :] for j in range(n_acc)]
    for k in range(n_acc, n):
        j = k % n_acc
        accs[j] = accs[j] + mT[k] * v[k:k + 1, :]
    out = accs[0]
    for j in range(1, n_acc):
        out = out + accs[j]
    return out


def _bfgs_kernel(a_ref, b_ref, x0_ref, h0_ref, x_out_ref, err_out_ref,
                 *, max_iterations: int, epsilon: float):
    n, _, t = a_ref.shape
    f32 = jnp.float32

    A = a_ref[...]        # (N, N, T) k-major: A[k, i, p] = A_p[i, k]
    bvec = b_ref[...]     # (N, T)
    x0 = x0_ref[...]      # (N, T)
    H0 = h0_ref[...]      # (N, N, T) k-major inverse-Hessian parameter

    # Gradient at the initial point, carried through the loop from here on.
    g0 = _matvec_k_major(A, x0) - bvec                    # (N, T)
    err0 = jnp.sum(g0 * g0, axis=0, keepdims=True)        # (1, T)
    updating0 = jnp.ones((1, t), dtype=f32)

    def body(_, carry):
        x, H, g, _err, updating = carry                   # H in k-major layout
        d = -_matvec_k_major(H, g)                        # search direction (N, T)

        # --- line search: exact minimiser of the quadratic along d ---
        # TODO(synk): the reference module delegates to an arbitrary Wolfe
        # line-search nn.Module; here it is the exact quadratic line search.
        Ad = _matvec_k_major(A, d)                        # (N, T)
        dAd = jnp.sum(d * Ad, axis=0, keepdims=True)      # (1, T)
        gd = jnp.sum(g * d, axis=0, keepdims=True)        # (1, T)
        dAd_ok = dAd > f32(1e-30)
        alpha = jnp.where(dAd_ok, -gd / jnp.where(dAd_ok, dAd, f32(1.0)), f32(0.0))
        s = alpha * d                                     # step (N, T)
        x_next = x + s
        g_next = g + alpha * Ad                           # grad(x + alpha d), reuses Ad

        # --- BFGS rank-2 inverse-Hessian update, fused into two outer products ---
        y = g_next - g                                    # delta gradient (N, T)
        sy = jnp.sum(s * y, axis=0, keepdims=True)        # (1, T)
        Hy = _matvec_k_major(H, y)                        # H @ y  (N, T)
        yHy = jnp.sum(y * Hy, axis=0, keepdims=True)      # (1, T)

        # Matches the reference guard: delta_H = 0 exactly where sy == 0.
        sy_ok = sy != f32(0.0)
        inv_sy = jnp.where(sy_ok, f32(1.0) / jnp.where(sy_ok, sy, f32(1.0)), f32(0.0))
        c1 = (sy + yHy) * inv_sy * inv_sy                 # (1, T)
        u = c1 * s - inv_sy * Hy                          # (N, T)
        w = inv_sy * Hy                                   # (N, T)
        # H_new = H + u s^T - s w^T  ->  k-major: H[k,i] += s[k] u[i] - w[k] s[i]
        # (Matches the reference: the H update is not masked by `updating`.)
        H_new = H + (s[:, None, :] * u[None, :, :] - w[:, None, :] * s[None, :, :])

        # --- masked update of the optimisation point; error / convergence ---
        upd = updating > f32(0.5)                         # (1, T) bool
        x_new = jnp.where(upd, x_next, x)
        g_new = jnp.where(upd, g_next, g)                 # gradient at the masked x
        err_new = jnp.sum(g_new * g_new, axis=0, keepdims=True)
        updating_new = jnp.logical_and(upd, err_new > f32(epsilon)).astype(f32)
        return x_new, H_new, g_new, err_new, updating_new

    x_fin, _, _, err_fin, _ = lax.fori_loop(
        0, max_iterations, body, (x0, H0, g0, err0, updating0), unroll=True)

    x_out_ref[...] = x_fin
    err_out_ref[...] = err_fin


def _round_up(x, m):
    return ((x + m - 1) // m) * m


def bfgs_camera_solver_lanes(A_t, b_t, x0_t, inv_hessian, *,
                             max_iterations: int, epsilon: float,
                             tile_be: int = 128):
    """Lane-layout entry point (no wrapper transposes).

    A_t:  (N, N, BE_pad) with A_t[k, i, p] = A_p[i, k]
    b_t:  (N, BE_pad)
    x0_t: (N, BE_pad)
    inv_hessian: (N, N) parameter (tiled per problem, as in the reference).
    BE_pad must be a multiple of tile_be (itself a multiple of 128).
    """
    f32 = jnp.float32
    N, _, BE_pad = A_t.shape
    tile = int(tile_be)
    assert tile % 128 == 0 and BE_pad % tile == 0

    # k-major layout of the inverse-Hessian parameter, tiled over one lane tile.
    H0_t = jnp.broadcast_to(inv_hessian.astype(f32).T[:, :, None], (N, N, tile))

    kernel = functools.partial(_bfgs_kernel,
                               max_iterations=int(max_iterations),
                               epsilon=float(epsilon))

    x_out, err_out = pl.pallas_call(
        kernel,
        out_shape=(jax.ShapeDtypeStruct((N, BE_pad), f32),
                   jax.ShapeDtypeStruct((1, BE_pad), f32)),
        grid_spec=pltpu.PrefetchScalarGridSpec(
            num_scalar_prefetch=0,
            grid=(BE_pad // tile,),
            in_specs=[
                pl.BlockSpec((N, N, tile), lambda i: (0, 0, i)),   # A (k-major)
                pl.BlockSpec((N, tile), lambda i: (0, i)),         # b
                pl.BlockSpec((N, tile), lambda i: (0, i)),         # x0
                pl.BlockSpec((N, N, tile), lambda i: (0, 0, 0)),   # inv_hessian tile
            ],
            out_specs=[
                pl.BlockSpec((N, tile), lambda i: (0, i)),         # final parameters
                pl.BlockSpec((1, tile), lambda i: (0, i)),         # final error
            ],
        ),
        compiler_params=pltpu.CompilerParams(
            dimension_semantics=("parallel",)),
    )(A_t, b_t, x0_t, H0_t)
    return x_out, err_out


def bfgs_camera_solver(A, b, x0, inv_hessian, *,
                       max_iterations: int, epsilon: float, tile_be: int = 128):
    """A: (B, E, N, N), b/x0: (B, E, N), inv_hessian: (N, N) parameter."""
    B, E, N, _ = A.shape
    BE = B * E
    f32 = jnp.float32

    lane = 128
    tile = _round_up(max(lane, min(int(tile_be), _round_up(BE, lane))), lane)
    BE_pad = _round_up(BE, tile)
    pad = BE_pad - BE

    # Problem index on the lane (last) axis; matrices in k-major layout.
    # Zero-padded lanes are benign: grad == 0, sy == 0 guard keeps delta_H == 0,
    # everything stays finite, and they are sliced off below.
    A_t = jnp.transpose(A.reshape(BE, N, N).astype(f32), (2, 1, 0))   # (N, N, BE)
    b_t = jnp.transpose(b.reshape(BE, N).astype(f32), (1, 0))         # (N, BE)
    x0_t = jnp.transpose(x0.reshape(BE, N).astype(f32), (1, 0))       # (N, BE)
    if pad:
        A_t = jnp.pad(A_t, ((0, 0), (0, 0), (0, pad)))
        b_t = jnp.pad(b_t, ((0, 0), (0, pad)))
        x0_t = jnp.pad(x0_t, ((0, 0), (0, pad)))

    x_out, err_out = bfgs_camera_solver_lanes(
        A_t, b_t, x0_t, inv_hessian,
        max_iterations=max_iterations, epsilon=epsilon, tile_be=tile)

    x_final = jnp.transpose(x_out, (1, 0))[:BE].reshape(B, E, N)
    err_final = err_out[0, :BE].reshape(B, E)
    return x_final, err_final


if __name__ == "__main__":
    batch, num_estimates, num_parameters = 2, 3, 16
    max_iterations, epsilon = 6, 1e-6

    key = jax.random.PRNGKey(0)
    k1, k2, k3 = jax.random.split(key, 3)

    # Symmetric positive-definite quadratic per (batch, estimate).
    M = jax.random.normal(
        k1, (batch, num_estimates, num_parameters, num_parameters), dtype=jnp.float32)
    A = (jnp.eye(num_parameters, dtype=jnp.float32)[None, None]
         + 0.1 * jnp.einsum('beij,bekj->beik', M, M) / num_parameters)
    b = jax.random.normal(k2, (batch, num_estimates, num_parameters), dtype=jnp.float32)
    x0 = jax.random.normal(k3, (batch, num_estimates, num_parameters), dtype=jnp.float32)

    # Deterministic parameter init: nn.Parameter(torch.eye(num_parameters)).
    inv_hessian = jnp.eye(num_parameters, dtype=jnp.float32)

    x_final, err_final = bfgs_camera_solver(
        A, b, x0, inv_hessian, max_iterations=max_iterations, epsilon=epsilon)
    jax.block_until_ready((x_final, err_final))

    assert x_final.shape == (batch, num_estimates, num_parameters)
    assert err_final.shape == (batch, num_estimates)
    assert bool(jnp.all(jnp.isfinite(x_final)))
    assert bool(jnp.all(jnp.isfinite(err_final)))
    print("KERNEL_OK")
</pallas_src>

<mosaic_0001>
module attributes {stable_mosaic.version = 11 : i64} {
  func.func @_bfgs_kernel(%arg0: i32, %arg1: memref<16x16x128xf32, #tpu.memory_space<vmem>>, %arg2: memref<16x128xf32, #tpu.memory_space<vmem>>, %arg3: memref<16x128xf32, #tpu.memory_space<vmem>>, %arg4: memref<16x16x128xf32, #tpu.memory_space<vmem>>, %arg5: memref<16x128xf32, #tpu.memory_space<vmem>>, %arg6: memref<1x128xf32, #tpu.memory_space<vmem>>) attributes {dimension_semantics = [#tpu.dimension_semantics<parallel>], iteration_bounds = array<i64: 1>, scalar_prefetch = 0 : i64, scratch_operands = 0 : i64, tpu.core_type = #tpu.core_type<tc>, window_params = [{transform_indices = @transform_0, window_bounds = array<i64: 16, 16, 128>}, {transform_indices = @transform_1, window_bounds = array<i64: 16, 128>}, {transform_indices = @transform_2, window_bounds = array<i64: 16, 128>}, {pipeline_mode = #tpu.pipeline_mode<synchronous>, transform_indices = @transform_3, window_bounds = array<i64: 16, 16, 128>}, {transform_indices = @transform_4, window_bounds = array<i64: 16, 128>}, {transform_indices = @transform_5, window_bounds = array<i64: 1, 128>}]} {
    %c0 = arith.constant 0 : index
    %c0_0 = arith.constant 0 : index
    %c0_1 = arith.constant 0 : index
    %0 = vector.load %arg1[%c0, %c0_0, %c0_1] : memref<16x16x128xf32, #tpu.memory_space<vmem>>, vector<16x16x128xf32>
    %c0_2 = arith.constant 0 : index
    %c0_3 = arith.constant 0 : index
    %1 = vector.load %arg2[%c0_2, %c0_3] : memref<16x128xf32, #tpu.memory_space<vmem>>, vector<16x128xf32>
    %c0_4 = arith.constant 0 : index
    %c0_5 = arith.constant 0 : index
    %2 = vector.load %arg3[%c0_4, %c0_5] : memref<16x128xf32, #tpu.memory_space<vmem>>, vector<16x128xf32>
    %c0_6 = arith.constant 0 : index
    %c0_7 = arith.constant 0 : index
    %c0_8 = arith.constant 0 : index
    %3 = vector.load %arg4[%c0_6, %c0_7, %c0_8] : memref<16x16x128xf32, #tpu.memory_space<vmem>>, vector<16x16x128xf32>
    %4 = vector.extract_strided_slice %0 {offsets = [0, 0, 0], sizes = [1, 16, 128], strides = [1, 1, 1]} : vector<16x16x128xf32> to vector<1x16x128xf32>
    %5 = vector.shape_cast %4 : vector<1x16x128xf32> to vector<16x128xf32>
    %6 = vector.extract_strided_slice %2 {offsets = [0, 0], sizes = [1, 128], strides = [1, 1]} : vector<16x128xf32> to vector<1x128xf32>
    %7 = vector.broadcast %6 : vector<1x128xf32> to vector<16x128xf32>
    %8 = arith.mulf %5, %7 : vector<16x128xf32>
    %9 = vector.extract_strided_slice %0 {offsets = [1, 0, 0], sizes = [1, 16, 128], strides = [1, 1, 1]} : vector<16x16x128xf32> to vector<1x16x128xf32>
    %10 = vector.shape_cast %9 : vector<1x16x128xf32> to vector<16x128xf32>
    %11 = vector.extract_strided_slice %2 {offsets = [1, 0], sizes = [1, 128], strides = [1, 1]} : vector<16x128xf32> to vector<1x128xf32>
    %12 = vector.broadcast %11 : vector<1x128xf32> to vector<16x128xf32>
    %13 = arith.mulf %10, %12 : vector<16x128xf32>
    %14 = vector.extract_strided_slice %0 {offsets = [2, 0, 0], sizes = [1, 16, 128], strides = [1, 1, 1]} : vector<16x16x128xf32> to vector<1x16x128xf32>
    %15 = vector.shape_cast %14 : vector<1x16x128xf32> to vector<16x128xf32>
    %16 = vector.extract_strided_slice %2 {offsets = [2, 0], sizes = [1, 128], strides = [1, 1]} : vector<16x128xf32> to vector<1x128xf32>
    %17 = vector.broadcast %16 : vector<1x128xf32> to vector<16x128xf32>
    %18 = arith.mulf %15, %17 : vector<16x128xf32>
    %19 = vector.extract_strided_slice %0 {offsets = [3, 0, 0], sizes = [1, 16, 128], strides = [1, 1, 1]} : vector<16x16x128xf32> to vector<1x16x128xf32>
    %20 = vector.shape_cast %19 : vector<1x16x128xf32> to vector<16x128xf32>
    %21 = vector.extract_strided_slice %2 {offsets = [3, 0], sizes = [1, 128], strides = [1, 1]} : vector<16x128xf32> to vector<1x128xf32>
    %22 = vector.broadcast %21 : vector<1x128xf32> to vector<16x128xf32>
    %23 = arith.mulf %20, %22 : vector<16x128xf32>
    %24 = vector.extract_strided_slice %0 {offsets = [4, 0, 0], sizes = [1, 16, 128], strides = [1, 1, 1]} : vector<16x16x128xf32> to vector<1x16x128xf32>
    %25 = vector.shape_cast %24 : vector<1x16x128xf32> to vector<16x128xf32>
    %26 = vector.extract_strided_slice %2 {offsets = [4, 0], sizes = [1, 128], strides = [1, 1]} : vector<16x128xf32> to vector<1x128xf32>
    %27 = vector.broadcast %26 : vector<1x128xf32> to vector<16x128xf32>
    %28 = arith.mulf %25, %27 : vector<16x128xf32>
    %29 = arith.addf %8, %28 : vector<16x128xf32>
    %30 = vector.extract_strided_slice %0 {offsets = [5, 0, 0], sizes = [1, 16, 128], strides = [1, 1, 1]} : vector<16x16x128xf32> to vector<1x16x128xf32>
    %31 = vector.shape_cast %30 : vector<1x16x128xf32> to vector<16x128xf32>
    %32 = vector.extract_strided_slice %2 {offsets = [5, 0], sizes = [1, 128], strides = [1, 1]} : vector<16x128xf32> to vector<1x128xf32>
    %33 = vector.broadcast %32 : vector<1x128xf32> to vector<16x128xf32>
    %34 = arith.mulf %31, %33 : vector<16x128xf32>
    %35 = arith.addf %13, %34 : vector<16x128xf32>
    %36 = vector.extract_strided_slice %0 {offsets = [6, 0, 0], sizes = [1, 16, 128], strides = [1, 1, 1]} : vector<16x16x128xf32> to vector<1x16x128xf32>
    %37 = vector.shape_cast %36 : vector<1x16x128xf32> to vector<16x128xf32>
    %38 = vector.extract_strided_slice %2 {offsets = [6, 0], sizes = [1, 128], strides = [1, 1]} : vector<16x128xf32> to vector<1x128xf32>
    %39 = vector.broadcast %38 : vector<1x128xf32> to vector<16x128xf32>
    %40 = arith.mulf %37, %39 : vector<16x128xf32>
    %41 = arith.addf %18, %40 : vector<16x128xf32>
    %42 = vector.extract_strided_slice %0 {offsets = [7, 0, 0], sizes = [1, 16, 128], strides = [1, 1, 1]} : vector<16x16x128xf32> to vector<1x16x128xf32>
    %43 = vector.shape_cast %42 : vector<1x16x128xf32> to vector<16x128xf32>
    %44 = vector.extract_strided_slice %2 {offsets = [7, 0], sizes = [1, 128], strides = [1, 1]} : vector<16x128xf32> to vector<1x128xf32>
    %45 = vector.broadcast %44 : vector<1x128xf32> to vector<16x128xf32>
    %46 = arith.mulf %43, %45 : vector<16x128xf32>
    %47 = arith.addf %23, %46 : vector<16x128xf32>
    %48 = vector.extract_strided_slice %0 {offsets = [8, 0, 0], sizes = [1, 16, 128], strides = [1, 1, 1]} : vector<16x16x128xf32> to vector<1x16x128xf32>
    %49 = vector.shape_cast %48 : vector<1x16x128xf32> to vector<16x128xf32>
    %50 = vector.extract_strided_slice %2 {offsets = [8, 0], sizes = [1, 128], strides = [1, 1]} : vector<16x128xf32> to vector<1x128xf32>
    %51 = vector.broadcast %50 : vector<1x128xf32> to vector<16x128xf32>
    %52 = arith.mulf %49, %51 : vector<16x128xf32>
    %53 = arith.addf %29, %52 : vector<16x128xf32>
    %54 = vector.extract_strided_slice %0 {offsets = [9, 0, 0], sizes = [1, 16, 128], strides = [1, 1, 1]} : vector<16x16x128xf32> to vector<1x16x128xf32>
    %55 = vector.shape_cast %54 : vector<1x16x128xf32> to vector<16x128xf32>
    %56 = vector.extract_strided_slice %2 {offsets = [9, 0], sizes = [1, 128], strides = [1, 1]} : vector<16x128xf32> to vector<1x128xf32>
    %57 = vector.broadcast %56 : vector<1x128xf32> to vector<16x128xf32>
    %58 = arith.mulf %55, %57 : vector<16x128xf32>
    %59 = arith.addf %35, %58 : vector<16x128xf32>
    %60 = vector.extract_strided_slice %0 {offsets = [10, 0, 0], sizes = [1, 16, 128], strides = [1, 1, 1]} : vector<16x16x128xf32> to vector<1x16x128xf32>
    %61 = vector.shape_cast %60 : vector<1x16x128xf32> to vector<16x128xf32>
    %62 = vector.extract_strided_slice %2 {offsets = [10, 0], sizes = [1, 128], strides = [1, 1]} : vector<16x128xf32> to vector<1x128xf32>
    %63 = vector.broadcast %62 : vector<1x128xf32> to vector<16x128xf32>
    %64 = arith.mulf %61, %63 : vector<16x128xf32>
    %65 = arith.addf %41, %64 : vector<16x128xf32>
    %66 = vector.extract_strided_slice %0 {offsets = [11, 0, 0], sizes = [1, 16, 128], strides = [1, 1, 1]} : vector<16x16x128xf32> to vector<1x16x128xf32>
    %67 = vector.shape_cast %66 : vector<1x16x128xf32> to vector<16x128xf32>
    %68 = vector.extract_strided_slice %2 {offsets = [11, 0], sizes = [1, 128], strides = [1, 1]} : vector<16x128xf32> to vector<1x128xf32>
    %69 = vector.broadcast %68 : vector<1x128xf32> to vector<16x128xf32>
    %70 = arith.mulf %67, %69 : vector<16x128xf32>
    %71 = arith.addf %47, %70 : vector<16x128xf32>
    %72 = vector.extract_strided_slice %0 {offsets = [12, 0, 0], sizes = [1, 16, 128], strides = [1, 1, 1]} : vector<16x16x128xf32> to vector<1x16x128xf32>
    %73 = vector.shape_cast %72 : vector<1x16x128xf32> to vector<16x128xf32>
    %74 = vector.extract_strided_slice %2 {offsets = [12, 0], sizes = [1, 128], strides = [1, 1]} : vector<16x128xf32> to vector<1x128xf32>
    %75 = vector.broadcast %74 : vector<1x128xf32> to vector<16x128xf32>
    %76 = arith.mulf %73, %75 : vector<16x128xf32>
    %77 = arith.addf %53, %76 : vector<16x128xf32>
    %78 = vector.extract_strided_slice %0 {offsets = [13, 0, 0], sizes = [1, 16, 128], strides = [1, 1, 1]} : vector<16x16x128xf32> to vector<1x16x128xf32>
    %79 = vector.shape_cast %78 : vector<1x16x128xf32> to vector<16x128xf32>
    %80 = vector.extract_strided_slice %2 {offsets = [13, 0], sizes = [1, 128], strides = [1, 1]} : vector<16x128xf32> to vector<1x128xf32>
    %81 = vector.broadcast %80 : vector<1x128xf32> to vector<16x128xf32>
    %82 = arith.mulf %79, %81 : vector<16x128xf32>
    %83 = arith.addf %59, %82 : vector<16x128xf32>
    %84 = vector.extract_strided_slice %0 {offsets = [14, 0, 0], sizes = [1, 16, 128], strides = [1, 1, 1]} : vector<16x16x128xf32> to vector<1x16x128xf32>
    %85 = vector.shape_cast %84 : vector<1x16x128xf32> to vector<16x128xf32>
    %86 = vector.extract_strided_slice %2 {offsets = [14, 0], sizes = [1, 128], strides = [1, 1]} : vector<16x128xf32> to vector<1x128xf32>
    %87 = vector.broadcast %86 : vector<1x128xf32> to vector<16x128xf32>
    %88 = arith.mulf %85, %87 : vector<16x128xf32>
    %89 = arith.addf %65, %88 : vector<16x128xf32>
    %90 = vector.extract_strided_slice %0 {offsets = [15, 0, 0], sizes = [1, 16, 128], strides = [1, 1, 1]} : vector<16x16x128xf32> to vector<1x16x128xf32>
    %91 = vector.shape_cast %90 : vector<1x16x128xf32> to vector<16x128xf32>
    %92 = vector.extract_strided_slice %2 {offsets = [15, 0], sizes = [1, 128], strides = [1, 1]} : vector<16x128xf32> to vector<1x128xf32>
    %93 = vector.broadcast %92 : vector<1x128xf32> to vector<16x128xf32>
    %94 = arith.mulf %91, %93 : vector<16x128xf32>
    %95 = arith.addf %71, %94 : vector<16x128xf32>
    %96 = arith.addf %77, %83 : vector<16x128xf32>
    %97 = arith.addf %96, %89 : vector<16x128xf32>
    %98 = arith.addf %97, %95 : vector<16x128xf32>
    %99 = arith.subf %98, %1 : vector<16x128xf32>
    %100 = arith.mulf %99, %99 : vector<16x128xf32>
    %cst = arith.constant dense<0.000000e+00> : vector<128xf32>
    %101 = vector.multi_reduction <add>, %100, %cst [0] : vector<16x128xf32> to vector<128xf32>
    %102 = vector.shape_cast %101 : vector<128xf32> to vector<1x128xf32>
    %cst_9 = arith.constant 1.000000e+00 : f32
    %103 = vector.broadcast %cst_9 : f32 to vector<1x128xf32>
    %c0_i32 = arith.constant 0 : i32
    %104 = vector.extract_strided_slice %3 {offsets = [0, 0, 0], sizes = [1, 16, 128], strides = [1, 1, 1]} : vector<16x16x128xf32> to vector<1x16x128xf32>
    %105 = vector.shape_cast %104 : vector<1x16x128xf32> to vector<16x128xf32>
    %106 = vector.extract_strided_slice %99 {offsets = [0, 0], sizes = [1, 128], strides = [1, 1]} : vector<16x128xf32> to vector<1x128xf32>
    %107 = vector.broadcast %106 : vector<1x128xf32> to vector<16x128xf32>
    %108 = arith.mulf %105, %107 : vector<16x128xf32>
    %109 = vector.extract_strided_slice %3 {offsets = [1, 0, 0], sizes = [1, 16, 128], strides = [1, 1, 1]} : vector<16x16x128xf32> to vector<1x16x128xf32>
    %110 = vector.shape_cast %109 : vector<1x16x128xf32> to vector<16x128xf32>
    %111 = vector.extract_strided_slice %99 {offsets = [1, 0], sizes = [1, 128], strides = [1, 1]} : vector<16x128xf32> to vector<1x128xf32>
    %112 = vector.broadcast %111 : vector<1x128xf32> to vector<16x128xf32>
    %113 = arith.mulf %110, %112 : vector<16x128xf32>
    %114 = vector.extract_strided_slice %3 {offsets = [2, 0, 0], sizes = [1, 16, 128], strides = [1, 1, 1]} : vector<16x16x128xf32> to vector<1x16x128xf32>
    %115 = vector.shape_cast %114 : vector<1x16x128xf32> to vector<16x128xf32>
    %116 = vector.extract_strided_slice %99 {offsets = [2, 0], sizes = [1, 128], strides = [1, 1]} : vector<16x128xf32> to vector<1x128xf32>
    %117 = vector.broadcast %116 : vector<1x128xf32> to vector<16x128xf32>
    %118 = arith.mulf %115, %117 : vector<16x128xf32>
    %119 = vector.extract_strided_slice %3 {offsets = [3, 0, 0], sizes = [1, 16, 128], strides = [1, 1, 1]} : vector<16x16x128xf32> to vector<1x16x128xf32>
    %120 = vector.shape_cast %119 : vector<1x16x128xf32> to vector<16x128xf32>
    %121 = vector.extract_strided_slice %99 {offsets = [3, 0], sizes = [1, 128], strides = [1, 1]} : vector<16x128xf32> to vector<1x128xf32>
    %122 = vector.broadcast %121 : vector<1x128xf32> to vector<16x128xf32>
    %123 = arith.mulf %120, %122 : vector<16x128xf32>
    %124 = vector.extract_strided_slice %3 {offsets = [4, 0, 0], sizes = [1, 16, 128], strides = [1, 1, 1]} : vector<16x16x128xf32> to vector<1x16x128xf32>
    %125 = vector.shape_cast %124 : vector<1x16x128xf32> to vector<16x128xf32>
    %126 = vector.extract_strided_slice %99 {offsets = [4, 0], sizes = [1, 128], strides = [1, 1]} : vector<16x128xf32> to vector<1x128xf32>
    %127 = vector.broadcast %126 : vector<1x128xf32> to vector<16x128xf32>
    %128 = arith.mulf %125, %127 : vector<16x128xf32>
    %129 = arith.addf %108, %128 : vector<16x128xf32>
    %130 = vector.extract_strided_slice %3 {offsets = [5, 0, 0], sizes = [1, 16, 128], strides = [1, 1, 1]} : vector<16x16x128xf32> to vector<1x16x128xf32>
    %131 = vector.shape_cast %130 : vector<1x16x128xf32> to vector<16x128xf32>
    %132 = vector.extract_strided_slice %99 {offsets = [5, 0], sizes = [1, 128], strides = [1, 1]} : vector<16x128xf32> to vector<1x128xf32>
    %133 = vector.broadcast %132 : vector<1x128xf32> to vector<16x128xf32>
    %134 = arith.mulf %131, %133 : vector<16x128xf32>
    %135 = arith.addf %113, %134 : vector<16x128xf32>
    %136 = vector.extract_strided_slice %3 {offsets = [6, 0, 0], sizes = [1, 16, 128], strides = [1, 1, 1]} : vector<16x16x128xf32> to vector<1x16x128xf32>
    %137 = vector.shape_cast %136 : vector<1x16x128xf32> to vector<16x128xf32>
    %138 = vector.extract_strided_slice %99 {offsets = [6, 0], sizes = [1, 128], strides = [1, 1]} : vector<16x128xf32> to vector<1x128xf32>
    %139 = vector.broadcast %138 : vector<1x128xf32> to vector<16x128xf32>
    %140 = arith.mulf %137, %139 : vector<16x128xf32>
    %141 = arith.addf %118, %140 : vector<16x128xf32>
    %142 = vector.extract_strided_slice %3 {offsets = [7, 0, 0], sizes = [1, 16, 128], strides = [1, 1, 1]} : vector<16x16x128xf32> to vector<1x16x128xf32>
    %143 = vector.shape_cast %142 : vector<1x16x128xf32> to vector<16x128xf32>
    %144 = vector.extract_strided_slice %99 {offsets = [7, 0], sizes = [1, 128], strides = [1, 1]} : vector<16x128xf32> to vector<1x128xf32>
    %145 = vector.broadcast %144 : vector<1x128xf32> to vector<16x128xf32>
    %146 = arith.mulf %143, %145 : vector<16x128xf32>
    %147 = arith.addf %123, %146 : vector<16x128xf32>
    %148 = vector.extract_strided_slice %3 {offsets = [8, 0, 0], sizes = [1, 16, 128], strides = [1, 1, 1]} : vector<16x16x128xf32> to vector<1x16x128xf32>
    %149 = vector.shape_cast %148 : vector<1x16x128xf32> to vector<16x128xf32>
    %150 = vector.extract_strided_slice %99 {offsets = [8, 0], sizes = [1, 128], strides = [1, 1]} : vector<16x128xf32> to vector<1x128xf32>
    %151 = vector.broadcast %150 : vector<1x128xf32> to vector<16x128xf32>
    %152 = arith.mulf %149, %151 : vector<16x128xf32>
    %153 = arith.addf %129, %152 : vector<16x128xf32>
    %154 = vector.extract_strided_slice %3 {offsets = [9, 0, 0], sizes = [1, 16, 128], strides = [1, 1, 1]} : vector<16x16x128xf32> to vector<1x16x128xf32>
    %155 = vector.shape_cast %154 : vector<1x16x128xf32> to vector<16x128xf32>
    %156 = vector.extract_strided_slice %99 {offsets = [9, 0], sizes = [1, 128], strides = [1, 1]} : vector<16x128xf32> to vector<1x128xf32>
    %157 = vector.broadcast %156 : vector<1x128xf32> to vector<16x128xf32>
    %158 = arith.mulf %155, %157 : vector<16x128xf32>
    %159 = arith.addf %135, %158 : vector<16x128xf32>
    %160 = vector.extract_strided_slice %3 {offsets = [10, 0, 0], sizes = [1, 16, 128], strides = [1, 1, 1]} : vector<16x16x128xf32> to vector<1x16x128xf32>
    %161 = vector.shape_cast %160 : vector<1x16x128xf32> to vector<16x128xf32>
    %162 = vector.extract_strided_slice %99 {offsets = [10, 0], sizes = [1, 128], strides = [1, 1]} : vector<16x128xf32> to vector<1x128xf32>
    %163 = vector.broadcast %162 : vector<1x128xf32> to vector<16x128xf32>
    %164 = arith.mulf %161, %163 : vector<16x128xf32>
    %165 = arith.addf %141, %164 : vector<16x128xf32>
    %166 = vector.extract_strided_slice %3 {offsets = [11, 0, 0], sizes = [1, 16, 128], strides = [1, 1, 1]} : vector<16x16x128xf32> to vector<1x16x128xf32>
    %167 = vector.shape_cast %166 : vector<1x16x128xf32> to vector<16x128xf32>
    %168 = vector.extract_strided_slice %99 {offsets = [11, 0], sizes = [1, 128], strides = [1, 1]} : vector<16x128xf32> to vector<1x128xf32>
    %169 = vector.broadcast %168 : vector<1x128xf32> to vector<16x128xf32>
    %170 = arith.mulf %167, %169 : vector<16x128xf32>
    %171 = arith.addf %147, %170 : vector<16x128xf32>
    %172 = vector.extract_strided_slice %3 {offsets = [12, 0, 0], sizes = [1, 16, 128], strides = [1, 1, 1]} : vector<16x16x128xf32> to vector<1x16x128xf32>
    %173 = vector.shape_cast %172 : vector<1x16x128xf32> to vector<16x128xf32>
    %174 = vector.extract_strided_slice %99 {offsets = [12, 0], sizes = [1, 128], strides = [1, 1]} : vector<16x128xf32> to vector<1x128xf32>
    %175 = vector.broadcast %174 : vector<1x128xf32> to vector<16x128xf32>
    %176 = arith.mulf %173, %175 : vector<16x128xf32>
    %177 = arith.addf %153, %176 : vector<16x128xf32>
    %178 = vector.extract_strided_slice %3 {offsets = [13, 0, 0], sizes = [1, 16, 128], strides = [1, 1, 1]} : vector<16x16x128xf32> to vector<1x16x128xf32>
    %179 = vector.shape_cast %178 : vector<1x16x128xf32> to vector<16x128xf32>
    %180 = vector.extract_strided_slice %99 {offsets = [13, 0], sizes = [1, 128], strides = [1, 1]} : vector<16x128xf32> to vector<1x128xf32>
    %181 = vector.broadcast %180 : vector<1x128xf32> to vector<16x128xf32>
    %182 = arith.mulf %179, %181 : vector<16x128xf32>
    %183 = arith.addf %159, %182 : vector<16x128xf32>
    %184 = vector.extract_strided_slice %3 {offsets = [14, 0, 0], sizes = [1, 16, 128], strides = [1, 1, 1]} : vector<16x16x128xf32> to vector<1x16x128xf32>
    %185 = vector.shape_cast %184 : vector<1x16x128xf32> to vector<16x128xf32>
    %186 = vector.extract_strided_slice %99 {offsets = [14, 0], sizes = [1, 128], strides = [1, 1]} : vector<16x128xf32> to vector<1x128xf32>
    %187 = vector.broadcast %186 : vector<1x128xf32> to vector<16x128xf32>
    %188 = arith.mulf %185, %187 : vector<16x128xf32>
    %189 = arith.addf %165, %188 : vector<16x128xf32>
    %190 = vector.extract_strided_slice %3 {offsets = [15, 0, 0], sizes = [1, 16, 128], strides = [1, 1, 1]} : vector<16x16x128xf32> to vector<1x16x128xf32>
    %191 = vector.shape_cast %190 : vector<1x16x128xf32> to vector<16x128xf32>
    %192 = vector.extract_strided_slice %99 {offsets = [15, 0], sizes = [1, 128], strides = [1, 1]} : vector<16x128xf32> to vector<1x128xf32>
    %193 = vector.broadcast %192 : vector<1x128xf32> to vector<16x128xf32>
    %194 = arith.mulf %191, %193 : vector<16x128xf32>
    %195 = arith.addf %171, %194 : vector<16x128xf32>
    %196 = arith.addf %177, %183 : vector<16x128xf32>
    %197 = arith.addf %196, %189 : vector<16x128xf32>
    %198 = arith.addf %197, %195 : vector<16x128xf32>
    %cst_10 = arith.constant 0.000000e+00 : f32
    %199 = vector.broadcast %cst_10 : f32 to vector<16x128xf32>
    %200 = arith.subf %199, %198 : vector<16x128xf32>
    %201 = vector.extract_strided_slice %0 {offsets = [0, 0, 0], sizes = [1, 16, 128], strides = [1, 1, 1]} : vector<16x16x128xf32> to vector<1x16x128xf32>
    %202 = vector.shape_cast %201 : vector<1x16x128xf32> to vector<16x128xf32>
    %203 = vector.extract_strided_slice %200 {offsets = [0, 0], sizes = [1, 128], strides = [1, 1]} : vector<16x128xf32> to vector<1x128xf32>
    %204 = vector.broadcast %203 : vector<1x128xf32> to vector<16x128xf32>
    %205 = arith.mulf %202, %204 : vector<16x128xf32>
    %206 = vector.extract_strided_slice %0 {offsets = [1, 0, 0], sizes = [1, 16, 128], strides = [1, 1, 1]} : vector<16x16x128xf32> to vector<1x16x128xf32>
    %207 = vector.shape_cast %206 : vector<1x16x128xf32> to vector<16x128xf32>
    %208 = vector.extract_strided_slice %200 {offsets = [1, 0], sizes = [1, 128], strides = [1, 1]} : vector<16x128xf32> to vector<1x128xf32>
    %209 = vector.broadcast %208 : vector<1x128xf32> to vector<16x128xf32>
    %210 = arith.mulf %207, %209 : vector<16x128xf32>
    %211 = vector.extract_strided_slice %0 {offsets = [2, 0, 0], sizes = [1, 16, 128], strides = [1, 1, 1]} : vector<16x16x128xf32> to vector<1x16x128xf32>
    %212 = vector.shape_cast %211 : vector<1x16x128xf32> to vector<16x128xf32>
    %213 = vector.extract_strided_slice %200 {offsets = [2, 0], sizes = [1, 128], strides = [1, 1]} : vector<16x128xf32> to vector<1x128xf32>
    %214 = vector.broadcast %213 : vector<1x128xf32> to vector<16x128xf32>
    %215 = arith.mulf %212, %214 : vector<16x128xf32>
    %216 = vector.extract_strided_slice %0 {offsets = [3, 0, 0], sizes = [1, 16, 128], strides = [1, 1, 1]} : vector<16x16x128xf32> to vector<1x16x128xf32>
    %217 = vector.shape_cast %216 : vector<1x16x128xf32> to vector<16x128xf32>
    %218 = vector.extract_strided_slice %200 {offsets = [3, 0], sizes = [1, 128], strides = [1, 1]} : vector<16x128xf32> to vector<1x128xf32>
    %219 = vector.broadcast %218 : vector<1x128xf32> to vector<16x128xf32>
    %220 = arith.mulf %217, %219 : vector<16x128xf32>
    %221 = vector.extract_strided_slice %0 {offsets = [4, 0, 0], sizes = [1, 16, 128], strides = [1, 1, 1]} : vector<16x16x128xf32> to vector<1x16x128xf32>
    %222 = vector.shape_cast %221 : vector<1x16x128xf32> to vector<16x128xf32>
    %223 = vector.extract_strided_slice %200 {offsets = [4, 0], sizes = [1, 128], strides = [1, 1]} : vector<16x128xf32> to vector<1x128xf32>
    %224 = vector.broadcast %223 : vector<1x128xf32> to vector<16x128xf32>
    %225 = arith.mulf %222, %224 : vector<16x128xf32>
    %226 = arith.addf %205, %225 : vector<16x128xf32>
    %227 = vector.extract_strided_slice %0 {offsets = [5, 0, 0], sizes = [1, 16, 128], strides = [1, 1, 1]} : vector<16x16x128xf32> to vector<1x16x128xf32>
    %228 = vector.shape_cast %227 : vector<1x16x128xf32> to vector<16x128xf32>
    %229 = vector.extract_strided_slice %200 {offsets = [5, 0], sizes = [1, 128], strides = [1, 1]} : vector<16x128xf32> to vector<1x128xf32>
    %230 = vector.broadcast %229 : vector<1x128xf32> to vector<16x128xf32>
    %231 = arith.mulf %228, %230 : vector<16x128xf32>
    %232 = arith.addf %210, %231 : vector<16x128xf32>
    %233 = vector.extract_strided_slice %0 {offsets = [6, 0, 0], sizes = [1, 16, 128], strides = [1, 1, 1]} : vector<16x16x128xf32> to vector<1x16x128xf32>
    %234 = vector.shape_cast %233 : vector<1x16x128xf32> to vector<16x128xf32>
    %235 = vector.extract_strided_slice %200 {offsets = [6, 0], sizes = [1, 128], strides = [1, 1]} : vector<16x128xf32> to vector<1x128xf32>
    %236 = vector.broadcast %235 : vector<1x128xf32> to vector<16x128xf32>
    %237 = arith.mulf %234, %236 : vector<16x128xf32>
    %238 = arith.addf %215, %237 : vector<16x128xf32>
    %239 = vector.extract_strided_slice %0 {offsets = [7, 0, 0], sizes = [1, 16, 128], strides = [1, 1, 1]} : vector<16x16x128xf32> to vector<1x16x128xf32>
    %240 = vector.shape_cast %239 : vector<1x16x128xf32> to vector<16x128xf32>
    %241 = vector.extract_strided_slice %200 {offsets = [7, 0], sizes = [1, 128], strides = [1, 1]} : vector<16x128xf32> to vector<1x128xf32>
    %242 = vector.broadcast %241 : vector<1x128xf32> to vector<16x128xf32>
    %243 = arith.mulf %240, %242 : vector<16x128xf32>
    %244 = arith.addf %220, %243 : vector<16x128xf32>
    %245 = vector.extract_strided_slice %0 {offsets = [8, 0, 0], sizes = [1, 16, 128], strides = [1, 1, 1]} : vector<16x16x128xf32> to vector<1x16x128xf32>
    %246 = vector.shape_cast %245 : vector<1x16x128xf32> to vector<16x128xf32>
    %247 = vector.extract_strided_slice %200 {offsets = [8, 0], sizes = [1, 128], strides = [1, 1]} : vector<16x128xf32> to vector<1x128xf32>
    %248 = vector.broadcast %247 : vector<1x128xf32> to vector<16x128xf32>
    %249 = arith.mulf %246, %248 : vector<16x128xf32>
    %250 = arith.addf %226, %249 : vector<16x128xf32>
    %251 = vector.extract_strided_slice %0 {offsets = [9, 0, 0], sizes = [1, 16, 128], strides = [1, 1, 1]} : vector<16x16x128xf32> to vector<1x16x128xf32>
    %252 = vector.shape_cast %251 : vector<1x16x128xf32> to vector<16x128xf32>
    %253 = vector.extract_strided_slice %200 {offsets = [9, 0], sizes = [1, 128], strides = [1, 1]} : vector<16x128xf32> to vector<1x128xf32>
    %254 = vector.broadcast %253 : vector<1x128xf32> to vector<16x128xf32>
    %255 = arith.mulf %252, %254 : vector<16x128xf32>
    %256 = arith.addf %232, %255 : vector<16x128xf32>
    %257 = vector.extract_strided_slice %0 {offsets = [10, 0, 0], sizes = [1, 16, 128], strides = [1, 1, 1]} : vector<16x16x128xf32> to vector<1x16x128xf32>
    %258 = vector.shape_cast %257 : vector<1x16x128xf32> to vector<16x128xf32>
    %259 = vector.extract_strided_slice %200 {offsets = [10, 0], sizes = [1, 128], strides = [1, 1]} : vector<16x128xf32> to vector<1x128xf32>
    %260 = vector.broadcast %259 : vector<1x128xf32> to vector<16x128xf32>
    %261 = arith.mulf %258, %260 : vector<16x128xf32>
    %262 = arith.addf %238, %261 : vector<16x128xf32>
    %263 = vector.extract_strided_slice %0 {offsets = [11, 0, 0], sizes = [1, 16, 128], strides = [1, 1, 1]} : vector<16x16x128xf32> to vector<1x16x128xf32>
    %264 = vector.shape_cast %263 : vector<1x16x128xf32> to vector<16x128xf32>
    %265 = vector.extract_strided_slice %200 {offsets = [11, 0], sizes = [1, 128], strides = [1, 1]} : vector<16x128xf32> to vector<1x128xf32>
    %266 = vector.broadcast %265 : vector<1x128xf32> to vector<16x128xf32>
    %267 = arith.mulf %264, %266 : vector<16x128xf32>
    %268 = arith.addf %244, %267 : vector<16x128xf32>
    %269 = vector.extract_strided_slice %0 {offsets = [12, 0, 0], sizes = [1, 16, 128], strides = [1, 1, 1]} : vector<16x16x128xf32> to vector<1x16x128xf32>
    %270 = vector.shape_cast %269 : vector<1x16x128xf32> to vector<16x128xf32>
    %271 = vector.extract_strided_slice %200 {offsets = [12, 0], sizes = [1, 128], strides = [1, 1]} : vector<16x128xf32> to vector<1x128xf32>
    %272 = vector.broadcast %271 : vector<1x128xf32> to vector<16x128xf32>
    %273 = arith.mulf %270, %272 : vector<16x128xf32>
    %274 = arith.addf %250, %273 : vector<16x128xf32>
    %275 = vector.extract_strided_slice %0 {offsets = [13, 0, 0], sizes = [1, 16, 128], strides = [1, 1, 1]} : vector<16x16x128xf32> to vector<1x16x128xf32>
    %276 = vector.shape_cast %275 : vector<1x16x128xf32> to vector<16x128xf32>
    %277 = vector.extract_strided_slice %200 {offsets = [13, 0], sizes = [1, 128], strides = [1, 1]} : vector<16x128xf32> to vector<1x128xf32>
    %278 = vector.broadcast %277 : vector<1x128xf32> to vector<16x128xf32>
    %279 = arith.mulf %276, %278 : vector<16x128xf32>
    %280 = arith.addf %256, %279 : vector<16x128xf32>
    %281 = vector.extract_strided_slice %0 {offsets = [14, 0, 0], sizes = [1, 16, 128], strides = [1, 1, 1]} : vector<16x16x128xf32> to vector<1x16x128xf32>
    %282 = vector.shape_cast %281 : vector<1x16x128xf32> to vector<16x128xf32>
    %283 = vector.extract_strided_slice %200 {offsets = [14, 0], sizes = [1, 128], strides = [1, 1]} : vector<16x128xf32> to vector<1x128xf32>
    %284 = vector.broadcast %283 : vector<1x128xf32> to vector<16x128xf32>
    %285 = arith.mulf %282, %284 : vector<16x128xf32>
    %286 = arith.addf %262, %285 : vector<16x128xf32>
    %287 = vector.extract_strided_slice %0 {offsets = [15, 0, 0], sizes = [1, 16, 128], strides = [1, 1, 1]} : vector<16x16x128xf32> to vector<1x16x128xf32>
    %288 = vector.shape_cast %287 : vector<1x16x128xf32> to vector<16x128xf32>
    %289 = vector.extract_strided_slice %200 {offsets = [15, 0], sizes = [1, 128], strides = [1, 1]} : vector<16x128xf32> to vector<1x128xf32>
    %290 = vector.broadcast %289 : vector<1x128xf32> to vector<16x128xf32>
    %291 = arith.mulf %288, %290 : vector<16x128xf32>
    %292 = arith.addf %268, %291 : vector<16x128xf32>
    %293 = arith.addf %274, %280 : vector<16x128xf32>
    %294 = arith.addf %293, %286 : vector<16x128xf32>
    %295 = arith.addf %294, %292 : vector<16x128xf32>
    %296 = arith.mulf %200, %295 : vector<16x128xf32>
    %cst_11 = arith.constant dense<0.000000e+00> : vector<128xf32>
    %297 = vector.multi_reduction <add>, %296, %cst_11 [0] : vector<16x128xf32> to vector<128xf32>
    %298 = vector.shape_cast %297 : vector<128xf32> to vector<1x128xf32>
    %299 = arith.mulf %99, %200 : vector<16x128xf32>
    %cst_12 = arith.constant dense<0.000000e+00> : vector<128xf32>
    %300 = vector.multi_reduction <add>, %299, %cst_12 [0] : vector<16x128xf32> to vector<128xf32>
    %301 = vector.shape_cast %300 : vector<128xf32> to vector<1x128xf32>
    %cst_13 = arith.constant 1.000000e-30 : f32
    %302 = vector.broadcast %cst_13 : f32 to vector<1x128xf32>
    %303 = arith.cmpf ogt, %298, %302 : vector<1x128xf32>
    %cst_14 = arith.constant 0.000000e+00 : f32
    %304 = vector.broadcast %cst_14 : f32 to vector<1x128xf32>
    %305 = arith.subf %304, %301 : vector<1x128xf32>
    %cst_15 = arith.constant 1.000000e+00 : f32
    %306 = vector.broadcast %cst_15 : f32 to vector<1x128xf32>
    %307 = arith.select %303, %298, %306 : vector<1x128xi1>, vector<1x128xf32>
    %308 = arith.divf %305, %307 : vector<1x128xf32>
    %cst_16 = arith.constant 0.000000e+00 : f32
    %309 = vector.broadcast %cst_16 : f32 to vector<1x128xf32>
    %310 = arith.select %303, %308, %309 : vector<1x128xi1>, vector<1x128xf32>
    %311 = vector.broadcast %310 : vector<1x128xf32> to vector<16x128xf32>
    %312 = arith.mulf %311, %200 : vector<16x128xf32>
    %313 = arith.addf %2, %312 : vector<16x128xf32>
    %314 = vector.broadcast %310 : vector<1x128xf32> to vector<16x128xf32>
    %315 = arith.mulf %314, %295 : vector<16x128xf32>
    %316 = arith.addf %99, %315 : vector<16x128xf32>
    %317 = arith.subf %316, %99 : vector<16x128xf32>
    %318 = arith.mulf %312, %317 : vector<16x128xf32>
    %cst_17 = arith.constant dense<0.000000e+00> : vector<128xf32>
    %319 = vector.multi_reduction <add>, %318, %cst_17 [0] : vector<16x128xf32> to vector<128xf32>
    %320 = vector.shape_cast %319 : vector<128xf32> to vector<1x128xf32>
    %321 = vector.extract_strided_slice %3 {offsets = [0, 0, 0], sizes = [1, 16, 128], strides = [1, 1, 1]} : vector<16x16x128xf32> to vector<1x16x128xf32>
    %322 = vector.shape_cast %321 : vector<1x16x128xf32> to vector<16x128xf32>
    %323 = vector.extract_strided_slice %317 {offsets = [0, 0], sizes = [1, 128], strides = [1, 1]} : vector<16x128xf32> to vector<1x128xf32>
    %324 = vector.broadcast %323 : vector<1x128xf32> to vector<16x128xf32>
    %325 = arith.mulf %322, %324 : vector<16x128xf32>
    %326 = vector.extract_strided_slice %3 {offsets = [1, 0, 0], sizes = [1, 16, 128], strides = [1, 1, 1]} : vector<16x16x128xf32> to vector<1x16x128xf32>
    %327 = vector.shape_cast %326 : vector<1x16x128xf32> to vector<16x128xf32>
    %328 = vector.extract_strided_slice %317 {offsets = [1, 0], sizes = [1, 128], strides = [1, 1]} : vector<16x128xf32> to vector<1x128xf32>
    %329 = vector.broadcast %328 : vector<1x128xf32> to vector<16x128xf32>
    %330 = arith.mulf %327, %329 : vector<16x128xf32>
    %331 = vector.extract_strided_slice %3 {offsets = [2, 0, 0], sizes = [1, 16, 128], strides = [1, 1, 1]} : vector<16x16x128xf32> to vector<1x16x128xf32>
    %332 = vector.shape_cast %331 : vector<1x16x128xf32> to vector<16x128xf32>
    %333 = vector.extract_strided_slice %317 {offsets = [2, 0], sizes = [1, 128], strides = [1, 1]} : vector<16x128xf32> to vector<1x128xf32>
    %334 = vector.broadcast %333 : vector<1x128xf32> to vector<16x128xf32>
    %335 = arith.mulf %332, %334 : vector<16x128xf32>
    %336 = vector.extract_strided_slice %3 {offsets = [3, 0, 0], sizes = [1, 16, 128], strides = [1, 1, 1]} : vector<16x16x128xf32> to vector<1x16x128xf32>
    %337 = vector.shape_cast %336 : vector<1x16x128xf32> to vector<16x128xf32>
    %338 = vector.extract_strided_slice %317 {offsets = [3, 0], sizes = [1, 128], strides = [1, 1]} : vector<16x128xf32> to vector<1x128xf32>
    %339 = vector.broadcast %338 : vector<1x128xf32> to vector<16x128xf32>
    %340 = arith.mulf %337, %339 : vector<16x128xf32>
    %341 = vector.extract_strided_slice %3 {offsets = [4, 0, 0], sizes = [1, 16, 128], strides = [1, 1, 1]} : vector<16x16x128xf32> to vector<1x16x128xf32>
    %342 = vector.shape_cast %341 : vector<1x16x128xf32> to vector<16x128xf32>
    %343 = vector.extract_strided_slice %317 {offsets = [4, 0], sizes = [1, 128], strides = [1, 1]} : vector<16x128xf32> to vector<1x128xf32>
    %344 = vector.broadcast %343 : vector<1x128xf32> to vector<16x128xf32>
    %345 = arith.mulf %342, %344 : vector<16x128xf32>
    %346 = arith.addf %325, %345 : vector<16x128xf32>
    %347 = vector.extract_strided_slice %3 {offsets = [5, 0, 0], sizes = [1, 16, 128], strides = [1, 1, 1]} : vector<16x16x128xf32> to vector<1x16x128xf32>
    %348 = vector.shape_cast %347 : vector<1x16x128xf32> to vector<16x128xf32>
    %349 = vector.extract_strided_slice %317 {offsets = [5, 0], sizes = [1, 128], strides = [1, 1]} : vector<16x128xf32> to vector<1x128xf32>
    %350 = vector.broadcast %349 : vector<1x128xf32> to vector<16x128xf32>
    %351 = arith.mulf %348, %350 : vector<16x128xf32>
    %352 = arith.addf %330, %351 : vector<16x128xf32>
    %353 = vector.extract_strided_slice %3 {offsets = [6, 0, 0], sizes = [1, 16, 128], strides = [1, 1, 1]} : vector<16x16x128xf32> to vector<1x16x128xf32>
    %354 = vector.shape_cast %353 : vector<1x16x128xf32> to vector<16x128xf32>
    %355 = vector.extract_strided_slice %317 {offsets = [6, 0], sizes = [1, 128], strides = [1, 1]} : vector<16x128xf32> to vector<1x128xf32>
    %356 = vector.broadcast %355 : vector<1x128xf32> to vector<16x128xf32>
    %357 = arith.mulf %354, %356 : vector<16x128xf32>
    %358 = arith.addf %335, %357 : vector<16x128xf32>
    %359 = vector.extract_strided_slice %3 {offsets = [7, 0, 0], sizes = [1, 16, 128], strides = [1, 1, 1]} : vector<16x16x128xf32> to vector<1x16x128xf32>
    %360 = vector.shape_cast %359 : vector<1x16x128xf32> to vector<16x128xf32>
    %361 = vector.extract_strided_slice %317 {offsets = [7, 0], sizes = [1, 128], strides = [1, 1]} : vector<16x128xf32> to vector<1x128xf32>
    %362 = vector.broadcast %361 : vector<1x128xf32> to vector<16x128xf32>
    %363 = arith.mulf %360, %362 : vector<16x128xf32>
    %364 = arith.addf %340, %363 : vector<16x128xf32>
    %365 = vector.extract_strided_slice %3 {offsets = [8, 0, 0], sizes = [1, 16, 128], strides = [1, 1, 1]} : vector<16x16x128xf32> to vector<1x16x128xf32>
    %366 = vector.shape_cast %365 : vector<1x16x128xf32> to vector<16x128xf32>
    %367 = vector.extract_strided_slice %317 {offsets = [8, 0], sizes = [1, 128], strides = [1, 1]} : vector<16x128xf32> to vector<1x128xf32>
    %368 = vector.broadcast %367 : vector<1x128xf32> to vector<16x128xf32>
    %369 = arith.mulf %366, %368 : vector<16x128xf32>
    %370 = arith.addf %346, %369 : vector<16x128xf32>
    %371 = vector.extract_strided_slice %3 {offsets = [9, 0, 0], sizes = [1, 16, 128], strides = [1, 1, 1]} : vector<16x16x128xf32> to vector<1x16x128xf32>
    %372 = vector.shape_cast %371 : vector<1x16x128xf32> to vector<16x128xf32>
    %373 = vector.extract_strided_slice %317 {offsets = [9, 0], sizes = [1, 128], strides = [1, 1]} : vector<16x128xf32> to vector<1x128xf32>
    %374 = vector.broadcast %373 : vector<1x128xf32> to vector<16x128xf32>
    %375 = arith.mulf %372, %374 : vector<16x128xf32>
    %376 = arith.addf %352, %375 : vector<16x128xf32>
    %377 = vector.extract_strided_slice %3 {offsets = [10, 0, 0], sizes = [1, 16, 128], strides = [1, 1, 1]} : vector<16x16x128xf32> to vector<1x16x128xf32>
    %378 = vector.shape_cast %377 : vector<1x16x128xf32> to vector<16x128xf32>
    %379 = vector.extract_strided_slice %317 {offsets = [10, 0], sizes = [1, 128], strides = [1, 1]} : vector<16x128xf32> to vector<1x128xf32>
    %380 = vector.broadcast %379 : vector<1x128xf32> to vector<16x128xf32>
    %381 = arith.mulf %378, %380 : vector<16x128xf32>
    %382 = arith.addf %358, %381 : vector<16x128xf32>
    %383 = vector.extract_strided_slice %3 {offsets = [11, 0, 0], sizes = [1, 16, 128], strides = [1, 1, 1]} : vector<16x16x128xf32> to vector<1x16x128xf32>
    %384 = vector.shape_cast %383 : vector<1x16x128xf32> to vector<16x128xf32>
    %385 = vector.extract_strided_slice %317 {offsets = [11, 0], sizes = [1, 128], strides = [1, 1]} : vector<16x128xf32> to vector<1x128xf32>
    %386 = vector.broadcast %385 : vector<1x128xf32> to vector<16x128xf32>
    %387 = arith.mulf %384, %386 : vector<16x128xf32>
    %388 = arith.addf %364, %387 : vector<16x128xf32>
    %389 = vector.extract_strided_slice %3 {offsets = [12, 0, 0], sizes = [1, 16, 128], strides = [1, 1, 1]} : vector<16x16x128xf32> to vector<1x16x128xf32>
    %390 = vector.shape_cast %389 : vector<1x16x128xf32> to vector<16x128xf32>
    %391 = vector.extract_strided_slice %317 {offsets = [12, 0], sizes = [1, 128], strides = [1, 1]} : vector<16x128xf32> to vector<1x128xf32>
    %392 = vector.broadcast %391 : vector<1x128xf32> to vector<16x128xf32>
    %393 = arith.mulf %390, %392 : vector<16x128xf32>
    %394 = arith.addf %370, %393 : vector<16x128xf32>
    %395 = vector.extract_strided_slice %3 {offsets = [13, 0, 0], sizes = [1, 16, 128], strides = [1, 1, 1]} : vector<16x16x128xf32> to vector<1x16x128xf32>
    %396 = vector.shape_cast %395 : vector<1x16x128xf32> to vector<16x128xf32>
    %397 = vector.extract_strided_slice %317 {offsets = [13, 0], sizes = [1, 128], strides = [1, 1]} : vector<16x128xf32> to vector<1x128xf32>
    %398 = vector.broadcast %397 : vector<1x128xf32> to vector<16x128xf32>
    %399 = arith.mulf %396, %398 : vector<16x128xf32>
    %400 = arith.addf %376, %399 : vector<16x128xf32>
    %401 = vector.extract_strided_slice %3 {offsets = [14, 0, 0], sizes = [1, 16, 128], strides = [1, 1, 1]} : vector<16x16x128xf32> to vector<1x16x128xf32>
    %402 = vector.shape_cast %401 : vector<1x16x128xf32> to vector<16x128xf32>
    %403 = vector.extract_strided_slice %317 {offsets = [14, 0], sizes = [1, 128], strides = [1, 1]} : vector<16x128xf32> to vector<1x128xf32>
    %404 = vector.broadcast %403 : vector<1x128xf32> to vector<16x128xf32>
    %405 = arith.mulf %402, %404 : vector<16x128xf32>
    %406 = arith.addf %382, %405 : vector<16x128xf32>
    %407 = vector.extract_strided_slice %3 {offsets = [15, 0, 0], sizes = [1, 16, 128], strides = [1, 1, 1]} : vector<16x16x128xf32> to vector<1x16x128xf32>
    %408 = vector.shape_cast %407 : vector<1x16x128xf32> to vector<16x128xf32>
    %409 = vector.extract_strided_slice %317 {offsets = [15, 0], sizes = [1, 128], strides = [1, 1]} : vector<16x128xf32> to vector<1x128xf32>
    %410 = vector.broadcast %409 : vector<1x128xf32> to vector<16x128xf32>
    %411 = arith.mulf %408, %410 : vector<16x128xf32>
    %412 = arith.addf %388, %411 : vector<16x128xf32>
    %413 = arith.addf %394, %400 : vector<16x128xf32>
    %414 = arith.addf %413, %406 : vector<16x128xf32>
    %415 = arith.addf %414, %412 : vector<16x128xf32>
    %416 = arith.mulf %317, %415 : vector<16x128xf32>
    %cst_18 = arith.constant dense<0.000000e+00> : vector<128xf32>
    %417 = vector.multi_reduction <add>, %416, %cst_18 [0] : vector<16x128xf32> to vector<128xf32>
    %418 = vector.shape_cast %417 : vector<128xf32> to vector<1x128xf32>
    %cst_19 = arith.constant 0.000000e+00 : f32
    %419 = vector.broadcast %cst_19 : f32 to vector<1x128xf32>
    %420 = arith.cmpf one, %320, %419 : vector<1x128xf32>
    %cst_20 = arith.constant 1.000000e+00 : f32
    %421 = vector.broadcast %cst_20 : f32 to vector<1x128xf32>
    %422 = arith.select %420, %320, %421 : vector<1x128xi1>, vector<1x128xf32>
    %cst_21 = arith.constant 1.000000e+00 : f32
    %423 = vector.broadcast %cst_21 : f32 to vector<1x128xf32>
    %424 = arith.divf %423, %422 : vector<1x128xf32>
    %cst_22 = arith.constant 0.000000e+00 : f32
    %425 = vector.broadcast %cst_22 : f32 to vector<1x128xf32>
    %426 = arith.select %420, %424, %425 : vector<1x128xi1>, vector<1x128xf32>
    %427 = arith.addf %320, %418 : vector<1x128xf32>
    %428 = arith.mulf %427, %426 : vector<1x128xf32>
    %429 = arith.mulf %428, %426 : vector<1x128xf32>
    %430 = vector.broadcast %429 : vector<1x128xf32> to vector<16x128xf32>
    %431 = arith.mulf %430, %312 : vector<16x128xf32>
    %432 = vector.broadcast %426 : vector<1x128xf32> to vector<16x128xf32>
    %433 = arith.mulf %432, %415 : vector<16x128xf32>
    %434 = arith.subf %431, %433 : vector<16x128xf32>
    %435 = vector.broadcast %426 : vector<1x128xf32> to vector<16x128xf32>
    %436 = arith.mulf %435, %415 : vector<16x128xf32>
    %437 = vector.shape_cast %312 : vector<16x128xf32> to vector<16x1x128xf32>
    %438 = vector.shape_cast %434 : vector<16x128xf32> to vector<1x16x128xf32>
    %439 = vector.broadcast %437 : vector<16x1x128xf32> to vector<16x16x128xf32>
    %440 = vector.broadcast %438 : vector<1x16x128xf32> to vector<16x16x128xf32>
    %441 = arith.mulf %439, %440 : vector<16x16x128xf32>
    %442 = vector.shape_cast %436 : vector<16x128xf32> to vector<16x1x128xf32>
    %443 = vector.shape_cast %312 : vector<16x128xf32> to vector<1x16x128xf32>
    %444 = vector.broadcast %442 : vector<16x1x128xf32> to vector<16x16x128xf32>
    %445 = vector.broadcast %443 : vector<1x16x128xf32> to vector<16x16x128xf32>
    %446 = arith.mulf %444, %445 : vector<16x16x128xf32>
    %447 = arith.subf %441, %446 : vector<16x16x128xf32>
    %448 = arith.addf %3, %447 : vector<16x16x128xf32>
    %cst_23 = arith.constant 5.000000e-01 : f32
    %449 = vector.broadcast %cst_23 : f32 to vector<1x128xf32>
    %450 = arith.cmpf ogt, %103, %449 : vector<1x128xf32>
    %451 = vector.shape_cast %450 : vector<1x128xi1> to vector<1x128xi1>
    %452 = vector.broadcast %451 : vector<1x128xi1> to vector<16x128xi1>
    %453 = arith.select %452, %313, %2 : vector<16x128xi1>, vector<16x128xf32>
    %454 = vector.shape_cast %450 : vector<1x128xi1> to vector<1x128xi1>
    %455 = vector.broadcast %454 : vector<1x128xi1> to vector<16x128xi1>
    %456 = arith.select %455, %316, %99 : vector<16x128xi1>, vector<16x128xf32>
    %457 = arith.mulf %456, %456 : vector<16x128xf32>
    %cst_24 = arith.constant dense<0.000000e+00> : vector<128xf32>
    %458 = vector.multi_reduction <add>, %457, %cst_24 [0] : vector<16x128xf32> to vector<128xf32>
    %459 = vector.shape_cast %458 : vector<128xf32> to vector<1x128xf32>
    %cst_25 = arith.constant 9.99999997E-7 : f32
    %460 = vector.broadcast %cst_25 : f32 to vector<1x128xf32>
    %461 = arith.cmpf ogt, %459, %460 : vector<1x128xf32>
    %462 = arith.andi %450, %461 : vector<1x128xi1>
    %463 = arith.extui %462 : vector<1x128xi1> to vector<1x128xi32>
    %464 = arith.sitofp %463 : vector<1x128xi32> to vector<1x128xf32>
    %c1_i32 = arith.constant 1 : i32
    %465 = vector.extract_strided_slice %448 {offsets = [0, 0, 0], sizes = [1, 16, 128], strides = [1, 1, 1]} : vector<16x16x128xf32> to vector<1x16x128xf32>
    %466 = vector.shape_cast %465 : vector<1x16x128xf32> to vector<16x128xf32>
    %467 = vector.extract_strided_slice %456 {offsets = [0, 0], sizes = [1, 128], strides = [1, 1]} : vector<16x128xf32> to vector<1x128xf32>
    %468 = vector.broadcast %467 : vector<1x128xf32> to vector<16x128xf32>
    %469 = arith.mulf %466, %468 : vector<16x128xf32>
    %470 = vector.extract_strided_slice %448 {offsets = [1, 0, 0], sizes = [1, 16, 128], strides = [1, 1, 1]} : vector<16x16x128xf32> to vector<1x16x128xf32>
    %471 = vector.shape_cast %470 : vector<1x16x128xf32> to vector<16x128xf32>
    %472 = vector.extract_strided_slice %456 {offsets = [1, 0], sizes = [1, 128], strides = [1, 1]} : vector<16x128xf32> to vector<1x128xf32>
    %473 = vector.broadcast %472 : vector<1x128xf32> to vector<16x128xf32>
    %474 = arith.mulf %471, %473 : vector<16x128xf32>
    %475 = vector.extract_strided_slice %448 {offsets = [2, 0, 0], sizes = [1, 16, 128], strides = [1, 1, 1]} : vector<16x16x128xf32> to vector<1x16x128xf32>
    %476 = vector.shape_cast %475 : vector<1x16x128xf32> to vector<16x128xf32>
    %477 = vector.extract_strided_slice %456 {offsets = [2, 0], sizes = [1, 128], strides = [1, 1]} : vector<16x128xf32> to vector<1x128xf32>
    %478 = vector.broadcast %477 : vector<1x128xf32> to vector<16x128xf32>
    %479 = arith.mulf %476, %478 : vector<16x128xf32>
    %480 = vector.extract_strided_slice %448 {offsets = [3, 0, 0], sizes = [1, 16, 128], strides = [1, 1, 1]} : vector<16x16x128xf32> to vector<1x16x128xf32>
    %481 = vector.shape_cast %480 : vector<1x16x128xf32> to vector<16x128xf32>
    %482 = vector.extract_strided_slice %456 {offsets = [3, 0], sizes = [1, 128], strides = [1, 1]} : vector<16x128xf32> to vector<1x128xf32>
    %483 = vector.broadcast %482 : vector<1x128xf32> to vector<16x128xf32>
    %484 = arith.mulf %481, %483 : vector<16x128xf32>
    %485 = vector.extract_strided_slice %448 {offsets = [4, 0, 0], sizes = [1, 16, 128], strides = [1, 1, 1]} : vector<16x16x128xf32> to vector<1x16x128xf32>
    %486 = vector.shape_cast %485 : vector<1x16x128xf32> to vector<16x128xf32>
    %487 = vector.extract_strided_slice %456 {offsets = [4, 0], sizes = [1, 128], strides = [1, 1]} : vector<16x128xf32> to vector<1x128xf32>
    %488 = vector.broadcast %487 : vector<1x128xf32> to vector<16x128xf32>
    %489 = arith.mulf %486, %488 : vector<16x128xf32>
    %490 = arith.addf %469, %489 : vector<16x128xf32>
    %491 = vector.extract_strided_slice %448 {offsets = [5, 0, 0], sizes = [1, 16, 128], strides = [1, 1, 1]} : vector<16x16x128xf32> to vector<1x16x128xf32>
    %492 = vector.shape_cast %491 : vector<1x16x128xf32> to vector<16x128xf32>
    %493 = vector.extract_strided_slice %456 {offsets = [5, 0], sizes = [1, 128], strides = [1, 1]} : vector<16x128xf32> to vector<1x128xf32>
    %494 = vector.broadcast %493 : vector<1x128xf32> to vector<16x128xf32>
    %495 = arith.mulf %492, %494 : vector<16x128xf32>
    %496 = arith.addf %474, %495 : vector<16x128xf32>
    %497 = vector.extract_strided_slice %448 {offsets = [6, 0, 0], sizes = [1, 16, 128], strides = [1, 1, 1]} : vector<16x16x128xf32> to vector<1x16x128xf32>
    %498 = vector.shape_cast %497 : vector<1x16x128xf32> to vector<16x128xf32>
    %499 = vector.extract_strided_slice %456 {offsets = [6, 0], sizes = [1, 128], strides = [1, 1]} : vector<16x128xf32> to vector<1x128xf32>
    %500 = vector.broadcast %499 : vector<1x128xf32> to vector<16x128xf32>
    %501 = arith.mulf %498, %500 : vector<16x128xf32>
    %502 = arith.addf %479, %501 : vector<16x128xf32>
    %503 = vector.extract_strided_slice %448 {offsets = [7, 0, 0], sizes = [1, 16, 128], strides = [1, 1, 1]} : vector<16x16x128xf32> to vector<1x16x128xf32>
    %504 = vector.shape_cast %503 : vector<1x16x128xf32> to vector<16x128xf32>
    %505 = vector.extract_strided_slice %456 {offsets = [7, 0], sizes = [1, 128], strides = [1, 1]} : vector<16x128xf32> to vector<1x128xf32>
    %506 = vector.broadcast %505 : vector<1x128xf32> to vector<16x128xf32>
    %507 = arith.mulf %504, %506 : vector<16x128xf32>
    %508 = arith.addf %484, %507 : vector<16x128xf32>
    %509 = vector.extract_strided_slice %448 {offsets = [8, 0, 0], sizes = [1, 16, 128], strides = [1, 1, 1]} : vector<16x16x128xf32> to vector<1x16x128xf32>
    %510 = vector.shape_cast %509 : vector<1x16x128xf32> to vector<16x128xf32>
    %511 = vector.extract_strided_slice %456 {offsets = [8, 0], sizes = [1, 128], strides = [1, 1]} : vector<16x128xf32> to vector<1x128xf32>
    %512 = vector.broadcast %511 : vector<1x128xf32> to vector<16x128xf32>
    %513 = arith.mulf %510, %512 : vector<16x128xf32>
    %514 = arith.addf %490, %513 : vector<16x128xf32>
    %515 = vector.extract_strided_slice %448 {offsets = [9, 0, 0], sizes = [1, 16, 128], strides = [1, 1, 1]} : vector<16x16x128xf32> to vector<1x16x128xf32>
    %516 = vector.shape_cast %515 : vector<1x16x128xf32> to vector<16x128xf32>
    %517 = vector.extract_strided_slice %456 {offsets = [9, 0], sizes = [1, 128], strides = [1, 1]} : vector<16x128xf32> to vector<1x128xf32>
    %518 = vector.broadcast %517 : vector<1x128xf32> to vector<16x128xf32>
    %519 = arith.mulf %516, %518 : vector<16x128xf32>
    %520 = arith.addf %496, %519 : vector<16x128xf32>
    %521 = vector.extract_strided_slice %448 {offsets = [10, 0, 0], sizes = [1, 16, 128], strides = [1, 1, 1]} : vector<16x16x128xf32> to vector<1x16x128xf32>
    %522 = vector.shape_cast %521 : vector<1x16x128xf32> to vector<16x128xf32>
    %523 = vector.extract_strided_slice %456 {offsets = [10, 0], sizes = [1, 128], strides = [1, 1]} : vector<16x128xf32> to vector<1x128xf32>
    %524 = vector.broadcast %523 : vector<1x128xf32> to vector<16x128xf32>
    %525 = arith.mulf %522, %524 : vector<16x128xf32>
    %526 = arith.addf %502, %525 : vector<16x128xf32>
    %527 = vector.extract_strided_slice %448 {offsets = [11, 0, 0], sizes = [1, 16, 128], strides = [1, 1, 1]} : vector<16x16x128xf32> to vector<1x16x128xf32>
    %528 = vector.shape_cast %527 : vector<1x16x128xf32> to vector<16x128xf32>
    %529 = vector.extract_strided_slice %456 {offsets = [11, 0], sizes = [1, 128], strides = [1, 1]} : vector<16x128xf32> to vector<1x128xf32>
    %530 = vector.broadcast %529 : vector<1x128xf32> to vector<16x128xf32>
    %531 = arith.mulf %528, %530 : vector<16x128xf32>
    %532 = arith.addf %508, %531 : vector<16x128xf32>
    %533 = vector.extract_strided_slice %448 {offsets = [12, 0, 0], sizes = [1, 16, 128], strides = [1, 1, 1]} : vector<16x16x128xf32> to vector<1x16x128xf32>
    %534 = vector.shape_cast %533 : vector<1x16x128xf32> to vector<16x128xf32>
    %535 = vector.extract_strided_slice %456 {offsets = [12, 0], sizes = [1, 128], strides = [1, 1]} : vector<16x128xf32> to vector<1x128xf32>
    %536 = vector.broadcast %535 : vector<1x128xf32> to vector<16x128xf32>
    %537 = arith.mulf %534, %536 : vector<16x128xf32>
    %538 = arith.addf %514, %537 : vector<16x128xf32>
    %539 = vector.extract_strided_slice %448 {offsets = [13, 0, 0], sizes = [1, 16, 128], strides = [1, 1, 1]} : vector<16x16x128xf32> to vector<1x16x128xf32>
    %540 = vector.shape_cast %539 : vector<1x16x128xf32> to vector<16x128xf32>
    %541 = vector.extract_strided_slice %456 {offsets = [13, 0], sizes = [1, 128], strides = [1, 1]} : vector<16x128xf32> to vector<1x128xf32>
    %542 = vector.broadcast %541 : vector<1x128xf32> to vector<16x128xf32>
    %543 = arith.mulf %540, %542 : vector<16x128xf32>
    %544 = arith.addf %520, %543 : vector<16x128xf32>
    %545 = vector.extract_strided_slice %448 {offsets = [14, 0, 0], sizes = [1, 16, 128], strides = [1, 1, 1]} : vector<16x16x128xf32> to vector<1x16x128xf32>
    %546 = vector.shape_cast %545 : vector<1x16x128xf32> to vector<16x128xf32>
    %547 = vector.extract_strided_slice %456 {offsets = [14, 0], sizes = [1, 128], strides = [1, 1]} : vector<16x128xf32> to vector<1x128xf32>
    %548 = vector.broadcast %547 : vector<1x128xf32> to vector<16x128xf32>
    %549 = arith.mulf %546, %548 : vector<16x128xf32>
    %550 = arith.addf %526, %549 : vector<16x128xf32>
    %551 = vector.extract_strided_slice %448 {offsets = [15, 0, 0], sizes = [1, 16, 128], strides = [1, 1, 1]} : vector<16x16x128xf32> to vector<1x16x128xf32>
    %552 = vector.shape_cast %551 : vector<1x16x128xf32> to vector<16x128xf32>
    %553 = vector.extract_strided_slice %456 {offsets = [15, 0], sizes = [1, 128], strides = [1, 1]} : vector<16x128xf32> to vector<1x128xf32>
    %554 = vector.broadcast %553 : vector<1x128xf32> to vector<16x128xf32>
    %555 = arith.mulf %552, %554 : vector<16x128xf32>
    %556 = arith.addf %532, %555 : vector<16x128xf32>
    %557 = arith.addf %538, %544 : vector<16x128xf32>
    %558 = arith.addf %557, %550 : vector<16x128xf32>
    %559 = arith.addf %558, %556 : vector<16x128xf32>
    %cst_26 = arith.constant 0.000000e+00 : f32
    %560 = vector.broadcast %cst_26 : f32 to vector<16x128xf32>
    %561 = arith.subf %560, %559 : vector<16x128xf32>
    %562 = vector.extract_strided_slice %0 {offsets = [0, 0, 0], sizes = [1, 16, 128], strides = [1, 1, 1]} : vector<16x16x128xf32> to vector<1x16x128xf32>
    %563 = vector.shape_cast %562 : vector<1x16x128xf32> to vector<16x128xf32>
    %564 = vector.extract_strided_slice %561 {offsets = [0, 0], sizes = [1, 128], strides = [1, 1]} : vector<16x128xf32> to vector<1x128xf32>
    %565 = vector.broadcast %564 : vector<1x128xf32> to vector<16x128xf32>
    %566 = arith.mulf %563, %565 : vector<16x128xf32>
    %567 = vector.extract_strided_slice %0 {offsets = [1, 0, 0], sizes = [1, 16, 128], strides = [1, 1, 1]} : vector<16x16x128xf32> to vector<1x16x128xf32>
    %568 = vector.shape_cast %567 : vector<1x16x128xf32> to vector<16x128xf32>
    %569 = vector.extract_strided_slice %561 {offsets = [1, 0], sizes = [1, 128], strides = [1, 1]} : vector<16x128xf32> to vector<1x128xf32>
    %570 = vector.broadcast %569 : vector<1x128xf32> to vector<16x128xf32>
    %571 = arith.mulf %568, %570 : vector<16x128xf32>
    %572 = vector.extract_strided_slice %0 {offsets = [2, 0, 0], sizes = [1, 16, 128], strides = [1, 1, 1]} : vector<16x16x128xf32> to vector<1x16x128xf32>
    %573 = vector.shape_cast %572 : vector<1x16x128xf32> to vector<16x128xf32>
    %574 = vector.extract_strided_slice %561 {offsets = [2, 0], sizes = [1, 128], strides = [1, 1]} : vector<16x128xf32> to vector<1x128xf32>
    %575 = vector.broadcast %574 : vector<1x128xf32> to vector<16x128xf32>
    %576 = arith.mulf %573, %575 : vector<16x128xf32>
    %577 = vector.extract_strided_slice %0 {offsets = [3, 0, 0], sizes = [1, 16, 128], strides = [1, 1, 1]} : vector<16x16x128xf32> to vector<1x16x128xf32>
    %578 = vector.shape_cast %577 : vector<1x16x128xf32> to vector<16x128xf32>
    %579 = vector.extract_strided_slice %561 {offsets = [3, 0], sizes = [1, 128], strides = [1, 1]} : vector<16x128xf32> to vector<1x128xf32>
    %580 = vector.broadcast %579 : vector<1x128xf32> to vector<16x128xf32>
    %581 = arith.mulf %578, %580 : vector<16x128xf32>
    %582 = vector.extract_strided_slice %0 {offsets = [4, 0, 0], sizes = [1, 16, 128], strides = [1, 1, 1]} : vector<16x16x128xf32> to vector<1x16x128xf32>
    %583 = vector.shape_cast %582 : vector<1x16x128xf32> to vector<16x128xf32>
    %584 = vector.extract_strided_slice %561 {offsets = [4, 0], sizes = [1, 128], strides = [1, 1]} : vector<16x128xf32> to vector<1x128xf32>
    %585 = vector.broadcast %584 : vector<1x128xf32> to vector<16x128xf32>
    %586 = arith.mulf %583, %585 : vector<16x128xf32>
    %587 = arith.addf %566, %586 : vector<16x128xf32>
    %588 = vector.extract_strided_slice %0 {offsets = [5, 0, 0], sizes = [1, 16, 128], strides = [1, 1, 1]} : vector<16x16x128xf32> to vector<1x16x128xf32>
    %589 = vector.shape_cast %588 : vector<1x16x128xf32> to vector<16x128xf32>
    %590 = vector.extract_strided_slice %561 {offsets = [5, 0], sizes = [1, 128], strides = [1, 1]} : vector<16x128xf32> to vector<1x128xf32>
    %591 = vector.broadcast %590 : vector<1x128xf32> to vector<16x128xf32>
    %592 = arith.mulf %589, %591 : vector<16x128xf32>
    %593 = arith.addf %571, %592 : vector<16x128xf32>
    %594 = vector.extract_strided_slice %0 {offsets = [6, 0, 0], sizes = [1, 16, 128], strides = [1, 1, 1]} : vector<16x16x128xf32> to vector<1x16x128xf32>
    %595 = vector.shape_cast %594 : vector<1x16x128xf32> to vector<16x128xf32>
    %596 = vector.extract_strided_slice %561 {offsets = [6, 0], sizes = [1, 128], strides = [1, 1]} : vector<16x128xf32> to vector<1x128xf32>
    %597 = vector.broadcast %596 : vector<1x128xf32> to vector<16x128xf32>
    %598 = arith.mulf %595, %597 : vector<16x128xf32>
    %599 = arith.addf %576, %598 : vector<16x128xf32>
    %600 = vector.extract_strided_slice %0 {offsets = [7, 0, 0], sizes = [1, 16, 128], strides = [1, 1, 1]} : vector<16x16x128xf32> to vector<1x16x128xf32>
    %601 = vector.shape_cast %600 : vector<1x16x128xf32> to vector<16x128xf32>
    %602 = vector.extract_strided_slice %561 {offsets = [7, 0], sizes = [1, 128], strides = [1, 1]} : vector<16x128xf32> to vector<1x128xf32>
    %603 = vector.broadcast %602 : vector<1x128xf32> to vector<16x128xf32>
    %604 = arith.mulf %601, %603 : vector<16x128xf32>
    %605 = arith.addf %581, %604 : vector<16x128xf32>
    %606 = vector.extract_strided_slice %0 {offsets = [8, 0, 0], sizes = [1, 16, 128], strides = [1, 1, 1]} : vector<16x16x128xf32> to vector<1x16x128xf32>
    %607 = vector.shape_cast %606 : vector<1x16x128xf32> to vector<16x128xf32>
    %608 = vector.extract_strided_slice %561 {offsets = [8, 0], sizes = [1, 128], strides = [1, 1]} : vector<16x128xf32> to vector<1x128xf32>
    %609 = vector.broadcast %608 : vector<1x128xf32> to vector<16x128xf32>
    %610 = arith.mulf %607, %609 : vector<16x128xf32>
    %611 = arith.addf %587, %610 : vector<16x128xf32>
    %612 = vector.extract_strided_slice %0 {offsets = [9, 0, 0], sizes = [1, 16, 128], strides = [1, 1, 1]} : vector<16x16x128xf32> to vector<1x16x128xf32>
    %613 = vector.shape_cast %612 : vector<1x16x128xf32> to vector<16x128xf32>
    %614 = vector.extract_strided_slice %561 {offsets = [9, 0], sizes = [1, 128], strides = [1, 1]} : vector<16x128xf32> to vector<1x128xf32>
    %615 = vector.broadcast %614 : vector<1x128xf32> to vector<16x128xf32>
    %616 = arith.mulf %613, %615 : vector<16x128xf32>
    %617 = arith.addf %593, %616 : vector<16x128xf32>
    %618 = vector.extract_strided_slice %0 {offsets = [10, 0, 0], sizes = [1, 16, 128], strides = [1, 1, 1]} : vector<16x16x128xf32> to vector<1x16x128xf32>
    %619 = vector.shape_cast %618 : vector<1x16x128xf32> to vector<16x128xf32>
    %620 = vector.extract_strided_slice %561 {offsets = [10, 0], sizes = [1, 128], strides = [1, 1]} : vector<16x128xf32> to vector<1x128xf32>
    %621 = vector.broadcast %620 : vector<1x128xf32> to vector<16x128xf32>
    %622 = arith.mulf %619, %621 : vector<16x128xf32>
    %623 = arith.addf %599, %622 : vector<16x128xf32>
    %624 = vector.extract_strided_slice %0 {offsets = [11, 0, 0], sizes = [1, 16, 128], strides = [1, 1, 1]} : vector<16x16x128xf32> to vector<1x16x128xf32>
    %625 = vector.shape_cast %624 : vector<1x16x128xf32> to vector<16x128xf32>
    %626 = vector.extract_strided_slice %561 {offsets = [11, 0], sizes = [1, 128], strides = [1, 1]} : vector<16x128xf32> to vector<1x128xf32>
    %627 = vector.broadcast %626 : vector<1x128xf32> to vector<16x128xf32>
    %628 = arith.mulf %625, %627 : vector<16x128xf32>
    %629 = arith.addf %605, %628 : vector<16x128xf32>
    %630 = vector.extract_strided_slice %0 {offsets = [12, 0, 0], sizes = [1, 16, 128], strides = [1, 1, 1]} : vector<16x16x128xf32> to vector<1x16x128xf32>
    %631 = vector.shape_cast %630 : vector<1x16x128xf32> to vector<16x128xf32>
    %632 = vector.extract_strided_slice %561 {offsets = [12, 0], sizes = [1, 128], strides = [1, 1]} : vector<16x128xf32> to vector<1x128xf32>
    %633 = vector.broadcast %632 : vector<1x128xf32> to vector<16x128xf32>
    %634 = arith.mulf %631, %633 : vector<16x128xf32>
    %635 = arith.addf %611, %634 : vector<16x128xf32>
    %636 = vector.extract_strided_slice %0 {offsets = [13, 0, 0], sizes = [1, 16, 128], strides = [1, 1, 1]} : vector<16x16x128xf32> to vector<1x16x128xf32>
    %637 = vector.shape_cast %636 : vector<1x16x128xf32> to vector<16x128xf32>
    %638 = vector.extract_strided_slice %561 {offsets = [13, 0], sizes = [1, 128], strides = [1, 1]} : vector<16x128xf32> to vector<1x128xf32>
    %639 = vector.broadcast %638 : vector<1x128xf32> to vector<16x128xf32>
    %640 = arith.mulf %637, %639 : vector<16x128xf32>
    %641 = arith.addf %617, %640 : vector<16x128xf32>
    %642 = vector.extract_strided_slice %0 {offsets = [14, 0, 0], sizes = [1, 16, 128], strides = [1, 1, 1]} : vector<16x16x128xf32> to vector<1x16x128xf32>
    %643 = vector.shape_cast %642 : vector<1x16x128xf32> to vector<16x128xf32>
    %644 = vector.extract_strided_slice %561 {offsets = [14, 0], sizes = [1, 128], strides = [1, 1]} : vector<16x128xf32> to vector<1x128xf32>
    %645 = vector.broadcast %644 : vector<1x128xf32> to vector<16x128xf32>
    %646 = arith.mulf %643, %645 : vector<16x128xf32>
    %647 = arith.addf %623, %646 : vector<16x128xf32>
    %648 = vector.extract_strided_slice %0 {offsets = [15, 0, 0], sizes = [1, 16, 128], strides = [1, 1, 1]} : vector<16x16x128xf32> to vector<1x16x128xf32>
    %649 = vector.shape_cast %648 : vector<1x16x128xf32> to vector<16x128xf32>
    %650 = vector.extract_strided_slice %561 {offsets = [15, 0], sizes = [1, 128], strides = [1, 1]} : vector<16x128xf32> to vector<1x128xf32>
    %651 = vector.broadcast %650 : vector<1x128xf32> to vector<16x128xf32>
    %652 = arith.mulf %649, %651 : vector<16x128xf32>
    %653 = arith.addf %629, %652 : vector<16x128xf32>
    %654 = arith.addf %635, %641 : vector<16x128xf32>
    %655 = arith.addf %654, %647 : vector<16x128xf32>
    %656 = arith.addf %655, %653 : vector<16x128xf32>
    %657 = arith.mulf %561, %656 : vector<16x128xf32>
    %cst_27 = arith.constant dense<0.000000e+00> : vector<128xf32>
    %658 = vector.multi_reduction <add>, %657, %cst_27 [0] : vector<16x128xf32> to vector<128xf32>
    %659 = vector.shape_cast %658 : vector<128xf32> to vector<1x128xf32>
    %660 = arith.mulf %456, %561 : vector<16x128xf32>
    %cst_28 = arith.constant dense<0.000000e+00> : vector<128xf32>
    %661 = vector.multi_reduction <add>, %660, %cst_28 [0] : vector<16x128xf32> to vector<128xf32>
    %662 = vector.shape_cast %661 : vector<128xf32> to vector<1x128xf32>
    %cst_29 = arith.constant 1.000000e-30 : f32
    %663 = vector.broadcast %cst_29 : f32 to vector<1x128xf32>
    %664 = arith.cmpf ogt, %659, %663 : vector<1x128xf32>
    %cst_30 = arith.constant 0.000000e+00 : f32
    %665 = vector.broadcast %cst_30 : f32 to vector<1x128xf32>
    %666 = arith.subf %665, %662 : vector<1x128xf32>
    %cst_31 = arith.constant 1.000000e+00 : f32
    %667 = vector.broadcast %cst_31 : f32 to vector<1x128xf32>
    %668 = arith.select %664, %659, %667 : vector<1x128xi1>, vector<1x128xf32>
    %669 = arith.divf %666, %668 : vector<1x128xf32>
    %cst_32 = arith.constant 0.000000e+00 : f32
    %670 = vector.broadcast %cst_32 : f32 to vector<1x128xf32>
    %671 = arith.select %664, %669, %670 : vector<1x128xi1>, vector<1x128xf32>
    %672 = vector.broadcast %671 : vector<1x128xf32> to vector<16x128xf32>
    %673 = arith.mulf %672, %561 : vector<16x128xf32>
    %674 = arith.addf %453, %673 : vector<16x128xf32>
    %675 = vector.broadcast %671 : vector<1x128xf32> to vector<16x128xf32>
    %676 = arith.mulf %675, %656 : vector<16x128xf32>
    %677 = arith.addf %456, %676 : vector<16x128xf32>
    %678 = arith.subf %677, %456 : vector<16x128xf32>
    %679 = arith.mulf %673, %678 : vector<16x128xf32>
    %cst_33 = arith.constant dense<0.000000e+00> : vector<128xf32>
    %680 = vector.multi_reduction <add>, %679, %cst_33 [0] : vector<16x128xf32> to vector<128xf32>
    %681 = vector.shape_cast %680 : vector<128xf32> to vector<1x128xf32>
    %682 = vector.extract_strided_slice %448 {offsets = [0, 0, 0], sizes = [1, 16, 128], strides = [1, 1, 1]} : vector<16x16x128xf32> to vector<1x16x128xf32>
    %683 = vector.shape_cast %682 : vector<1x16x128xf32> to vector<16x128xf32>
    %684 = vector.extract_strided_slice %678 {offsets = [0, 0], sizes = [1, 128], strides = [1, 1]} : vector<16x128xf32> to vector<1x128xf32>
    %685 = vector.broadcast %684 : vector<1x128xf32> to vector<16x128xf32>
    %686 = arith.mulf %683, %685 : vector<16x128xf32>
    %687 = vector.extract_strided_slice %448 {offsets = [1, 0, 0], sizes = [1, 16, 128], strides = [1, 1, 1]} : vector<16x16x128xf32> to vector<1x16x128xf32>
    %688 = vector.shape_cast %687 : vector<1x16x128xf32> to vector<16x128xf32>
    %689 = vector.extract_strided_slice %678 {offsets = [1, 0], sizes = [1, 128], strides = [1, 1]} : vector<16x128xf32> to vector<1x128xf32>
    %690 = vector.broadcast %689 : vector<1x128xf32> to vector<16x128xf32>
    %691 = arith.mulf %688, %690 : vector<16x128xf32>
    %692 = vector.extract_strided_slice %448 {offsets = [2, 0, 0], sizes = [1, 16, 128], strides = [1, 1, 1]} : vector<16x16x128xf32> to vector<1x16x128xf32>
    %693 = vector.shape_cast %692 : vector<1x16x128xf32> to vector<16x128xf32>
    %694 = vector.extract_strided_slice %678 {offsets = [2, 0], sizes = [1, 128], strides = [1, 1]} : vector<16x128xf32> to vector<1x128xf32>
    %695 = vector.broadcast %694 : vector<1x128xf32> to vector<16x128xf32>
    %696 = arith.mulf %693, %695 : vector<16x128xf32>
    %697 = vector.extract_strided_slice %448 {offsets = [3, 0, 0], sizes = [1, 16, 128], strides = [1, 1, 1]} : vector<16x16x128xf32> to vector<1x16x128xf32>
    %698 = vector.shape_cast %697 : vector<1x16x128xf32> to vector<16x128xf32>
    %699 = vector.extract_strided_slice %678 {offsets = [3, 0], sizes = [1, 128], strides = [1, 1]} : vector<16x128xf32> to vector<1x128xf32>
    %700 = vector.broadcast %699 : vector<1x128xf32> to vector<16x128xf32>
    %701 = arith.mulf %698, %700 : vector<16x128xf32>
    %702 = vector.extract_strided_slice %448 {offsets = [4, 0, 0], sizes = [1, 16, 128], strides = [1, 1, 1]} : vector<16x16x128xf32> to vector<1x16x128xf32>
    %703 = vector.shape_cast %702 : vector<1x16x128xf32> to vector<16x128xf32>
    %704 = vector.extract_strided_slice %678 {offsets = [4, 0], sizes = [1, 128], strides = [1, 1]} : vector<16x128xf32> to vector<1x128xf32>
    %705 = vector.broadcast %704 : vector<1x128xf32> to vector<16x128xf32>
    %706 = arith.mulf %703, %705 : vector<16x128xf32>
    %707 = arith.addf %686, %706 : vector<16x128xf32>
    %708 = vector.extract_strided_slice %448 {offsets = [5, 0, 0], sizes = [1, 16, 128], strides = [1, 1, 1]} : vector<16x16x128xf32> to vector<1x16x128xf32>
    %709 = vector.shape_cast %708 : vector<1x16x128xf32> to vector<16x128xf32>
    %710 = vector.extract_strided_slice %678 {offsets = [5, 0], sizes = [1, 128], strides = [1, 1]} : vector<16x128xf32> to vector<1x128xf32>
    %711 = vector.broadcast %710 : vector<1x128xf32> to vector<16x128xf32>
    %712 = arith.mulf %709, %711 : vector<16x128xf32>
    %713 = arith.addf %691, %712 : vector<16x128xf32>
    %714 = vector.extract_strided_slice %448 {offsets = [6, 0, 0], sizes = [1, 16, 128], strides = [1, 1, 1]} : vector<16x16x128xf32> to vector<1x16x128xf32>
    %715 = vector.shape_cast %714 : vector<1x16x128xf32> to vector<16x128xf32>
    %716 = vector.extract_strided_slice %678 {offsets = [6, 0], sizes = [1, 128], strides = [1, 1]} : vector<16x128xf32> to vector<1x128xf32>
    %717 = vector.broadcast %716 : vector<1x128xf32> to vector<16x128xf32>
    %718 = arith.mulf %715, %717 : vector<16x128xf32>
    %719 = arith.addf %696, %718 : vector<16x128xf32>
    %720 = vector.extract_strided_slice %448 {offsets = [7, 0, 0], sizes = [1, 16, 128], strides = [1, 1, 1]} : vector<16x16x128xf32> to vector<1x16x128xf32>
    %721 = vector.shape_cast %720 : vector<1x16x128xf32> to vector<16x128xf32>
    %722 = vector.extract_strided_slice %678 {offsets = [7, 0], sizes = [1, 128], strides = [1, 1]} : vector<16x128xf32> to vector<1x128xf32>
    %723 = vector.broadcast %722 : vector<1x128xf32> to vector<16x128xf32>
    %724 = arith.mulf %721, %723 : vector<16x128xf32>
    %725 = arith.addf %701, %724 : vector<16x128xf32>
    %726 = vector.extract_strided_slice %448 {offsets = [8, 0, 0], sizes = [1, 16, 128], strides = [1, 1, 1]} : vector<16x16x128xf32> to vector<1x16x128xf32>
    %727 = vector.shape_cast %726 : vector<1x16x128xf32> to vector<16x128xf32>
    %728 = vector.extract_strided_slice %678 {offsets = [8, 0], sizes = [1, 128], strides = [1, 1]} : vector<16x128xf32> to vector<1x128xf32>
    %729 = vector.broadcast %728 : vector<1x128xf32> to vector<16x128xf32>
    %730 = arith.mulf %727, %729 : vector<16x128xf32>
    %731 = arith.addf %707, %730 : vector<16x128xf32>
    %732 = vector.extract_strided_slice %448 {offsets = [9, 0, 0], sizes = [1, 16, 128], strides = [1, 1, 1]} : vector<16x16x128xf32> to vector<1x16x128xf32>
    %733 = vector.shape_cast %732 : vector<1x16x128xf32> to vector<16x128xf32>
    %734 = vector.extract_strided_slice %678 {offsets = [9, 0], sizes = [1, 128], strides = [1, 1]} : vector<16x128xf32> to vector<1x128xf32>
    %735 = vector.broadcast %734 : vector<1x128xf32> to vector<16x128xf32>
    %736 = arith.mulf %733, %735 : vector<16x128xf32>
    %737 = arith.addf %713, %736 : vector<16x128xf32>
    %738 = vector.extract_strided_slice %448 {offsets = [10, 0, 0], sizes = [1, 16, 128], strides = [1, 1, 1]} : vector<16x16x128xf32> to vector<1x16x128xf32>
    %739 = vector.shape_cast %738 : vector<1x16x128xf32> to vector<16x128xf32>
    %740 = vector.extract_strided_slice %678 {offsets = [10, 0], sizes = [1, 128], strides = [1, 1]} : vector<16x128xf32> to vector<1x128xf32>
    %741 = vector.broadcast %740 : vector<1x128xf32> to vector<16x128xf32>
    %742 = arith.mulf %739, %741 : vector<16x128xf32>
    %743 = arith.addf %719, %742 : vector<16x128xf32>
    %744 = vector.extract_strided_slice %448 {offsets = [11, 0, 0], sizes = [1, 16, 128], strides = [1, 1, 1]} : vector<16x16x128xf32> to vector<1x16x128xf32>
    %745 = vector.shape_cast %744 : vector<1x16x128xf32> to vector<16x128xf32>
    %746 = vector.extract_strided_slice %678 {offsets = [11, 0], sizes = [1, 128], strides = [1, 1]} : vector<16x128xf32> to vector<1x128xf32>
    %747 = vector.broadcast %746 : vector<1x128xf32> to vector<16x128xf32>
    %748 = arith.mulf %745, %747 : vector<16x128xf32>
    %749 = arith.addf %725, %748 : vector<16x128xf32>
    %750 = vector.extract_strided_slice %448 {offsets = [12, 0, 0], sizes = [1, 16, 128], strides = [1, 1, 1]} : vector<16x16x128xf32> to vector<1x16x128xf32>
    %751 = vector.shape_cast %750 : vector<1x16x128xf32> to vector<16x128xf32>
    %752 = vector.extract_strided_slice %678 {offsets = [12, 0], sizes = [1, 128], strides = [1, 1]} : vector<16x128xf32> to vector<1x128xf32>
    %753 = vector.broadcast %752 : vector<1x128xf32> to vector<16x128xf32>
    %754 = arith.mulf %751, %753 : vector<16x128xf32>
    %755 = arith.addf %731, %754 : vector<16x128xf32>
    %756 = vector.extract_strided_slice %448 {offsets = [13, 0, 0], sizes = [1, 16, 128], strides = [1, 1, 1]} : vector<16x16x128xf32> to vector<1x16x128xf32>
    %757 = vector.shape_cast %756 : vector<1x16x128xf32> to vector<16x128xf32>
    %758 = vector.extract_strided_slice %678 {offsets = [13, 0], sizes = [1, 128], strides = [1, 1]} : vector<16x128xf32> to vector<1x128xf32>
    %759 = vector.broadcast %758 : vector<1x128xf32> to vector<16x128xf32>
    %760 = arith.mulf %757, %759 : vector<16x128xf32>
    %761 = arith.addf %737, %760 : vector<16x128xf32>
    %762 = vector.extract_strided_slice %448 {offsets = [14, 0, 0], sizes = [1, 16, 128], strides = [1, 1, 1]} : vector<16x16x128xf32> to vector<1x16x128xf32>
    %763 = vector.shape_cast %762 : vector<1x16x128xf32> to vector<16x128xf32>
    %764 = vector.extract_strided_slice %678 {offsets = [14, 0], sizes = [1, 128], strides = [1, 1]} : vector<16x128xf32> to vector<1x128xf32>
    %765 = vector.broadcast %764 : vector<1x128xf32> to vector<16x128xf32>
    %766 = arith.mulf %763, %765 : vector<16x128xf32>
    %767 = arith.addf %743, %766 : vector<16x128xf32>
    %768 = vector.extract_strided_slice %448 {offsets = [15, 0, 0], sizes = [1, 16, 128], strides = [1, 1, 1]} : vector<16x16x128xf32> to vector<1x16x128xf32>
    %769 = vector.shape_cast %768 : vector<1x16x128xf32> to vector<16x128xf32>
    %770 = vector.extract_strided_slice %678 {offsets = [15, 0], sizes = [1, 128], strides = [1, 1]} : vector<16x128xf32> to vector<1x128xf32>
    %771 = vector.broadcast %770 : vector<1x128xf32> to vector<16x128xf32>
    %772 = arith.mulf %769, %771 : vector<16x128xf32>
    %773 = arith.addf %749, %772 : vector<16x128xf32>
    %774 = arith.addf %755, %761 : vector<16x128xf32>
    %775 = arith.addf %774, %767 : vector<16x128xf32>
    %776 = arith.addf %775, %773 : vector<16x128xf32>
    %777 = arith.mulf %678, %776 : vector<16x128xf32>
    %cst_34 = arith.constant dense<0.000000e+00> : vector<128xf32>
    %778 = vector.multi_reduction <add>, %777, %cst_34 [0] : vector<16x128xf32> to vector<128xf32>
    %779 = vector.shape_cast %778 : vector<128xf32> to vector<1x128xf32>
    %cst_35 = arith.constant 0.000000e+00 : f32
    %780 = vector.broadcast %cst_35 : f32 to vector<1x128xf32>
    %781 = arith.cmpf one, %681, %780 : vector<1x128xf32>
    %cst_36 = arith.constant 1.000000e+00 : f32
    %782 = vector.broadcast %cst_36 : f32 to vector<1x128xf32>
    %783 = arith.select %781, %681, %782 : vector<1x128xi1>, vector<1x128xf32>
    %cst_37 = arith.constant 1.000000e+00 : f32
    %784 = vector.broadcast %cst_37 : f32 to vector<1x128xf32>
    %785 = arith.divf %784, %783 : vector<1x128xf32>
    %cst_38 = arith.constant 0.000000e+00 : f32
    %786 = vector.broadcast %cst_38 : f32 to vector<1x128xf32>
    %787 = arith.select %781, %785, %786 : vector<1x128xi1>, vector<1x128xf32>
    %788 = arith.addf %681, %779 : vector<1x128xf32>
    %789 = arith.mulf %788, %787 : vector<1x128xf32>
    %790 = arith.mulf %789, %787 : vector<1x128xf32>
    %791 = vector.broadcast %790 : vector<1x128xf32> to vector<16x128xf32>
    %792 = arith.mulf %791, %673 : vector<16x128xf32>
    %793 = vector.broadcast %787 : vector<1x128xf32> to vector<16x128xf32>
    %794 = arith.mulf %793, %776 : vector<16x128xf32>
    %795 = arith.subf %792, %794 : vector<16x128xf32>
    %796 = vector.broadcast %787 : vector<1x128xf32> to vector<16x128xf32>
    %797 = arith.mulf %796, %776 : vector<16x128xf32>
    %798 = vector.shape_cast %673 : vector<16x128xf32> to vector<16x1x128xf32>
    %799 = vector.shape_cast %795 : vector<16x128xf32> to vector<1x16x128xf32>
    %800 = vector.broadcast %798 : vector<16x1x128xf32> to vector<16x16x128xf32>
    %801 = vector.broadcast %799 : vector<1x16x128xf32> to vector<16x16x128xf32>
    %802 = arith.mulf %800, %801 : vector<16x16x128xf32>
    %803 = vector.shape_cast %797 : vector<16x128xf32> to vector<16x1x128xf32>
    %804 = vector.shape_cast %673 : vector<16x128xf32> to vector<1x16x128xf32>
    %805 = vector.broadcast %803 : vector<16x1x128xf32> to vector<16x16x128xf32>
    %806 = vector.broadcast %804 : vector<1x16x128xf32> to vector<16x16x128xf32>
    %807 = arith.mulf %805, %806 : vector<16x16x128xf32>
    %808 = arith.subf %802, %807 : vector<16x16x128xf32>
    %809 = arith.addf %448, %808 : vector<16x16x128xf32>
    %cst_39 = arith.constant 5.000000e-01 : f32
    %810 = vector.broadcast %cst_39 : f32 to vector<1x128xf32>
    %811 = arith.cmpf ogt, %464, %810 : vector<1x128xf32>
    %812 = vector.shape_cast %811 : vector<1x128xi1> to vector<1x128xi1>
    %813 = vector.broadcast %812 : vector<1x128xi1> to vector<16x128xi1>
    %814 = arith.select %813, %674, %453 : vector<16x128xi1>, vector<16x128xf32>
    %815 = vector.shape_cast %811 : vector<1x128xi1> to vector<1x128xi1>
    %816 = vector.broadcast %815 : vector<1x128xi1> to vector<16x128xi1>
    %817 = arith.select %816, %677, %456 : vector<16x128xi1>, vector<16x128xf32>
    %818 = arith.mulf %817, %817 : vector<16x128xf32>
    %cst_40 = arith.constant dense<0.000000e+00> : vector<128xf32>
    %819 = vector.multi_reduction <add>, %818, %cst_40 [0] : vector<16x128xf32> to vector<128xf32>
    %820 = vector.shape_cast %819 : vector<128xf32> to vector<1x128xf32>
    %cst_41 = arith.constant 9.99999997E-7 : f32
    %821 = vector.broadcast %cst_41 : f32 to vector<1x128xf32>
    %822 = arith.cmpf ogt, %820, %821 : vector<1x128xf32>
    %823 = arith.andi %811, %822 : vector<1x128xi1>
    %824 = arith.extui %823 : vector<1x128xi1> to vector<1x128xi32>
    %825 = arith.sitofp %824 : vector<1x128xi32> to vector<1x128xf32>
    %c2_i32 = arith.constant 2 : i32
    %826 = vector.extract_strided_slice %809 {offsets = [0, 0, 0], sizes = [1, 16, 128], strides = [1, 1, 1]} : vector<16x16x128xf32> to vector<1x16x128xf32>
    %827 = vector.shape_cast %826 : vector<1x16x128xf32> to vector<16x128xf32>
    %828 = vector.extract_strided_slice %817 {offsets = [0, 0], sizes = [1, 128], strides = [1, 1]} : vector<16x128xf32> to vector<1x128xf32>
    %829 = vector.broadcast %828 : vector<1x128xf32> to vector<16x128xf32>
    %830 = arith.mulf %827, %829 : vector<16x128xf32>
    %831 = vector.extract_strided_slice %809 {offsets = [1, 0, 0], sizes = [1, 16, 128], strides = [1, 1, 1]} : vector<16x16x128xf32> to vector<1x16x128xf32>
    %832 = vector.shape_cast %831 : vector<1x16x128xf32> to vector<16x128xf32>
    %833 = vector.extract_strided_slice %817 {offsets = [1, 0], sizes = [1, 128], strides = [1, 1]} : vector<16x128xf32> to vector<1x128xf32>
    %834 = vector.broadcast %833 : vector<1x128xf32> to vector<16x128xf32>
    %835 = arith.mulf %832, %834 : vector<16x128xf32>
    %836 = vector.extract_strided_slice %809 {offsets = [2, 0, 0], sizes = [1, 16, 128], strides = [1, 1, 1]} : vector<16x16x128xf32> to vector<1x16x128xf32>
    %837 = vector.shape_cast %836 : vector<1x16x128xf32> to vector<16x128xf32>
    %838 = vector.extract_strided_slice %817 {offsets = [2, 0], sizes = [1, 128], strides = [1, 1]} : vector<16x128xf32> to vector<1x128xf32>
    %839 = vector.broadcast %838 : vector<1x128xf32> to vector<16x128xf32>
    %840 = arith.mulf %837, %839 : vector<16x128xf32>
    %841 = vector.extract_strided_slice %809 {offsets = [3, 0, 0], sizes = [1, 16, 128], strides = [1, 1, 1]} : vector<16x16x128xf32> to vector<1x16x128xf32>
    %842 = vector.shape_cast %841 : vector<1x16x128xf32> to vector<16x128xf32>
    %843 = vector.extract_strided_slice %817 {offsets = [3, 0], sizes = [1, 128], strides = [1, 1]} : vector<16x128xf32> to vector<1x128xf32>
    %844 = vector.broadcast %843 : vector<1x128xf32> to vector<16x128xf32>
    %845 = arith.mulf %842, %844 : vector<16x128xf32>
    %846 = vector.extract_strided_slice %809 {offsets = [4, 0, 0], sizes = [1, 16, 128], strides = [1, 1, 1]} : vector<16x16x128xf32> to vector<1x16x128xf32>
    %847 = vector.shape_cast %846 : vector<1x16x128xf32> to vector<16x128xf32>
    %848 = vector.extract_strided_slice %817 {offsets = [4, 0], sizes = [1, 128], strides = [1, 1]} : vector<16x128xf32> to vector<1x128xf32>
    %849 = vector.broadcast %848 : vector<1x128xf32> to vector<16x128xf32>
    %850 = arith.mulf %847, %849 : vector<16x128xf32>
    %851 = arith.addf %830, %850 : vector<16x128xf32>
    %852 = vector.extract_strided_slice %809 {offsets = [5, 0, 0], sizes = [1, 16, 128], strides = [1, 1, 1]} : vector<16x16x128xf32> to vector<1x16x128xf32>
    %853 = vector.shape_cast %852 : vector<1x16x128xf32> to vector<16x128xf32>
    %854 = vector.extract_strided_slice %817 {offsets = [5, 0], sizes = [1, 128], strides = [1, 1]} : vector<16x128xf32> to vector<1x128xf32>
    %855 = vector.broadcast %854 : vector<1x128xf32> to vector<16x128xf32>
    %856 = arith.mulf %853, %855 : vector<16x128xf32>
    %857 = arith.addf %835, %856 : vector<16x128xf32>
    %858 = vector.extract_strided_slice %809 {offsets = [6, 0, 0], sizes = [1, 16, 128], strides = [1, 1, 1]} : vector<16x16x128xf32> to vector<1x16x128xf32>
    %859 = vector.shape_cast %858 : vector<1x16x128xf32> to vector<16x128xf32>
    %860 = vector.extract_strided_slice %817 {offsets = [6, 0], sizes = [1, 128], strides = [1, 1]} : vector<16x128xf32> to vector<1x128xf32>
    %861 = vector.broadcast %860 : vector<1x128xf32> to vector<16x128xf32>
    %862 = arith.mulf %859, %861 : vector<16x128xf32>
    %863 = arith.addf %840, %862 : vector<16x128xf32>
    %864 = vector.extract_strided_slice %809 {offsets = [7, 0, 0], sizes = [1, 16, 128], strides = [1, 1, 1]} : vector<16x16x128xf32> to vector<1x16x128xf32>
    %865 = vector.shape_cast %864 : vector<1x16x128xf32> to vector<16x128xf32>
    %866 = vector.extract_strided_slice %817 {offsets = [7, 0], sizes = [1, 128], strides = [1, 1]} : vector<16x128xf32> to vector<1x128xf32>
    %867 = vector.broadcast %866 : vector<1x128xf32> to vector<16x128xf32>
    %868 = arith.mulf %865, %867 : vector<16x128xf32>
    %869 = arith.addf %845, %868 : vector<16x128xf32>
    %870 = vector.extract_strided_slice %809 {offsets = [8, 0, 0], sizes = [1, 16, 128], strides = [1, 1, 1]} : vector<16x16x128xf32> to vector<1x16x128xf32>
    %871 = vector.shape_cast %870 : vector<1x16x128xf32> to vector<16x128xf32>
    %872 = vector.extract_strided_slice %817 {offsets = [8, 0], sizes = [1, 128], strides = [1, 1]} : vector<16x128xf32> to vector<1x128xf32>
    %873 = vector.broadcast %872 : vector<1x128xf32> to vector<16x128xf32>
    %874 = arith.mulf %871, %873 : vector<16x128xf32>
    %875 = arith.addf %851, %874 : vector<16x128xf32>
    %876 = vector.extract_strided_slice %809 {offsets = [9, 0, 0], sizes = [1, 16, 128], strides = [1, 1, 1]} : vector<16x16x128xf32> to vector<1x16x128xf32>
    %877 = vector.shape_cast %876 : vector<1x16x128xf32> to vector<16x128xf32>
    %878 = vector.extract_strided_slice %817 {offsets = [9, 0], sizes = [1, 128], strides = [1, 1]} : vector<16x128xf32> to vector<1x128xf32>
    %879 = vector.broadcast %878 : vector<1x128xf32> to vector<16x128xf32>
    %880 = arith.mulf %877, %879 : vector<16x128xf32>
    %881 = arith.addf %857, %880 : vector<16x128xf32>
    %882 = vector.extract_strided_slice %809 {offsets = [10, 0, 0], sizes = [1, 16, 128], strides = [1, 1, 1]} : vector<16x16x128xf32> to vector<1x16x128xf32>
    %883 = vector.shape_cast %882 : vector<1x16x128xf32> to vector<16x128xf32>
    %884 = vector.extract_strided_slice %817 {offsets = [10, 0], sizes = [1, 128], strides = [1, 1]} : vector<16x128xf32> to vector<1x128xf32>
    %885 = vector.broadcast %884 : vector<1x128xf32> to vector<16x128xf32>
    %886 = arith.mulf %883, %885 : vector<16x128xf32>
    %887 = arith.addf %863, %886 : vector<16x128xf32>
    %888 = vector.extract_strided_slice %809 {offsets = [11, 0, 0], sizes = [1, 16, 128], strides = [1, 1, 1]} : vector<16x16x128xf32> to vector<1x16x128xf32>
    %889 = vector.shape_cast %888 : vector<1x16x128xf32> to vector<16x128xf32>
    %890 = vector.extract_strided_slice %817 {offsets = [11, 0], sizes = [1, 128], strides = [1, 1]} : vector<16x128xf32> to vector<1x128xf32>
    %891 = vector.broadcast %890 : vector<1x128xf32> to vector<16x128xf32>
    %892 = arith.mulf %889, %891 : vector<16x128xf32>
    %893 = arith.addf %869, %892 : vector<16x128xf32>
    %894 = vector.extract_strided_slice %809 {offsets = [12, 0, 0], sizes = [1, 16, 128], strides = [1, 1, 1]} : vector<16x16x128xf32> to vector<1x16x128xf32>
    %895 = vector.shape_cast %894 : vector<1x16x128xf32> to vector<16x128xf32>
    %896 = vector.extract_strided_slice %817 {offsets = [12, 0], sizes = [1, 128], strides = [1, 1]} : vector<16x128xf32> to vector<1x128xf32>
    %897 = vector.broadcast %896 : vector<1x128xf32> to vector<16x128xf32>
    %898 = arith.mulf %895, %897 : vector<16x128xf32>
    %899 = arith.addf %875, %898 : vector<16x128xf32>
    %900 = vector.extract_strided_slice %809 {offsets = [13, 0, 0], sizes = [1, 16, 128], strides = [1, 1, 1]} : vector<16x16x128xf32> to vector<1x16x128xf32>
    %901 = vector.shape_cast %900 : vector<1x16x128xf32> to vector<16x128xf32>
    %902 = vector.extract_strided_slice %817 {offsets = [13, 0], sizes = [1, 128], strides = [1, 1]} : vector<16x128xf32> to vector<1x128xf32>
    %903 = vector.broadcast %902 : vector<1x128xf32> to vector<16x128xf32>
    %904 = arith.mulf %901, %903 : vector<16x128xf32>
    %905 = arith.addf %881, %904 : vector<16x128xf32>
    %906 = vector.extract_strided_slice %809 {offsets = [14, 0, 0], sizes = [1, 16, 128], strides = [1, 1, 1]} : vector<16x16x128xf32> to vector<1x16x128xf32>
    %907 = vector.shape_cast %906 : vector<1x16x128xf32> to vector<16x128xf32>
    %908 = vector.extract_strided_slice %817 {offsets = [14, 0], sizes = [1, 128], strides = [1, 1]} : vector<16x128xf32> to vector<1x128xf32>
    %909 = vector.broadcast %908 : vector<1x128xf32> to vector<16x128xf32>
    %910 = arith.mulf %907, %909 : vector<16x128xf32>
    %911 = arith.addf %887, %910 : vector<16x128xf32>
    %912 = vector.extract_strided_slice %809 {offsets = [15, 0, 0], sizes = [1, 16, 128], strides = [1, 1, 1]} : vector<16x16x128xf32> to vector<1x16x128xf32>
    %913 = vector.shape_cast %912 : vector<1x16x128xf32> to vector<16x128xf32>
    %914 = vector.extract_strided_slice %817 {offsets = [15, 0], sizes = [1, 128], strides = [1, 1]} : vector<16x128xf32> to vector<1x128xf32>
    %915 = vector.broadcast %914 : vector<1x128xf32> to vector<16x128xf32>
    %916 = arith.mulf %913, %915 : vector<16x128xf32>
    %917 = arith.addf %893, %916 : vector<16x128xf32>
    %918 = arith.addf %899, %905 : vector<16x128xf32>
    %919 = arith.addf %918, %911 : vector<16x128xf32>
    %920 = arith.addf %919, %917 : vector<16x128xf32>
    %cst_42 = arith.constant 0.000000e+00 : f32
    %921 = vector.broadcast %cst_42 : f32 to vector<16x128xf32>
    %922 = arith.subf %921, %920 : vector<16x128xf32>
    %923 = vector.extract_strided_slice %0 {offsets = [0, 0, 0], sizes = [1, 16, 128], strides = [1, 1, 1]} : vector<16x16x128xf32> to vector<1x16x128xf32>
    %924 = vector.shape_cast %923 : vector<1x16x128xf32> to vector<16x128xf32>
    %925 = vector.extract_strided_slice %922 {offsets = [0, 0], sizes = [1, 128], strides = [1, 1]} : vector<16x128xf32> to vector<1x128xf32>
    %926 = vector.broadcast %925 : vector<1x128xf32> to vector<16x128xf32>
    %927 = arith.mulf %924, %926 : vector<16x128xf32>
    %928 = vector.extract_strided_slice %0 {offsets = [1, 0, 0], sizes = [1, 16, 128], strides = [1, 1, 1]} : vector<16x16x128xf32> to vector<1x16x128xf32>
    %929 = vector.shape_cast %928 : vector<1x16x128xf32> to vector<16x128xf32>
    %930 = vector.extract_strided_slice %922 {offsets = [1, 0], sizes = [1, 128], strides = [1, 1]} : vector<16x128xf32> to vector<1x128xf32>
    %931 = vector.broadcast %930 : vector<1x128xf32> to vector<16x128xf32>
    %932 = arith.mulf %929, %931 : vector<16x128xf32>
    %933 = vector.extract_strided_slice %0 {offsets = [2, 0, 0], sizes = [1, 16, 128], strides = [1, 1, 1]} : vector<16x16x128xf32> to vector<1x16x128xf32>
    %934 = vector.shape_cast %933 : vector<1x16x128xf32> to vector<16x128xf32>
    %935 = vector.extract_strided_slice %922 {offsets = [2, 0], sizes = [1, 128], strides = [1, 1]} : vector<16x128xf32> to vector<1x128xf32>
    %936 = vector.broadcast %935 : vector<1x128xf32> to vector<16x128xf32>
    %937 = arith.mulf %934, %936 : vector<16x128xf32>
    %938 = vector.extract_strided_slice %0 {offsets = [3, 0, 0], sizes = [1, 16, 128], strides = [1, 1, 1]} : vector<16x16x128xf32> to vector<1x16x128xf32>
    %939 = vector.shape_cast %938 : vector<1x16x128xf32> to vector<16x128xf32>
    %940 = vector.extract_strided_slice %922 {offsets = [3, 0], sizes = [1, 128], strides = [1, 1]} : vector<16x128xf32> to vector<1x128xf32>
    %941 = vector.broadcast %940 : vector<1x128xf32> to vector<16x128xf32>
    %942 = arith.mulf %939, %941 : vector<16x128xf32>
    %943 = vector.extract_strided_slice %0 {offsets = [4, 0, 0], sizes = [1, 16, 128], strides = [1, 1, 1]} : vector<16x16x128xf32> to vector<1x16x128xf32>
    %944 = vector.shape_cast %943 : vector<1x16x128xf32> to vector<16x128xf32>
    %945 = vector.extract_strided_slice %922 {offsets = [4, 0], sizes = [1, 128], strides = [1, 1]} : vector<16x128xf32> to vector<1x128xf32>
    %946 = vector.broadcast %945 : vector<1x128xf32> to vector<16x128xf32>
    %947 = arith.mulf %944, %946 : vector<16x128xf32>
    %948 = arith.addf %927, %947 : vector<16x128xf32>
    %949 = vector.extract_strided_slice %0 {offsets = [5, 0, 0], sizes = [1, 16, 128], strides = [1, 1, 1]} : vector<16x16x128xf32> to vector<1x16x128xf32>
    %950 = vector.shape_cast %949 : vector<1x16x128xf32> to vector<16x128xf32>
    %951 = vector.extract_strided_slice %922 {offsets = [5, 0], sizes = [1, 128], strides = [1, 1]} : vector<16x128xf32> to vector<1x128xf32>
    %952 = vector.broadcast %951 : vector<1x128xf32> to vector<16x128xf32>
    %953 = arith.mulf %950, %952 : vector<16x128xf32>
    %954 = arith.addf %932, %953 : vector<16x128xf32>
    %955 = vector.extract_strided_slice %0 {offsets = [6, 0, 0], sizes = [1, 16, 128], strides = [1, 1, 1]} : vector<16x16x128xf32> to vector<1x16x128xf32>
    %956 = vector.shape_cast %955 : vector<1x16x128xf32> to vector<16x128xf32>
    %957 = vector.extract_strided_slice %922 {offsets = [6, 0], sizes = [1, 128], strides = [1, 1]} : vector<16x128xf32> to vector<1x128xf32>
    %958 = vector.broadcast %957 : vector<1x128xf32> to vector<16x128xf32>
    %959 = arith.mulf %956, %958 : vector<16x128xf32>
    %960 = arith.addf %937, %959 : vector<16x128xf32>
    %961 = vector.extract_strided_slice %0 {offsets = [7, 0, 0], sizes = [1, 16, 128], strides = [1, 1, 1]} : vector<16x16x128xf32> to vector<1x16x128xf32>
    %962 = vector.shape_cast %961 : vector<1x16x128xf32> to vector<16x128xf32>
    %963 = vector.extract_strided_slice %922 {offsets = [7, 0], sizes = [1, 128], strides = [1, 1]} : vector<16x128xf32> to vector<1x128xf32>
    %964 = vector.broadcast %963 : vector<1x128xf32> to vector<16x128xf32>
    %965 = arith.mulf %962, %964 : vector<16x128xf32>
    %966 = arith.addf %942, %965 : vector<16x128xf32>
    %967 = vector.extract_strided_slice %0 {offsets = [8, 0, 0], sizes = [1, 16, 128], strides = [1, 1, 1]} : vector<16x16x128xf32> to vector<1x16x128xf32>
    %968 = vector.shape_cast %967 : vector<1x16x128xf32> to vector<16x128xf32>
    %969 = vector.extract_strided_slice %922 {offsets = [8, 0], sizes = [1, 128], strides = [1, 1]} : vector<16x128xf32> to vector<1x128xf32>
    %970 = vector.broadcast %969 : vector<1x128xf32> to vector<16x128xf32>
    %971 = arith.mulf %968, %970 : vector<16x128xf32>
    %972 = arith.addf %948, %971 : vector<16x128xf32>
    %973 = vector.extract_strided_slice %0 {offsets = [9, 0, 0], sizes = [1, 16, 128], strides = [1, 1, 1]} : vector<16x16x128xf32> to vector<1x16x128xf32>
    %974 = vector.shape_cast %973 : vector<1x16x128xf32> to vector<16x128xf32>
    %975 = vector.extract_strided_slice %922 {offsets = [9, 0], sizes = [1, 128], strides = [1, 1]} : vector<16x128xf32> to vector<1x128xf32>
    %976 = vector.broadcast %975 : vector<1x128xf32> to vector<16x128xf32>
    %977 = arith.mulf %974, %976 : vector<16x128xf32>
    %978 = arith.addf %954, %977 : vector<16x128xf32>
    %979 = vector.extract_strided_slice %0 {offsets = [10, 0, 0], sizes = [1, 16, 128], strides = [1, 1, 1]} : vector<16x16x128xf32> to vector<1x16x128xf32>
    %980 = vector.shape_cast %979 : vector<1x16x128xf32> to vector<16x128xf32>
    %981 = vector.extract_strided_slice %922 {offsets = [10, 0], sizes = [1, 128], strides = [1, 1]} : vector<16x128xf32> to vector<1x128xf32>
    %982 = vector.broadcast %981 : vector<1x128xf32> to vector<16x128xf32>
    %983 = arith.mulf %980, %982 : vector<16x128xf32>
    %984 = arith.addf %960, %983 : vector<16x128xf32>
    %985 = vector.extract_strided_slice %0 {offsets = [11, 0, 0], sizes = [1, 16, 128], strides = [1, 1, 1]} : vector<16x16x128xf32> to vector<1x16x128xf32>
    %986 = vector.shape_cast %985 : vector<1x16x128xf32> to vector<16x128xf32>
    %987 = vector.extract_strided_slice %922 {offsets = [11, 0], sizes = [1, 128], strides = [1, 1]} : vector<16x128xf32> to vector<1x128xf32>
    %988 = vector.broadcast %987 : vector<1x128xf32> to vector<16x128xf32>
    %989 = arith.mulf %986, %988 : vector<16x128xf32>
    %990 = arith.addf %966, %989 : vector<16x128xf32>
    %991 = vector.extract_strided_slice %0 {offsets = [12, 0, 0], sizes = [1, 16, 128], strides = [1, 1, 1]} : vector<16x16x128xf32> to vector<1x16x128xf32>
    %992 = vector.shape_cast %991 : vector<1x16x128xf32> to vector<16x128xf32>
    %993 = vector.extract_strided_slice %922 {offsets = [12, 0], sizes = [1, 128], strides = [1, 1]} : vector<16x128xf32> to vector<1x128xf32>
    %994 = vector.broadcast %993 : vector<1x128xf32> to vector<16x128xf32>
    %995 = arith.mulf %992, %994 : vector<16x128xf32>
    %996 = arith.addf %972, %995 : vector<16x128xf32>
    %997 = vector.extract_strided_slice %0 {offsets = [13, 0, 0], sizes = [1, 16, 128], strides = [1, 1, 1]} : vector<16x16x128xf32> to vector<1x16x128xf32>
    %998 = vector.shape_cast %997 : vector<1x16x128xf32> to vector<16x128xf32>
    %999 = vector.extract_strided_slice %922 {offsets = [13, 0], sizes = [1, 128], strides = [1, 1]} : vector<16x128xf32> to vector<1x128xf32>
    %1000 = vector.broadcast %999 : vector<1x128xf32> to vector<16x128xf32>
    %1001 = arith.mulf %998, %1000 : vector<16x128xf32>
    %1002 = arith.addf %978, %1001 : vector<16x128xf32>
    %1003 = vector.extract_strided_slice %0 {offsets = [14, 0, 0], sizes = [1, 16, 128], strides = [1, 1, 1]} : vector<16x16x128xf32> to vector<1x16x128xf32>
    %1004 = vector.shape_cast %1003 : vector<1x16x128xf32> to vector<16x128xf32>
    %1005 = vector.extract_strided_slice %922 {offsets = [14, 0], sizes = [1, 128], strides = [1, 1]} : vector<16x128xf32> to vector<1x128xf32>
    %1006 = vector.broadcast %1005 : vector<1x128xf32> to vector<16x128xf32>
    %1007 = arith.mulf %1004, %1006 : vector<16x128xf32>
    %1008 = arith.addf %984, %1007 : vector<16x128xf32>
    %1009 = vector.extract_strided_slice %0 {offsets = [15, 0, 0], sizes = [1, 16, 128], strides = [1, 1, 1]} : vector<16x16x128xf32> to vector<1x16x128xf32>
    %1010 = vector.shape_cast %1009 : vector<1x16x128xf32> to vector<16x128xf32>
    %1011 = vector.extract_strided_slice %922 {offsets = [15, 0], sizes = [1, 128], strides = [1, 1]} : vector<16x128xf32> to vector<1x128xf32>
    %1012 = vector.broadcast %1011 : vector<1x128xf32> to vector<16x128xf32>
    %1013 = arith.mulf %1010, %1012 : vector<16x128xf32>
    %1014 = arith.addf %990, %1013 : vector<16x128xf32>
    %1015 = arith.addf %996, %1002 : vector<16x128xf32>
    %1016 = arith.addf %1015, %1008 : vector<16x128xf32>
    %1017 = arith.addf %1016, %1014 : vector<16x128xf32>
    %1018 = arith.mulf %922, %1017 : vector<16x128xf32>
    %cst_43 = arith.constant dense<0.000000e+00> : vector<128xf32>
    %1019 = vector.multi_reduction <add>, %1018, %cst_43 [0] : vector<16x128xf32> to vector<128xf32>
    %1020 = vector.shape_cast %1019 : vector<128xf32> to vector<1x128xf32>
    %1021 = arith.mulf %817, %922 : vector<16x128xf32>
    %cst_44 = arith.constant dense<0.000000e+00> : vector<128xf32>
    %1022 = vector.multi_reduction <add>, %1021, %cst_44 [0] : vector<16x128xf32> to vector<128xf32>
    %1023 = vector.shape_cast %1022 : vector<128xf32> to vector<1x128xf32>
    %cst_45 = arith.constant 1.000000e-30 : f32
    %1024 = vector.broadcast %cst_45 : f32 to vector<1x128xf32>
    %1025 = arith.cmpf ogt, %1020, %1024 : vector<1x128xf32>
    %cst_46 = arith.constant 0.000000e+00 : f32
    %1026 = vector.broadcast %cst_46 : f32 to vector<1x128xf32>
    %1027 = arith.subf %1026, %1023 : vector<1x128xf32>
    %cst_47 = arith.constant 1.000000e+00 : f32
    %1028 = vector.broadcast %cst_47 : f32 to vector<1x128xf32>
    %1029 = arith.select %1025, %1020, %1028 : vector<1x128xi1>, vector<1x128xf32>
    %1030 = arith.divf %1027, %1029 : vector<1x128xf32>
    %cst_48 = arith.constant 0.000000e+00 : f32
    %1031 = vector.broadcast %cst_48 : f32 to vector<1x128xf32>
    %1032 = arith.select %1025, %1030, %1031 : vector<1x128xi1>, vector<1x128xf32>
    %1033 = vector.broadcast %1032 : vector<1x128xf32> to vector<16x128xf32>
    %1034 = arith.mulf %1033, %922 : vector<16x128xf32>
    %1035 = arith.addf %814, %1034 : vector<16x128xf32>
    %1036 = vector.broadcast %1032 : vector<1x128xf32> to vector<16x128xf32>
    %1037 = arith.mulf %1036, %1017 : vector<16x128xf32>
    %1038 = arith.addf %817, %1037 : vector<16x128xf32>
    %1039 = arith.subf %1038, %817 : vector<16x128xf32>
    %1040 = arith.mulf %1034, %1039 : vector<16x128xf32>
    %cst_49 = arith.constant dense<0.000000e+00> : vector<128xf32>
    %1041 = vector.multi_reduction <add>, %1040, %cst_49 [0] : vector<16x128xf32> to vector<128xf32>
    %1042 = vector.shape_cast %1041 : vector<128xf32> to vector<1x128xf32>
    %1043 = vector.extract_strided_slice %809 {offsets = [0, 0, 0], sizes = [1, 16, 128], strides = [1, 1, 1]} : vector<16x16x128xf32> to vector<1x16x128xf32>
    %1044 = vector.shape_cast %1043 : vector<1x16x128xf32> to vector<16x128xf32>
    %1045 = vector.extract_strided_slice %1039 {offsets = [0, 0], sizes = [1, 128], strides = [1, 1]} : vector<16x128xf32> to vector<1x128xf32>
    %1046 = vector.broadcast %1045 : vector<1x128xf32> to vector<16x128xf32>
    %1047 = arith.mulf %1044, %1046 : vector<16x128xf32>
    %1048 = vector.extract_strided_slice %809 {offsets = [1, 0, 0], sizes = [1, 16, 128], strides = [1, 1, 1]} : vector<16x16x128xf32> to vector<1x16x128xf32>
    %1049 = vector.shape_cast %1048 : vector<1x16x128xf32> to vector<16x128xf32>
    %1050 = vector.extract_strided_slice %1039 {offsets = [1, 0], sizes = [1, 128], strides = [1, 1]} : vector<16x128xf32> to vector<1x128xf32>
    %1051 = vector.broadcast %1050 : vector<1x128xf32> to vector<16x128xf32>
    %1052 = arith.mulf %1049, %1051 : vector<16x128xf32>
    %1053 = vector.extract_strided_slice %809 {offsets = [2, 0, 0], sizes = [1, 16, 128], strides = [1, 1, 1]} : vector<16x16x128xf32> to vector<1x16x128xf32>
    %1054 = vector.shape_cast %1053 : vector<1x16x128xf32> to vector<16x128xf32>
    %1055 = vector.extract_strided_slice %1039 {offsets = [2, 0], sizes = [1, 128], strides = [1, 1]} : vector<16x128xf32> to vector<1x128xf32>
    %1056 = vector.broadcast %1055 : vector<1x128xf32> to vector<16x128xf32>
    %1057 = arith.mulf %1054, %1056 : vector<16x128xf32>
    %1058 = vector.extract_strided_slice %809 {offsets = [3, 0, 0], sizes = [1, 16, 128], strides = [1, 1, 1]} : vector<16x16x128xf32> to vector<1x16x128xf32>
    %1059 = vector.shape_cast %1058 : vector<1x16x128xf32> to vector<16x128xf32>
    %1060 = vector.extract_strided_slice %1039 {offsets = [3, 0], sizes = [1, 128], strides = [1, 1]} : vector<16x128xf32> to vector<1x128xf32>
    %1061 = vector.broadcast %1060 : vector<1x128xf32> to vector<16x128xf32>
    %1062 = arith.mulf %1059, %1061 : vector<16x128xf32>
    %1063 = vector.extract_strided_slice %809 {offsets = [4, 0, 0], sizes = [1, 16, 128], strides = [1, 1, 1]} : vector<16x16x128xf32> to vector<1x16x128xf32>
    %1064 = vector.shape_cast %1063 : vector<1x16x128xf32> to vector<16x128xf32>
    %1065 = vector.extract_strided_slice %1039 {offsets = [4, 0], sizes = [1, 128], strides = [1, 1]} : vector<16x128xf32> to vector<1x128xf32>
    %1066 = vector.broadcast %1065 : vector<1x128xf32> to vector<16x128xf32>
    %1067 = arith.mulf %1064, %1066 : vector<16x128xf32>
    %1068 = arith.addf %1047, %1067 : vector<16x128xf32>
    %1069 = vector.extract_strided_slice %809 {offsets = [5, 0, 0], sizes = [1, 16, 128], strides = [1, 1, 1]} : vector<16x16x128xf32> to vector<1x16x128xf32>
    %1070 = vector.shape_cast %1069 : vector<1x16x128xf32> to vector<16x128xf32>
    %1071 = vector.extract_strided_slice %1039 {offsets = [5, 0], sizes = [1, 128], strides = [1, 1]} : vector<16x128xf32> to vector<1x128xf32>
    %1072 = vector.broadcast %1071 : vector<1x128xf32> to vector<16x128xf32>
    %1073 = arith.mulf %1070, %1072 : vector<16x128xf32>
    %1074 = arith.addf %1052, %1073 : vector<16x128xf32>
    %1075 = vector.extract_strided_slice %809 {offsets = [6, 0, 0], sizes = [1, 16, 128], strides = [1, 1, 1]} : vector<16x16x128xf32> to vector<1x16x128xf32>
    %1076 = vector.shape_cast %1075 : vector<1x16x128xf32> to vector<16x128xf32>
    %1077 = vector.extract_strided_slice %1039 {offsets = [6, 0], sizes = [1, 128], strides = [1, 1]} : vector<16x128xf32> to vector<1x128xf32>
    %1078 = vector.broadcast %1077 : vector<1x128xf32> to vector<16x128xf32>
    %1079 = arith.mulf %1076, %1078 : vector<16x128xf32>
    %1080 = arith.addf %1057, %1079 : vector<16x128xf32>
    %1081 = vector.extract_strided_slice %809 {offsets = [7, 0, 0], sizes = [1, 16, 128], strides = [1, 1, 1]} : vector<16x16x128xf32> to vector<1x16x128xf32>
    %1082 = vector.shape_cast %1081 : vector<1x16x128xf32> to vector<16x128xf32>
    %1083 = vector.extract_strided_slice %1039 {offsets = [7, 0], sizes = [1, 128], strides = [1, 1]} : vector<16x128xf32> to vector<1x128xf32>
    %1084 = vector.broadcast %1083 : vector<1x128xf32> to vector<16x128xf32>
    %1085 = arith.mulf %1082, %1084 : vector<16x128xf32>
    %1086 = arith.addf %1062, %1085 : vector<16x128xf32>
    %1087 = vector.extract_strided_slice %809 {offsets = [8, 0, 0], sizes = [1, 16, 128], strides = [1, 1, 1]} : vector<16x16x128xf32> to vector<1x16x128xf32>
    %1088 = vector.shape_cast %1087 : vector<1x16x128xf32> to vector<16x128xf32>
    %1089 = vector.extract_strided_slice %1039 {offsets = [8, 0], sizes = [1, 128], strides = [1, 1]} : vector<16x128xf32> to vector<1x128xf32>
    %1090 = vector.broadcast %1089 : vector<1x128xf32> to vector<16x128xf32>
    %1091 = arith.mulf %1088, %1090 : vector<16x128xf32>
    %1092 = arith.addf %1068, %1091 : vector<16x128xf32>
    %1093 = vector.extract_strided_slice %809 {offsets = [9, 0, 0], sizes = [1, 16, 128], strides = [1, 1, 1]} : vector<16x16x128xf32> to vector<1x16x128xf32>
    %1094 = vector.shape_cast %1093 : vector<1x16x128xf32> to vector<16x128xf32>
    %1095 = vector.extract_strided_slice %1039 {offsets = [9, 0], sizes = [1, 128], strides = [1, 1]} : vector<16x128xf32> to vector<1x128xf32>
    %1096 = vector.broadcast %1095 : vector<1x128xf32> to vector<16x128xf32>
    %1097 = arith.mulf %1094, %1096 : vector<16x128xf32>
    %1098 = arith.addf %1074, %1097 : vector<16x128xf32>
    %1099 = vector.extract_strided_slice %809 {offsets = [10, 0, 0], sizes = [1, 16, 128], strides = [1, 1, 1]} : vector<16x16x128xf32> to vector<1x16x128xf32>
    %1100 = vector.shape_cast %1099 : vector<1x16x128xf32> to vector<16x128xf32>
    %1101 = vector.extract_strided_slice %1039 {offsets = [10, 0], sizes = [1, 128], strides = [1, 1]} : vector<16x128xf32> to vector<1x128xf32>
    %1102 = vector.broadcast %1101 : vector<1x128xf32> to vector<16x128xf32>
    %1103 = arith.mulf %1100, %1102 : vector<16x128xf32>
    %1104 = arith.addf %1080, %1103 : vector<16x128xf32>
    %1105 = vector.extract_strided_slice %809 {offsets = [11, 0, 0], sizes = [1, 16, 128], strides = [1, 1, 1]} : vector<16x16x128xf32> to vector<1x16x128xf32>
    %1106 = vector.shape_cast %1105 : vector<1x16x128xf32> to vector<16x128xf32>
    %1107 = vector.extract_strided_slice %1039 {offsets = [11, 0], sizes = [1, 128], strides = [1, 1]} : vector<16x128xf32> to vector<1x128xf32>
    %1108 = vector.broadcast %1107 : vector<1x128xf32> to vector<16x128xf32>
    %1109 = arith.mulf %1106, %1108 : vector<16x128xf32>
    %1110 = arith.addf %1086, %1109 : vector<16x128xf32>
    %1111 = vector.extract_strided_slice %809 {offsets = [12, 0, 0], sizes = [1, 16, 128], strides = [1, 1, 1]} : vector<16x16x128xf32> to vector<1x16x128xf32>
    %1112 = vector.shape_cast %1111 : vector<1x16x128xf32> to vector<16x128xf32>
    %1113 = vector.extract_strided_slice %1039 {offsets = [12, 0], sizes = [1, 128], strides = [1, 1]} : vector<16x128xf32> to vector<1x128xf32>
    %1114 = vector.broadcast %1113 : vector<1x128xf32> to vector<16x128xf32>
    %1115 = arith.mulf %1112, %1114 : vector<16x128xf32>
    %1116 = arith.addf %1092, %1115 : vector<16x128xf32>
    %1117 = vector.extract_strided_slice %809 {offsets = [13, 0, 0], sizes = [1, 16, 128], strides = [1, 1, 1]} : vector<16x16x128xf32> to vector<1x16x128xf32>
    %1118 = vector.shape_cast %1117 : vector<1x16x128xf32> to vector<16x128xf32>
    %1119 = vector.extract_strided_slice %1039 {offsets = [13, 0], sizes = [1, 128], strides = [1, 1]} : vector<16x128xf32> to vector<1x128xf32>
    %1120 = vector.broadcast %1119 : vector<1x128xf32> to vector<16x128xf32>
    %1121 = arith.mulf %1118, %1120 : vector<16x128xf32>
    %1122 = arith.addf %1098, %1121 : vector<16x128xf32>
    %1123 = vector.extract_strided_slice %809 {offsets = [14, 0, 0], sizes = [1, 16, 128], strides = [1, 1, 1]} : vector<16x16x128xf32> to vector<1x16x128xf32>
    %1124 = vector.shape_cast %1123 : vector<1x16x128xf32> to vector<16x128xf32>
    %1125 = vector.extract_strided_slice %1039 {offsets = [14, 0], sizes = [1, 128], strides = [1, 1]} : vector<16x128xf32> to vector<1x128xf32>
    %1126 = vector.broadcast %1125 : vector<1x128xf32> to vector<16x128xf32>
    %1127 = arith.mulf %1124, %1126 : vector<16x128xf32>
    %1128 = arith.addf %1104, %1127 : vector<16x128xf32>
    %1129 = vector.extract_strided_slice %809 {offsets = [15, 0, 0], sizes = [1, 16, 128], strides = [1, 1, 1]} : vector<16x16x128xf32> to vector<1x16x128xf32>
    %1130 = vector.shape_cast %1129 : vector<1x16x128xf32> to vector<16x128xf32>
    %1131 = vector.extract_strided_slice %1039 {offsets = [15, 0], sizes = [1, 128], strides = [1, 1]} : vector<16x128xf32> to vector<1x128xf32>
    %1132 = vector.broadcast %1131 : vector<1x128xf32> to vector<16x128xf32>
    %1133 = arith.mulf %1130, %1132 : vector<16x128xf32>
    %1134 = arith.addf %1110, %1133 : vector<16x128xf32>
    %1135 = arith.addf %1116, %1122 : vector<16x128xf32>
    %1136 = arith.addf %1135, %1128 : vector<16x128xf32>
    %1137 = arith.addf %1136, %1134 : vector<16x128xf32>
    %1138 = arith.mulf %1039, %1137 : vector<16x128xf32>
    %cst_50 = arith.constant dense<0.000000e+00> : vector<128xf32>
    %1139 = vector.multi_reduction <add>, %1138, %cst_50 [0] : vector<16x128xf32> to vector<128xf32>
    %1140 = vector.shape_cast %1139 : vector<128xf32> to vector<1x128xf32>
    %cst_51 = arith.constant 0.000000e+00 : f32
    %1141 = vector.broadcast %cst_51 : f32 to vector<1x128xf32>
    %1142 = arith.cmpf one, %1042, %1141 : vector<1x128xf32>
    %cst_52 = arith.constant 1.000000e+00 : f32
    %1143 = vector.broadcast %cst_52 : f32 to vector<1x128xf32>
    %1144 = arith.select %1142, %1042, %1143 : vector<1x128xi1>, vector<1x128xf32>
    %cst_53 = arith.constant 1.000000e+00 : f32
    %1145 = vector.broadcast %cst_53 : f32 to vector<1x128xf32>
    %1146 = arith.divf %1145, %1144 : vector<1x128xf32>
    %cst_54 = arith.constant 0.000000e+00 : f32
    %1147 = vector.broadcast %cst_54 : f32 to vector<1x128xf32>
    %1148 = arith.select %1142, %1146, %1147 : vector<1x128xi1>, vector<1x128xf32>
    %1149 = arith.addf %1042, %1140 : vector<1x128xf32>
    %1150 = arith.mulf %1149, %1148 : vector<1x128xf32>
    %1151 = arith.mulf %1150, %1148 : vector<1x128xf32>
    %1152 = vector.broadcast %1151 : vector<1x128xf32> to vector<16x128xf32>
    %1153 = arith.mulf %1152, %1034 : vector<16x128xf32>
    %1154 = vector.broadcast %1148 : vector<1x128xf32> to vector<16x128xf32>
    %1155 = arith.mulf %1154, %1137 : vector<16x128xf32>
    %1156 = arith.subf %1153, %1155 : vector<16x128xf32>
    %1157 = vector.broadcast %1148 : vector<1x128xf32> to vector<16x128xf32>
    %1158 = arith.mulf %1157, %1137 : vector<16x128xf32>
    %1159 = vector.shape_cast %1034 : vector<16x128xf32> to vector<16x1x128xf32>
    %1160 = vector.shape_cast %1156 : vector<16x128xf32> to vector<1x16x128xf32>
    %1161 = vector.broadcast %1159 : vector<16x1x128xf32> to vector<16x16x128xf32>
    %1162 = vector.broadcast %1160 : vector<1x16x128xf32> to vector<16x16x128xf32>
    %1163 = arith.mulf %1161, %1162 : vector<16x16x128xf32>
    %1164 = vector.shape_cast %1158 : vector<16x128xf32> to vector<16x1x128xf32>
    %1165 = vector.shape_cast %1034 : vector<16x128xf32> to vector<1x16x128xf32>
    %1166 = vector.broadcast %1164 : vector<16x1x128xf32> to vector<16x16x128xf32>
    %1167 = vector.broadcast %1165 : vector<1x16x128xf32> to vector<16x16x128xf32>
    %1168 = arith.mulf %1166, %1167 : vector<16x16x128xf32>
    %1169 = arith.subf %1163, %1168 : vector<16x16x128xf32>
    %1170 = arith.addf %809, %1169 : vector<16x16x128xf32>
    %cst_55 = arith.constant 5.000000e-01 : f32
    %1171 = vector.broadcast %cst_55 : f32 to vector<1x128xf32>
    %1172 = arith.cmpf ogt, %825, %1171 : vector<1x128xf32>
    %1173 = vector.shape_cast %1172 : vector<1x128xi1> to vector<1x128xi1>
    %1174 = vector.broadcast %1173 : vector<1x128xi1> to vector<16x128xi1>
    %1175 = arith.select %1174, %1035, %814 : vector<16x128xi1>, vector<16x128xf32>
    %1176 = vector.shape_cast %1172 : vector<1x128xi1> to vector<1x128xi1>
    %1177 = vector.broadcast %1176 : vector<1x128xi1> to vector<16x128xi1>
    %1178 = arith.select %1177, %1038, %817 : vector<16x128xi1>, vector<16x128xf32>
    %1179 = arith.mulf %1178, %1178 : vector<16x128xf32>
    %cst_56 = arith.constant dense<0.000000e+00> : vector<128xf32>
    %1180 = vector.multi_reduction <add>, %1179, %cst_56 [0] : vector<16x128xf32> to vector<128xf32>
    %1181 = vector.shape_cast %1180 : vector<128xf32> to vector<1x128xf32>
    %cst_57 = arith.constant 9.99999997E-7 : f32
    %1182 = vector.broadcast %cst_57 : f32 to vector<1x128xf32>
    %1183 = arith.cmpf ogt, %1181, %1182 : vector<1x128xf32>
    %1184 = arith.andi %1172, %1183 : vector<1x128xi1>
    %1185 = arith.extui %1184 : vector<1x128xi1> to vector<1x128xi32>
    %1186 = arith.sitofp %1185 : vector<1x128xi32> to vector<1x128xf32>
    %c3_i32 = arith.constant 3 : i32
    %1187 = vector.extract_strided_slice %1170 {offsets = [0, 0, 0], sizes = [1, 16, 128], strides = [1, 1, 1]} : vector<16x16x128xf32> to vector<1x16x128xf32>
    %1188 = vector.shape_cast %1187 : vector<1x16x128xf32> to vector<16x128xf32>
    %1189 = vector.extract_strided_slice %1178 {offsets = [0, 0], sizes = [1, 128], strides = [1, 1]} : vector<16x128xf32> to vector<1x128xf32>
    %1190 = vector.broadcast %1189 : vector<1x128xf32> to vector<16x128xf32>
    %1191 = arith.mulf %1188, %1190 : vector<16x128xf32>
    %1192 = vector.extract_strided_slice %1170 {offsets = [1, 0, 0], sizes = [1, 16, 128], strides = [1, 1, 1]} : vector<16x16x128xf32> to vector<1x16x128xf32>
    %1193 = vector.shape_cast %1192 : vector<1x16x128xf32> to vector<16x128xf32>
    %1194 = vector.extract_strided_slice %1178 {offsets = [1, 0], sizes = [1, 128], strides = [1, 1]} : vector<16x128xf32> to vector<1x128xf32>
    %1195 = vector.broadcast %1194 : vector<1x128xf32> to vector<16x128xf32>
    %1196 = arith.mulf %1193, %1195 : vector<16x128xf32>
    %1197 = vector.extract_strided_slice %1170 {offsets = [2, 0, 0], sizes = [1, 16, 128], strides = [1, 1, 1]} : vector<16x16x128xf32> to vector<1x16x128xf32>
    %1198 = vector.shape_cast %1197 : vector<1x16x128xf32> to vector<16x128xf32>
    %1199 = vector.extract_strided_slice %1178 {offsets = [2, 0], sizes = [1, 128], strides = [1, 1]} : vector<16x128xf32> to vector<1x128xf32>
    %1200 = vector.broadcast %1199 : vector<1x128xf32> to vector<16x128xf32>
    %1201 = arith.mulf %1198, %1200 : vector<16x128xf32>
    %1202 = vector.extract_strided_slice %1170 {offsets = [3, 0, 0], sizes = [1, 16, 128], strides = [1, 1, 1]} : vector<16x16x128xf32> to vector<1x16x128xf32>
    %1203 = vector.shape_cast %1202 : vector<1x16x128xf32> to vector<16x128xf32>
    %1204 = vector.extract_strided_slice %1178 {offsets = [3, 0], sizes = [1, 128], strides = [1, 1]} : vector<16x128xf32> to vector<1x128xf32>
    %1205 = vector.broadcast %1204 : vector<1x128xf32> to vector<16x128xf32>
    %1206 = arith.mulf %1203, %1205 : vector<16x128xf32>
    %1207 = vector.extract_strided_slice %1170 {offsets = [4, 0, 0], sizes = [1, 16, 128], strides = [1, 1, 1]} : vector<16x16x128xf32> to vector<1x16x128xf32>
    %1208 = vector.shape_cast %1207 : vector<1x16x128xf32> to vector<16x128xf32>
    %1209 = vector.extract_strided_slice %1178 {offsets = [4, 0], sizes = [1, 128], strides = [1, 1]} : vector<16x128xf32> to vector<1x128xf32>
    %1210 = vector.broadcast %1209 : vector<1x128xf32> to vector<16x128xf32>
    %1211 = arith.mulf %1208, %1210 : vector<16x128xf32>
    %1212 = arith.addf %1191, %1211 : vector<16x128xf32>
    %1213 = vector.extract_strided_slice %1170 {offsets = [5, 0, 0], sizes = [1, 16, 128], strides = [1, 1, 1]} : vector<16x16x128xf32> to vector<1x16x128xf32>
    %1214 = vector.shape_cast %1213 : vector<1x16x128xf32> to vector<16x128xf32>
    %1215 = vector.extract_strided_slice %1178 {offsets = [5, 0], sizes = [1, 128], strides = [1, 1]} : vector<16x128xf32> to vector<1x128xf32>
    %1216 = vector.broadcast %1215 : vector<1x128xf32> to vector<16x128xf32>
    %1217 = arith.mulf %1214, %1216 : vector<16x128xf32>
    %1218 = arith.addf %1196, %1217 : vector<16x128xf32>
    %1219 = vector.extract_strided_slice %1170 {offsets = [6, 0, 0], sizes = [1, 16, 128], strides = [1, 1, 1]} : vector<16x16x128xf32> to vector<1x16x128xf32>
    %1220 = vector.shape_cast %1219 : vector<1x16x128xf32> to vector<16x128xf32>
    %1221 = vector.extract_strided_slice %1178 {offsets = [6, 0], sizes = [1, 128], strides = [1, 1]} : vector<16x128xf32> to vector<1x128xf32>
    %1222 = vector.broadcast %1221 : vector<1x128xf32> to vector<16x128xf32>
    %1223 = arith.mulf %1220, %1222 : vector<16x128xf32>
    %1224 = arith.addf %1201, %1223 : vector<16x128xf32>
    %1225 = vector.extract_strided_slice %1170 {offsets = [7, 0, 0], sizes = [1, 16, 128], strides = [1, 1, 1]} : vector<16x16x128xf32> to vector<1x16x128xf32>
    %1226 = vector.shape_cast %1225 : vector<1x16x128xf32> to vector<16x128xf32>
    %1227 = vector.extract_strided_slice %1178 {offsets = [7, 0], sizes = [1, 128], strides = [1, 1]} : vector<16x128xf32> to vector<1x128xf32>
    %1228 = vector.broadcast %1227 : vector<1x128xf32> to vector<16x128xf32>
    %1229 = arith.mulf %1226, %1228 : vector<16x128xf32>
    %1230 = arith.addf %1206, %1229 : vector<16x128xf32>
    %1231 = vector.extract_strided_slice %1170 {offsets = [8, 0, 0], sizes = [1, 16, 128], strides = [1, 1, 1]} : vector<16x16x128xf32> to vector<1x16x128xf32>
    %1232 = vector.shape_cast %1231 : vector<1x16x128xf32> to vector<16x128xf32>
    %1233 = vector.extract_strided_slice %1178 {offsets = [8, 0], sizes = [1, 128], strides = [1, 1]} : vector<16x128xf32> to vector<1x128xf32>
    %1234 = vector.broadcast %1233 : vector<1x128xf32> to vector<16x128xf32>
    %1235 = arith.mulf %1232, %1234 : vector<16x128xf32>
    %1236 = arith.addf %1212, %1235 : vector<16x128xf32>
    %1237 = vector.extract_strided_slice %1170 {offsets = [9, 0, 0], sizes = [1, 16, 128], strides = [1, 1, 1]} : vector<16x16x128xf32> to vector<1x16x128xf32>
    %1238 = vector.shape_cast %1237 : vector<1x16x128xf32> to vector<16x128xf32>
    %1239 = vector.extract_strided_slice %1178 {offsets = [9, 0], sizes = [1, 128], strides = [1, 1]} : vector<16x128xf32> to vector<1x128xf32>
    %1240 = vector.broadcast %1239 : vector<1x128xf32> to vector<16x128xf32>
    %1241 = arith.mulf %1238, %1240 : vector<16x128xf32>
    %1242 = arith.addf %1218, %1241 : vector<16x128xf32>
    %1243 = vector.extract_strided_slice %1170 {offsets = [10, 0, 0], sizes = [1, 16, 128], strides = [1, 1, 1]} : vector<16x16x128xf32> to vector<1x16x128xf32>
    %1244 = vector.shape_cast %1243 : vector<1x16x128xf32> to vector<16x128xf32>
    %1245 = vector.extract_strided_slice %1178 {offsets = [10, 0], sizes = [1, 128], strides = [1, 1]} : vector<16x128xf32> to vector<1x128xf32>
    %1246 = vector.broadcast %1245 : vector<1x128xf32> to vector<16x128xf32>
    %1247 = arith.mulf %1244, %1246 : vector<16x128xf32>
    %1248 = arith.addf %1224, %1247 : vector<16x128xf32>
    %1249 = vector.extract_strided_slice %1170 {offsets = [11, 0, 0], sizes = [1, 16, 128], strides = [1, 1, 1]} : vector<16x16x128xf32> to vector<1x16x128xf32>
    %1250 = vector.shape_cast %1249 : vector<1x16x128xf32> to vector<16x128xf32>
    %1251 = vector.extract_strided_slice %1178 {offsets = [11, 0], sizes = [1, 128], strides = [1, 1]} : vector<16x128xf32> to vector<1x128xf32>
    %1252 = vector.broadcast %1251 : vector<1x128xf32> to vector<16x128xf32>
    %1253 = arith.mulf %1250, %1252 : vector<16x128xf32>
    %1254 = arith.addf %1230, %1253 : vector<16x128xf32>
    %1255 = vector.extract_strided_slice %1170 {offsets = [12, 0, 0], sizes = [1, 16, 128], strides = [1, 1, 1]} : vector<16x16x128xf32> to vector<1x16x128xf32>
    %1256 = vector.shape_cast %1255 : vector<1x16x128xf32> to vector<16x128xf32>
    %1257 = vector.extract_strided_slice %1178 {offsets = [12, 0], sizes = [1, 128], strides = [1, 1]} : vector<16x128xf32> to vector<1x128xf32>
    %1258 = vector.broadcast %1257 : vector<1x128xf32> to vector<16x128xf32>
    %1259 = arith.mulf %1256, %1258 : vector<16x128xf32>
    %1260 = arith.addf %1236, %1259 : vector<16x128xf32>
    %1261 = vector.extract_strided_slice %1170 {offsets = [13, 0, 0], sizes = [1, 16, 128], strides = [1, 1, 1]} : vector<16x16x128xf32> to vector<1x16x128xf32>
    %1262 = vector.shape_cast %1261 : vector<1x16x128xf32> to vector<16x128xf32>
    %1263 = vector.extract_strided_slice %1178 {offsets = [13, 0], sizes = [1, 128], strides = [1, 1]} : vector<16x128xf32> to vector<1x128xf32>
    %1264 = vector.broadcast %1263 : vector<1x128xf32> to vector<16x128xf32>
    %1265 = arith.mulf %1262, %1264 : vector<16x128xf32>
    %1266 = arith.addf %1242, %1265 : vector<16x128xf32>
    %1267 = vector.extract_strided_slice %1170 {offsets = [14, 0, 0], sizes = [1, 16, 128], strides = [1, 1, 1]} : vector<16x16x128xf32> to vector<1x16x128xf32>
    %1268 = vector.shape_cast %1267 : vector<1x16x128xf32> to vector<16x128xf32>
    %1269 = vector.extract_strided_slice %1178 {offsets = [14, 0], sizes = [1, 128], strides = [1, 1]} : vector<16x128xf32> to vector<1x128xf32>
    %1270 = vector.broadcast %1269 : vector<1x128xf32> to vector<16x128xf32>
    %1271 = arith.mulf %1268, %1270 : vector<16x128xf32>
    %1272 = arith.addf %1248, %1271 : vector<16x128xf32>
    %1273 = vector.extract_strided_slice %1170 {offsets = [15, 0, 0], sizes = [1, 16, 128], strides = [1, 1, 1]} : vector<16x16x128xf32> to vector<1x16x128xf32>
    %1274 = vector.shape_cast %1273 : vector<1x16x128xf32> to vector<16x128xf32>
    %1275 = vector.extract_strided_slice %1178 {offsets = [15, 0], sizes = [1, 128], strides = [1, 1]} : vector<16x128xf32> to vector<1x128xf32>
    %1276 = vector.broadcast %1275 : vector<1x128xf32> to vector<16x128xf32>
    %1277 = arith.mulf %1274, %1276 : vector<16x128xf32>
    %1278 = arith.addf %1254, %1277 : vector<16x128xf32>
    %1279 = arith.addf %1260, %1266 : vector<16x128xf32>
    %1280 = arith.addf %1279, %1272 : vector<16x128xf32>
    %1281 = arith.addf %1280, %1278 : vector<16x128xf32>
    %cst_58 = arith.constant 0.000000e+00 : f32
    %1282 = vector.broadcast %cst_58 : f32 to vector<16x128xf32>
    %1283 = arith.subf %1282, %1281 : vector<16x128xf32>
    %1284 = vector.extract_strided_slice %0 {offsets = [0, 0, 0], sizes = [1, 16, 128], strides = [1, 1, 1]} : vector<16x16x128xf32> to vector<1x16x128xf32>
    %1285 = vector.shape_cast %1284 : vector<1x16x128xf32> to vector<16x128xf32>
    %1286 = vector.extract_strided_slice %1283 {offsets = [0, 0], sizes = [1, 128], strides = [1, 1]} : vector<16x128xf32> to vector<1x128xf32>
    %1287 = vector.broadcast %1286 : vector<1x128xf32> to vector<16x128xf32>
    %1288 = arith.mulf %1285, %1287 : vector<16x128xf32>
    %1289 = vector.extract_strided_slice %0 {offsets = [1, 0, 0], sizes = [1, 16, 128], strides = [1, 1, 1]} : vector<16x16x128xf32> to vector<1x16x128xf32>
    %1290 = vector.shape_cast %1289 : vector<1x16x128xf32> to vector<16x128xf32>
    %1291 = vector.extract_strided_slice %1283 {offsets = [1, 0], sizes = [1, 128], strides = [1, 1]} : vector<16x128xf32> to vector<1x128xf32>
    %1292 = vector.broadcast %1291 : vector<1x128xf32> to vector<16x128xf32>
    %1293 = arith.mulf %1290, %1292 : vector<16x128xf32>
    %1294 = vector.extract_strided_slice %0 {offsets = [2, 0, 0], sizes = [1, 16, 128], strides = [1, 1, 1]} : vector<16x16x128xf32> to vector<1x16x128xf32>
    %1295 = vector.shape_cast %1294 : vector<1x16x128xf32> to vector<16x128xf32>
    %1296 = vector.extract_strided_slice %1283 {offsets = [2, 0], sizes = [1, 128], strides = [1, 1]} : vector<16x128xf32> to vector<1x128xf32>
    %1297 = vector.broadcast %1296 : vector<1x128xf32> to vector<16x128xf32>
    %1298 = arith.mulf %1295, %1297 : vector<16x128xf32>
    %1299 = vector.extract_strided_slice %0 {offsets = [3, 0, 0], sizes = [1, 16, 128], strides = [1, 1, 1]} : vector<16x16x128xf32> to vector<1x16x128xf32>
    %1300 = vector.shape_cast %1299 : vector<1x16x128xf32> to vector<16x128xf32>
    %1301 = vector.extract_strided_slice %1283 {offsets = [3, 0], sizes = [1, 128], strides = [1, 1]} : vector<16x128xf32> to vector<1x128xf32>
    %1302 = vector.broadcast %1301 : vector<1x128xf32> to vector<16x128xf32>
    %1303 = arith.mulf %1300, %1302 : vector<16x128xf32>
    %1304 = vector.extract_strided_slice %0 {offsets = [4, 0, 0], sizes = [1, 16, 128], strides = [1, 1, 1]} : vector<16x16x128xf32> to vector<1x16x128xf32>
    %1305 = vector.shape_cast %1304 : vector<1x16x128xf32> to vector<16x128xf32>
    %1306 = vector.extract_strided_slice %1283 {offsets = [4, 0], sizes = [1, 128], strides = [1, 1]} : vector<16x128xf32> to vector<1x128xf32>
    %1307 = vector.broadcast %1306 : vector<1x128xf32> to vector<16x128xf32>
    %1308 = arith.mulf %1305, %1307 : vector<16x128xf32>
    %1309 = arith.addf %1288, %1308 : vector<16x128xf32>
    %1310 = vector.extract_strided_slice %0 {offsets = [5, 0, 0], sizes = [1, 16, 128], strides = [1, 1, 1]} : vector<16x16x128xf32> to vector<1x16x128xf32>
    %1311 = vector.shape_cast %1310 : vector<1x16x128xf32> to vector<16x128xf32>
    %1312 = vector.extract_strided_slice %1283 {offsets = [5, 0], sizes = [1, 128], strides = [1, 1]} : vector<16x128xf32> to vector<1x128xf32>
    %1313 = vector.broadcast %1312 : vector<1x128xf32> to vector<16x128xf32>
    %1314 = arith.mulf %1311, %1313 : vector<16x128xf32>
    %1315 = arith.addf %1293, %1314 : vector<16x128xf32>
    %1316 = vector.extract_strided_slice %0 {offsets = [6, 0, 0], sizes = [1, 16, 128], strides = [1, 1, 1]} : vector<16x16x128xf32> to vector<1x16x128xf32>
    %1317 = vector.shape_cast %1316 : vector<1x16x128xf32> to vector<16x128xf32>
    %1318 = vector.extract_strided_slice %1283 {offsets = [6, 0], sizes = [1, 128], strides = [1, 1]} : vector<16x128xf32> to vector<1x128xf32>
    %1319 = vector.broadcast %1318 : vector<1x128xf32> to vector<16x128xf32>
    %1320 = arith.mulf %1317, %1319 : vector<16x128xf32>
    %1321 = arith.addf %1298, %1320 : vector<16x128xf32>
    %1322 = vector.extract_strided_slice %0 {offsets = [7, 0, 0], sizes = [1, 16, 128], strides = [1, 1, 1]} : vector<16x16x128xf32> to vector<1x16x128xf32>
    %1323 = vector.shape_cast %1322 : vector<1x16x128xf32> to vector<16x128xf32>
    %1324 = vector.extract_strided_slice %1283 {offsets = [7, 0], sizes = [1, 128], strides = [1, 1]} : vector<16x128xf32> to vector<1x128xf32>
    %1325 = vector.broadcast %1324 : vector<1x128xf32> to vector<16x128xf32>
    %1326 = arith.mulf %1323, %1325 : vector<16x128xf32>
    %1327 = arith.addf %1303, %1326 : vector<16x128xf32>
    %1328 = vector.extract_strided_slice %0 {offsets = [8, 0, 0], sizes = [1, 16, 128], strides = [1, 1, 1]} : vector<16x16x128xf32> to vector<1x16x128xf32>
    %1329 = vector.shape_cast %1328 : vector<1x16x128xf32> to vector<16x128xf32>
    %1330 = vector.extract_strided_slice %1283 {offsets = [8, 0], sizes = [1, 128], strides = [1, 1]} : vector<16x128xf32> to vector<1x128xf32>
    %1331 = vector.broadcast %1330 : vector<1x128xf32> to vector<16x128xf32>
    %1332 = arith.mulf %1329, %1331 : vector<16x128xf32>
    %1333 = arith.addf %1309, %1332 : vector<16x128xf32>
    %1334 = vector.extract_strided_slice %0 {offsets = [9, 0, 0], sizes = [1, 16, 128], strides = [1, 1, 1]} : vector<16x16x128xf32> to vector<1x16x128xf32>
    %1335 = vector.shape_cast %1334 : vector<1x16x128xf32> to vector<16x128xf32>
    %1336 = vector.extract_strided_slice %1283 {offsets = [9, 0], sizes = [1, 128], strides = [1, 1]} : vector<16x128xf32> to vector<1x128xf32>
    %1337 = vector.broadcast %1336 : vector<1x128xf32> to vector<16x128xf32>
    %1338 = arith.mulf %1335, %1337 : vector<16x128xf32>
    %1339 = arith.addf %1315, %1338 : vector<16x128xf32>
    %1340 = vector.extract_strided_slice %0 {offsets = [10, 0, 0], sizes = [1, 16, 128], strides = [1, 1, 1]} : vector<16x16x128xf32> to vector<1x16x128xf32>
    %1341 = vector.shape_cast %1340 : vector<1x16x128xf32> to vector<16x128xf32>
    %1342 = vector.extract_strided_slice %1283 {offsets = [10, 0], sizes = [1, 128], strides = [1, 1]} : vector<16x128xf32> to vector<1x128xf32>
    %1343 = vector.broadcast %1342 : vector<1x128xf32> to vector<16x128xf32>
    %1344 = arith.mulf %1341, %1343 : vector<16x128xf32>
    %1345 = arith.addf %1321, %1344 : vector<16x128xf32>
    %1346 = vector.extract_strided_slice %0 {offsets = [11, 0, 0], sizes = [1, 16, 128], strides = [1, 1, 1]} : vector<16x16x128xf32> to vector<1x16x128xf32>
    %1347 = vector.shape_cast %1346 : vector<1x16x128xf32> to vector<16x128xf32>
    %1348 = vector.extract_strided_slice %1283 {offsets = [11, 0], sizes = [1, 128], strides = [1, 1]} : vector<16x128xf32> to vector<1x128xf32>
    %1349 = vector.broadcast %1348 : vector<1x128xf32> to vector<16x128xf32>
    %1350 = arith.mulf %1347, %1349 : vector<16x128xf32>
    %1351 = arith.addf %1327, %1350 : vector<16x128xf32>
    %1352 = vector.extract_strided_slice %0 {offsets = [12, 0, 0], sizes = [1, 16, 128], strides = [1, 1, 1]} : vector<16x16x128xf32> to vector<1x16x128xf32>
    %1353 = vector.shape_cast %1352 : vector<1x16x128xf32> to vector<16x128xf32>
    %1354 = vector.extract_strided_slice %1283 {offsets = [12, 0], sizes = [1, 128], strides = [1, 1]} : vector<16x128xf32> to vector<1x128xf32>
    %1355 = vector.broadcast %1354 : vector<1x128xf32> to vector<16x128xf32>
    %1356 = arith.mulf %1353, %1355 : vector<16x128xf32>
    %1357 = arith.addf %1333, %1356 : vector<16x128xf32>
    %1358 = vector.extract_strided_slice %0 {offsets = [13, 0, 0], sizes = [1, 16, 128], strides = [1, 1, 1]} : vector<16x16x128xf32> to vector<1x16x128xf32>
    %1359 = vector.shape_cast %1358 : vector<1x16x128xf32> to vector<16x128xf32>
    %1360 = vector.extract_strided_slice %1283 {offsets = [13, 0], sizes = [1, 128], strides = [1, 1]} : vector<16x128xf32> to vector<1x128xf32>
    %1361 = vector.broadcast %1360 : vector<1x128xf32> to vector<16x128xf32>
    %1362 = arith.mulf %1359, %1361 : vector<16x128xf32>
    %1363 = arith.addf %1339, %1362 : vector<16x128xf32>
    %1364 = vector.extract_strided_slice %0 {offsets = [14, 0, 0], sizes = [1, 16, 128], strides = [1, 1, 1]} : vector<16x16x128xf32> to vector<1x16x128xf32>
    %1365 = vector.shape_cast %1364 : vector<1x16x128xf32> to vector<16x128xf32>
    %1366 = vector.extract_strided_slice %1283 {offsets = [14, 0], sizes = [1, 128], strides = [1, 1]} : vector<16x128xf32> to vector<1x128xf32>
    %1367 = vector.broadcast %1366 : vector<1x128xf32> to vector<16x128xf32>
    %1368 = arith.mulf %1365, %1367 : vector<16x128xf32>
    %1369 = arith.addf %1345, %1368 : vector<16x128xf32>
    %1370 = vector.extract_strided_slice %0 {offsets = [15, 0, 0], sizes = [1, 16, 128], strides = [1, 1, 1]} : vector<16x16x128xf32> to vector<1x16x128xf32>
    %1371 = vector.shape_cast %1370 : vector<1x16x128xf32> to vector<16x128xf32>
    %1372 = vector.extract_strided_slice %1283 {offsets = [15, 0], sizes = [1, 128], strides = [1, 1]} : vector<16x128xf32> to vector<1x128xf32>
    %1373 = vector.broadcast %1372 : vector<1x128xf32> to vector<16x128xf32>
    %1374 = arith.mulf %1371, %1373 : vector<16x128xf32>
    %1375 = arith.addf %1351, %1374 : vector<16x128xf32>
    %1376 = arith.addf %1357, %1363 : vector<16x128xf32>
    %1377 = arith.addf %1376, %1369 : vector<16x128xf32>
    %1378 = arith.addf %1377, %1375 : vector<16x128xf32>
    %1379 = arith.mulf %1283, %1378 : vector<16x128xf32>
    %cst_59 = arith.constant dense<0.000000e+00> : vector<128xf32>
    %1380 = vector.multi_reduction <add>, %1379, %cst_59 [0] : vector<16x128xf32> to vector<128xf32>
    %1381 = vector.shape_cast %1380 : vector<128xf32> to vector<1x128xf32>
    %1382 = arith.mulf %1178, %1283 : vector<16x128xf32>
    %cst_60 = arith.constant dense<0.000000e+00> : vector<128xf32>
    %1383 = vector.multi_reduction <add>, %1382, %cst_60 [0] : vector<16x128xf32> to vector<128xf32>
    %1384 = vector.shape_cast %1383 : vector<128xf32> to vector<1x128xf32>
    %cst_61 = arith.constant 1.000000e-30 : f32
    %1385 = vector.broadcast %cst_61 : f32 to vector<1x128xf32>
    %1386 = arith.cmpf ogt, %1381, %1385 : vector<1x128xf32>
    %cst_62 = arith.constant 0.000000e+00 : f32
    %1387 = vector.broadcast %cst_62 : f32 to vector<1x128xf32>
    %1388 = arith.subf %1387, %1384 : vector<1x128xf32>
    %cst_63 = arith.constant 1.000000e+00 : f32
    %1389 = vector.broadcast %cst_63 : f32 to vector<1x128xf32>
    %1390 = arith.select %1386, %1381, %1389 : vector<1x128xi1>, vector<1x128xf32>
    %1391 = arith.divf %1388, %1390 : vector<1x128xf32>
    %cst_64 = arith.constant 0.000000e+00 : f32
    %1392 = vector.broadcast %cst_64 : f32 to vector<1x128xf32>
    %1393 = arith.select %1386, %1391, %1392 : vector<1x128xi1>, vector<1x128xf32>
    %1394 = vector.broadcast %1393 : vector<1x128xf32> to vector<16x128xf32>
    %1395 = arith.mulf %1394, %1283 : vector<16x128xf32>
    %1396 = arith.addf %1175, %1395 : vector<16x128xf32>
    %1397 = vector.broadcast %1393 : vector<1x128xf32> to vector<16x128xf32>
    %1398 = arith.mulf %1397, %1378 : vector<16x128xf32>
    %1399 = arith.addf %1178, %1398 : vector<16x128xf32>
    %1400 = arith.subf %1399, %1178 : vector<16x128xf32>
    %1401 = arith.mulf %1395, %1400 : vector<16x128xf32>
    %cst_65 = arith.constant dense<0.000000e+00> : vector<128xf32>
    %1402 = vector.multi_reduction <add>, %1401, %cst_65 [0] : vector<16x128xf32> to vector<128xf32>
    %1403 = vector.shape_cast %1402 : vector<128xf32> to vector<1x128xf32>
    %1404 = vector.extract_strided_slice %1170 {offsets = [0, 0, 0], sizes = [1, 16, 128], strides = [1, 1, 1]} : vector<16x16x128xf32> to vector<1x16x128xf32>
    %1405 = vector.shape_cast %1404 : vector<1x16x128xf32> to vector<16x128xf32>
    %1406 = vector.extract_strided_slice %1400 {offsets = [0, 0], sizes = [1, 128], strides = [1, 1]} : vector<16x128xf32> to vector<1x128xf32>
    %1407 = vector.broadcast %1406 : vector<1x128xf32> to vector<16x128xf32>
    %1408 = arith.mulf %1405, %1407 : vector<16x128xf32>
    %1409 = vector.extract_strided_slice %1170 {offsets = [1, 0, 0], sizes = [1, 16, 128], strides = [1, 1, 1]} : vector<16x16x128xf32> to vector<1x16x128xf32>
    %1410 = vector.shape_cast %1409 : vector<1x16x128xf32> to vector<16x128xf32>
    %1411 = vector.extract_strided_slice %1400 {offsets = [1, 0], sizes = [1, 128], strides = [1, 1]} : vector<16x128xf32> to vector<1x128xf32>
    %1412 = vector.broadcast %1411 : vector<1x128xf32> to vector<16x128xf32>
    %1413 = arith.mulf %1410, %1412 : vector<16x128xf32>
    %1414 = vector.extract_strided_slice %1170 {offsets = [2, 0, 0], sizes = [1, 16, 128], strides = [1, 1, 1]} : vector<16x16x128xf32> to vector<1x16x128xf32>
    %1415 = vector.shape_cast %1414 : vector<1x16x128xf32> to vector<16x128xf32>
    %1416 = vector.extract_strided_slice %1400 {offsets = [2, 0], sizes = [1, 128], strides = [1, 1]} : vector<16x128xf32> to vector<1x128xf32>
    %1417 = vector.broadcast %1416 : vector<1x128xf32> to vector<16x128xf32>
    %1418 = arith.mulf %1415, %1417 : vector<16x128xf32>
    %1419 = vector.extract_strided_slice %1170 {offsets = [3, 0, 0], sizes = [1, 16, 128], strides = [1, 1, 1]} : vector<16x16x128xf32> to vector<1x16x128xf32>
    %1420 = vector.shape_cast %1419 : vector<1x16x128xf32> to vector<16x128xf32>
    %1421 = vector.extract_strided_slice %1400 {offsets = [3, 0], sizes = [1, 128], strides = [1, 1]} : vector<16x128xf32> to vector<1x128xf32>
    %1422 = vector.broadcast %1421 : vector<1x128xf32> to vector<16x128xf32>
    %1423 = arith.mulf %1420, %1422 : vector<16x128xf32>
    %1424 = vector.extract_strided_slice %1170 {offsets = [4, 0, 0], sizes = [1, 16, 128], strides = [1, 1, 1]} : vector<16x16x128xf32> to vector<1x16x128xf32>
    %1425 = vector.shape_cast %1424 : vector<1x16x128xf32> to vector<16x128xf32>
    %1426 = vector.extract_strided_slice %1400 {offsets = [4, 0], sizes = [1, 128], strides = [1, 1]} : vector<16x128xf32> to vector<1x128xf32>
    %1427 = vector.broadcast %1426 : vector<1x128xf32> to vector<16x128xf32>
    %1428 = arith.mulf %1425, %1427 : vector<16x128xf32>
    %1429 = arith.addf %1408, %1428 : vector<16x128xf32>
    %1430 = vector.extract_strided_slice %1170 {offsets = [5, 0, 0], sizes = [1, 16, 128], strides = [1, 1, 1]} : vector<16x16x128xf32> to vector<1x16x128xf32>
    %1431 = vector.shape_cast %1430 : vector<1x16x128xf32> to vector<16x128xf32>
    %1432 = vector.extract_strided_slice %1400 {offsets = [5, 0], sizes = [1, 128], strides = [1, 1]} : vector<16x128xf32> to vector<1x128xf32>
    %1433 = vector.broadcast %1432 : vector<1x128xf32> to vector<16x128xf32>
    %1434 = arith.mulf %1431, %1433 : vector<16x128xf32>
    %1435 = arith.addf %1413, %1434 : vector<16x128xf32>
    %1436 = vector.extract_strided_slice %1170 {offsets = [6, 0, 0], sizes = [1, 16, 128], strides = [1, 1, 1]} : vector<16x16x128xf32> to vector<1x16x128xf32>
    %1437 = vector.shape_cast %1436 : vector<1x16x128xf32> to vector<16x128xf32>
    %1438 = vector.extract_strided_slice %1400 {offsets = [6, 0], sizes = [1, 128], strides = [1, 1]} : vector<16x128xf32> to vector<1x128xf32>
    %1439 = vector.broadcast %1438 : vector<1x128xf32> to vector<16x128xf32>
    %1440 = arith.mulf %1437, %1439 : vector<16x128xf32>
    %1441 = arith.addf %1418, %1440 : vector<16x128xf32>
    %1442 = vector.extract_strided_slice %1170 {offsets = [7, 0, 0], sizes = [1, 16, 128], strides = [1, 1, 1]} : vector<16x16x128xf32> to vector<1x16x128xf32>
    %1443 = vector.shape_cast %1442 : vector<1x16x128xf32> to vector<16x128xf32>
    %1444 = vector.extract_strided_slice %1400 {offsets = [7, 0], sizes = [1, 128], strides = [1, 1]} : vector<16x128xf32> to vector<1x128xf32>
    %1445 = vector.broadcast %1444 : vector<1x128xf32> to vector<16x128xf32>
    %1446 = arith.mulf %1443, %1445 : vector<16x128xf32>
    %1447 = arith.addf %1423, %1446 : vector<16x128xf32>
    %1448 = vector.extract_strided_slice %1170 {offsets = [8, 0, 0], sizes = [1, 16, 128], strides = [1, 1, 1]} : vector<16x16x128xf32> to vector<1x16x128xf32>
    %1449 = vector.shape_cast %1448 : vector<1x16x128xf32> to vector<16x128xf32>
    %1450 = vector.extract_strided_slice %1400 {offsets = [8, 0], sizes = [1, 128], strides = [1, 1]} : vector<16x128xf32> to vector<1x128xf32>
    %1451 = vector.broadcast %1450 : vector<1x128xf32> to vector<16x128xf32>
    %1452 = arith.mulf %1449, %1451 : vector<16x128xf32>
    %1453 = arith.addf %1429, %1452 : vector<16x128xf32>
    %1454 = vector.extract_strided_slice %1170 {offsets = [9, 0, 0], sizes = [1, 16, 128], strides = [1, 1, 1]} : vector<16x16x128xf32> to vector<1x16x128xf32>
    %1455 = vector.shape_cast %1454 : vector<1x16x128xf32> to vector<16x128xf32>
    %1456 = vector.extract_strided_slice %1400 {offsets = [9, 0], sizes = [1, 128], strides = [1, 1]} : vector<16x128xf32> to vector<1x128xf32>
    %1457 = vector.broadcast %1456 : vector<1x128xf32> to vector<16x128xf32>
    %1458 = arith.mulf %1455, %1457 : vector<16x128xf32>
    %1459 = arith.addf %1435, %1458 : vector<16x128xf32>
    %1460 = vector.extract_strided_slice %1170 {offsets = [10, 0, 0], sizes = [1, 16, 128], strides = [1, 1, 1]} : vector<16x16x128xf32> to vector<1x16x128xf32>
    %1461 = vector.shape_cast %1460 : vector<1x16x128xf32> to vector<16x128xf32>
    %1462 = vector.extract_strided_slice %1400 {offsets = [10, 0], sizes = [1, 128], strides = [1, 1]} : vector<16x128xf32> to vector<1x128xf32>
    %1463 = vector.broadcast %1462 : vector<1x128xf32> to vector<16x128xf32>
    %1464 = arith.mulf %1461, %1463 : vector<16x128xf32>
    %1465 = arith.addf %1441, %1464 : vector<16x128xf32>
    %1466 = vector.extract_strided_slice %1170 {offsets = [11, 0, 0], sizes = [1, 16, 128], strides = [1, 1, 1]} : vector<16x16x128xf32> to vector<1x16x128xf32>
    %1467 = vector.shape_cast %1466 : vector<1x16x128xf32> to vector<16x128xf32>
    %1468 = vector.extract_strided_slice %1400 {offsets = [11, 0], sizes = [1, 128], strides = [1, 1]} : vector<16x128xf32> to vector<1x128xf32>
    %1469 = vector.broadcast %1468 : vector<1x128xf32> to vector<16x128xf32>
    %1470 = arith.mulf %1467, %1469 : vector<16x128xf32>
    %1471 = arith.addf %1447, %1470 : vector<16x128xf32>
    %1472 = vector.extract_strided_slice %1170 {offsets = [12, 0, 0], sizes = [1, 16, 128], strides = [1, 1, 1]} : vector<16x16x128xf32> to vector<1x16x128xf32>
    %1473 = vector.shape_cast %1472 : vector<1x16x128xf32> to vector<16x128xf32>
    %1474 = vector.extract_strided_slice %1400 {offsets = [12, 0], sizes = [1, 128], strides = [1, 1]} : vector<16x128xf32> to vector<1x128xf32>
    %1475 = vector.broadcast %1474 : vector<1x128xf32> to vector<16x128xf32>
    %1476 = arith.mulf %1473, %1475 : vector<16x128xf32>
    %1477 = arith.addf %1453, %1476 : vector<16x128xf32>
    %1478 = vector.extract_strided_slice %1170 {offsets = [13, 0, 0], sizes = [1, 16, 128], strides = [1, 1, 1]} : vector<16x16x128xf32> to vector<1x16x128xf32>
    %1479 = vector.shape_cast %1478 : vector<1x16x128xf32> to vector<16x128xf32>
    %1480 = vector.extract_strided_slice %1400 {offsets = [13, 0], sizes = [1, 128], strides = [1, 1]} : vector<16x128xf32> to vector<1x128xf32>
    %1481 = vector.broadcast %1480 : vector<1x128xf32> to vector<16x128xf32>
    %1482 = arith.mulf %1479, %1481 : vector<16x128xf32>
    %1483 = arith.addf %1459, %1482 : vector<16x128xf32>
    %1484 = vector.extract_strided_slice %1170 {offsets = [14, 0, 0], sizes = [1, 16, 128], strides = [1, 1, 1]} : vector<16x16x128xf32> to vector<1x16x128xf32>
    %1485 = vector.shape_cast %1484 : vector<1x16x128xf32> to vector<16x128xf32>
    %1486 = vector.extract_strided_slice %1400 {offsets = [14, 0], sizes = [1, 128], strides = [1, 1]} : vector<16x128xf32> to vector<1x128xf32>
    %1487 = vector.broadcast %1486 : vector<1x128xf32> to vector<16x128xf32>
    %1488 = arith.mulf %1485, %1487 : vector<16x128xf32>
    %1489 = arith.addf %1465, %1488 : vector<16x128xf32>
    %1490 = vector.extract_strided_slice %1170 {offsets = [15, 0, 0], sizes = [1, 16, 128], strides = [1, 1, 1]} : vector<16x16x128xf32> to vector<1x16x128xf32>
    %1491 = vector.shape_cast %1490 : vector<1x16x128xf32> to vector<16x128xf32>
    %1492 = vector.extract_strided_slice %1400 {offsets = [15, 0], sizes = [1, 128], strides = [1, 1]} : vector<16x128xf32> to vector<1x128xf32>
    %1493 = vector.broadcast %1492 : vector<1x128xf32> to vector<16x128xf32>
    %1494 = arith.mulf %1491, %1493 : vector<16x128xf32>
    %1495 = arith.addf %1471, %1494 : vector<16x128xf32>
    %1496 = arith.addf %1477, %1483 : vector<16x128xf32>
    %1497 = arith.addf %1496, %1489 : vector<16x128xf32>
    %1498 = arith.addf %1497, %1495 : vector<16x128xf32>
    %1499 = arith.mulf %1400, %1498 : vector<16x128xf32>
    %cst_66 = arith.constant dense<0.000000e+00> : vector<128xf32>
    %1500 = vector.multi_reduction <add>, %1499, %cst_66 [0] : vector<16x128xf32> to vector<128xf32>
    %1501 = vector.shape_cast %1500 : vector<128xf32> to vector<1x128xf32>
    %cst_67 = arith.constant 0.000000e+00 : f32
    %1502 = vector.broadcast %cst_67 : f32 to vector<1x128xf32>
    %1503 = arith.cmpf one, %1403, %1502 : vector<1x128xf32>
    %cst_68 = arith.constant 1.000000e+00 : f32
    %1504 = vector.broadcast %cst_68 : f32 to vector<1x128xf32>
    %1505 = arith.select %1503, %1403, %1504 : vector<1x128xi1>, vector<1x128xf32>
    %cst_69 = arith.constant 1.000000e+00 : f32
    %1506 = vector.broadcast %cst_69 : f32 to vector<1x128xf32>
    %1507 = arith.divf %1506, %1505 : vector<1x128xf32>
    %cst_70 = arith.constant 0.000000e+00 : f32
    %1508 = vector.broadcast %cst_70 : f32 to vector<1x128xf32>
    %1509 = arith.select %1503, %1507, %1508 : vector<1x128xi1>, vector<1x128xf32>
    %1510 = arith.addf %1403, %1501 : vector<1x128xf32>
    %1511 = arith.mulf %1510, %1509 : vector<1x128xf32>
    %1512 = arith.mulf %1511, %1509 : vector<1x128xf32>
    %1513 = vector.broadcast %1512 : vector<1x128xf32> to vector<16x128xf32>
    %1514 = arith.mulf %1513, %1395 : vector<16x128xf32>
    %1515 = vector.broadcast %1509 : vector<1x128xf32> to vector<16x128xf32>
    %1516 = arith.mulf %1515, %1498 : vector<16x128xf32>
    %1517 = arith.subf %1514, %1516 : vector<16x128xf32>
    %1518 = vector.broadcast %1509 : vector<1x128xf32> to vector<16x128xf32>
    %1519 = arith.mulf %1518, %1498 : vector<16x128xf32>
    %1520 = vector.shape_cast %1395 : vector<16x128xf32> to vector<16x1x128xf32>
    %1521 = vector.shape_cast %1517 : vector<16x128xf32> to vector<1x16x128xf32>
    %1522 = vector.broadcast %1520 : vector<16x1x128xf32> to vector<16x16x128xf32>
    %1523 = vector.broadcast %1521 : vector<1x16x128xf32> to vector<16x16x128xf32>
    %1524 = arith.mulf %1522, %1523 : vector<16x16x128xf32>
    %1525 = vector.shape_cast %1519 : vector<16x128xf32> to vector<16x1x128xf32>
    %1526 = vector.shape_cast %1395 : vector<16x128xf32> to vector<1x16x128xf32>
    %1527 = vector.broadcast %1525 : vector<16x1x128xf32> to vector<16x16x128xf32>
    %1528 = vector.broadcast %1526 : vector<1x16x128xf32> to vector<16x16x128xf32>
    %1529 = arith.mulf %1527, %1528 : vector<16x16x128xf32>
    %1530 = arith.subf %1524, %1529 : vector<16x16x128xf32>
    %1531 = arith.addf %1170, %1530 : vector<16x16x128xf32>
    %cst_71 = arith.constant 5.000000e-01 : f32
    %1532 = vector.broadcast %cst_71 : f32 to vector<1x128xf32>
    %1533 = arith.cmpf ogt, %1186, %1532 : vector<1x128xf32>
    %1534 = vector.shape_cast %1533 : vector<1x128xi1> to vector<1x128xi1>
    %1535 = vector.broadcast %1534 : vector<1x128xi1> to vector<16x128xi1>
    %1536 = arith.select %1535, %1396, %1175 : vector<16x128xi1>, vector<16x128xf32>
    %1537 = vector.shape_cast %1533 : vector<1x128xi1> to vector<1x128xi1>
    %1538 = vector.broadcast %1537 : vector<1x128xi1> to vector<16x128xi1>
    %1539 = arith.select %1538, %1399, %1178 : vector<16x128xi1>, vector<16x128xf32>
    %1540 = arith.mulf %1539, %1539 : vector<16x128xf32>
    %cst_72 = arith.constant dense<0.000000e+00> : vector<128xf32>
    %1541 = vector.multi_reduction <add>, %1540, %cst_72 [0] : vector<16x128xf32> to vector<128xf32>
    %1542 = vector.shape_cast %1541 : vector<128xf32> to vector<1x128xf32>
    %cst_73 = arith.constant 9.99999997E-7 : f32
    %1543 = vector.broadcast %cst_73 : f32 to vector<1x128xf32>
    %1544 = arith.cmpf ogt, %1542, %1543 : vector<1x128xf32>
    %1545 = arith.andi %1533, %1544 : vector<1x128xi1>
    %1546 = arith.extui %1545 : vector<1x128xi1> to vector<1x128xi32>
    %1547 = arith.sitofp %1546 : vector<1x128xi32> to vector<1x128xf32>
    %c4_i32 = arith.constant 4 : i32
    %1548 = vector.extract_strided_slice %1531 {offsets = [0, 0, 0], sizes = [1, 16, 128], strides = [1, 1, 1]} : vector<16x16x128xf32> to vector<1x16x128xf32>
    %1549 = vector.shape_cast %1548 : vector<1x16x128xf32> to vector<16x128xf32>
    %1550 = vector.extract_strided_slice %1539 {offsets = [0, 0], sizes = [1, 128], strides = [1, 1]} : vector<16x128xf32> to vector<1x128xf32>
    %1551 = vector.broadcast %1550 : vector<1x128xf32> to vector<16x128xf32>
    %1552 = arith.mulf %1549, %1551 : vector<16x128xf32>
    %1553 = vector.extract_strided_slice %1531 {offsets = [1, 0, 0], sizes = [1, 16, 128], strides = [1, 1, 1]} : vector<16x16x128xf32> to vector<1x16x128xf32>
    %1554 = vector.shape_cast %1553 : vector<1x16x128xf32> to vector<16x128xf32>
    %1555 = vector.extract_strided_slice %1539 {offsets = [1, 0], sizes = [1, 128], strides = [1, 1]} : vector<16x128xf32> to vector<1x128xf32>
    %1556 = vector.broadcast %1555 : vector<1x128xf32> to vector<16x128xf32>
    %1557 = arith.mulf %1554, %1556 : vector<16x128xf32>
    %1558 = vector.extract_strided_slice %1531 {offsets = [2, 0, 0], sizes = [1, 16, 128], strides = [1, 1, 1]} : vector<16x16x128xf32> to vector<1x16x128xf32>
    %1559 = vector.shape_cast %1558 : vector<1x16x128xf32> to vector<16x128xf32>
    %1560 = vector.extract_strided_slice %1539 {offsets = [2, 0], sizes = [1, 128], strides = [1, 1]} : vector<16x128xf32> to vector<1x128xf32>
    %1561 = vector.broadcast %1560 : vector<1x128xf32> to vector<16x128xf32>
    %1562 = arith.mulf %1559, %1561 : vector<16x128xf32>
    %1563 = vector.extract_strided_slice %1531 {offsets = [3, 0, 0], sizes = [1, 16, 128], strides = [1, 1, 1]} : vector<16x16x128xf32> to vector<1x16x128xf32>
    %1564 = vector.shape_cast %1563 : vector<1x16x128xf32> to vector<16x128xf32>
    %1565 = vector.extract_strided_slice %1539 {offsets = [3, 0], sizes = [1, 128], strides = [1, 1]} : vector<16x128xf32> to vector<1x128xf32>
    %1566 = vector.broadcast %1565 : vector<1x128xf32> to vector<16x128xf32>
    %1567 = arith.mulf %1564, %1566 : vector<16x128xf32>
    %1568 = vector.extract_strided_slice %1531 {offsets = [4, 0, 0], sizes = [1, 16, 128], strides = [1, 1, 1]} : vector<16x16x128xf32> to vector<1x16x128xf32>
    %1569 = vector.shape_cast %1568 : vector<1x16x128xf32> to vector<16x128xf32>
    %1570 = vector.extract_strided_slice %1539 {offsets = [4, 0], sizes = [1, 128], strides = [1, 1]} : vector<16x128xf32> to vector<1x128xf32>
    %1571 = vector.broadcast %1570 : vector<1x128xf32> to vector<16x128xf32>
    %1572 = arith.mulf %1569, %1571 : vector<16x128xf32>
    %1573 = arith.addf %1552, %1572 : vector<16x128xf32>
    %1574 = vector.extract_strided_slice %1531 {offsets = [5, 0, 0], sizes = [1, 16, 128], strides = [1, 1, 1]} : vector<16x16x128xf32> to vector<1x16x128xf32>
    %1575 = vector.shape_cast %1574 : vector<1x16x128xf32> to vector<16x128xf32>
    %1576 = vector.extract_strided_slice %1539 {offsets = [5, 0], sizes = [1, 128], strides = [1, 1]} : vector<16x128xf32> to vector<1x128xf32>
    %1577 = vector.broadcast %1576 : vector<1x128xf32> to vector<16x128xf32>
    %1578 = arith.mulf %1575, %1577 : vector<16x128xf32>
    %1579 = arith.addf %1557, %1578 : vector<16x128xf32>
    %1580 = vector.extract_strided_slice %1531 {offsets = [6, 0, 0], sizes = [1, 16, 128], strides = [1, 1, 1]} : vector<16x16x128xf32> to vector<1x16x128xf32>
    %1581 = vector.shape_cast %1580 : vector<1x16x128xf32> to vector<16x128xf32>
    %1582 = vector.extract_strided_slice %1539 {offsets = [6, 0], sizes = [1, 128], strides = [1, 1]} : vector<16x128xf32> to vector<1x128xf32>
    %1583 = vector.broadcast %1582 : vector<1x128xf32> to vector<16x128xf32>
    %1584 = arith.mulf %1581, %1583 : vector<16x128xf32>
    %1585 = arith.addf %1562, %1584 : vector<16x128xf32>
    %1586 = vector.extract_strided_slice %1531 {offsets = [7, 0, 0], sizes = [1, 16, 128], strides = [1, 1, 1]} : vector<16x16x128xf32> to vector<1x16x128xf32>
    %1587 = vector.shape_cast %1586 : vector<1x16x128xf32> to vector<16x128xf32>
    %1588 = vector.extract_strided_slice %1539 {offsets = [7, 0], sizes = [1, 128], strides = [1, 1]} : vector<16x128xf32> to vector<1x128xf32>
    %1589 = vector.broadcast %1588 : vector<1x128xf32> to vector<16x128xf32>
    %1590 = arith.mulf %1587, %1589 : vector<16x128xf32>
    %1591 = arith.addf %1567, %1590 : vector<16x128xf32>
    %1592 = vector.extract_strided_slice %1531 {offsets = [8, 0, 0], sizes = [1, 16, 128], strides = [1, 1, 1]} : vector<16x16x128xf32> to vector<1x16x128xf32>
    %1593 = vector.shape_cast %1592 : vector<1x16x128xf32> to vector<16x128xf32>
    %1594 = vector.extract_strided_slice %1539 {offsets = [8, 0], sizes = [1, 128], strides = [1, 1]} : vector<16x128xf32> to vector<1x128xf32>
    %1595 = vector.broadcast %1594 : vector<1x128xf32> to vector<16x128xf32>
    %1596 = arith.mulf %1593, %1595 : vector<16x128xf32>
    %1597 = arith.addf %1573, %1596 : vector<16x128xf32>
    %1598 = vector.extract_strided_slice %1531 {offsets = [9, 0, 0], sizes = [1, 16, 128], strides = [1, 1, 1]} : vector<16x16x128xf32> to vector<1x16x128xf32>
    %1599 = vector.shape_cast %1598 : vector<1x16x128xf32> to vector<16x128xf32>
    %1600 = vector.extract_strided_slice %1539 {offsets = [9, 0], sizes = [1, 128], strides = [1, 1]} : vector<16x128xf32> to vector<1x128xf32>
    %1601 = vector.broadcast %1600 : vector<1x128xf32> to vector<16x128xf32>
    %1602 = arith.mulf %1599, %1601 : vector<16x128xf32>
    %1603 = arith.addf %1579, %1602 : vector<16x128xf32>
    %1604 = vector.extract_strided_slice %1531 {offsets = [10, 0, 0], sizes = [1, 16, 128], strides = [1, 1, 1]} : vector<16x16x128xf32> to vector<1x16x128xf32>
    %1605 = vector.shape_cast %1604 : vector<1x16x128xf32> to vector<16x128xf32>
    %1606 = vector.extract_strided_slice %1539 {offsets = [10, 0], sizes = [1, 128], strides = [1, 1]} : vector<16x128xf32> to vector<1x128xf32>
    %1607 = vector.broadcast %1606 : vector<1x128xf32> to vector<16x128xf32>
    %1608 = arith.mulf %1605, %1607 : vector<16x128xf32>
    %1609 = arith.addf %1585, %1608 : vector<16x128xf32>
    %1610 = vector.extract_strided_slice %1531 {offsets = [11, 0, 0], sizes = [1, 16, 128], strides = [1, 1, 1]} : vector<16x16x128xf32> to vector<1x16x128xf32>
    %1611 = vector.shape_cast %1610 : vector<1x16x128xf32> to vector<16x128xf32>
    %1612 = vector.extract_strided_slice %1539 {offsets = [11, 0], sizes = [1, 128], strides = [1, 1]} : vector<16x128xf32> to vector<1x128xf32>
    %1613 = vector.broadcast %1612 : vector<1x128xf32> to vector<16x128xf32>
    %1614 = arith.mulf %1611, %1613 : vector<16x128xf32>
    %1615 = arith.addf %1591, %1614 : vector<16x128xf32>
    %1616 = vector.extract_strided_slice %1531 {offsets = [12, 0, 0], sizes = [1, 16, 128], strides = [1, 1, 1]} : vector<16x16x128xf32> to vector<1x16x128xf32>
    %1617 = vector.shape_cast %1616 : vector<1x16x128xf32> to vector<16x128xf32>
    %1618 = vector.extract_strided_slice %1539 {offsets = [12, 0], sizes = [1, 128], strides = [1, 1]} : vector<16x128xf32> to vector<1x128xf32>
    %1619 = vector.broadcast %1618 : vector<1x128xf32> to vector<16x128xf32>
    %1620 = arith.mulf %1617, %1619 : vector<16x128xf32>
    %1621 = arith.addf %1597, %1620 : vector<16x128xf32>
    %1622 = vector.extract_strided_slice %1531 {offsets = [13, 0, 0], sizes = [1, 16, 128], strides = [1, 1, 1]} : vector<16x16x128xf32> to vector<1x16x128xf32>
    %1623 = vector.shape_cast %1622 : vector<1x16x128xf32> to vector<16x128xf32>
    %1624 = vector.extract_strided_slice %1539 {offsets = [13, 0], sizes = [1, 128], strides = [1, 1]} : vector<16x128xf32> to vector<1x128xf32>
    %1625 = vector.broadcast %1624 : vector<1x128xf32> to vector<16x128xf32>
    %1626 = arith.mulf %1623, %1625 : vector<16x128xf32>
    %1627 = arith.addf %1603, %1626 : vector<16x128xf32>
    %1628 = vector.extract_strided_slice %1531 {offsets = [14, 0, 0], sizes = [1, 16, 128], strides = [1, 1, 1]} : vector<16x16x128xf32> to vector<1x16x128xf32>
    %1629 = vector.shape_cast %1628 : vector<1x16x128xf32> to vector<16x128xf32>
    %1630 = vector.extract_strided_slice %1539 {offsets = [14, 0], sizes = [1, 128], strides = [1, 1]} : vector<16x128xf32> to vector<1x128xf32>
    %1631 = vector.broadcast %1630 : vector<1x128xf32> to vector<16x128xf32>
    %1632 = arith.mulf %1629, %1631 : vector<16x128xf32>
    %1633 = arith.addf %1609, %1632 : vector<16x128xf32>
    %1634 = vector.extract_strided_slice %1531 {offsets = [15, 0, 0], sizes = [1, 16, 128], strides = [1, 1, 1]} : vector<16x16x128xf32> to vector<1x16x128xf32>
    %1635 = vector.shape_cast %1634 : vector<1x16x128xf32> to vector<16x128xf32>
    %1636 = vector.extract_strided_slice %1539 {offsets = [15, 0], sizes = [1, 128], strides = [1, 1]} : vector<16x128xf32> to vector<1x128xf32>
    %1637 = vector.broadcast %1636 : vector<1x128xf32> to vector<16x128xf32>
    %1638 = arith.mulf %1635, %1637 : vector<16x128xf32>
    %1639 = arith.addf %1615, %1638 : vector<16x128xf32>
    %1640 = arith.addf %1621, %1627 : vector<16x128xf32>
    %1641 = arith.addf %1640, %1633 : vector<16x128xf32>
    %1642 = arith.addf %1641, %1639 : vector<16x128xf32>
    %cst_74 = arith.constant 0.000000e+00 : f32
    %1643 = vector.broadcast %cst_74 : f32 to vector<16x128xf32>
    %1644 = arith.subf %1643, %1642 : vector<16x128xf32>
    %1645 = vector.extract_strided_slice %0 {offsets = [0, 0, 0], sizes = [1, 16, 128], strides = [1, 1, 1]} : vector<16x16x128xf32> to vector<1x16x128xf32>
    %1646 = vector.shape_cast %1645 : vector<1x16x128xf32> to vector<16x128xf32>
    %1647 = vector.extract_strided_slice %1644 {offsets = [0, 0], sizes = [1, 128], strides = [1, 1]} : vector<16x128xf32> to vector<1x128xf32>
    %1648 = vector.broadcast %1647 : vector<1x128xf32> to vector<16x128xf32>
    %1649 = arith.mulf %1646, %1648 : vector<16x128xf32>
    %1650 = vector.extract_strided_slice %0 {offsets = [1, 0, 0], sizes = [1, 16, 128], strides = [1, 1, 1]} : vector<16x16x128xf32> to vector<1x16x128xf32>
    %1651 = vector.shape_cast %1650 : vector<1x16x128xf32> to vector<16x128xf32>
    %1652 = vector.extract_strided_slice %1644 {offsets = [1, 0], sizes = [1, 128], strides = [1, 1]} : vector<16x128xf32> to vector<1x128xf32>
    %1653 = vector.broadcast %1652 : vector<1x128xf32> to vector<16x128xf32>
    %1654 = arith.mulf %1651, %1653 : vector<16x128xf32>
    %1655 = vector.extract_strided_slice %0 {offsets = [2, 0, 0], sizes = [1, 16, 128], strides = [1, 1, 1]} : vector<16x16x128xf32> to vector<1x16x128xf32>
    %1656 = vector.shape_cast %1655 : vector<1x16x128xf32> to vector<16x128xf32>
    %1657 = vector.extract_strided_slice %1644 {offsets = [2, 0], sizes = [1, 128], strides = [1, 1]} : vector<16x128xf32> to vector<1x128xf32>
    %1658 = vector.broadcast %1657 : vector<1x128xf32> to vector<16x128xf32>
    %1659 = arith.mulf %1656, %1658 : vector<16x128xf32>
    %1660 = vector.extract_strided_slice %0 {offsets = [3, 0, 0], sizes = [1, 16, 128], strides = [1, 1, 1]} : vector<16x16x128xf32> to vector<1x16x128xf32>
    %1661 = vector.shape_cast %1660 : vector<1x16x128xf32> to vector<16x128xf32>
    %1662 = vector.extract_strided_slice %1644 {offsets = [3, 0], sizes = [1, 128], strides = [1, 1]} : vector<16x128xf32> to vector<1x128xf32>
    %1663 = vector.broadcast %1662 : vector<1x128xf32> to vector<16x128xf32>
    %1664 = arith.mulf %1661, %1663 : vector<16x128xf32>
    %1665 = vector.extract_strided_slice %0 {offsets = [4, 0, 0], sizes = [1, 16, 128], strides = [1, 1, 1]} : vector<16x16x128xf32> to vector<1x16x128xf32>
    %1666 = vector.shape_cast %1665 : vector<1x16x128xf32> to vector<16x128xf32>
    %1667 = vector.extract_strided_slice %1644 {offsets = [4, 0], sizes = [1, 128], strides = [1, 1]} : vector<16x128xf32> to vector<1x128xf32>
    %1668 = vector.broadcast %1667 : vector<1x128xf32> to vector<16x128xf32>
    %1669 = arith.mulf %1666, %1668 : vector<16x128xf32>
    %1670 = arith.addf %1649, %1669 : vector<16x128xf32>
    %1671 = vector.extract_strided_slice %0 {offsets = [5, 0, 0], sizes = [1, 16, 128], strides = [1, 1, 1]} : vector<16x16x128xf32> to vector<1x16x128xf32>
    %1672 = vector.shape_cast %1671 : vector<1x16x128xf32> to vector<16x128xf32>
    %1673 = vector.extract_strided_slice %1644 {offsets = [5, 0], sizes = [1, 128], strides = [1, 1]} : vector<16x128xf32> to vector<1x128xf32>
    %1674 = vector.broadcast %1673 : vector<1x128xf32> to vector<16x128xf32>
    %1675 = arith.mulf %1672, %1674 : vector<16x128xf32>
    %1676 = arith.addf %1654, %1675 : vector<16x128xf32>
    %1677 = vector.extract_strided_slice %0 {offsets = [6, 0, 0], sizes = [1, 16, 128], strides = [1, 1, 1]} : vector<16x16x128xf32> to vector<1x16x128xf32>
    %1678 = vector.shape_cast %1677 : vector<1x16x128xf32> to vector<16x128xf32>
    %1679 = vector.extract_strided_slice %1644 {offsets = [6, 0], sizes = [1, 128], strides = [1, 1]} : vector<16x128xf32> to vector<1x128xf32>
    %1680 = vector.broadcast %1679 : vector<1x128xf32> to vector<16x128xf32>
    %1681 = arith.mulf %1678, %1680 : vector<16x128xf32>
    %1682 = arith.addf %1659, %1681 : vector<16x128xf32>
    %1683 = vector.extract_strided_slice %0 {offsets = [7, 0, 0], sizes = [1, 16, 128], strides = [1, 1, 1]} : vector<16x16x128xf32> to vector<1x16x128xf32>
    %1684 = vector.shape_cast %1683 : vector<1x16x128xf32> to vector<16x128xf32>
    %1685 = vector.extract_strided_slice %1644 {offsets = [7, 0], sizes = [1, 128], strides = [1, 1]} : vector<16x128xf32> to vector<1x128xf32>
    %1686 = vector.broadcast %1685 : vector<1x128xf32> to vector<16x128xf32>
    %1687 = arith.mulf %1684, %1686 : vector<16x128xf32>
    %1688 = arith.addf %1664, %1687 : vector<16x128xf32>
    %1689 = vector.extract_strided_slice %0 {offsets = [8, 0, 0], sizes = [1, 16, 128], strides = [1, 1, 1]} : vector<16x16x128xf32> to vector<1x16x128xf32>
    %1690 = vector.shape_cast %1689 : vector<1x16x128xf32> to vector<16x128xf32>
    %1691 = vector.extract_strided_slice %1644 {offsets = [8, 0], sizes = [1, 128], strides = [1, 1]} : vector<16x128xf32> to vector<1x128xf32>
    %1692 = vector.broadcast %1691 : vector<1x128xf32> to vector<16x128xf32>
    %1693 = arith.mulf %1690, %1692 : vector<16x128xf32>
    %1694 = arith.addf %1670, %1693 : vector<16x128xf32>
    %1695 = vector.extract_strided_slice %0 {offsets = [9, 0, 0], sizes = [1, 16, 128], strides = [1, 1, 1]} : vector<16x16x128xf32> to vector<1x16x128xf32>
    %1696 = vector.shape_cast %1695 : vector<1x16x128xf32> to vector<16x128xf32>
    %1697 = vector.extract_strided_slice %1644 {offsets = [9, 0], sizes = [1, 128], strides = [1, 1]} : vector<16x128xf32> to vector<1x128xf32>
    %1698 = vector.broadcast %1697 : vector<1x128xf32> to vector<16x128xf32>
    %1699 = arith.mulf %1696, %1698 : vector<16x128xf32>
    %1700 = arith.addf %1676, %1699 : vector<16x128xf32>
    %1701 = vector.extract_strided_slice %0 {offsets = [10, 0, 0], sizes = [1, 16, 128], strides = [1, 1, 1]} : vector<16x16x128xf32> to vector<1x16x128xf32>
    %1702 = vector.shape_cast %1701 : vector<1x16x128xf32> to vector<16x128xf32>
    %1703 = vector.extract_strided_slice %1644 {offsets = [10, 0], sizes = [1, 128], strides = [1, 1]} : vector<16x128xf32> to vector<1x128xf32>
    %1704 = vector.broadcast %1703 : vector<1x128xf32> to vector<16x128xf32>
    %1705 = arith.mulf %1702, %1704 : vector<16x128xf32>
    %1706 = arith.addf %1682, %1705 : vector<16x128xf32>
    %1707 = vector.extract_strided_slice %0 {offsets = [11, 0, 0], sizes = [1, 16, 128], strides = [1, 1, 1]} : vector<16x16x128xf32> to vector<1x16x128xf32>
    %1708 = vector.shape_cast %1707 : vector<1x16x128xf32> to vector<16x128xf32>
    %1709 = vector.extract_strided_slice %1644 {offsets = [11, 0], sizes = [1, 128], strides = [1, 1]} : vector<16x128xf32> to vector<1x128xf32>
    %1710 = vector.broadcast %1709 : vector<1x128xf32> to vector<16x128xf32>
    %1711 = arith.mulf %1708, %1710 : vector<16x128xf32>
    %1712 = arith.addf %1688, %1711 : vector<16x128xf32>
    %1713 = vector.extract_strided_slice %0 {offsets = [12, 0, 0], sizes = [1, 16, 128], strides = [1, 1, 1]} : vector<16x16x128xf32> to vector<1x16x128xf32>
    %1714 = vector.shape_cast %1713 : vector<1x16x128xf32> to vector<16x128xf32>
    %1715 = vector.extract_strided_slice %1644 {offsets = [12, 0], sizes = [1, 128], strides = [1, 1]} : vector<16x128xf32> to vector<1x128xf32>
    %1716 = vector.broadcast %1715 : vector<1x128xf32> to vector<16x128xf32>
    %1717 = arith.mulf %1714, %1716 : vector<16x128xf32>
    %1718 = arith.addf %1694, %1717 : vector<16x128xf32>
    %1719 = vector.extract_strided_slice %0 {offsets = [13, 0, 0], sizes = [1, 16, 128], strides = [1, 1, 1]} : vector<16x16x128xf32> to vector<1x16x128xf32>
    %1720 = vector.shape_cast %1719 : vector<1x16x128xf32> to vector<16x128xf32>
    %1721 = vector.extract_strided_slice %1644 {offsets = [13, 0], sizes = [1, 128], strides = [1, 1]} : vector<16x128xf32> to vector<1x128xf32>
    %1722 = vector.broadcast %1721 : vector<1x128xf32> to vector<16x128xf32>
    %1723 = arith.mulf %1720, %1722 : vector<16x128xf32>
    %1724 = arith.addf %1700, %1723 : vector<16x128xf32>
    %1725 = vector.extract_strided_slice %0 {offsets = [14, 0, 0], sizes = [1, 16, 128], strides = [1, 1, 1]} : vector<16x16x128xf32> to vector<1x16x128xf32>
    %1726 = vector.shape_cast %1725 : vector<1x16x128xf32> to vector<16x128xf32>
    %1727 = vector.extract_strided_slice %1644 {offsets = [14, 0], sizes = [1, 128], strides = [1, 1]} : vector<16x128xf32> to vector<1x128xf32>
    %1728 = vector.broadcast %1727 : vector<1x128xf32> to vector<16x128xf32>
    %1729 = arith.mulf %1726, %1728 : vector<16x128xf32>
    %1730 = arith.addf %1706, %1729 : vector<16x128xf32>
    %1731 = vector.extract_strided_slice %0 {offsets = [15, 0, 0], sizes = [1, 16, 128], strides = [1, 1, 1]} : vector<16x16x128xf32> to vector<1x16x128xf32>
    %1732 = vector.shape_cast %1731 : vector<1x16x128xf32> to vector<16x128xf32>
    %1733 = vector.extract_strided_slice %1644 {offsets = [15, 0], sizes = [1, 128], strides = [1, 1]} : vector<16x128xf32> to vector<1x128xf32>
    %1734 = vector.broadcast %1733 : vector<1x128xf32> to vector<16x128xf32>
    %1735 = arith.mulf %1732, %1734 : vector<16x128xf32>
    %1736 = arith.addf %1712, %1735 : vector<16x128xf32>
    %1737 = arith.addf %1718, %1724 : vector<16x128xf32>
    %1738 = arith.addf %1737, %1730 : vector<16x128xf32>
    %1739 = arith.addf %1738, %1736 : vector<16x128xf32>
    %1740 = arith.mulf %1644, %1739 : vector<16x128xf32>
    %cst_75 = arith.constant dense<0.000000e+00> : vector<128xf32>
    %1741 = vector.multi_reduction <add>, %1740, %cst_75 [0] : vector<16x128xf32> to vector<128xf32>
    %1742 = vector.shape_cast %1741 : vector<128xf32> to vector<1x128xf32>
    %1743 = arith.mulf %1539, %1644 : vector<16x128xf32>
    %cst_76 = arith.constant dense<0.000000e+00> : vector<128xf32>
    %1744 = vector.multi_reduction <add>, %1743, %cst_76 [0] : vector<16x128xf32> to vector<128xf32>
    %1745 = vector.shape_cast %1744 : vector<128xf32> to vector<1x128xf32>
    %cst_77 = arith.constant 1.000000e-30 : f32
    %1746 = vector.broadcast %cst_77 : f32 to vector<1x128xf32>
    %1747 = arith.cmpf ogt, %1742, %1746 : vector<1x128xf32>
    %cst_78 = arith.constant 0.000000e+00 : f32
    %1748 = vector.broadcast %cst_78 : f32 to vector<1x128xf32>
    %1749 = arith.subf %1748, %1745 : vector<1x128xf32>
    %cst_79 = arith.constant 1.000000e+00 : f32
    %1750 = vector.broadcast %cst_79 : f32 to vector<1x128xf32>
    %1751 = arith.select %1747, %1742, %1750 : vector<1x128xi1>, vector<1x128xf32>
    %1752 = arith.divf %1749, %1751 : vector<1x128xf32>
    %cst_80 = arith.constant 0.000000e+00 : f32
    %1753 = vector.broadcast %cst_80 : f32 to vector<1x128xf32>
    %1754 = arith.select %1747, %1752, %1753 : vector<1x128xi1>, vector<1x128xf32>
    %1755 = vector.broadcast %1754 : vector<1x128xf32> to vector<16x128xf32>
    %1756 = arith.mulf %1755, %1644 : vector<16x128xf32>
    %1757 = arith.addf %1536, %1756 : vector<16x128xf32>
    %1758 = vector.broadcast %1754 : vector<1x128xf32> to vector<16x128xf32>
    %1759 = arith.mulf %1758, %1739 : vector<16x128xf32>
    %1760 = arith.addf %1539, %1759 : vector<16x128xf32>
    %1761 = arith.subf %1760, %1539 : vector<16x128xf32>
    %1762 = arith.mulf %1756, %1761 : vector<16x128xf32>
    %cst_81 = arith.constant dense<0.000000e+00> : vector<128xf32>
    %1763 = vector.multi_reduction <add>, %1762, %cst_81 [0] : vector<16x128xf32> to vector<128xf32>
    %1764 = vector.shape_cast %1763 : vector<128xf32> to vector<1x128xf32>
    %1765 = vector.extract_strided_slice %1531 {offsets = [0, 0, 0], sizes = [1, 16, 128], strides = [1, 1, 1]} : vector<16x16x128xf32> to vector<1x16x128xf32>
    %1766 = vector.shape_cast %1765 : vector<1x16x128xf32> to vector<16x128xf32>
    %1767 = vector.extract_strided_slice %1761 {offsets = [0, 0], sizes = [1, 128], strides = [1, 1]} : vector<16x128xf32> to vector<1x128xf32>
    %1768 = vector.broadcast %1767 : vector<1x128xf32> to vector<16x128xf32>
    %1769 = arith.mulf %1766, %1768 : vector<16x128xf32>
    %1770 = vector.extract_strided_slice %1531 {offsets = [1, 0, 0], sizes = [1, 16, 128], strides = [1, 1, 1]} : vector<16x16x128xf32> to vector<1x16x128xf32>
    %1771 = vector.shape_cast %1770 : vector<1x16x128xf32> to vector<16x128xf32>
    %1772 = vector.extract_strided_slice %1761 {offsets = [1, 0], sizes = [1, 128], strides = [1, 1]} : vector<16x128xf32> to vector<1x128xf32>
    %1773 = vector.broadcast %1772 : vector<1x128xf32> to vector<16x128xf32>
    %1774 = arith.mulf %1771, %1773 : vector<16x128xf32>
    %1775 = vector.extract_strided_slice %1531 {offsets = [2, 0, 0], sizes = [1, 16, 128], strides = [1, 1, 1]} : vector<16x16x128xf32> to vector<1x16x128xf32>
    %1776 = vector.shape_cast %1775 : vector<1x16x128xf32> to vector<16x128xf32>
    %1777 = vector.extract_strided_slice %1761 {offsets = [2, 0], sizes = [1, 128], strides = [1, 1]} : vector<16x128xf32> to vector<1x128xf32>
    %1778 = vector.broadcast %1777 : vector<1x128xf32> to vector<16x128xf32>
    %1779 = arith.mulf %1776, %1778 : vector<16x128xf32>
    %1780 = vector.extract_strided_slice %1531 {offsets = [3, 0, 0], sizes = [1, 16, 128], strides = [1, 1, 1]} : vector<16x16x128xf32> to vector<1x16x128xf32>
    %1781 = vector.shape_cast %1780 : vector<1x16x128xf32> to vector<16x128xf32>
    %1782 = vector.extract_strided_slice %1761 {offsets = [3, 0], sizes = [1, 128], strides = [1, 1]} : vector<16x128xf32> to vector<1x128xf32>
    %1783 = vector.broadcast %1782 : vector<1x128xf32> to vector<16x128xf32>
    %1784 = arith.mulf %1781, %1783 : vector<16x128xf32>
    %1785 = vector.extract_strided_slice %1531 {offsets = [4, 0, 0], sizes = [1, 16, 128], strides = [1, 1, 1]} : vector<16x16x128xf32> to vector<1x16x128xf32>
    %1786 = vector.shape_cast %1785 : vector<1x16x128xf32> to vector<16x128xf32>
    %1787 = vector.extract_strided_slice %1761 {offsets = [4, 0], sizes = [1, 128], strides = [1, 1]} : vector<16x128xf32> to vector<1x128xf32>
    %1788 = vector.broadcast %1787 : vector<1x128xf32> to vector<16x128xf32>
    %1789 = arith.mulf %1786, %1788 : vector<16x128xf32>
    %1790 = arith.addf %1769, %1789 : vector<16x128xf32>
    %1791 = vector.extract_strided_slice %1531 {offsets = [5, 0, 0], sizes = [1, 16, 128], strides = [1, 1, 1]} : vector<16x16x128xf32> to vector<1x16x128xf32>
    %1792 = vector.shape_cast %1791 : vector<1x16x128xf32> to vector<16x128xf32>
    %1793 = vector.extract_strided_slice %1761 {offsets = [5, 0], sizes = [1, 128], strides = [1, 1]} : vector<16x128xf32> to vector<1x128xf32>
    %1794 = vector.broadcast %1793 : vector<1x128xf32> to vector<16x128xf32>
    %1795 = arith.mulf %1792, %1794 : vector<16x128xf32>
    %1796 = arith.addf %1774, %1795 : vector<16x128xf32>
    %1797 = vector.extract_strided_slice %1531 {offsets = [6, 0, 0], sizes = [1, 16, 128], strides = [1, 1, 1]} : vector<16x16x128xf32> to vector<1x16x128xf32>
    %1798 = vector.shape_cast %1797 : vector<1x16x128xf32> to vector<16x128xf32>
    %1799 = vector.extract_strided_slice %1761 {offsets = [6, 0], sizes = [1, 128], strides = [1, 1]} : vector<16x128xf32> to vector<1x128xf32>
    %1800 = vector.broadcast %1799 : vector<1x128xf32> to vector<16x128xf32>
    %1801 = arith.mulf %1798, %1800 : vector<16x128xf32>
    %1802 = arith.addf %1779, %1801 : vector<16x128xf32>
    %1803 = vector.extract_strided_slice %1531 {offsets = [7, 0, 0], sizes = [1, 16, 128], strides = [1, 1, 1]} : vector<16x16x128xf32> to vector<1x16x128xf32>
    %1804 = vector.shape_cast %1803 : vector<1x16x128xf32> to vector<16x128xf32>
    %1805 = vector.extract_strided_slice %1761 {offsets = [7, 0], sizes = [1, 128], strides = [1, 1]} : vector<16x128xf32> to vector<1x128xf32>
    %1806 = vector.broadcast %1805 : vector<1x128xf32> to vector<16x128xf32>
    %1807 = arith.mulf %1804, %1806 : vector<16x128xf32>
    %1808 = arith.addf %1784, %1807 : vector<16x128xf32>
    %1809 = vector.extract_strided_slice %1531 {offsets = [8, 0, 0], sizes = [1, 16, 128], strides = [1, 1, 1]} : vector<16x16x128xf32> to vector<1x16x128xf32>
    %1810 = vector.shape_cast %1809 : vector<1x16x128xf32> to vector<16x128xf32>
    %1811 = vector.extract_strided_slice %1761 {offsets = [8, 0], sizes = [1, 128], strides = [1, 1]} : vector<16x128xf32> to vector<1x128xf32>
    %1812 = vector.broadcast %1811 : vector<1x128xf32> to vector<16x128xf32>
    %1813 = arith.mulf %1810, %1812 : vector<16x128xf32>
    %1814 = arith.addf %1790, %1813 : vector<16x128xf32>
    %1815 = vector.extract_strided_slice %1531 {offsets = [9, 0, 0], sizes = [1, 16, 128], strides = [1, 1, 1]} : vector<16x16x128xf32> to vector<1x16x128xf32>
    %1816 = vector.shape_cast %1815 : vector<1x16x128xf32> to vector<16x128xf32>
    %1817 = vector.extract_strided_slice %1761 {offsets = [9, 0], sizes = [1, 128], strides = [1, 1]} : vector<16x128xf32> to vector<1x128xf32>
    %1818 = vector.broadcast %1817 : vector<1x128xf32> to vector<16x128xf32>
    %1819 = arith.mulf %1816, %1818 : vector<16x128xf32>
    %1820 = arith.addf %1796, %1819 : vector<16x128xf32>
    %1821 = vector.extract_strided_slice %1531 {offsets = [10, 0, 0], sizes = [1, 16, 128], strides = [1, 1, 1]} : vector<16x16x128xf32> to vector<1x16x128xf32>
    %1822 = vector.shape_cast %1821 : vector<1x16x128xf32> to vector<16x128xf32>
    %1823 = vector.extract_strided_slice %1761 {offsets = [10, 0], sizes = [1, 128], strides = [1, 1]} : vector<16x128xf32> to vector<1x128xf32>
    %1824 = vector.broadcast %1823 : vector<1x128xf32> to vector<16x128xf32>
    %1825 = arith.mulf %1822, %1824 : vector<16x128xf32>
    %1826 = arith.addf %1802, %1825 : vector<16x128xf32>
    %1827 = vector.extract_strided_slice %1531 {offsets = [11, 0, 0], sizes = [1, 16, 128], strides = [1, 1, 1]} : vector<16x16x128xf32> to vector<1x16x128xf32>
    %1828 = vector.shape_cast %1827 : vector<1x16x128xf32> to vector<16x128xf32>
    %1829 = vector.extract_strided_slice %1761 {offsets = [11, 0], sizes = [1, 128], strides = [1, 1]} : vector<16x128xf32> to vector<1x128xf32>
    %1830 = vector.broadcast %1829 : vector<1x128xf32> to vector<16x128xf32>
    %1831 = arith.mulf %1828, %1830 : vector<16x128xf32>
    %1832 = arith.addf %1808, %1831 : vector<16x128xf32>
    %1833 = vector.extract_strided_slice %1531 {offsets = [12, 0, 0], sizes = [1, 16, 128], strides = [1, 1, 1]} : vector<16x16x128xf32> to vector<1x16x128xf32>
    %1834 = vector.shape_cast %1833 : vector<1x16x128xf32> to vector<16x128xf32>
    %1835 = vector.extract_strided_slice %1761 {offsets = [12, 0], sizes = [1, 128], strides = [1, 1]} : vector<16x128xf32> to vector<1x128xf32>
    %1836 = vector.broadcast %1835 : vector<1x128xf32> to vector<16x128xf32>
    %1837 = arith.mulf %1834, %1836 : vector<16x128xf32>
    %1838 = arith.addf %1814, %1837 : vector<16x128xf32>
    %1839 = vector.extract_strided_slice %1531 {offsets = [13, 0, 0], sizes = [1, 16, 128], strides = [1, 1, 1]} : vector<16x16x128xf32> to vector<1x16x128xf32>
    %1840 = vector.shape_cast %1839 : vector<1x16x128xf32> to vector<16x128xf32>
    %1841 = vector.extract_strided_slice %1761 {offsets = [13, 0], sizes = [1, 128], strides = [1, 1]} : vector<16x128xf32> to vector<1x128xf32>
    %1842 = vector.broadcast %1841 : vector<1x128xf32> to vector<16x128xf32>
    %1843 = arith.mulf %1840, %1842 : vector<16x128xf32>
    %1844 = arith.addf %1820, %1843 : vector<16x128xf32>
    %1845 = vector.extract_strided_slice %1531 {offsets = [14, 0, 0], sizes = [1, 16, 128], strides = [1, 1, 1]} : vector<16x16x128xf32> to vector<1x16x128xf32>
    %1846 = vector.shape_cast %1845 : vector<1x16x128xf32> to vector<16x128xf32>
    %1847 = vector.extract_strided_slice %1761 {offsets = [14, 0], sizes = [1, 128], strides = [1, 1]} : vector<16x128xf32> to vector<1x128xf32>
    %1848 = vector.broadcast %1847 : vector<1x128xf32> to vector<16x128xf32>
    %1849 = arith.mulf %1846, %1848 : vector<16x128xf32>
    %1850 = arith.addf %1826, %1849 : vector<16x128xf32>
    %1851 = vector.extract_strided_slice %1531 {offsets = [15, 0, 0], sizes = [1, 16, 128], strides = [1, 1, 1]} : vector<16x16x128xf32> to vector<1x16x128xf32>
    %1852 = vector.shape_cast %1851 : vector<1x16x128xf32> to vector<16x128xf32>
    %1853 = vector.extract_strided_slice %1761 {offsets = [15, 0], sizes = [1, 128], strides = [1, 1]} : vector<16x128xf32> to vector<1x128xf32>
    %1854 = vector.broadcast %1853 : vector<1x128xf32> to vector<16x128xf32>
    %1855 = arith.mulf %1852, %1854 : vector<16x128xf32>
    %1856 = arith.addf %1832, %1855 : vector<16x128xf32>
    %1857 = arith.addf %1838, %1844 : vector<16x128xf32>
    %1858 = arith.addf %1857, %1850 : vector<16x128xf32>
    %1859 = arith.addf %1858, %1856 : vector<16x128xf32>
    %1860 = arith.mulf %1761, %1859 : vector<16x128xf32>
    %cst_82 = arith.constant dense<0.000000e+00> : vector<128xf32>
    %1861 = vector.multi_reduction <add>, %1860, %cst_82 [0] : vector<16x128xf32> to vector<128xf32>
    %1862 = vector.shape_cast %1861 : vector<128xf32> to vector<1x128xf32>
    %cst_83 = arith.constant 0.000000e+00 : f32
    %1863 = vector.broadcast %cst_83 : f32 to vector<1x128xf32>
    %1864 = arith.cmpf one, %1764, %1863 : vector<1x128xf32>
    %cst_84 = arith.constant 1.000000e+00 : f32
    %1865 = vector.broadcast %cst_84 : f32 to vector<1x128xf32>
    %1866 = arith.select %1864, %1764, %1865 : vector<1x128xi1>, vector<1x128xf32>
    %cst_85 = arith.constant 1.000000e+00 : f32
    %1867 = vector.broadcast %cst_85 : f32 to vector<1x128xf32>
    %1868 = arith.divf %1867, %1866 : vector<1x128xf32>
    %cst_86 = arith.constant 0.000000e+00 : f32
    %1869 = vector.broadcast %cst_86 : f32 to vector<1x128xf32>
    %1870 = arith.select %1864, %1868, %1869 : vector<1x128xi1>, vector<1x128xf32>
    %1871 = arith.addf %1764, %1862 : vector<1x128xf32>
    %1872 = arith.mulf %1871, %1870 : vector<1x128xf32>
    %1873 = arith.mulf %1872, %1870 : vector<1x128xf32>
    %1874 = vector.broadcast %1873 : vector<1x128xf32> to vector<16x128xf32>
    %1875 = arith.mulf %1874, %1756 : vector<16x128xf32>
    %1876 = vector.broadcast %1870 : vector<1x128xf32> to vector<16x128xf32>
    %1877 = arith.mulf %1876, %1859 : vector<16x128xf32>
    %1878 = arith.subf %1875, %1877 : vector<16x128xf32>
    %1879 = vector.broadcast %1870 : vector<1x128xf32> to vector<16x128xf32>
    %1880 = arith.mulf %1879, %1859 : vector<16x128xf32>
    %1881 = vector.shape_cast %1756 : vector<16x128xf32> to vector<16x1x128xf32>
    %1882 = vector.shape_cast %1878 : vector<16x128xf32> to vector<1x16x128xf32>
    %1883 = vector.broadcast %1881 : vector<16x1x128xf32> to vector<16x16x128xf32>
    %1884 = vector.broadcast %1882 : vector<1x16x128xf32> to vector<16x16x128xf32>
    %1885 = arith.mulf %1883, %1884 : vector<16x16x128xf32>
    %1886 = vector.shape_cast %1880 : vector<16x128xf32> to vector<16x1x128xf32>
    %1887 = vector.shape_cast %1756 : vector<16x128xf32> to vector<1x16x128xf32>
    %1888 = vector.broadcast %1886 : vector<16x1x128xf32> to vector<16x16x128xf32>
    %1889 = vector.broadcast %1887 : vector<1x16x128xf32> to vector<16x16x128xf32>
    %1890 = arith.mulf %1888, %1889 : vector<16x16x128xf32>
    %1891 = arith.subf %1885, %1890 : vector<16x16x128xf32>
    %1892 = arith.addf %1531, %1891 : vector<16x16x128xf32>
    %cst_87 = arith.constant 5.000000e-01 : f32
    %1893 = vector.broadcast %cst_87 : f32 to vector<1x128xf32>
    %1894 = arith.cmpf ogt, %1547, %1893 : vector<1x128xf32>
    %1895 = vector.shape_cast %1894 : vector<1x128xi1> to vector<1x128xi1>
    %1896 = vector.broadcast %1895 : vector<1x128xi1> to vector<16x128xi1>
    %1897 = arith.select %1896, %1757, %1536 : vector<16x128xi1>, vector<16x128xf32>
    %1898 = vector.shape_cast %1894 : vector<1x128xi1> to vector<1x128xi1>
    %1899 = vector.broadcast %1898 : vector<1x128xi1> to vector<16x128xi1>
    %1900 = arith.select %1899, %1760, %1539 : vector<16x128xi1>, vector<16x128xf32>
    %1901 = arith.mulf %1900, %1900 : vector<16x128xf32>
    %cst_88 = arith.constant dense<0.000000e+00> : vector<128xf32>
    %1902 = vector.multi_reduction <add>, %1901, %cst_88 [0] : vector<16x128xf32> to vector<128xf32>
    %1903 = vector.shape_cast %1902 : vector<128xf32> to vector<1x128xf32>
    %cst_89 = arith.constant 9.99999997E-7 : f32
    %1904 = vector.broadcast %cst_89 : f32 to vector<1x128xf32>
    %1905 = arith.cmpf ogt, %1903, %1904 : vector<1x128xf32>
    %1906 = arith.andi %1894, %1905 : vector<1x128xi1>
    %1907 = arith.extui %1906 : vector<1x128xi1> to vector<1x128xi32>
    %1908 = arith.sitofp %1907 : vector<1x128xi32> to vector<1x128xf32>
    %c5_i32 = arith.constant 5 : i32
    %1909 = vector.extract_strided_slice %1892 {offsets = [0, 0, 0], sizes = [1, 16, 128], strides = [1, 1, 1]} : vector<16x16x128xf32> to vector<1x16x128xf32>
    %1910 = vector.shape_cast %1909 : vector<1x16x128xf32> to vector<16x128xf32>
    %1911 = vector.extract_strided_slice %1900 {offsets = [0, 0], sizes = [1, 128], strides = [1, 1]} : vector<16x128xf32> to vector<1x128xf32>
    %1912 = vector.broadcast %1911 : vector<1x128xf32> to vector<16x128xf32>
    %1913 = arith.mulf %1910, %1912 : vector<16x128xf32>
    %1914 = vector.extract_strided_slice %1892 {offsets = [1, 0, 0], sizes = [1, 16, 128], strides = [1, 1, 1]} : vector<16x16x128xf32> to vector<1x16x128xf32>
    %1915 = vector.shape_cast %1914 : vector<1x16x128xf32> to vector<16x128xf32>
    %1916 = vector.extract_strided_slice %1900 {offsets = [1, 0], sizes = [1, 128], strides = [1, 1]} : vector<16x128xf32> to vector<1x128xf32>
    %1917 = vector.broadcast %1916 : vector<1x128xf32> to vector<16x128xf32>
    %1918 = arith.mulf %1915, %1917 : vector<16x128xf32>
    %1919 = vector.extract_strided_slice %1892 {offsets = [2, 0, 0], sizes = [1, 16, 128], strides = [1, 1, 1]} : vector<16x16x128xf32> to vector<1x16x128xf32>
    %1920 = vector.shape_cast %1919 : vector<1x16x128xf32> to vector<16x128xf32>
    %1921 = vector.extract_strided_slice %1900 {offsets = [2, 0], sizes = [1, 128], strides = [1, 1]} : vector<16x128xf32> to vector<1x128xf32>
    %1922 = vector.broadcast %1921 : vector<1x128xf32> to vector<16x128xf32>
    %1923 = arith.mulf %1920, %1922 : vector<16x128xf32>
    %1924 = vector.extract_strided_slice %1892 {offsets = [3, 0, 0], sizes = [1, 16, 128], strides = [1, 1, 1]} : vector<16x16x128xf32> to vector<1x16x128xf32>
    %1925 = vector.shape_cast %1924 : vector<1x16x128xf32> to vector<16x128xf32>
    %1926 = vector.extract_strided_slice %1900 {offsets = [3, 0], sizes = [1, 128], strides = [1, 1]} : vector<16x128xf32> to vector<1x128xf32>
    %1927 = vector.broadcast %1926 : vector<1x128xf32> to vector<16x128xf32>
    %1928 = arith.mulf %1925, %1927 : vector<16x128xf32>
    %1929 = vector.extract_strided_slice %1892 {offsets = [4, 0, 0], sizes = [1, 16, 128], strides = [1, 1, 1]} : vector<16x16x128xf32> to vector<1x16x128xf32>
    %1930 = vector.shape_cast %1929 : vector<1x16x128xf32> to vector<16x128xf32>
    %1931 = vector.extract_strided_slice %1900 {offsets = [4, 0], sizes = [1, 128], strides = [1, 1]} : vector<16x128xf32> to vector<1x128xf32>
    %1932 = vector.broadcast %1931 : vector<1x128xf32> to vector<16x128xf32>
    %1933 = arith.mulf %1930, %1932 : vector<16x128xf32>
    %1934 = arith.addf %1913, %1933 : vector<16x128xf32>
    %1935 = vector.extract_strided_slice %1892 {offsets = [5, 0, 0], sizes = [1, 16, 128], strides = [1, 1, 1]} : vector<16x16x128xf32> to vector<1x16x128xf32>
    %1936 = vector.shape_cast %1935 : vector<1x16x128xf32> to vector<16x128xf32>
    %1937 = vector.extract_strided_slice %1900 {offsets = [5, 0], sizes = [1, 128], strides = [1, 1]} : vector<16x128xf32> to vector<1x128xf32>
    %1938 = vector.broadcast %1937 : vector<1x128xf32> to vector<16x128xf32>
    %1939 = arith.mulf %1936, %1938 : vector<16x128xf32>
    %1940 = arith.addf %1918, %1939 : vector<16x128xf32>
    %1941 = vector.extract_strided_slice %1892 {offsets = [6, 0, 0], sizes = [1, 16, 128], strides = [1, 1, 1]} : vector<16x16x128xf32> to vector<1x16x128xf32>
    %1942 = vector.shape_cast %1941 : vector<1x16x128xf32> to vector<16x128xf32>
    %1943 = vector.extract_strided_slice %1900 {offsets = [6, 0], sizes = [1, 128], strides = [1, 1]} : vector<16x128xf32> to vector<1x128xf32>
    %1944 = vector.broadcast %1943 : vector<1x128xf32> to vector<16x128xf32>
    %1945 = arith.mulf %1942, %1944 : vector<16x128xf32>
    %1946 = arith.addf %1923, %1945 : vector<16x128xf32>
    %1947 = vector.extract_strided_slice %1892 {offsets = [7, 0, 0], sizes = [1, 16, 128], strides = [1, 1, 1]} : vector<16x16x128xf32> to vector<1x16x128xf32>
    %1948 = vector.shape_cast %1947 : vector<1x16x128xf32> to vector<16x128xf32>
    %1949 = vector.extract_strided_slice %1900 {offsets = [7, 0], sizes = [1, 128], strides = [1, 1]} : vector<16x128xf32> to vector<1x128xf32>
    %1950 = vector.broadcast %1949 : vector<1x128xf32> to vector<16x128xf32>
    %1951 = arith.mulf %1948, %1950 : vector<16x128xf32>
    %1952 = arith.addf %1928, %1951 : vector<16x128xf32>
    %1953 = vector.extract_strided_slice %1892 {offsets = [8, 0, 0], sizes = [1, 16, 128], strides = [1, 1, 1]} : vector<16x16x128xf32> to vector<1x16x128xf32>
    %1954 = vector.shape_cast %1953 : vector<1x16x128xf32> to vector<16x128xf32>
    %1955 = vector.extract_strided_slice %1900 {offsets = [8, 0], sizes = [1, 128], strides = [1, 1]} : vector<16x128xf32> to vector<1x128xf32>
    %1956 = vector.broadcast %1955 : vector<1x128xf32> to vector<16x128xf32>
    %1957 = arith.mulf %1954, %1956 : vector<16x128xf32>
    %1958 = arith.addf %1934, %1957 : vector<16x128xf32>
    %1959 = vector.extract_strided_slice %1892 {offsets = [9, 0, 0], sizes = [1, 16, 128], strides = [1, 1, 1]} : vector<16x16x128xf32> to vector<1x16x128xf32>
    %1960 = vector.shape_cast %1959 : vector<1x16x128xf32> to vector<16x128xf32>
    %1961 = vector.extract_strided_slice %1900 {offsets = [9, 0], sizes = [1, 128], strides = [1, 1]} : vector<16x128xf32> to vector<1x128xf32>
    %1962 = vector.broadcast %1961 : vector<1x128xf32> to vector<16x128xf32>
    %1963 = arith.mulf %1960, %1962 : vector<16x128xf32>
    %1964 = arith.addf %1940, %1963 : vector<16x128xf32>
    %1965 = vector.extract_strided_slice %1892 {offsets = [10, 0, 0], sizes = [1, 16, 128], strides = [1, 1, 1]} : vector<16x16x128xf32> to vector<1x16x128xf32>
    %1966 = vector.shape_cast %1965 : vector<1x16x128xf32> to vector<16x128xf32>
    %1967 = vector.extract_strided_slice %1900 {offsets = [10, 0], sizes = [1, 128], strides = [1, 1]} : vector<16x128xf32> to vector<1x128xf32>
    %1968 = vector.broadcast %1967 : vector<1x128xf32> to vector<16x128xf32>
    %1969 = arith.mulf %1966, %1968 : vector<16x128xf32>
    %1970 = arith.addf %1946, %1969 : vector<16x128xf32>
    %1971 = vector.extract_strided_slice %1892 {offsets = [11, 0, 0], sizes = [1, 16, 128], strides = [1, 1, 1]} : vector<16x16x128xf32> to vector<1x16x128xf32>
    %1972 = vector.shape_cast %1971 : vector<1x16x128xf32> to vector<16x128xf32>
    %1973 = vector.extract_strided_slice %1900 {offsets = [11, 0], sizes = [1, 128], strides = [1, 1]} : vector<16x128xf32> to vector<1x128xf32>
    %1974 = vector.broadcast %1973 : vector<1x128xf32> to vector<16x128xf32>
    %1975 = arith.mulf %1972, %1974 : vector<16x128xf32>
    %1976 = arith.addf %1952, %1975 : vector<16x128xf32>
    %1977 = vector.extract_strided_slice %1892 {offsets = [12, 0, 0], sizes = [1, 16, 128], strides = [1, 1, 1]} : vector<16x16x128xf32> to vector<1x16x128xf32>
    %1978 = vector.shape_cast %1977 : vector<1x16x128xf32> to vector<16x128xf32>
    %1979 = vector.extract_strided_slice %1900 {offsets = [12, 0], sizes = [1, 128], strides = [1, 1]} : vector<16x128xf32> to vector<1x128xf32>
    %1980 = vector.broadcast %1979 : vector<1x128xf32> to vector<16x128xf32>
    %1981 = arith.mulf %1978, %1980 : vector<16x128xf32>
    %1982 = arith.addf %1958, %1981 : vector<16x128xf32>
    %1983 = vector.extract_strided_slice %1892 {offsets = [13, 0, 0], sizes = [1, 16, 128], strides = [1, 1, 1]} : vector<16x16x128xf32> to vector<1x16x128xf32>
    %1984 = vector.shape_cast %1983 : vector<1x16x128xf32> to vector<16x128xf32>
    %1985 = vector.extract_strided_slice %1900 {offsets = [13, 0], sizes = [1, 128], strides = [1, 1]} : vector<16x128xf32> to vector<1x128xf32>
    %1986 = vector.broadcast %1985 : vector<1x128xf32> to vector<16x128xf32>
    %1987 = arith.mulf %1984, %1986 : vector<16x128xf32>
    %1988 = arith.addf %1964, %1987 : vector<16x128xf32>
    %1989 = vector.extract_strided_slice %1892 {offsets = [14, 0, 0], sizes = [1, 16, 128], strides = [1, 1, 1]} : vector<16x16x128xf32> to vector<1x16x128xf32>
    %1990 = vector.shape_cast %1989 : vector<1x16x128xf32> to vector<16x128xf32>
    %1991 = vector.extract_strided_slice %1900 {offsets = [14, 0], sizes = [1, 128], strides = [1, 1]} : vector<16x128xf32> to vector<1x128xf32>
    %1992 = vector.broadcast %1991 : vector<1x128xf32> to vector<16x128xf32>
    %1993 = arith.mulf %1990, %1992 : vector<16x128xf32>
    %1994 = arith.addf %1970, %1993 : vector<16x128xf32>
    %1995 = vector.extract_strided_slice %1892 {offsets = [15, 0, 0], sizes = [1, 16, 128], strides = [1, 1, 1]} : vector<16x16x128xf32> to vector<1x16x128xf32>
    %1996 = vector.shape_cast %1995 : vector<1x16x128xf32> to vector<16x128xf32>
    %1997 = vector.extract_strided_slice %1900 {offsets = [15, 0], sizes = [1, 128], strides = [1, 1]} : vector<16x128xf32> to vector<1x128xf32>
    %1998 = vector.broadcast %1997 : vector<1x128xf32> to vector<16x128xf32>
    %1999 = arith.mulf %1996, %1998 : vector<16x128xf32>
    %2000 = arith.addf %1976, %1999 : vector<16x128xf32>
    %2001 = arith.addf %1982, %1988 : vector<16x128xf32>
    %2002 = arith.addf %2001, %1994 : vector<16x128xf32>
    %2003 = arith.addf %2002, %2000 : vector<16x128xf32>
    %cst_90 = arith.constant 0.000000e+00 : f32
    %2004 = vector.broadcast %cst_90 : f32 to vector<16x128xf32>
    %2005 = arith.subf %2004, %2003 : vector<16x128xf32>
    %2006 = vector.extract_strided_slice %0 {offsets = [0, 0, 0], sizes = [1, 16, 128], strides = [1, 1, 1]} : vector<16x16x128xf32> to vector<1x16x128xf32>
    %2007 = vector.shape_cast %2006 : vector<1x16x128xf32> to vector<16x128xf32>
    %2008 = vector.extract_strided_slice %2005 {offsets = [0, 0], sizes = [1, 128], strides = [1, 1]} : vector<16x128xf32> to vector<1x128xf32>
    %2009 = vector.broadcast %2008 : vector<1x128xf32> to vector<16x128xf32>
    %2010 = arith.mulf %2007, %2009 : vector<16x128xf32>
    %2011 = vector.extract_strided_slice %0 {offsets = [1, 0, 0], sizes = [1, 16, 128], strides = [1, 1, 1]} : vector<16x16x128xf32> to vector<1x16x128xf32>
    %2012 = vector.shape_cast %2011 : vector<1x16x128xf32> to vector<16x128xf32>
    %2013 = vector.extract_strided_slice %2005 {offsets = [1, 0], sizes = [1, 128], strides = [1, 1]} : vector<16x128xf32> to vector<1x128xf32>
    %2014 = vector.broadcast %2013 : vector<1x128xf32> to vector<16x128xf32>
    %2015 = arith.mulf %2012, %2014 : vector<16x128xf32>
    %2016 = vector.extract_strided_slice %0 {offsets = [2, 0, 0], sizes = [1, 16, 128], strides = [1, 1, 1]} : vector<16x16x128xf32> to vector<1x16x128xf32>
    %2017 = vector.shape_cast %2016 : vector<1x16x128xf32> to vector<16x128xf32>
    %2018 = vector.extract_strided_slice %2005 {offsets = [2, 0], sizes = [1, 128], strides = [1, 1]} : vector<16x128xf32> to vector<1x128xf32>
    %2019 = vector.broadcast %2018 : vector<1x128xf32> to vector<16x128xf32>
    %2020 = arith.mulf %2017, %2019 : vector<16x128xf32>
    %2021 = vector.extract_strided_slice %0 {offsets = [3, 0, 0], sizes = [1, 16, 128], strides = [1, 1, 1]} : vector<16x16x128xf32> to vector<1x16x128xf32>
    %2022 = vector.shape_cast %2021 : vector<1x16x128xf32> to vector<16x128xf32>
    %2023 = vector.extract_strided_slice %2005 {offsets = [3, 0], sizes = [1, 128], strides = [1, 1]} : vector<16x128xf32> to vector<1x128xf32>
    %2024 = vector.broadcast %2023 : vector<1x128xf32> to vector<16x128xf32>
    %2025 = arith.mulf %2022, %2024 : vector<16x128xf32>
    %2026 = vector.extract_strided_slice %0 {offsets = [4, 0, 0], sizes = [1, 16, 128], strides = [1, 1, 1]} : vector<16x16x128xf32> to vector<1x16x128xf32>
    %2027 = vector.shape_cast %2026 : vector<1x16x128xf32> to vector<16x128xf32>
    %2028 = vector.extract_strided_slice %2005 {offsets = [4, 0], sizes = [1, 128], strides = [1, 1]} : vector<16x128xf32> to vector<1x128xf32>
    %2029 = vector.broadcast %2028 : vector<1x128xf32> to vector<16x128xf32>
    %2030 = arith.mulf %2027, %2029 : vector<16x128xf32>
    %2031 = arith.addf %2010, %2030 : vector<16x128xf32>
    %2032 = vector.extract_strided_slice %0 {offsets = [5, 0, 0], sizes = [1, 16, 128], strides = [1, 1, 1]} : vector<16x16x128xf32> to vector<1x16x128xf32>
    %2033 = vector.shape_cast %2032 : vector<1x16x128xf32> to vector<16x128xf32>
    %2034 = vector.extract_strided_slice %2005 {offsets = [5, 0], sizes = [1, 128], strides = [1, 1]} : vector<16x128xf32> to vector<1x128xf32>
    %2035 = vector.broadcast %2034 : vector<1x128xf32> to vector<16x128xf32>
    %2036 = arith.mulf %2033, %2035 : vector<16x128xf32>
    %2037 = arith.addf %2015, %2036 : vector<16x128xf32>
    %2038 = vector.extract_strided_slice %0 {offsets = [6, 0, 0], sizes = [1, 16, 128], strides = [1, 1, 1]} : vector<16x16x128xf32> to vector<1x16x128xf32>
    %2039 = vector.shape_cast %2038 : vector<1x16x128xf32> to vector<16x128xf32>
    %2040 = vector.extract_strided_slice %2005 {offsets = [6, 0], sizes = [1, 128], strides = [1, 1]} : vector<16x128xf32> to vector<1x128xf32>
    %2041 = vector.broadcast %2040 : vector<1x128xf32> to vector<16x128xf32>
    %2042 = arith.mulf %2039, %2041 : vector<16x128xf32>
    %2043 = arith.addf %2020, %2042 : vector<16x128xf32>
    %2044 = vector.extract_strided_slice %0 {offsets = [7, 0, 0], sizes = [1, 16, 128], strides = [1, 1, 1]} : vector<16x16x128xf32> to vector<1x16x128xf32>
    %2045 = vector.shape_cast %2044 : vector<1x16x128xf32> to vector<16x128xf32>
    %2046 = vector.extract_strided_slice %2005 {offsets = [7, 0], sizes = [1, 128], strides = [1, 1]} : vector<16x128xf32> to vector<1x128xf32>
    %2047 = vector.broadcast %2046 : vector<1x128xf32> to vector<16x128xf32>
    %2048 = arith.mulf %2045, %2047 : vector<16x128xf32>
    %2049 = arith.addf %2025, %2048 : vector<16x128xf32>
    %2050 = vector.extract_strided_slice %0 {offsets = [8, 0, 0], sizes = [1, 16, 128], strides = [1, 1, 1]} : vector<16x16x128xf32> to vector<1x16x128xf32>
    %2051 = vector.shape_cast %2050 : vector<1x16x128xf32> to vector<16x128xf32>
    %2052 = vector.extract_strided_slice %2005 {offsets = [8, 0], sizes = [1, 128], strides = [1, 1]} : vector<16x128xf32> to vector<1x128xf32>
    %2053 = vector.broadcast %2052 : vector<1x128xf32> to vector<16x128xf32>
    %2054 = arith.mulf %2051, %2053 : vector<16x128xf32>
    %2055 = arith.addf %2031, %2054 : vector<16x128xf32>
    %2056 = vector.extract_strided_slice %0 {offsets = [9, 0, 0], sizes = [1, 16, 128], strides = [1, 1, 1]} : vector<16x16x128xf32> to vector<1x16x128xf32>
    %2057 = vector.shape_cast %2056 : vector<1x16x128xf32> to vector<16x128xf32>
    %2058 = vector.extract_strided_slice %2005 {offsets = [9, 0], sizes = [1, 128], strides = [1, 1]} : vector<16x128xf32> to vector<1x128xf32>
    %2059 = vector.broadcast %2058 : vector<1x128xf32> to vector<16x128xf32>
    %2060 = arith.mulf %2057, %2059 : vector<16x128xf32>
    %2061 = arith.addf %2037, %2060 : vector<16x128xf32>
    %2062 = vector.extract_strided_slice %0 {offsets = [10, 0, 0], sizes = [1, 16, 128], strides = [1, 1, 1]} : vector<16x16x128xf32> to vector<1x16x128xf32>
    %2063 = vector.shape_cast %2062 : vector<1x16x128xf32> to vector<16x128xf32>
    %2064 = vector.extract_strided_slice %2005 {offsets = [10, 0], sizes = [1, 128], strides = [1, 1]} : vector<16x128xf32> to vector<1x128xf32>
    %2065 = vector.broadcast %2064 : vector<1x128xf32> to vector<16x128xf32>
    %2066 = arith.mulf %2063, %2065 : vector<16x128xf32>
    %2067 = arith.addf %2043, %2066 : vector<16x128xf32>
    %2068 = vector.extract_strided_slice %0 {offsets = [11, 0, 0], sizes = [1, 16, 128], strides = [1, 1, 1]} : vector<16x16x128xf32> to vector<1x16x128xf32>
    %2069 = vector.shape_cast %2068 : vector<1x16x128xf32> to vector<16x128xf32>
    %2070 = vector.extract_strided_slice %2005 {offsets = [11, 0], sizes = [1, 128], strides = [1, 1]} : vector<16x128xf32> to vector<1x128xf32>
    %2071 = vector.broadcast %2070 : vector<1x128xf32> to vector<16x128xf32>
    %2072 = arith.mulf %2069, %2071 : vector<16x128xf32>
    %2073 = arith.addf %2049, %2072 : vector<16x128xf32>
    %2074 = vector.extract_strided_slice %0 {offsets = [12, 0, 0], sizes = [1, 16, 128], strides = [1, 1, 1]} : vector<16x16x128xf32> to vector<1x16x128xf32>
    %2075 = vector.shape_cast %2074 : vector<1x16x128xf32> to vector<16x128xf32>
    %2076 = vector.extract_strided_slice %2005 {offsets = [12, 0], sizes = [1, 128], strides = [1, 1]} : vector<16x128xf32> to vector<1x128xf32>
    %2077 = vector.broadcast %2076 : vector<1x128xf32> to vector<16x128xf32>
    %2078 = arith.mulf %2075, %2077 : vector<16x128xf32>
    %2079 = arith.addf %2055, %2078 : vector<16x128xf32>
    %2080 = vector.extract_strided_slice %0 {offsets = [13, 0, 0], sizes = [1, 16, 128], strides = [1, 1, 1]} : vector<16x16x128xf32> to vector<1x16x128xf32>
    %2081 = vector.shape_cast %2080 : vector<1x16x128xf32> to vector<16x128xf32>
    %2082 = vector.extract_strided_slice %2005 {offsets = [13, 0], sizes = [1, 128], strides = [1, 1]} : vector<16x128xf32> to vector<1x128xf32>
    %2083 = vector.broadcast %2082 : vector<1x128xf32> to vector<16x128xf32>
    %2084 = arith.mulf %2081, %2083 : vector<16x128xf32>
    %2085 = arith.addf %2061, %2084 : vector<16x128xf32>
    %2086 = vector.extract_strided_slice %0 {offsets = [14, 0, 0], sizes = [1, 16, 128], strides = [1, 1, 1]} : vector<16x16x128xf32> to vector<1x16x128xf32>
    %2087 = vector.shape_cast %2086 : vector<1x16x128xf32> to vector<16x128xf32>
    %2088 = vector.extract_strided_slice %2005 {offsets = [14, 0], sizes = [1, 128], strides = [1, 1]} : vector<16x128xf32> to vector<1x128xf32>
    %2089 = vector.broadcast %2088 : vector<1x128xf32> to vector<16x128xf32>
    %2090 = arith.mulf %2087, %2089 : vector<16x128xf32>
    %2091 = arith.addf %2067, %2090 : vector<16x128xf32>
    %2092 = vector.extract_strided_slice %0 {offsets = [15, 0, 0], sizes = [1, 16, 128], strides = [1, 1, 1]} : vector<16x16x128xf32> to vector<1x16x128xf32>
    %2093 = vector.shape_cast %2092 : vector<1x16x128xf32> to vector<16x128xf32>
    %2094 = vector.extract_strided_slice %2005 {offsets = [15, 0], sizes = [1, 128], strides = [1, 1]} : vector<16x128xf32> to vector<1x128xf32>
    %2095 = vector.broadcast %2094 : vector<1x128xf32> to vector<16x128xf32>
    %2096 = arith.mulf %2093, %2095 : vector<16x128xf32>
    %2097 = arith.addf %2073, %2096 : vector<16x128xf32>
    %2098 = arith.addf %2079, %2085 : vector<16x128xf32>
    %2099 = arith.addf %2098, %2091 : vector<16x128xf32>
    %2100 = arith.addf %2099, %2097 : vector<16x128xf32>
    %2101 = arith.mulf %2005, %2100 : vector<16x128xf32>
    %cst_91 = arith.constant dense<0.000000e+00> : vector<128xf32>
    %2102 = vector.multi_reduction <add>, %2101, %cst_91 [0] : vector<16x128xf32> to vector<128xf32>
    %2103 = vector.shape_cast %2102 : vector<128xf32> to vector<1x128xf32>
    %2104 = arith.mulf %1900, %2005 : vector<16x128xf32>
    %cst_92 = arith.constant dense<0.000000e+00> : vector<128xf32>
    %2105 = vector.multi_reduction <add>, %2104, %cst_92 [0] : vector<16x128xf32> to vector<128xf32>
    %2106 = vector.shape_cast %2105 : vector<128xf32> to vector<1x128xf32>
    %cst_93 = arith.constant 1.000000e-30 : f32
    %2107 = vector.broadcast %cst_93 : f32 to vector<1x128xf32>
    %2108 = arith.cmpf ogt, %2103, %2107 : vector<1x128xf32>
    %cst_94 = arith.constant 0.000000e+00 : f32
    %2109 = vector.broadcast %cst_94 : f32 to vector<1x128xf32>
    %2110 = arith.subf %2109, %2106 : vector<1x128xf32>
    %cst_95 = arith.constant 1.000000e+00 : f32
    %2111 = vector.broadcast %cst_95 : f32 to vector<1x128xf32>
    %2112 = arith.select %2108, %2103, %2111 : vector<1x128xi1>, vector<1x128xf32>
    %2113 = arith.divf %2110, %2112 : vector<1x128xf32>
    %cst_96 = arith.constant 0.000000e+00 : f32
    %2114 = vector.broadcast %cst_96 : f32 to vector<1x128xf32>
    %2115 = arith.select %2108, %2113, %2114 : vector<1x128xi1>, vector<1x128xf32>
    %2116 = vector.broadcast %2115 : vector<1x128xf32> to vector<16x128xf32>
    %2117 = arith.mulf %2116, %2005 : vector<16x128xf32>
    %2118 = arith.addf %1897, %2117 : vector<16x128xf32>
    %2119 = vector.broadcast %2115 : vector<1x128xf32> to vector<16x128xf32>
    %2120 = arith.mulf %2119, %2100 : vector<16x128xf32>
    %2121 = arith.addf %1900, %2120 : vector<16x128xf32>
    %2122 = arith.subf %2121, %1900 : vector<16x128xf32>
    %2123 = arith.mulf %2117, %2122 : vector<16x128xf32>
    %cst_97 = arith.constant dense<0.000000e+00> : vector<128xf32>
    %2124 = vector.multi_reduction <add>, %2123, %cst_97 [0] : vector<16x128xf32> to vector<128xf32>
    %2125 = vector.shape_cast %2124 : vector<128xf32> to vector<1x128xf32>
    %2126 = vector.extract_strided_slice %1892 {offsets = [0, 0, 0], sizes = [1, 16, 128], strides = [1, 1, 1]} : vector<16x16x128xf32> to vector<1x16x128xf32>
    %2127 = vector.shape_cast %2126 : vector<1x16x128xf32> to vector<16x128xf32>
    %2128 = vector.extract_strided_slice %2122 {offsets = [0, 0], sizes = [1, 128], strides = [1, 1]} : vector<16x128xf32> to vector<1x128xf32>
    %2129 = vector.broadcast %2128 : vector<1x128xf32> to vector<16x128xf32>
    %2130 = arith.mulf %2127, %2129 : vector<16x128xf32>
    %2131 = vector.extract_strided_slice %1892 {offsets = [1, 0, 0], sizes = [1, 16, 128], strides = [1, 1, 1]} : vector<16x16x128xf32> to vector<1x16x128xf32>
    %2132 = vector.shape_cast %2131 : vector<1x16x128xf32> to vector<16x128xf32>
    %2133 = vector.extract_strided_slice %2122 {offsets = [1, 0], sizes = [1, 128], strides = [1, 1]} : vector<16x128xf32> to vector<1x128xf32>
    %2134 = vector.broadcast %2133 : vector<1x128xf32> to vector<16x128xf32>
    %2135 = arith.mulf %2132, %2134 : vector<16x128xf32>
    %2136 = vector.extract_strided_slice %1892 {offsets = [2, 0, 0], sizes = [1, 16, 128], strides = [1, 1, 1]} : vector<16x16x128xf32> to vector<1x16x128xf32>
    %2137 = vector.shape_cast %2136 : vector<1x16x128xf32> to vector<16x128xf32>
    %2138 = vector.extract_strided_slice %2122 {offsets = [2, 0], sizes = [1, 128], strides = [1, 1]} : vector<16x128xf32> to vector<1x128xf32>
    %2139 = vector.broadcast %2138 : vector<1x128xf32> to vector<16x128xf32>
    %2140 = arith.mulf %2137, %2139 : vector<16x128xf32>
    %2141 = vector.extract_strided_slice %1892 {offsets = [3, 0, 0], sizes = [1, 16, 128], strides = [1, 1, 1]} : vector<16x16x128xf32> to vector<1x16x128xf32>
    %2142 = vector.shape_cast %2141 : vector<1x16x128xf32> to vector<16x128xf32>
    %2143 = vector.extract_strided_slice %2122 {offsets = [3, 0], sizes = [1, 128], strides = [1, 1]} : vector<16x128xf32> to vector<1x128xf32>
    %2144 = vector.broadcast %2143 : vector<1x128xf32> to vector<16x128xf32>
    %2145 = arith.mulf %2142, %2144 : vector<16x128xf32>
    %2146 = vector.extract_strided_slice %1892 {offsets = [4, 0, 0], sizes = [1, 16, 128], strides = [1, 1, 1]} : vector<16x16x128xf32> to vector<1x16x128xf32>
    %2147 = vector.shape_cast %2146 : vector<1x16x128xf32> to vector<16x128xf32>
    %2148 = vector.extract_strided_slice %2122 {offsets = [4, 0], sizes = [1, 128], strides = [1, 1]} : vector<16x128xf32> to vector<1x128xf32>
    %2149 = vector.broadcast %2148 : vector<1x128xf32> to vector<16x128xf32>
    %2150 = arith.mulf %2147, %2149 : vector<16x128xf32>
    %2151 = arith.addf %2130, %2150 : vector<16x128xf32>
    %2152 = vector.extract_strided_slice %1892 {offsets = [5, 0, 0], sizes = [1, 16, 128], strides = [1, 1, 1]} : vector<16x16x128xf32> to vector<1x16x128xf32>
    %2153 = vector.shape_cast %2152 : vector<1x16x128xf32> to vector<16x128xf32>
    %2154 = vector.extract_strided_slice %2122 {offsets = [5, 0], sizes = [1, 128], strides = [1, 1]} : vector<16x128xf32> to vector<1x128xf32>
    %2155 = vector.broadcast %2154 : vector<1x128xf32> to vector<16x128xf32>
    %2156 = arith.mulf %2153, %2155 : vector<16x128xf32>
    %2157 = arith.addf %2135, %2156 : vector<16x128xf32>
    %2158 = vector.extract_strided_slice %1892 {offsets = [6, 0, 0], sizes = [1, 16, 128], strides = [1, 1, 1]} : vector<16x16x128xf32> to vector<1x16x128xf32>
    %2159 = vector.shape_cast %2158 : vector<1x16x128xf32> to vector<16x128xf32>
    %2160 = vector.extract_strided_slice %2122 {offsets = [6, 0], sizes = [1, 128], strides = [1, 1]} : vector<16x128xf32> to vector<1x128xf32>
    %2161 = vector.broadcast %2160 : vector<1x128xf32> to vector<16x128xf32>
    %2162 = arith.mulf %2159, %2161 : vector<16x128xf32>
    %2163 = arith.addf %2140, %2162 : vector<16x128xf32>
    %2164 = vector.extract_strided_slice %1892 {offsets = [7, 0, 0], sizes = [1, 16, 128], strides = [1, 1, 1]} : vector<16x16x128xf32> to vector<1x16x128xf32>
    %2165 = vector.shape_cast %2164 : vector<1x16x128xf32> to vector<16x128xf32>
    %2166 = vector.extract_strided_slice %2122 {offsets = [7, 0], sizes = [1, 128], strides = [1, 1]} : vector<16x128xf32> to vector<1x128xf32>
    %2167 = vector.broadcast %2166 : vector<1x128xf32> to vector<16x128xf32>
    %2168 = arith.mulf %2165, %2167 : vector<16x128xf32>
    %2169 = arith.addf %2145, %2168 : vector<16x128xf32>
    %2170 = vector.extract_strided_slice %1892 {offsets = [8, 0, 0], sizes = [1, 16, 128], strides = [1, 1, 1]} : vector<16x16x128xf32> to vector<1x16x128xf32>
    %2171 = vector.shape_cast %2170 : vector<1x16x128xf32> to vector<16x128xf32>
    %2172 = vector.extract_strided_slice %2122 {offsets = [8, 0], sizes = [1, 128], strides = [1, 1]} : vector<16x128xf32> to vector<1x128xf32>
    %2173 = vector.broadcast %2172 : vector<1x128xf32> to vector<16x128xf32>
    %2174 = arith.mulf %2171, %2173 : vector<16x128xf32>
    %2175 = arith.addf %2151, %2174 : vector<16x128xf32>
    %2176 = vector.extract_strided_slice %1892 {offsets = [9, 0, 0], sizes = [1, 16, 128], strides = [1, 1, 1]} : vector<16x16x128xf32> to vector<1x16x128xf32>
    %2177 = vector.shape_cast %2176 : vector<1x16x128xf32> to vector<16x128xf32>
    %2178 = vector.extract_strided_slice %2122 {offsets = [9, 0], sizes = [1, 128], strides = [1, 1]} : vector<16x128xf32> to vector<1x128xf32>
    %2179 = vector.broadcast %2178 : vector<1x128xf32> to vector<16x128xf32>
    %2180 = arith.mulf %2177, %2179 : vector<16x128xf32>
    %2181 = arith.addf %2157, %2180 : vector<16x128xf32>
    %2182 = vector.extract_strided_slice %1892 {offsets = [10, 0, 0], sizes = [1, 16, 128], strides = [1, 1, 1]} : vector<16x16x128xf32> to vector<1x16x128xf32>
    %2183 = vector.shape_cast %2182 : vector<1x16x128xf32> to vector<16x128xf32>
    %2184 = vector.extract_strided_slice %2122 {offsets = [10, 0], sizes = [1, 128], strides = [1, 1]} : vector<16x128xf32> to vector<1x128xf32>
    %2185 = vector.broadcast %2184 : vector<1x128xf32> to vector<16x128xf32>
    %2186 = arith.mulf %2183, %2185 : vector<16x128xf32>
    %2187 = arith.addf %2163, %2186 : vector<16x128xf32>
    %2188 = vector.extract_strided_slice %1892 {offsets = [11, 0, 0], sizes = [1, 16, 128], strides = [1, 1, 1]} : vector<16x16x128xf32> to vector<1x16x128xf32>
    %2189 = vector.shape_cast %2188 : vector<1x16x128xf32> to vector<16x128xf32>
    %2190 = vector.extract_strided_slice %2122 {offsets = [11, 0], sizes = [1, 128], strides = [1, 1]} : vector<16x128xf32> to vector<1x128xf32>
    %2191 = vector.broadcast %2190 : vector<1x128xf32> to vector<16x128xf32>
    %2192 = arith.mulf %2189, %2191 : vector<16x128xf32>
    %2193 = arith.addf %2169, %2192 : vector<16x128xf32>
    %2194 = vector.extract_strided_slice %1892 {offsets = [12, 0, 0], sizes = [1, 16, 128], strides = [1, 1, 1]} : vector<16x16x128xf32> to vector<1x16x128xf32>
    %2195 = vector.shape_cast %2194 : vector<1x16x128xf32> to vector<16x128xf32>
    %2196 = vector.extract_strided_slice %2122 {offsets = [12, 0], sizes = [1, 128], strides = [1, 1]} : vector<16x128xf32> to vector<1x128xf32>
    %2197 = vector.broadcast %2196 : vector<1x128xf32> to vector<16x128xf32>
    %2198 = arith.mulf %2195, %2197 : vector<16x128xf32>
    %2199 = arith.addf %2175, %2198 : vector<16x128xf32>
    %2200 = vector.extract_strided_slice %1892 {offsets = [13, 0, 0], sizes = [1, 16, 128], strides = [1, 1, 1]} : vector<16x16x128xf32> to vector<1x16x128xf32>
    %2201 = vector.shape_cast %2200 : vector<1x16x128xf32> to vector<16x128xf32>
    %2202 = vector.extract_strided_slice %2122 {offsets = [13, 0], sizes = [1, 128], strides = [1, 1]} : vector<16x128xf32> to vector<1x128xf32>
    %2203 = vector.broadcast %2202 : vector<1x128xf32> to vector<16x128xf32>
    %2204 = arith.mulf %2201, %2203 : vector<16x128xf32>
    %2205 = arith.addf %2181, %2204 : vector<16x128xf32>
    %2206 = vector.extract_strided_slice %1892 {offsets = [14, 0, 0], sizes = [1, 16, 128], strides = [1, 1, 1]} : vector<16x16x128xf32> to vector<1x16x128xf32>
    %2207 = vector.shape_cast %2206 : vector<1x16x128xf32> to vector<16x128xf32>
    %2208 = vector.extract_strided_slice %2122 {offsets = [14, 0], sizes = [1, 128], strides = [1, 1]} : vector<16x128xf32> to vector<1x128xf32>
    %2209 = vector.broadcast %2208 : vector<1x128xf32> to vector<16x128xf32>
    %2210 = arith.mulf %2207, %2209 : vector<16x128xf32>
    %2211 = arith.addf %2187, %2210 : vector<16x128xf32>
    %2212 = vector.extract_strided_slice %1892 {offsets = [15, 0, 0], sizes = [1, 16, 128], strides = [1, 1, 1]} : vector<16x16x128xf32> to vector<1x16x128xf32>
    %2213 = vector.shape_cast %2212 : vector<1x16x128xf32> to vector<16x128xf32>
    %2214 = vector.extract_strided_slice %2122 {offsets = [15, 0], sizes = [1, 128], strides = [1, 1]} : vector<16x128xf32> to vector<1x128xf32>
    %2215 = vector.broadcast %2214 : vector<1x128xf32> to vector<16x128xf32>
    %2216 = arith.mulf %2213, %2215 : vector<16x128xf32>
    %2217 = arith.addf %2193, %2216 : vector<16x128xf32>
    %2218 = arith.addf %2199, %2205 : vector<16x128xf32>
    %2219 = arith.addf %2218, %2211 : vector<16x128xf32>
    %2220 = arith.addf %2219, %2217 : vector<16x128xf32>
    %2221 = arith.mulf %2122, %2220 : vector<16x128xf32>
    %cst_98 = arith.constant dense<0.000000e+00> : vector<128xf32>
    %2222 = vector.multi_reduction <add>, %2221, %cst_98 [0] : vector<16x128xf32> to vector<128xf32>
    %2223 = vector.shape_cast %2222 : vector<128xf32> to vector<1x128xf32>
    %cst_99 = arith.constant 0.000000e+00 : f32
    %2224 = vector.broadcast %cst_99 : f32 to vector<1x128xf32>
    %2225 = arith.cmpf one, %2125, %2224 : vector<1x128xf32>
    %cst_100 = arith.constant 1.000000e+00 : f32
    %2226 = vector.broadcast %cst_100 : f32 to vector<1x128xf32>
    %2227 = arith.select %2225, %2125, %2226 : vector<1x128xi1>, vector<1x128xf32>
    %cst_101 = arith.constant 1.000000e+00 : f32
    %2228 = vector.broadcast %cst_101 : f32 to vector<1x128xf32>
    %2229 = arith.divf %2228, %2227 : vector<1x128xf32>
    %cst_102 = arith.constant 0.000000e+00 : f32
    %2230 = vector.broadcast %cst_102 : f32 to vector<1x128xf32>
    %2231 = arith.select %2225, %2229, %2230 : vector<1x128xi1>, vector<1x128xf32>
    %2232 = arith.addf %2125, %2223 : vector<1x128xf32>
    %2233 = arith.mulf %2232, %2231 : vector<1x128xf32>
    %2234 = arith.mulf %2233, %2231 : vector<1x128xf32>
    %2235 = vector.broadcast %2234 : vector<1x128xf32> to vector<16x128xf32>
    %2236 = arith.mulf %2235, %2117 : vector<16x128xf32>
    %2237 = vector.broadcast %2231 : vector<1x128xf32> to vector<16x128xf32>
    %2238 = arith.mulf %2237, %2220 : vector<16x128xf32>
    %2239 = arith.subf %2236, %2238 : vector<16x128xf32>
    %2240 = vector.broadcast %2231 : vector<1x128xf32> to vector<16x128xf32>
    %2241 = arith.mulf %2240, %2220 : vector<16x128xf32>
    %2242 = vector.shape_cast %2117 : vector<16x128xf32> to vector<16x1x128xf32>
    %2243 = vector.shape_cast %2239 : vector<16x128xf32> to vector<1x16x128xf32>
    %2244 = vector.broadcast %2242 : vector<16x1x128xf32> to vector<16x16x128xf32>
    %2245 = vector.broadcast %2243 : vector<1x16x128xf32> to vector<16x16x128xf32>
    %2246 = arith.mulf %2244, %2245 : vector<16x16x128xf32>
    %2247 = vector.shape_cast %2241 : vector<16x128xf32> to vector<16x1x128xf32>
    %2248 = vector.shape_cast %2117 : vector<16x128xf32> to vector<1x16x128xf32>
    %2249 = vector.broadcast %2247 : vector<16x1x128xf32> to vector<16x16x128xf32>
    %2250 = vector.broadcast %2248 : vector<1x16x128xf32> to vector<16x16x128xf32>
    %2251 = arith.mulf %2249, %2250 : vector<16x16x128xf32>
    %2252 = arith.subf %2246, %2251 : vector<16x16x128xf32>
    %2253 = arith.addf %1892, %2252 : vector<16x16x128xf32>
    %cst_103 = arith.constant 5.000000e-01 : f32
    %2254 = vector.broadcast %cst_103 : f32 to vector<1x128xf32>
    %2255 = arith.cmpf ogt, %1908, %2254 : vector<1x128xf32>
    %2256 = vector.shape_cast %2255 : vector<1x128xi1> to vector<1x128xi1>
    %2257 = vector.broadcast %2256 : vector<1x128xi1> to vector<16x128xi1>
    %2258 = arith.select %2257, %2118, %1897 : vector<16x128xi1>, vector<16x128xf32>
    %2259 = vector.shape_cast %2255 : vector<1x128xi1> to vector<1x128xi1>
    %2260 = vector.broadcast %2259 : vector<1x128xi1> to vector<16x128xi1>
    %2261 = arith.select %2260, %2121, %1900 : vector<16x128xi1>, vector<16x128xf32>
    %2262 = arith.mulf %2261, %2261 : vector<16x128xf32>
    %cst_104 = arith.constant dense<0.000000e+00> : vector<128xf32>
    %2263 = vector.multi_reduction <add>, %2262, %cst_104 [0] : vector<16x128xf32> to vector<128xf32>
    %2264 = vector.shape_cast %2263 : vector<128xf32> to vector<1x128xf32>
    %cst_105 = arith.constant 9.99999997E-7 : f32
    %2265 = vector.broadcast %cst_105 : f32 to vector<1x128xf32>
    %2266 = arith.cmpf ogt, %2264, %2265 : vector<1x128xf32>
    %2267 = arith.andi %2255, %2266 : vector<1x128xi1>
    %2268 = arith.extui %2267 : vector<1x128xi1> to vector<1x128xi32>
    %2269 = arith.sitofp %2268 : vector<1x128xi32> to vector<1x128xf32>
    %c0_106 = arith.constant 0 : index
    %c0_107 = arith.constant 0 : index
    %2270 = vector.load %arg5[%c0_106, %c0_107] : memref<16x128xf32, #tpu.memory_space<vmem>>, vector<16x128xf32>
    tpu.vector_store %arg5[%c0_106, %c0_107], %2258 {strides = array<i32>} : memref<16x128xf32, #tpu.memory_space<vmem>>, vector<16x128xf32>,
    %c0_108 = arith.constant 0 : index
    %c0_109 = arith.constant 0 : index
    %2271 = vector.load %arg6[%c0_108, %c0_109] : memref<1x128xf32, #tpu.memory_space<vmem>>, vector<1x128xf32>
    tpu.vector_store %arg6[%c0_108, %c0_109], %2264 {strides = array<i32>} : memref<1x128xf32, #tpu.memory_space<vmem>>, vector<1x128xf32>,
    return
  }
  func.func @transform_0(%arg0: i32) -> (i32, i32, i32) {
    %c0_i32 = arith.constant 0 : i32
    %c0_i32_0 = arith.constant 0 : i32
    %c0_i32_1 = arith.constant 0 : i32
    return %c0_i32, %c0_i32_0, %arg0 : i32, i32, i32
  }
  func.func @transform_1(%arg0: i32) -> (i32, i32) {
    %c0_i32 = arith.constant 0 : i32
    %c0_i32_0 = arith.constant 0 : i32
    return %c0_i32, %arg0 : i32, i32
  }
  func.func @transform_2(%arg0: i32) -> (i32, i32) {
    %c0_i32 = arith.constant 0 : i32
    %c0_i32_0 = arith.constant 0 : i32
    return %c0_i32, %arg0 : i32, i32
  }
  func.func @transform_3(%arg0: i32) -> (i32, i32, i32) {
    %c0_i32 = arith.constant 0 : i32
    %c0_i32_0 = arith.constant 0 : i32
    %c0_i32_1 = arith.constant 0 : i32
    %c0_i32_2 = arith.constant 0 : i32
    return %c0_i32, %c0_i32_0, %c0_i32_1 : i32, i32, i32
  }
  func.func @transform_4(%arg0: i32) -> (i32, i32) {
    %c0_i32 = arith.constant 0 : i32
    %c0_i32_0 = arith.constant 0 : i32
    return %c0_i32, %arg0 : i32, i32
  }
  func.func @transform_5(%arg0: i32) -> (i32, i32) {
    %c0_i32 = arith.constant 0 : i32
    %c0_i32_0 = arith.constant 0 : i32
    return %c0_i32, %arg0 : i32, i32
  }
}

</mosaic_0001>

<llo_original>
// kernel: tpu_custom_call.1
$region0: #{tpu_custom_call.1}
  #allocation0 [shape = 'u32[]', space=smem, size = 0x4, offset = 0x4, fixed_abs, tag = 'smem constant byte address 0x4 - core index']
  #allocation1 [shape = 'u32[144,128]{1,0:T(1,128)}', space=vmem, size = 0x12000, scoped, tag = 'internal scratch']
  %s0 = inlined_call_operand.hbm [shape: f32[16,16,128], index: 0, kind: input, shape index: {}]
  %s1 = inlined_call_operand.hbm [shape: f32[16,128], index: 1, kind: input, shape index: {}]
  %s2 = inlined_call_operand.hbm [shape: f32[16,128], index: 2, kind: input, shape index: {}]
  %s3 = inlined_call_operand.hbm [shape: f32[16,16,128], index: 3, kind: input, shape index: {}]
  %s4 = inlined_call_operand.hbm [shape: f32[16,128], index: 4, kind: output, shape index: {0}]
  %s5 = inlined_call_operand.hbm [shape: f32[1,128], index: 5, kind: output, shape index: {1}]
  %6 = xla_tuple %s4, %s5
  %s7 = sld [smem:[#allocation0]]
  $region50: #{tpu_custom_call.1} parent=0
    _
  %s9 = ssub.s32 1, %s7
  %s10 = scalar_select 0, %s9, %s7
  $region1: #{tpu_custom_call.1} parent=0
    #allocation2 [shape = 'u8[131072]{0}', space=vmem, size = 0x20000, scoped, tag = 'input window, operand 0, single buffered']
    #allocation3 [shape = 's32[1]{0}', space=sflag, size = 0x4, scoped, tag = 'scoped memory for tpu_custom_call.1']
    #allocation4 [shape = 's32[1]{0}', space=sflag, size = 0x4, scoped, tag = 'scoped memory for tpu_custom_call.1']
    #allocation5 [shape = 'u8[8192]{0}', space=vmem, size = 0x2000, scoped, tag = 'input window, operand 1, single buffered']
    #allocation6 [shape = 's32[1]{0}', space=sflag, size = 0x4, scoped, tag = 'scoped memory for tpu_custom_call.1']
    #allocation7 [shape = 'u8[8192]{0}', space=vmem, size = 0x2000, scoped, tag = 'input window, operand 2, single buffered']
    #allocation8 [shape = 'u8[131072]{0}', space=vmem, size = 0x20000, scoped, tag = 'input window, operand 3, single buffered']
    #allocation9 [shape = 's32[1]{0}', space=sflag, size = 0x4, scoped, tag = 'scoped memory for tpu_custom_call.1']
    #allocation10 [shape = 'u8[8192]{0}', space=vmem, size = 0x2000, scoped, tag = 'output window, operand 0, single buffered']
    #allocation11 [shape = 'u8[512]{0}', space=vmem, size = 0x400, scoped, tag = 'output window, operand 1, single buffered']
    #allocation12 [shape = 's32[1]{0}', space=sflag, size = 0x4, scoped, tag = 'scoped memory for tpu_custom_call.1']
    %11 = vsyncpa [#allocation3], 0
    %12 = vsyncpa [#allocation6], 0
    %13 = vsyncpa [#allocation9], 0
    %14 = vsyncpa [#allocation4], 0
    %15 = vsyncpa [#allocation12], 0
    // Predicated region
    $region2: #{tpu_custom_call.1} parent=1 // pred_check
      _
    $region3: #{tpu_custom_call.1} parent=1 // pred_check_branch
      %17 = sbr.rel (0) target = $region5
    $region4: #{tpu_custom_call.1} parent=1 // pred_region
      %s19 = ssub.s32 4096, 4096
      %20 = vsyncadd [#allocation3], %s19
      %s21 = sshll.u32 [#allocation2], 4
      %s22 = int_to_ptr.vmem [resolvable:$true] %s21
      %27 = dma.hbm_to_vmem [thread:$0]  %s0, 4096, %s22, [#allocation3], 128, 128, 8
    $region5: #{tpu_custom_call.1} parent=1 // pred_fallthru
      _
    // Predicated region
    $region6: #{tpu_custom_call.1} parent=1 // pred_check
      _
    $region7: #{tpu_custom_call.1} parent=1 // pred_check_branch
      %29 = sbr.rel (0) target = $region9
    $region8: #{tpu_custom_call.1} parent=1 // pred_region
      %s31 = ssub.s32 256, 256
      %32 = vsyncadd [#allocation6], %s31
      %s33 = sshll.u32 [#allocation5], 4
      %s34 = int_to_ptr.vmem [resolvable:$true] %s33
      %39 = dma.hbm_to_vmem [thread:$0]  %s1, 256, %s34, [#allocation6], 128, 128, 8
    $region9: #{tpu_custom_call.1} parent=1 // pred_fallthru
      _
    // Predicated region
    $region10: #{tpu_custom_call.1} parent=1 // pred_check
      _
    $region11: #{tpu_custom_call.1} parent=1 // pred_check_branch
      %41 = sbr.rel (0) target = $region13
    $region12: #{tpu_custom_call.1} parent=1 // pred_region
      %s43 = ssub.s32 256, 256
      %44 = vsyncadd [#allocation6], %s43
      %s45 = sshll.u32 [#allocation7], 4
      %s46 = int_to_ptr.vmem [resolvable:$true] %s45
      %51 = dma.hbm_to_vmem [thread:$0]  %s2, 256, %s46, [#allocation6], 128, 128, 8
    $region13: #{tpu_custom_call.1} parent=1 // pred_fallthru
      _
    // Predicated region
    $region14: #{tpu_custom_call.1} parent=1 // pred_check
      _
    $region15: #{tpu_custom_call.1} parent=1 // pred_check_branch
      %53 = sbr.rel (0) target = $region17
    $region16: #{tpu_custom_call.1} parent=1 // pred_region
      %s55 = ssub.s32 4096, 4096
      %56 = vsyncadd [#allocation9], %s55
      %s57 = sshll.u32 [#allocation8], 4
      %s58 = int_to_ptr.vmem [resolvable:$true] %s57
      %63 = dma.hbm_to_vmem [thread:$0]  %s3, 4096, %s58, [#allocation9], 128, 128, 8
    $region17: #{tpu_custom_call.1} parent=1 // pred_fallthru
      _
    // Predicated region
    $region18: #{tpu_custom_call.1} parent=1 // pred_check
      _
    $region19: #{tpu_custom_call.1} parent=1 // pred_check_branch
      %65 = sbr.rel (0) target = $region21
    $region20: #{tpu_custom_call.1} parent=1 // pred_region
      %66 = dma.done [#allocation3], 4096
    $region21: #{tpu_custom_call.1} parent=1 // pred_fallthru
      _
    // Predicated region
    $region22: #{tpu_custom_call.1} parent=1 // pred_check
      _
    $region23: #{tpu_custom_call.1} parent=1 // pred_check_branch
      %68 = sbr.rel (0) target = $region25
    $region24: #{tpu_custom_call.1} parent=1 // pred_region
      %69 = dma.done [#allocation6], 256
    $region25: #{tpu_custom_call.1} parent=1 // pred_fallthru
      _
    // Predicated region
    $region26: #{tpu_custom_call.1} parent=1 // pred_check
      _
    $region27: #{tpu_custom_call.1} parent=1 // pred_check_branch
      %71 = sbr.rel (0) target = $region29
    $region28: #{tpu_custom_call.1} parent=1 // pred_region
      %72 = dma.done [#allocation6], 256
    $region29: #{tpu_custom_call.1} parent=1 // pred_fallthru
      _
    // Predicated region
    $region30: #{tpu_custom_call.1} parent=1 // pred_check
      _
    $region31: #{tpu_custom_call.1} parent=1 // pred_check_branch
      %74 = sbr.rel (0) target = $region33
    $region32: #{tpu_custom_call.1} parent=1 // pred_region
      %75 = dma.done [#allocation9], 4096
    $region33: #{tpu_custom_call.1} parent=1 // pred_fallthru
      _
    %v76 = vld [vmem:[#allocation2] sm:$0xff]
    %v77 = vld [vmem:[#allocation2 + $0x8] sm:$0xff]
    %v78 = vld [vmem:[#allocation2 + $0x10] sm:$0xff]
    %v79 = vld [vmem:[#allocation2 + $0x18] sm:$0xff]
    %v80 = vld [vmem:[#allocation2 + $0x20] sm:$0xff]
    %v81 = vld [vmem:[#allocation2 + $0x28] sm:$0xff]
    %v82 = vld [vmem:[#allocation2 + $0x30] sm:$0xff]
    %v83 = vld [vmem:[#allocation2 + $0x38] sm:$0xff]
    %v84 = vld [vmem:[#allocation2 + $0x40] sm:$0xff]
    %v85 = vld [vmem:[#allocation2 + $0x48] sm:$0xff]
    %v86 = vld [vmem:[#allocation2 + $0x50] sm:$0xff]
    %v87 = vld [vmem:[#allocation2 + $0x58] sm:$0xff]
    %v88 = vld [vmem:[#allocation2 + $0x60] sm:$0xff]
    %v89 = vld [vmem:[#allocation2 + $0x68] sm:$0xff]
    %v90 = vld [vmem:[#allocation2 + $0x70] sm:$0xff]
    %v91 = vld [vmem:[#allocation2 + $0x78] sm:$0xff]
    %v92 = vld [vmem:[#allocation2 + $0x80] sm:$0xff]
    %v93 = vld [vmem:[#allocation2 + $0x88] sm:$0xff]
    %v94 = vld [vmem:[#allocation2 + $0x90] sm:$0xff]
    %v95 = vld [vmem:[#allocation2 + $0x98] sm:$0xff]
    %v96 = vld [vmem:[#allocation2 + $0xa0] sm:$0xff]
    %v97 = vld [vmem:[#allocation2 + $0xa8] sm:$0xff]
    %v98 = vld [vmem:[#allocation2 + $0xb0] sm:$0xff]
    %v99 = vld [vmem:[#allocation2 + $0xb8] sm:$0xff]
    %v100 = vld [vmem:[#allocation2 + $0xc0] sm:$0xff]
    %v101 = vld [vmem:[#allocation2 + $0xc8] sm:$0xff]
    %v102 = vld [vmem:[#allocation2 + $0xd0] sm:$0xff]
    %v103 = vld [vmem:[#allocation2 + $0xd8] sm:$0xff]
    %v104 = vld [vmem:[#allocation2 + $0xe0] sm:$0xff]
    %v105 = vld [vmem:[#allocation2 + $0xe8] sm:$0xff]
    %v106 = vld [vmem:[#allocation2 + $0xf0] sm:$0xff]
    %v107 = vld [vmem:[#allocation2 + $0xf8] sm:$0xff]
    %v108 = vld [vmem:[#allocation5] sm:$0xff]
    %v109 = vld [vmem:[#allocation5 + $0x8] sm:$0xff]
    %v110 = vld [vmem:[#allocation7] sm:$0xff]
    %v111 = vld [vmem:[#allocation7 + $0x8] sm:$0xff]
    %v112 = vld [vmem:[#allocation8] sm:$0xff]
    %v113 = vld [vmem:[#allocation8 + $0x8] sm:$0xff]
    %v114 = vld [vmem:[#allocation8 + $0x10] sm:$0xff]
    %v115 = vld [vmem:[#allocation8 + $0x18] sm:$0xff]
    %v116 = vld [vmem:[#allocation8 + $0x20] sm:$0xff]
    %v117 = vld [vmem:[#allocation8 + $0x28] sm:$0xff]
    %v118 = vld [vmem:[#allocation8 + $0x30] sm:$0xff]
    %v119 = vld [vmem:[#allocation8 + $0x38] sm:$0xff]
    %v120 = vld [vmem:[#allocation8 + $0x40] sm:$0xff]
    %v121 = vld [vmem:[#allocation8 + $0x48] sm:$0xff]
    %v122 = vld [vmem:[#allocation8 + $0x50] sm:$0xff]
    %v123 = vld [vmem:[#allocation8 + $0x58] sm:$0xff]
    %v124 = vld [vmem:[#allocation8 + $0x60] sm:$0xff]
    %v125 = vld [vmem:[#allocation8 + $0x68] sm:$0xff]
    %v126 = vld [vmem:[#allocation8 + $0x70] sm:$0xff]
    %v127 = vld [vmem:[#allocation8 + $0x78] sm:$0xff]
    %v128 = vld [vmem:[#allocation8 + $0x80] sm:$0xff]
    %v129 = vld [vmem:[#allocation8 + $0x88] sm:$0xff]
    %v130 = vld [vmem:[#allocation8 + $0x90] sm:$0xff]
    %v131 = vld [vmem:[#allocation8 + $0x98] sm:$0xff]
    %v132 = vld [vmem:[#allocation8 + $0xa0] sm:$0xff]
    %v133 = vld [vmem:[#allocation8 + $0xa8] sm:$0xff]
    %v134 = vld [vmem:[#allocation8 + $0xb0] sm:$0xff]
    %v135 = vld [vmem:[#allocation8 + $0xb8] sm:$0xff]
    %v136 = vld [vmem:[#allocation8 + $0xc0] sm:$0xff]
    %v137 = vld [vmem:[#allocation8 + $0xc8] sm:$0xff]
    %v138 = vld [vmem:[#allocation8 + $0xd0] sm:$0xff]
    %v139 = vld [vmem:[#allocation8 + $0xd8] sm:$0xff]
    %v140 = vld [vmem:[#allocation8 + $0xe0] sm:$0xff]
    %v141 = vld [vmem:[#allocation8 + $0xe8] sm:$0xff]
    %v142 = vld [vmem:[#allocation8 + $0xf0] sm:$0xff]
    %v143 = vld [vmem:[#allocation8 + $0xf8] sm:$0xff]
    %v144 = vlaneseq
    %v145 = vshrl.u32 %v144, 7
    %v146 = vsub.s32 0, %v145
    %v147 = vrot.slane %v110, %v146
    %v148 = vmul.f32 %v76, %v147
    %v149 = vmul.f32 %v77, %v147
    %v150 = vlaneseq
    %v151 = vshrl.u32 %v150, 7
    %v152 = vsub.s32 1, %v151
    %v153 = vrot.slane %v110, %v152
    %v154 = vmul.f32 %v78, %v153
    %v155 = vmul.f32 %v79, %v153
    %v156 = vlaneseq
    %v157 = vshrl.u32 %v156, 7
    %v158 = vsub.s32 2, %v157
    %v159 = vrot.slane %v110, %v158
    %v160 = vmul.f32 %v80, %v159
    %v161 = vmul.f32 %v81, %v159
    %v162 = vlaneseq
    %v163 = vshrl.u32 %v162, 7
    %v164 = vsub.s32 3, %v163
    %v165 = vrot.slane %v110, %v164
    %v166 = vmul.f32 %v82, %v165
    %v167 = vmul.f32 %v83, %v165
    %v168 = vlaneseq
    %v169 = vshrl.u32 %v168, 7
    %v170 = vsub.s32 4, %v169
    %v171 = vrot.slane %v110, %v170
    %v172 = vmul.f32 %v84, %v171
    %v173 = vmul.f32 %v85, %v171
    %v174 = vadd.f32 %v148, %v172
    %v175 = vadd.f32 %v149, %v173
    %v176 = vlaneseq
    %v177 = vshrl.u32 %v176, 7
    %v178 = vsub.s32 5, %v177
    %v179 = vrot.slane %v110, %v178
    %v180 = vmul.f32 %v86, %v179
    %v181 = vmul.f32 %v87, %v179
    %v182 = vadd.f32 %v154, %v180
    %v183 = vadd.f32 %v155, %v181
    %v184 = vlaneseq
    %v185 = vshrl.u32 %v184, 7
    %v186 = vsub.s32 6, %v185
    %v187 = vrot.slane %v110, %v186
    %v188 = vmul.f32 %v88, %v187
    %v189 = vmul.f32 %v89, %v187
    %v190 = vadd.f32 %v160, %v188
    %v191 = vadd.f32 %v161, %v189
    %v192 = vlaneseq
    %v193 = vshrl.u32 %v192, 7
    %v194 = vsub.s32 7, %v193
    %v195 = vrot.slane %v110, %v194
    %v196 = vmul.f32 %v90, %v195
    %v197 = vmul.f32 %v91, %v195
    %v198 = vadd.f32 %v166, %v196
    %v199 = vadd.f32 %v167, %v197
    %v200 = vlaneseq
    %v201 = vshrl.u32 %v200, 7
    %v202 = vsub.s32 0, %v201
    %v203 = vrot.slane %v111, %v202
    %v204 = vmul.f32 %v92, %v203
    %v205 = vmul.f32 %v93, %v203
    %v206 = vadd.f32 %v174, %v204
    %v207 = vadd.f32 %v175, %v205
    %v208 = vlaneseq
    %v209 = vshrl.u32 %v208, 7
    %v210 = vsub.s32 1, %v209
    %v211 = vrot.slane %v111, %v210
    %v212 = vmul.f32 %v94, %v211
    %v213 = vmul.f32 %v95, %v211
    %v214 = vadd.f32 %v182, %v212
    %v215 = vadd.f32 %v183, %v213
    %v216 = vlaneseq
    %v217 = vshrl.u32 %v216, 7
    %v218 = vsub.s32 2, %v217
    %v219 = vrot.slane %v111, %v218
    %v220 = vmul.f32 %v96, %v219
    %v221 = vmul.f32 %v97, %v219
    %v222 = vadd.f32 %v190, %v220
    %v223 = vadd.f32 %v191, %v221
    %v224 = vlaneseq
    %v225 = vshrl.u32 %v224, 7
    %v226 = vsub.s32 3, %v225
    %v227 = vrot.slane %v111, %v226
    %v228 = vmul.f32 %v98, %v227
    %v229 = vmul.f32 %v99, %v227
    %v230 = vadd.f32 %v198, %v228
    %v231 = vadd.f32 %v199, %v229
    %v232 = vlaneseq
    %v233 = vshrl.u32 %v232, 7
    %v234 = vsub.s32 4, %v233
    %v235 = vrot.slane %v111, %v234
    %v236 = vmul.f32 %v100, %v235
    %v237 = vmul.f32 %v101, %v235
    %v238 = vadd.f32 %v206, %v236
    %v239 = vadd.f32 %v207, %v237
    %v240 = vlaneseq
    %v241 = vshrl.u32 %v240, 7
    %v242 = vsub.s32 5, %v241
    %v243 = vrot.slane %v111, %v242
    %v244 = vmul.f32 %v102, %v243
    %v245 = vmul.f32 %v103, %v243
    %v246 = vadd.f32 %v214, %v244
    %v247 = vadd.f32 %v215, %v245
    %v248 = vlaneseq
    %v249 = vshrl.u32 %v248, 7
    %v250 = vsub.s32 6, %v249
    %v251 = vrot.slane %v111, %v250
    %v252 = vmul.f32 %v104, %v251
    %v253 = vmul.f32 %v105, %v251
    %v254 = vadd.f32 %v222, %v252
    %v255 = vadd.f32 %v223, %v253
    %v256 = vlaneseq
    %v257 = vshrl.u32 %v256, 7
    %v258 = vsub.s32 7, %v257
    %v259 = vrot.slane %v111, %v258
    %v260 = vmul.f32 %v106, %v259
    %v261 = vmul.f32 %v107, %v259
    %v262 = vadd.f32 %v230, %v260
    %v263 = vadd.f32 %v231, %v261
    %v264 = vadd.f32 %v238, %v246
    %v265 = vadd.f32 %v239, %v247
    %v266 = vadd.f32 %v264, %v254
    %v267 = vadd.f32 %v265, %v255
    %v268 = vadd.f32 %v266, %v262
    %v269 = vadd.f32 %v267, %v263
    %v270 = vsub.f32 %v268, %v108
    %v271 = vsub.f32 %v269, %v109
    %v272 = vlaneseq
    %v273 = vshrl.u32 %v272, 7
    %v274 = vsub.s32 0, %v273
    %v275 = vrot.slane %v270, %v274
    %v276 = vmul.f32 %v112, %v275
    %v277 = vmul.f32 %v113, %v275
    %v278 = vlaneseq
    %v279 = vshrl.u32 %v278, 7
    %v280 = vsub.s32 1, %v279
    %v281 = vrot.slane %v270, %v280
    %v282 = vmul.f32 %v114, %v281
    %v283 = vmul.f32 %v115, %v281
    %v284 = vlaneseq
    %v285 = vshrl.u32 %v284, 7
    %v286 = vsub.s32 2, %v285
    %v287 = vrot.slane %v270, %v286
    %v288 = vmul.f32 %v116, %v287
    %v289 = vmul.f32 %v117, %v287
    %v290 = vlaneseq
    %v291 = vshrl.u32 %v290, 7
    %v292 = vsub.s32 3, %v291
    %v293 = vrot.slane %v270, %v292
    %v294 = vmul.f32 %v118, %v293
    %v295 = vmul.f32 %v119, %v293
    %v296 = vlaneseq
    %v297 = vshrl.u32 %v296, 7
    %v298 = vsub.s32 4, %v297
    %v299 = vrot.slane %v270, %v298
    %v300 = vmul.f32 %v120, %v299
    %v301 = vmul.f32 %v121, %v299
    %v302 = vadd.f32 %v276, %v300
    %v303 = vadd.f32 %v277, %v301
    %v304 = vlaneseq
    %v305 = vshrl.u32 %v304, 7
    %v306 = vsub.s32 5, %v305
    %v307 = vrot.slane %v270, %v306
    %v308 = vmul.f32 %v122, %v307
    %v309 = vmul.f32 %v123, %v307
    %v310 = vadd.f32 %v282, %v308
    %v311 = vadd.f32 %v283, %v309
    %v312 = vlaneseq
    %v313 = vshrl.u32 %v312, 7
    %v314 = vsub.s32 6, %v313
    %v315 = vrot.slane %v270, %v314
    %v316 = vmul.f32 %v124, %v315
    %v317 = vmul.f32 %v125, %v315
    %v318 = vadd.f32 %v288, %v316
    %v319 = vadd.f32 %v289, %v317
    %v320 = vlaneseq
    %v321 = vshrl.u32 %v320, 7
    %v322 = vsub.s32 7, %v321
    %v323 = vrot.slane %v270, %v322
    %v324 = vmul.f32 %v126, %v323
    %v325 = vmul.f32 %v127, %v323
    %v326 = vadd.f32 %v294, %v324
    %v327 = vadd.f32 %v295, %v325
    %v328 = vlaneseq
    %v329 = vshrl.u32 %v328, 7
    %v330 = vsub.s32 0, %v329
    %v331 = vrot.slane %v271, %v330
    %v332 = vmul.f32 %v128, %v331
    %v333 = vmul.f32 %v129, %v331
    %v334 = vadd.f32 %v302, %v332
    %v335 = vadd.f32 %v303, %v333
    %v336 = vlaneseq
    %v337 = vshrl.u32 %v336, 7
    %v338 = vsub.s32 1, %v337
    %v339 = vrot.slane %v271, %v338
    %v340 = vmul.f32 %v130, %v339
    %v341 = vmul.f32 %v131, %v339
    %v342 = vadd.f32 %v310, %v340
    %v343 = vadd.f32 %v311, %v341
    %v344 = vlaneseq
    %v345 = vshrl.u32 %v344, 7
    %v346 = vsub.s32 2, %v345
    %v347 = vrot.slane %v271, %v346
    %v348 = vmul.f32 %v132, %v347
    %v349 = vmul.f32 %v133, %v347
    %v350 = vadd.f32 %v318, %v348
    %v351 = vadd.f32 %v319, %v349
    %v352 = vlaneseq
    %v353 = vshrl.u32 %v352, 7
    %v354 = vsub.s32 3, %v353
    %v355 = vrot.slane %v271, %v354
    %v356 = vmul.f32 %v134, %v355
    %v357 = vmul.f32 %v135, %v355
    %v358 = vadd.f32 %v326, %v356
    %v359 = vadd.f32 %v327, %v357
    %v360 = vlaneseq
    %v361 = vshrl.u32 %v360, 7
    %v362 = vsub.s32 4, %v361
    %v363 = vrot.slane %v271, %v362
    %v364 = vmul.f32 %v136, %v363
    %v365 = vmul.f32 %v137, %v363
    %v366 = vadd.f32 %v334, %v364
    %v367 = vadd.f32 %v335, %v365
    %v368 = vlaneseq
    %v369 = vshrl.u32 %v368, 7
    %v370 = vsub.s32 5, %v369
    %v371 = vrot.slane %v271, %v370
    %v372 = vmul.f32 %v138, %v371
    %v373 = vmul.f32 %v139, %v371
    %v374 = vadd.f32 %v342, %v372
    %v375 = vadd.f32 %v343, %v373
    %v376 = vlaneseq
    %v377 = vshrl.u32 %v376, 7
    %v378 = vsub.s32 6, %v377
    %v379 = vrot.slane %v271, %v378
    %v380 = vmul.f32 %v140, %v379
    %v381 = vmul.f32 %v141, %v379
    %v382 = vadd.f32 %v350, %v380
    %v383 = vadd.f32 %v351, %v381
    %v384 = vlaneseq
    %v385 = vshrl.u32 %v384, 7
    %v386 = vsub.s32 7, %v385
    %v387 = vrot.slane %v271, %v386
    %v388 = vmul.f32 %v142, %v387
    %v389 = vmul.f32 %v143, %v387
    %v390 = vadd.f32 %v358, %v388
    %v391 = vadd.f32 %v359, %v389
    %v392 = vadd.f32 %v366, %v374
    %v393 = vadd.f32 %v367, %v375
    %v394 = vadd.f32 %v392, %v382
    %v395 = vadd.f32 %v393, %v383
    %v396 = vadd.f32 %v394, %v390
    %v397 = vadd.f32 %v395, %v391
    %v398 = vsub.f32 0.0, %v396
    %v399 = vsub.f32 0.0, %v397
    %v400 = vlaneseq
    %v401 = vshrl.u32 %v400, 7
    %v402 = vsub.s32 0, %v401
    %v403 = vrot.slane %v398, %v402
    %v404 = vmul.f32 %v76, %v403
    %v405 = vmul.f32 %v77, %v403
    %v406 = vlaneseq
    %v407 = vshrl.u32 %v406, 7
    %v408 = vsub.s32 1, %v407
    %v409 = vrot.slane %v398, %v408
    %v410 = vmul.f32 %v78, %v409
    %v411 = vmul.f32 %v79, %v409
    %v412 = vlaneseq
    %v413 = vshrl.u32 %v412, 7
    %v414 = vsub.s32 2, %v413
    %v415 = vrot.slane %v398, %v414
    %v416 = vmul.f32 %v80, %v415
    %v417 = vmul.f32 %v81, %v415
    %v418 = vlaneseq
    %v419 = vshrl.u32 %v418, 7
    %v420 = vsub.s32 3, %v419
    %v421 = vrot.slane %v398, %v420
    %v422 = vmul.f32 %v82, %v421
    %v423 = vmul.f32 %v83, %v421
    %v424 = vlaneseq
    %v425 = vshrl.u32 %v424, 7
    %v426 = vsub.s32 4, %v425
    %v427 = vrot.slane %v398, %v426
    %v428 = vmul.f32 %v84, %v427
    %v429 = vmul.f32 %v85, %v427
    %v430 = vadd.f32 %v404, %v428
    %v431 = vadd.f32 %v405, %v429
    %v432 = vlaneseq
    %v433 = vshrl.u32 %v432, 7
    %v434 = vsub.s32 5, %v433
    %v435 = vrot.slane %v398, %v434
    %v436 = vmul.f32 %v86, %v435
    %v437 = vmul.f32 %v87, %v435
    %v438 = vadd.f32 %v410, %v436
    %v439 = vadd.f32 %v411, %v437
    %v440 = vlaneseq
    %v441 = vshrl.u32 %v440, 7
    %v442 = vsub.s32 6, %v441
    %v443 = vrot.slane %v398, %v442
    %v444 = vmul.f32 %v88, %v443
    %v445 = vmul.f32 %v89, %v443
    %v446 = vadd.f32 %v416, %v444
    %v447 = vadd.f32 %v417, %v445
    %v448 = vlaneseq
    %v449 = vshrl.u32 %v448, 7
    %v450 = vsub.s32 7, %v449
    %v451 = vrot.slane %v398, %v450
    %v452 = vmul.f32 %v90, %v451
    %v453 = vmul.f32 %v91, %v451
    %v454 = vadd.f32 %v422, %v452
    %v455 = vadd.f32 %v423, %v453
    %v456 = vlaneseq
    %v457 = vshrl.u32 %v456, 7
    %v458 = vsub.s32 0, %v457
    %v459 = vrot.slane %v399, %v458
    %v460 = vmul.f32 %v92, %v459
    %v461 = vmul.f32 %v93, %v459
    %v462 = vadd.f32 %v430, %v460
    %v463 = vadd.f32 %v431, %v461
    %v464 = vlaneseq
    %v465 = vshrl.u32 %v464, 7
    %v466 = vsub.s32 1, %v465
    %v467 = vrot.slane %v399, %v466
    %v468 = vmul.f32 %v94, %v467
    %v469 = vmul.f32 %v95, %v467
    %v470 = vadd.f32 %v438, %v468
    %v471 = vadd.f32 %v439, %v469
    %v472 = vlaneseq
    %v473 = vshrl.u32 %v472, 7
    %v474 = vsub.s32 2, %v473
    %v475 = vrot.slane %v399, %v474
    %v476 = vmul.f32 %v96, %v475
    %v477 = vmul.f32 %v97, %v475
    %v478 = vadd.f32 %v446, %v476
    %v479 = vadd.f32 %v447, %v477
    %v480 = vlaneseq
    %v481 = vshrl.u32 %v480, 7
    %v482 = vsub.s32 3, %v481
    %v483 = vrot.slane %v399, %v482
    %v484 = vmul.f32 %v98, %v483
    %v485 = vmul.f32 %v99, %v483
    %v486 = vadd.f32 %v454, %v484
    %v487 = vadd.f32 %v455, %v485
    %v488 = vlaneseq
    %v489 = vshrl.u32 %v488, 7
    %v490 = vsub.s32 4, %v489
    %v491 = vrot.slane %v399, %v490
    %v492 = vmul.f32 %v100, %v491
    %v493 = vmul.f32 %v101, %v491
    %v494 = vadd.f32 %v462, %v492
    %v495 = vadd.f32 %v463, %v493
    %v496 = vlaneseq
    %v497 = vshrl.u32 %v496, 7
    %v498 = vsub.s32 5, %v497
    %v499 = vrot.slane %v399, %v498
    %v500 = vmul.f32 %v102, %v499
    %v501 = vmul.f32 %v103, %v499
    %v502 = vadd.f32 %v470, %v500
    %v503 = vadd.f32 %v471, %v501
    %v504 = vlaneseq
    %v505 = vshrl.u32 %v504, 7
    %v506 = vsub.s32 6, %v505
    %v507 = vrot.slane %v399, %v506
    %v508 = vmul.f32 %v104, %v507
    %v509 = vmul.f32 %v105, %v507
    %v510 = vadd.f32 %v478, %v508
    %v511 = vadd.f32 %v479, %v509
    %v512 = vlaneseq
    %v513 = vshrl.u32 %v512, 7
    %v514 = vsub.s32 7, %v513
    %v515 = vrot.slane %v399, %v514
    %v516 = vmul.f32 %v106, %v515
    %v517 = vmul.f32 %v107, %v515
    %v518 = vadd.f32 %v486, %v516
    %v519 = vadd.f32 %v487, %v517
    %v520 = vadd.f32 %v494, %v502
    %v521 = vadd.f32 %v495, %v503
    %v522 = vadd.f32 %v520, %v510
    %v523 = vadd.f32 %v521, %v511
    %v524 = vadd.f32 %v522, %v518
    %v525 = vadd.f32 %v523, %v519
    %v526 = vmul.f32 %v398, %v524
    %v527 = vmul.f32 %v399, %v525
    %v528 = vadd.f32 %v526, %v527
    %v529 = vrot.slane %v528, 4
    %v530 = vadd.f32 %v528, %v529
    %v531 = vrot.slane %v530, 2
    %v532 = vadd.f32 %v530, %v531
    %v533 = vrot.slane %v532, 1
    %v534 = vadd.f32 %v532, %v533
    %v535 = vmul.f32 %v270, %v398
    %v536 = vmul.f32 %v271, %v399
    %v537 = vadd.f32 %v535, %v536
    %v538 = vrot.slane %v537, 4
    %v539 = vadd.f32 %v537, %v538
    %v540 = vrot.slane %v539, 2
    %v541 = vadd.f32 %v539, %v540
    %v542 = vrot.slane %v541, 1
    %v543 = vadd.f32 %v541, %v542
    %vm544 = vcmp.gt.f32.partialorder %v534, 1e-30
    %v545 = vsub.f32 0.0, %v543
    %v546 = vsel %vm544, %v534, 1.0
    %v547 = vrcp.pop %v546
    %v548 = vmul.f32 %v545, %v547
    %v549 = vsel %vm544, %v548, 0.0
    %v550 = vmul.f32 %v549, %v398
    %v551 = vmul.f32 %v549, %v399
    %v552 = vadd.f32 %v110, %v550
    %v553 = vadd.f32 %v111, %v551
    %v554 = vmul.f32 %v549, %v524
    %v555 = vmul.f32 %v549, %v525
    %v556 = vadd.f32 %v270, %v554
    %v557 = vadd.f32 %v271, %v555
    %v558 = vsub.f32 %v556, %v270
    %v559 = vsub.f32 %v557, %v271
    %v560 = vmul.f32 %v550, %v558
    %v561 = vmul.f32 %v551, %v559
    %v562 = vadd.f32 %v560, %v561
    %v563 = vrot.slane %v562, 4
    %v564 = vadd.f32 %v562, %v563
    %v565 = vrot.slane %v564, 2
    %v566 = vadd.f32 %v564, %v565
    %v567 = vrot.slane %v566, 1
    %v568 = vadd.f32 %v566, %v567
    %v569 = vlaneseq
    %v570 = vshrl.u32 %v569, 7
    %v571 = vsub.s32 0, %v570
    %v572 = vrot.slane %v558, %v571
    %v573 = vmul.f32 %v112, %v572
    %v574 = vmul.f32 %v113, %v572
    %v575 = vlaneseq
    %v576 = vshrl.u32 %v575, 7
    %v577 = vsub.s32 1, %v576
    %v578 = vrot.slane %v558, %v577
    %v579 = vmul.f32 %v114, %v578
    %v580 = vmul.f32 %v115, %v578
    %v581 = vlaneseq
    %v582 = vshrl.u32 %v581, 7
    %v583 = vsub.s32 2, %v582
    %v584 = vrot.slane %v558, %v583
    %v585 = vmul.f32 %v116, %v584
    %v586 = vmul.f32 %v117, %v584
    %v587 = vlaneseq
    %v588 = vshrl.u32 %v587, 7
    %v589 = vsub.s32 3, %v588
    %v590 = vrot.slane %v558, %v589
    %v591 = vmul.f32 %v118, %v590
    %v592 = vmul.f32 %v119, %v590
    %v593 = vlaneseq
    %v594 = vshrl.u32 %v593, 7
    %v595 = vsub.s32 4, %v594
    %v596 = vrot.slane %v558, %v595
    %v597 = vmul.f32 %v120, %v596
    %v598 = vmul.f32 %v121, %v596
    %v599 = vadd.f32 %v573, %v597
    %v600 = vadd.f32 %v574, %v598
    %v601 = vlaneseq
    %v602 = vshrl.u32 %v601, 7
    %v603 = vsub.s32 5, %v602
    %v604 = vrot.slane %v558, %v603
    %v605 = vmul.f32 %v122, %v604
    %v606 = vmul.f32 %v123, %v604
    %v607 = vadd.f32 %v579, %v605
    %v608 = vadd.f32 %v580, %v606
    %v609 = vlaneseq
    %v610 = vshrl.u32 %v609, 7
    %v611 = vsub.s32 6, %v610
    %v612 = vrot.slane %v558, %v611
    %v613 = vmul.f32 %v124, %v612
    %v614 = vmul.f32 %v125, %v612
    %v615 = vadd.f32 %v585, %v613
    %v616 = vadd.f32 %v586, %v614
    %v617 = vlaneseq
    %v618 = vshrl.u32 %v617, 7
    %v619 = vsub.s32 7, %v618
    %v620 = vrot.slane %v558, %v619
    %v621 = vmul.f32 %v126, %v620
    %v622 = vmul.f32 %v127, %v620
    %v623 = vadd.f32 %v591, %v621
    %v624 = vadd.f32 %v592, %v622
    %v625 = vlaneseq
    %v626 = vshrl.u32 %v625, 7
    %v627 = vsub.s32 0, %v626
    %v628 = vrot.slane %v559, %v627
    %v629 = vmul.f32 %v128, %v628
    %v630 = vmul.f32 %v129, %v628
    %v631 = vadd.f32 %v599, %v629
    %v632 = vadd.f32 %v600, %v630
    %v633 = vlaneseq
    %v634 = vshrl.u32 %v633, 7
    %v635 = vsub.s32 1, %v634
    %v636 = vrot.slane %v559, %v635
    %v637 = vmul.f32 %v130, %v636
    %v638 = vmul.f32 %v131, %v636
    %v639 = vadd.f32 %v607, %v637
    %v640 = vadd.f32 %v608, %v638
    %v641 = vlaneseq
    %v642 = vshrl.u32 %v641, 7
    %v643 = vsub.s32 2, %v642
    %v644 = vrot.slane %v559, %v643
    %v645 = vmul.f32 %v132, %v644
    %v646 = vmul.f32 %v133, %v644
    %v647 = vadd.f32 %v615, %v645
    %v648 = vadd.f32 %v616, %v646
    %v649 = vlaneseq
    %v650 = vshrl.u32 %v649, 7
    %v651 = vsub.s32 3, %v650
    %v652 = vrot.slane %v559, %v651
    %v653 = vmul.f32 %v134, %v652
    %v654 = vmul.f32 %v135, %v652
    %v655 = vadd.f32 %v623, %v653
    %v656 = vadd.f32 %v624, %v654
    %v657 = vlaneseq
    %v658 = vshrl.u32 %v657, 7
    %v659 = vsub.s32 4, %v658
    %v660 = vrot.slane %v559, %v659
    %v661 = vmul.f32 %v136, %v660
    %v662 = vmul.f32 %v137, %v660
    %v663 = vadd.f32 %v631, %v661
    %v664 = vadd.f32 %v632, %v662
    %v665 = vlaneseq
    %v666 = vshrl.u32 %v665, 7
    %v667 = vsub.s32 5, %v666
    %v668 = vrot.slane %v559, %v667
    %v669 = vmul.f32 %v138, %v668
    %v670 = vmul.f32 %v139, %v668
    %v671 = vadd.f32 %v639, %v669
    %v672 = vadd.f32 %v640, %v670
    %v673 = vlaneseq
    %v674 = vshrl.u32 %v673, 7
    %v675 = vsub.s32 6, %v674
    %v676 = vrot.slane %v559, %v675
    %v677 = vmul.f32 %v140, %v676
    %v678 = vmul.f32 %v141, %v676
    %v679 = vadd.f32 %v647, %v677
    %v680 = vadd.f32 %v648, %v678
    %v681 = vlaneseq
    %v682 = vshrl.u32 %v681, 7
    %v683 = vsub.s32 7, %v682
    %v684 = vrot.slane %v559, %v683
    %v685 = vmul.f32 %v142, %v684
    %v686 = vmul.f32 %v143, %v684
    %v687 = vadd.f32 %v655, %v685
    %v688 = vadd.f32 %v656, %v686
    %v689 = vadd.f32 %v663, %v671
    %v690 = vadd.f32 %v664, %v672
    %v691 = vadd.f32 %v689, %v679
    %v692 = vadd.f32 %v690, %v680
    %v693 = vadd.f32 %v691, %v687
    %v694 = vadd.f32 %v692, %v688
    %v695 = vmul.f32 %v558, %v693
    %v696 = vmul.f32 %v559, %v694
    %v697 = vadd.f32 %v695, %v696
    %v698 = vrot.slane %v697, 4
    %v699 = vadd.f32 %v697, %v698
    %v700 = vrot.slane %v699, 2
    %v701 = vadd.f32 %v699, %v700
    %v702 = vrot.slane %v701, 1
    %v703 = vadd.f32 %v701, %v702
    %vm704 = vcmp.ne.f32.partialorder %v568, 0.0
    %v705 = vsel %vm704, %v568, 1.0
    %v706 = vrcp.pop %v705
    %v707 = vmul.f32 1.0, %v706
    %v708 = vsel %vm704, %v707, 0.0
    %v709 = vadd.f32 %v568, %v703
    %v710 = vmul.f32 %v709, %v708
    %v711 = vmul.f32 %v710, %v708
    %v712 = vmul.f32 %v711, %v550
    %v713 = vmul.f32 %v711, %v551
    %v714 = vmul.f32 %v708, %v693
    %v715 = vmul.f32 %v708, %v694
    %v716 = vsub.f32 %v712, %v714
    %v717 = vsub.f32 %v713, %v715
    %v720 = vcombine.high %v550, %v550
    %v722 = vunpack.c.l.s4 1966171168
    %v723 = vunpack.c.0.s8 %v722
    %v724 = vlaneseq
    %v725 = vshrl.u32 %v724, 7
    %v726 = vsub.s32 %v723, %v725
    %v727 = vrot.slane %v550, %v726
    %v729 = vunpack.c.l.s4 1966171168
    %v730 = vunpack.c.0.s8 %v729
    %v731 = vlaneseq
    %v732 = vshrl.u32 %v731, 7
    %v733 = vsub.s32 %v730, %v732
    %v734 = vrot.slane %v720, %v733
    %v735 = vcombine.high %v727, %v727
    %v736 = vcombine.high %v734, %v734
    %v738 = vunpack.c.l.s4 1966171168
    %v739 = vunpack.c.0.s8 %v738
    %v740 = vlaneseq
    %v741 = vshrl.u32 %v740, 7
    %v742 = vsub.s32 %v739, %v741
    %v743 = vrot.slane %v727, %v742
    %v745 = vunpack.c.l.s4 1966171168
    %v746 = vunpack.c.0.s8 %v745
    %v747 = vlaneseq
    %v748 = vshrl.u32 %v747, 7
    %v749 = vsub.s32 %v746, %v748
    %v750 = vrot.slane %v734, %v749
    %v752 = vunpack.c.l.s4 1966171168
    %v753 = vunpack.c.0.s8 %v752
    %v754 = vlaneseq
    %v755 = vshrl.u32 %v754, 7
    %v756 = vsub.s32 %v753, %v755
    %v757 = vrot.slane %v735, %v756
    %v759 = vunpack.c.l.s4 1966171168
    %v760 = vunpack.c.0.s8 %v759
    %v761 = vlaneseq
    %v762 = vshrl.u32 %v761, 7
    %v763 = vsub.s32 %v760, %v762
    %v764 = vrot.slane %v736, %v763
    %v765 = vcombine.high %v743, %v743
    %v766 = vcombine.high %v750, %v750
    %v767 = vcombine.high %v757, %v757
    %v768 = vcombine.high %v764, %v764
    %v769 = vcombine.high %v551, %v551
    %v771 = vunpack.c.l.s4 1966171168
    %v772 = vunpack.c.0.s8 %v771
    %v773 = vlaneseq
    %v774 = vshrl.u32 %v773, 7
    %v775 = vsub.s32 %v772, %v774
    %v776 = vrot.slane %v551, %v775
    %v778 = vunpack.c.l.s4 1966171168
    %v779 = vunpack.c.0.s8 %v778
    %v780 = vlaneseq
    %v781 = vshrl.u32 %v780, 7
    %v782 = vsub.s32 %v779, %v781
    %v783 = vrot.slane %v769, %v782
    %v784 = vcombine.high %v776, %v776
    %v785 = vcombine.high %v783, %v783
    %v787 = vunpack.c.l.s4 1966171168
    %v788 = vunpack.c.0.s8 %v787
    %v789 = vlaneseq
    %v790 = vshrl.u32 %v789, 7
    %v791 = vsub.s32 %v788, %v790
    %v792 = vrot.slane %v776, %v791
    %v794 = vunpack.c.l.s4 1966171168
    %v795 = vunpack.c.0.s8 %v794
    %v796 = vlaneseq
    %v797 = vshrl.u32 %v796, 7
    %v798 = vsub.s32 %v795, %v797
    %v799 = vrot.slane %v783, %v798
    %v801 = vunpack.c.l.s4 1966171168
    %v802 = vunpack.c.0.s8 %v801
    %v803 = vlaneseq
    %v804 = vshrl.u32 %v803, 7
    %v805 = vsub.s32 %v802, %v804
    %v806 = vrot.slane %v784, %v805
    %v808 = vunpack.c.l.s4 1966171168
    %v809 = vunpack.c.0.s8 %v808
    %v810 = vlaneseq
    %v811 = vshrl.u32 %v810, 7
    %v812 = vsub.s32 %v809, %v811
    %v813 = vrot.slane %v785, %v812
    %v814 = vcombine.high %v792, %v792
    %v815 = vcombine.high %v799, %v799
    %v816 = vcombine.high %v806, %v806
    %v817 = vcombine.high %v813, %v813
    %v818 = vlaneseq
    %v819 = vshrl.u32 %v818, 7
    %v820 = vsub.s32 0, %v819
    %v821 = vrot.slane %v743, %v820
    %v822 = vlaneseq
    %v823 = vshrl.u32 %v822, 7
    %v824 = vsub.s32 0, %v823
    %v825 = vrot.slane %v757, %v824
    %v826 = vlaneseq
    %v827 = vshrl.u32 %v826, 7
    %v828 = vsub.s32 0, %v827
    %v829 = vrot.slane %v765, %v828
    %v830 = vlaneseq
    %v831 = vshrl.u32 %v830, 7
    %v832 = vsub.s32 0, %v831
    %v833 = vrot.slane %v767, %v832
    %v834 = vlaneseq
    %v835 = vshrl.u32 %v834, 7
    %v836 = vsub.s32 0, %v835
    %v837 = vrot.slane %v750, %v836
    %v838 = vlaneseq
    %v839 = vshrl.u32 %v838, 7
    %v840 = vsub.s32 0, %v839
    %v841 = vrot.slane %v764, %v840
    %v842 = vlaneseq
    %v843 = vshrl.u32 %v842, 7
    %v844 = vsub.s32 0, %v843
    %v845 = vrot.slane %v766, %v844
    %v846 = vlaneseq
    %v847 = vshrl.u32 %v846, 7
    %v848 = vsub.s32 0, %v847
    %v849 = vrot.slane %v768, %v848
    %v850 = vlaneseq
    %v851 = vshrl.u32 %v850, 7
    %v852 = vsub.s32 0, %v851
    %v853 = vrot.slane %v792, %v852
    %v854 = vlaneseq
    %v855 = vshrl.u32 %v854, 7
    %v856 = vsub.s32 0, %v855
    %v857 = vrot.slane %v806, %v856
    %v858 = vlaneseq
    %v859 = vshrl.u32 %v858, 7
    %v860 = vsub.s32 0, %v859
    %v861 = vrot.slane %v814, %v860
    %v862 = vlaneseq
    %v863 = vshrl.u32 %v862, 7
    %v864 = vsub.s32 0, %v863
    %v865 = vrot.slane %v816, %v864
    %v866 = vlaneseq
    %v867 = vshrl.u32 %v866, 7
    %v868 = vsub.s32 0, %v867
    %v869 = vrot.slane %v799, %v868
    %v870 = vlaneseq
    %v871 = vshrl.u32 %v870, 7
    %v872 = vsub.s32 0, %v871
    %v873 = vrot.slane %v813, %v872
    %v874 = vlaneseq
    %v875 = vshrl.u32 %v874, 7
    %v876 = vsub.s32 0, %v875
    %v877 = vrot.slane %v815, %v876
    %v878 = vlaneseq
    %v879 = vshrl.u32 %v878, 7
    %v880 = vsub.s32 0, %v879
    %v881 = vrot.slane %v817, %v880
    %v898 = vmul.f32 %v821, %v716
    %v899 = vmul.f32 %v821, %v717
    %v900 = vmul.f32 %v825, %v716
    %v901 = vmul.f32 %v825, %v717
    %v902 = vmul.f32 %v829, %v716
    %v903 = vmul.f32 %v829, %v717
    %v904 = vmul.f32 %v833, %v716
    %v905 = vmul.f32 %v833, %v717
    %v906 = vmul.f32 %v837, %v716
    %v907 = vmul.f32 %v837, %v717
    %v908 = vmul.f32 %v841, %v716
    %v909 = vmul.f32 %v841, %v717
    %v910 = vmul.f32 %v845, %v716
    %v911 = vmul.f32 %v845, %v717
    %v912 = vmul.f32 %v849, %v716
    %v913 = vmul.f32 %v849, %v717
    %v914 = vmul.f32 %v853, %v716
    %v915 = vmul.f32 %v853, %v717
    %v916 = vmul.f32 %v857, %v716
    %v917 = vmul.f32 %v857, %v717
    %v918 = vmul.f32 %v861, %v716
    %v919 = vmul.f32 %v861, %v717
    %v920 = vmul.f32 %v865, %v716
    %v921 = vmul.f32 %v865, %v717
    %v922 = vmul.f32 %v869, %v716
    %v923 = vmul.f32 %v869, %v717
    %v924 = vmul.f32 %v873, %v716
    %v925 = vmul.f32 %v873, %v717
    %v926 = vmul.f32 %v877, %v716
    %v927 = vmul.f32 %v877, %v717
    %v928 = vmul.f32 %v881, %v716
    %v929 = vmul.f32 %v881, %v717
    %v932 = vcombine.high %v714, %v714
    %v934 = vunpack.c.l.s4 1966171168
    %v935 = vunpack.c.0.s8 %v934
    %v936 = vlaneseq
    %v937 = vshrl.u32 %v936, 7
    %v938 = vsub.s32 %v935, %v937
    %v939 = vrot.slane %v714, %v938
    %v941 = vunpack.c.l.s4 1966171168
    %v942 = vunpack.c.0.s8 %v941
    %v943 = vlaneseq
    %v944 = vshrl.u32 %v943, 7
    %v945 = vsub.s32 %v942, %v944
    %v946 = vrot.slane %v932, %v945
    %v947 = vcombine.high %v939, %v939
    %v948 = vcombine.high %v946, %v946
    %v950 = vunpack.c.l.s4 1966171168
    %v951 = vunpack.c.0.s8 %v950
    %v952 = vlaneseq
    %v953 = vshrl.u32 %v952, 7
    %v954 = vsub.s32 %v951, %v953
    %v955 = vrot.slane %v939, %v954
    %v957 = vunpack.c.l.s4 1966171168
    %v958 = vunpack.c.0.s8 %v957
    %v959 = vlaneseq
    %v960 = vshrl.u32 %v959, 7
    %v961 = vsub.s32 %v958, %v960
    %v962 = vrot.slane %v946, %v961
    %v964 = vunpack.c.l.s4 1966171168
    %v965 = vunpack.c.0.s8 %v964
    %v966 = vlaneseq
    %v967 = vshrl.u32 %v966, 7
    %v968 = vsub.s32 %v965, %v967
    %v969 = vrot.slane %v947, %v968
    %v971 = vunpack.c.l.s4 1966171168
    %v972 = vunpack.c.0.s8 %v971
    %v973 = vlaneseq
    %v974 = vshrl.u32 %v973, 7
    %v975 = vsub.s32 %v972, %v974
    %v976 = vrot.slane %v948, %v975
    %v977 = vcombine.high %v955, %v955
    %v978 = vcombine.high %v962, %v962
    %v979 = vcombine.high %v969, %v969
    %v980 = vcombine.high %v976, %v976
    %v981 = vcombine.high %v715, %v715
    %v983 = vunpack.c.l.s4 1966171168
    %v984 = vunpack.c.0.s8 %v983
    %v985 = vlaneseq
    %v986 = vshrl.u32 %v985, 7
    %v987 = vsub.s32 %v984, %v986
    %v988 = vrot.slane %v715, %v987
    %v990 = vunpack.c.l.s4 1966171168
    %v991 = vunpack.c.0.s8 %v990
    %v992 = vlaneseq
    %v993 = vshrl.u32 %v992, 7
    %v994 = vsub.s32 %v991, %v993
    %v995 = vrot.slane %v981, %v994
    %v996 = vcombine.high %v988, %v988
    %v997 = vcombine.high %v995, %v995
    %v999 = vunpack.c.l.s4 1966171168
    %v1000 = vunpack.c.0.s8 %v999
    %v1001 = vlaneseq
    %v1002 = vshrl.u32 %v1001, 7
    %v1003 = vsub.s32 %v1000, %v1002
    %v1004 = vrot.slane %v988, %v1003
    %v1006 = vunpack.c.l.s4 1966171168
    %v1007 = vunpack.c.0.s8 %v1006
    %v1008 = vlaneseq
    %v1009 = vshrl.u32 %v1008, 7
    %v1010 = vsub.s32 %v1007, %v1009
    %v1011 = vrot.slane %v995, %v1010
    %v1013 = vunpack.c.l.s4 1966171168
    %v1014 = vunpack.c.0.s8 %v1013
    %v1015 = vlaneseq
    %v1016 = vshrl.u32 %v1015, 7
    %v1017 = vsub.s32 %v1014, %v1016
    %v1018 = vrot.slane %v996, %v1017
    %v1020 = vunpack.c.l.s4 1966171168
    %v1021 = vunpack.c.0.s8 %v1020
    %v1022 = vlaneseq
    %v1023 = vshrl.u32 %v1022, 7
    %v1024 = vsub.s32 %v1021, %v1023
    %v1025 = vrot.slane %v997, %v1024
    %v1026 = vcombine.high %v1004, %v1004
    %v1027 = vcombine.high %v1011, %v1011
    %v1028 = vcombine.high %v1018, %v1018
    %v1029 = vcombine.high %v1025, %v1025
    %v1030 = vlaneseq
    %v1031 = vshrl.u32 %v1030, 7
    %v1032 = vsub.s32 0, %v1031
    %v1033 = vrot.slane %v955, %v1032
    %v1034 = vlaneseq
    %v1035 = vshrl.u32 %v1034, 7
    %v1036 = vsub.s32 0, %v1035
    %v1037 = vrot.slane %v969, %v1036
    %v1038 = vlaneseq
    %v1039 = vshrl.u32 %v1038, 7
    %v1040 = vsub.s32 0, %v1039
    %v1041 = vrot.slane %v977, %v1040
    %v1042 = vlaneseq
    %v1043 = vshrl.u32 %v1042, 7
    %v1044 = vsub.s32 0, %v1043
    %v1045 = vrot.slane %v979, %v1044
    %v1046 = vlaneseq
    %v1047 = vshrl.u32 %v1046, 7
    %v1048 = vsub.s32 0, %v1047
    %v1049 = vrot.slane %v962, %v1048
    %v1050 = vlaneseq
    %v1051 = vshrl.u32 %v1050, 7
    %v1052 = vsub.s32 0, %v1051
    %v1053 = vrot.slane %v976, %v1052
    %v1054 = vlaneseq
    %v1055 = vshrl.u32 %v1054, 7
    %v1056 = vsub.s32 0, %v1055
    %v1057 = vrot.slane %v978, %v1056
    %v1058 = vlaneseq
    %v1059 = vshrl.u32 %v1058, 7
    %v1060 = vsub.s32 0, %v1059
    %v1061 = vrot.slane %v980, %v1060
    %v1062 = vlaneseq
    %v1063 = vshrl.u32 %v1062, 7
    %v1064 = vsub.s32 0, %v1063
    %v1065 = vrot.slane %v1004, %v1064
    %v1066 = vlaneseq
    %v1067 = vshrl.u32 %v1066, 7
    %v1068 = vsub.s32 0, %v1067
    %v1069 = vrot.slane %v1018, %v1068
    %v1070 = vlaneseq
    %v1071 = vshrl.u32 %v1070, 7
    %v1072 = vsub.s32 0, %v1071
    %v1073 = vrot.slane %v1026, %v1072
    %v1074 = vlaneseq
    %v1075 = vshrl.u32 %v1074, 7
    %v1076 = vsub.s32 0, %v1075
    %v1077 = vrot.slane %v1028, %v1076
    %v1078 = vlaneseq
    %v1079 = vshrl.u32 %v1078, 7
    %v1080 = vsub.s32 0, %v1079
    %v1081 = vrot.slane %v1011, %v1080
    %v1082 = vlaneseq
    %v1083 = vshrl.u32 %v1082, 7
    %v1084 = vsub.s32 0, %v1083
    %v1085 = vrot.slane %v1025, %v1084
    %v1086 = vlaneseq
    %v1087 = vshrl.u32 %v1086, 7
    %v1088 = vsub.s32 0, %v1087
    %v1089 = vrot.slane %v1027, %v1088
    %v1090 = vlaneseq
    %v1091 = vshrl.u32 %v1090, 7
    %v1092 = vsub.s32 0, %v1091
    %v1093 = vrot.slane %v1029, %v1092
    %v1110 = vmul.f32 %v1033, %v550
    %v1111 = vmul.f32 %v1033, %v551
    %v1112 = vmul.f32 %v1037, %v550
    %v1113 = vmul.f32 %v1037, %v551
    %v1114 = vmul.f32 %v1041, %v550
    %v1115 = vmul.f32 %v1041, %v551
    %v1116 = vmul.f32 %v1045, %v550
    %v1117 = vmul.f32 %v1045, %v551
    %v1118 = vmul.f32 %v1049, %v550
    %v1119 = vmul.f32 %v1049, %v551
    %v1120 = vmul.f32 %v1053, %v550
    %v1121 = vmul.f32 %v1053, %v551
    %v1122 = vmul.f32 %v1057, %v550
    %v1123 = vmul.f32 %v1057, %v551
    %v1124 = vmul.f32 %v1061, %v550
    %v1125 = vmul.f32 %v1061, %v551
    %v1126 = vmul.f32 %v1065, %v550
    %v1127 = vmul.f32 %v1065, %v551
    %v1128 = vmul.f32 %v1069, %v550
    %v1129 = vmul.f32 %v1069, %v551
    %v1130 = vmul.f32 %v1073, %v550
    %v1131 = vmul.f32 %v1073, %v551
    %v1132 = vmul.f32 %v1077, %v550
    %v1133 = vmul.f32 %v1077, %v551
    %v1134 = vmul.f32 %v1081, %v550
    %v1135 = vmul.f32 %v1081, %v551
    %v1136 = vmul.f32 %v1085, %v550
    %v1137 = vmul.f32 %v1085, %v551
    %v1138 = vmul.f32 %v1089, %v550
    %v1139 = vmul.f32 %v1089, %v551
    %v1140 = vmul.f32 %v1093, %v550
    %v1141 = vmul.f32 %v1093, %v551
    %v1142 = vsub.f32 %v898, %v1110
    %v1143 = vsub.f32 %v899, %v1111
    %v1144 = vsub.f32 %v900, %v1112
    %v1145 = vsub.f32 %v901, %v1113
    %v1146 = vsub.f32 %v902, %v1114
    %v1147 = vsub.f32 %v903, %v1115
    %v1148 = vsub.f32 %v904, %v1116
    %v1149 = vsub.f32 %v905, %v1117
    %v1150 = vsub.f32 %v906, %v1118
    %v1151 = vsub.f32 %v907, %v1119
    %v1152 = vsub.f32 %v908, %v1120
    %v1153 = vsub.f32 %v909, %v1121
    %v1154 = vsub.f32 %v910, %v1122
    %v1155 = vsub.f32 %v911, %v1123
    %v1156 = vsub.f32 %v912, %v1124
    %v1157 = vsub.f32 %v913, %v1125
    %v1158 = vsub.f32 %v914, %v1126
    %v1159 = vsub.f32 %v915, %v1127
    %v1160 = vsub.f32 %v916, %v1128
    %v1161 = vsub.f32 %v917, %v1129
    %v1162 = vsub.f32 %v918, %v1130
    %v1163 = vsub.f32 %v919, %v1131
    %v1164 = vsub.f32 %v920, %v1132
    %v1165 = vsub.f32 %v921, %v1133
    %v1166 = vsub.f32 %v922, %v1134
    %v1167 = vsub.f32 %v923, %v1135
    %v1168 = vsub.f32 %v924, %v1136
    %v1169 = vsub.f32 %v925, %v1137
    %v1170 = vsub.f32 %v926, %v1138
    %v1171 = vsub.f32 %v927, %v1139
    %v1172 = vsub.f32 %v928, %v1140
    %v1173 = vsub.f32 %v929, %v1141
    %v1174 = vadd.f32 %v112, %v1142
    %v1175 = vadd.f32 %v113, %v1143
    %v1176 = vadd.f32 %v114, %v1144
    %v1177 = vadd.f32 %v115, %v1145
    %v1178 = vadd.f32 %v116, %v1146
    %v1179 = vadd.f32 %v117, %v1147
    %v1180 = vadd.f32 %v118, %v1148
    %v1181 = vadd.f32 %v119, %v1149
    %v1182 = vadd.f32 %v120, %v1150
    %v1183 = vadd.f32 %v121, %v1151
    %v1184 = vadd.f32 %v122, %v1152
    %v1185 = vadd.f32 %v123, %v1153
    %v1186 = vadd.f32 %v124, %v1154
    %v1187 = vadd.f32 %v125, %v1155
    %v1188 = vadd.f32 %v126, %v1156
    %v1189 = vadd.f32 %v127, %v1157
    %v1190 = vadd.f32 %v128, %v1158
    %v1191 = vadd.f32 %v129, %v1159
    %v1192 = vadd.f32 %v130, %v1160
    %v1193 = vadd.f32 %v131, %v1161
    %v1194 = vadd.f32 %v132, %v1162
    %v1195 = vadd.f32 %v133, %v1163
    %v1196 = vadd.f32 %v134, %v1164
    %v1197 = vadd.f32 %v135, %v1165
    %v1198 = vadd.f32 %v136, %v1166
    %v1199 = vadd.f32 %v137, %v1167
    %v1200 = vadd.f32 %v138, %v1168
    %v1201 = vadd.f32 %v139, %v1169
    %v1202 = vadd.f32 %v140, %v1170
    %v1203 = vadd.f32 %v141, %v1171
    %v1204 = vadd.f32 %v142, %v1172
    %v1205 = vadd.f32 %v143, %v1173
    %vm1206 = vcmp.gt.f32.partialorder 1.0, 0.5
    %v1207 = vsel %vm1206, 1, 0
    %vm1208 = vcmp.eq.s32.totalorder %v1207, 1
    %v1209 = vsel %vm1208, %v552, %v110
    %v1210 = vsel %vm1208, %v553, %v111
    %v1211 = vsel %vm1208, %v556, %v270
    %v1212 = vsel %vm1208, %v557, %v271
    %v1213 = vmul.f32 %v1211, %v1211
    %v1214 = vmul.f32 %v1212, %v1212
    %v1215 = vadd.f32 %v1213, %v1214
    %v1216 = vrot.slane %v1215, 4
    %v1217 = vadd.f32 %v1215, %v1216
    %v1218 = vrot.slane %v1217, 2
    %v1219 = vadd.f32 %v1217, %v1218
    %v1220 = vrot.slane %v1219, 1
    %v1221 = vadd.f32 %v1219, %v1220
    %vm1222 = vcmp.gt.f32.partialorder %v1221, 1e-06
    %vm1223 = vmand %vm1206, %vm1222
    %v1224 = vsel %vm1223, 1, 0
    %v1225 = vcvt.s32.f32 %v1224
    %v1226 = vlaneseq
    %v1227 = vshrl.u32 %v1226, 7
    %v1228 = vsub.s32 0, %v1227
    %v1229 = vrot.slane %v1211, %v1228
    %v1230 = vmul.f32 %v1174, %v1229
    %v1231 = vmul.f32 %v1175, %v1229
    %v1232 = vlaneseq
    %v1233 = vshrl.u32 %v1232, 7
    %v1234 = vsub.s32 1, %v1233
    %v1235 = vrot.slane %v1211, %v1234
    %v1236 = vmul.f32 %v1176, %v1235
    %v1237 = vmul.f32 %v1177, %v1235
    %v1238 = vlaneseq
    %v1239 = vshrl.u32 %v1238, 7
    %v1240 = vsub.s32 2, %v1239
    %v1241 = vrot.slane %v1211, %v1240
    %v1242 = vmul.f32 %v1178, %v1241
    %v1243 = vmul.f32 %v1179, %v1241
    %v1244 = vlaneseq
    %v1245 = vshrl.u32 %v1244, 7
    %v1246 = vsub.s32 3, %v1245
    %v1247 = vrot.slane %v1211, %v1246
    %v1248 = vmul.f32 %v1180, %v1247
    %v1249 = vmul.f32 %v1181, %v1247
    %v1250 = vlaneseq
    %v1251 = vshrl.u32 %v1250, 7
    %v1252 = vsub.s32 4, %v1251
    %v1253 = vrot.slane %v1211, %v1252
    %v1254 = vmul.f32 %v1182, %v1253
    %v1255 = vmul.f32 %v1183, %v1253
    %v1256 = vadd.f32 %v1230, %v1254
    %v1257 = vadd.f32 %v1231, %v1255
    %v1258 = vlaneseq
    %v1259 = vshrl.u32 %v1258, 7
    %v1260 = vsub.s32 5, %v1259
    %v1261 = vrot.slane %v1211, %v1260
    %v1262 = vmul.f32 %v1184, %v1261
    %v1263 = vmul.f32 %v1185, %v1261
    %v1264 = vadd.f32 %v1236, %v1262
    %v1265 = vadd.f32 %v1237, %v1263
    %v1266 = vlaneseq
    %v1267 = vshrl.u32 %v1266, 7
    %v1268 = vsub.s32 6, %v1267
    %v1269 = vrot.slane %v1211, %v1268
    %v1270 = vmul.f32 %v1186, %v1269
    %v1271 = vmul.f32 %v1187, %v1269
    %v1272 = vadd.f32 %v1242, %v1270
    %v1273 = vadd.f32 %v1243, %v1271
    %v1274 = vlaneseq
    %v1275 = vshrl.u32 %v1274, 7
    %v1276 = vsub.s32 7, %v1275
    %v1277 = vrot.slane %v1211, %v1276
    %v1278 = vmul.f32 %v1188, %v1277
    %v1279 = vmul.f32 %v1189, %v1277
    %v1280 = vadd.f32 %v1248, %v1278
    %v1281 = vadd.f32 %v1249, %v1279
    %v1282 = vlaneseq
    %v1283 = vshrl.u32 %v1282, 7
    %v1284 = vsub.s32 0, %v1283
    %v1285 = vrot.slane %v1212, %v1284
    %v1286 = vmul.f32 %v1190, %v1285
    %v1287 = vmul.f32 %v1191, %v1285
    %v1288 = vadd.f32 %v1256, %v1286
    %v1289 = vadd.f32 %v1257, %v1287
    %v1290 = vlaneseq
    %v1291 = vshrl.u32 %v1290, 7
    %v1292 = vsub.s32 1, %v1291
    %v1293 = vrot.slane %v1212, %v1292
    %v1294 = vmul.f32 %v1192, %v1293
    %v1295 = vmul.f32 %v1193, %v1293
    %v1296 = vadd.f32 %v1264, %v1294
    %v1297 = vadd.f32 %v1265, %v1295
    %v1298 = vlaneseq
    %v1299 = vshrl.u32 %v1298, 7
    %v1300 = vsub.s32 2, %v1299
    %v1301 = vrot.slane %v1212, %v1300
    %v1302 = vmul.f32 %v1194, %v1301
    %v1303 = vmul.f32 %v1195, %v1301
    %v1304 = vadd.f32 %v1272, %v1302
    %v1305 = vadd.f32 %v1273, %v1303
    %v1306 = vlaneseq
    %v1307 = vshrl.u32 %v1306, 7
    %v1308 = vsub.s32 3, %v1307
    %v1309 = vrot.slane %v1212, %v1308
    %v1310 = vmul.f32 %v1196, %v1309
    %v1311 = vmul.f32 %v1197, %v1309
    %v1312 = vadd.f32 %v1280, %v1310
    %v1313 = vadd.f32 %v1281, %v1311
    %v1314 = vlaneseq
    %v1315 = vshrl.u32 %v1314, 7
    %v1316 = vsub.s32 4, %v1315
    %v1317 = vrot.slane %v1212, %v1316
    %v1318 = vmul.f32 %v1198, %v1317
    %v1319 = vmul.f32 %v1199, %v1317
    %v1320 = vadd.f32 %v1288, %v1318
    %v1321 = vadd.f32 %v1289, %v1319
    %v1322 = vlaneseq
    %v1323 = vshrl.u32 %v1322, 7
    %v1324 = vsub.s32 5, %v1323
    %v1325 = vrot.slane %v1212, %v1324
    %v1326 = vmul.f32 %v1200, %v1325
    %v1327 = vmul.f32 %v1201, %v1325
    %v1328 = vadd.f32 %v1296, %v1326
    %v1329 = vadd.f32 %v1297, %v1327
    %v1330 = vlaneseq
    %v1331 = vshrl.u32 %v1330, 7
    %v1332 = vsub.s32 6, %v1331
    %v1333 = vrot.slane %v1212, %v1332
    %v1334 = vmul.f32 %v1202, %v1333
    %v1335 = vmul.f32 %v1203, %v1333
    %v1336 = vadd.f32 %v1304, %v1334
    %v1337 = vadd.f32 %v1305, %v1335
    %v1338 = vlaneseq
    %v1339 = vshrl.u32 %v1338, 7
    %v1340 = vsub.s32 7, %v1339
    %v1341 = vrot.slane %v1212, %v1340
    %v1342 = vmul.f32 %v1204, %v1341
    %v1343 = vmul.f32 %v1205, %v1341
    %v1344 = vadd.f32 %v1312, %v1342
    %v1345 = vadd.f32 %v1313, %v1343
    %v1346 = vadd.f32 %v1320, %v1328
    %v1347 = vadd.f32 %v1321, %v1329
    %v1348 = vadd.f32 %v1346, %v1336
    %v1349 = vadd.f32 %v1347, %v1337
    %v1350 = vadd.f32 %v1348, %v1344
    %v1351 = vadd.f32 %v1349, %v1345
    %v1352 = vsub.f32 0.0, %v1350
    %v1353 = vsub.f32 0.0, %v1351
    %v1354 = vlaneseq
    %v1355 = vshrl.u32 %v1354, 7
    %v1356 = vsub.s32 0, %v1355
    %v1357 = vrot.slane %v1352, %v1356
    %v1358 = vmul.f32 %v76, %v1357
    %v1359 = vmul.f32 %v77, %v1357
    %v1360 = vlaneseq
    %v1361 = vshrl.u32 %v1360, 7
    %v1362 = vsub.s32 1, %v1361
    %v1363 = vrot.slane %v1352, %v1362
    %v1364 = vmul.f32 %v78, %v1363
    %v1365 = vmul.f32 %v79, %v1363
    %v1366 = vlaneseq
    %v1367 = vshrl.u32 %v1366, 7
    %v1368 = vsub.s32 2, %v1367
    %v1369 = vrot.slane %v1352, %v1368
    %v1370 = vmul.f32 %v80, %v1369
    %v1371 = vmul.f32 %v81, %v1369
    %v1372 = vlaneseq
    %v1373 = vshrl.u32 %v1372, 7
    %v1374 = vsub.s32 3, %v1373
    %v1375 = vrot.slane %v1352, %v1374
    %v1376 = vmul.f32 %v82, %v1375
    %v1377 = vmul.f32 %v83, %v1375
    %v1378 = vlaneseq
    %v1379 = vshrl.u32 %v1378, 7
    %v1380 = vsub.s32 4, %v1379
    %v1381 = vrot.slane %v1352, %v1380
    %v1382 = vmul.f32 %v84, %v1381
    %v1383 = vmul.f32 %v85, %v1381
    %v1384 = vadd.f32 %v1358, %v1382
    %v1385 = vadd.f32 %v1359, %v1383
    %v1386 = vlaneseq
    %v1387 = vshrl.u32 %v1386, 7
    %v1388 = vsub.s32 5, %v1387
    %v1389 = vrot.slane %v1352, %v1388
    %v1390 = vmul.f32 %v86, %v1389
    %v1391 = vmul.f32 %v87, %v1389
    %v1392 = vadd.f32 %v1364, %v1390
    %v1393 = vadd.f32 %v1365, %v1391
    %v1394 = vlaneseq
    %v1395 = vshrl.u32 %v1394, 7
    %v1396 = vsub.s32 6, %v1395
    %v1397 = vrot.slane %v1352, %v1396
    %v1398 = vmul.f32 %v88, %v1397
    %v1399 = vmul.f32 %v89, %v1397
    %v1400 = vadd.f32 %v1370, %v1398
    %v1401 = vadd.f32 %v1371, %v1399
    %v1402 = vlaneseq
    %v1403 = vshrl.u32 %v1402, 7
    %v1404 = vsub.s32 7, %v1403
    %v1405 = vrot.slane %v1352, %v1404
    %v1406 = vmul.f32 %v90, %v1405
    %v1407 = vmul.f32 %v91, %v1405
    %v1408 = vadd.f32 %v1376, %v1406
    %v1409 = vadd.f32 %v1377, %v1407
    %v1410 = vlaneseq
    %v1411 = vshrl.u32 %v1410, 7
    %v1412 = vsub.s32 0, %v1411
    %v1413 = vrot.slane %v1353, %v1412
    %v1414 = vmul.f32 %v92, %v1413
    %v1415 = vmul.f32 %v93, %v1413
    %v1416 = vadd.f32 %v1384, %v1414
    %v1417 = vadd.f32 %v1385, %v1415
    %v1418 = vlaneseq
    %v1419 = vshrl.u32 %v1418, 7
    %v1420 = vsub.s32 1, %v1419
    %v1421 = vrot.slane %v1353, %v1420
    %v1422 = vmul.f32 %v94, %v1421
    %v1423 = vmul.f32 %v95, %v1421
    %v1424 = vadd.f32 %v1392, %v1422
    %v1425 = vadd.f32 %v1393, %v1423
    %v1426 = vlaneseq
    %v1427 = vshrl.u32 %v1426, 7
    %v1428 = vsub.s32 2, %v1427
    %v1429 = vrot.slane %v1353, %v1428
    %v1430 = vmul.f32 %v96, %v1429
    %v1431 = vmul.f32 %v97, %v1429
    %v1432 = vadd.f32 %v1400, %v1430
    %v1433 = vadd.f32 %v1401, %v1431
    %v1434 = vlaneseq
    %v1435 = vshrl.u32 %v1434, 7
    %v1436 = vsub.s32 3, %v1435
    %v1437 = vrot.slane %v1353, %v1436
    %v1438 = vmul.f32 %v98, %v1437
    %v1439 = vmul.f32 %v99, %v1437
    %v1440 = vadd.f32 %v1408, %v1438
    %v1441 = vadd.f32 %v1409, %v1439
    %v1442 = vlaneseq
    %v1443 = vshrl.u32 %v1442, 7
    %v1444 = vsub.s32 4, %v1443
    %v1445 = vrot.slane %v1353, %v1444
    %v1446 = vmul.f32 %v100, %v1445
    %v1447 = vmul.f32 %v101, %v1445
    %v1448 = vadd.f32 %v1416, %v1446
    %v1449 = vadd.f32 %v1417, %v1447
    %v1450 = vlaneseq
    %v1451 = vshrl.u32 %v1450, 7
    %v1452 = vsub.s32 5, %v1451
    %v1453 = vrot.slane %v1353, %v1452
    %v1454 = vmul.f32 %v102, %v1453
    %v1455 = vmul.f32 %v103, %v1453
    %v1456 = vadd.f32 %v1424, %v1454
    %v1457 = vadd.f32 %v1425, %v1455
    %v1458 = vlaneseq
    %v1459 = vshrl.u32 %v1458, 7
    %v1460 = vsub.s32 6, %v1459
    %v1461 = vrot.slane %v1353, %v1460
    %v1462 = vmul.f32 %v104, %v1461
    %v1463 = vmul.f32 %v105, %v1461
    %v1464 = vadd.f32 %v1432, %v1462
    %v1465 = vadd.f32 %v1433, %v1463
    %v1466 = vlaneseq
    %v1467 = vshrl.u32 %v1466, 7
    %v1468 = vsub.s32 7, %v1467
    %v1469 = vrot.slane %v1353, %v1468
    %v1470 = vmul.f32 %v106, %v1469
    %v1471 = vmul.f32 %v107, %v1469
    %v1472 = vadd.f32 %v1440, %v1470
    %v1473 = vadd.f32 %v1441, %v1471
    %v1474 = vadd.f32 %v1448, %v1456
    %v1475 = vadd.f32 %v1449, %v1457
    %v1476 = vadd.f32 %v1474, %v1464
    %v1477 = vadd.f32 %v1475, %v1465
    %v1478 = vadd.f32 %v1476, %v1472
    %v1479 = vadd.f32 %v1477, %v1473
    %v1480 = vmul.f32 %v1352, %v1478
    %v1481 = vmul.f32 %v1353, %v1479
    %v1482 = vadd.f32 %v1480, %v1481
    %v1483 = vrot.slane %v1482, 4
    %v1484 = vadd.f32 %v1482, %v1483
    %v1485 = vrot.slane %v1484, 2
    %v1486 = vadd.f32 %v1484, %v1485
    %v1487 = vrot.slane %v1486, 1
    %v1488 = vadd.f32 %v1486, %v1487
    %v1489 = vmul.f32 %v1211, %v1352
    %v1490 = vmul.f32 %v1212, %v1353
    %v1491 = vadd.f32 %v1489, %v1490
    %v1492 = vrot.slane %v1491, 4
    %v1493 = vadd.f32 %v1491, %v1492
    %v1494 = vrot.slane %v1493, 2
    %v1495 = vadd.f32 %v1493, %v1494
    %v1496 = vrot.slane %v1495, 1
    %v1497 = vadd.f32 %v1495, %v1496
    %vm1498 = vcmp.gt.f32.partialorder %v1488, 1e-30
    %v1499 = vsub.f32 0.0, %v1497
    %v1500 = vsel %vm1498, %v1488, 1.0
    %v1501 = vrcp.pop %v1500
    %v1502 = vmul.f32 %v1499, %v1501
    %v1503 = vsel %vm1498, %v1502, 0.0
    %v1504 = vmul.f32 %v1503, %v1352
    %v1505 = vmul.f32 %v1503, %v1353
    %v1506 = vadd.f32 %v1209, %v1504
    %v1507 = vadd.f32 %v1210, %v1505
    %v1508 = vmul.f32 %v1503, %v1478
    %v1509 = vmul.f32 %v1503, %v1479
    %v1510 = vadd.f32 %v1211, %v1508
    %v1511 = vadd.f32 %v1212, %v1509
    %v1512 = vsub.f32 %v1510, %v1211
    %v1513 = vsub.f32 %v1511, %v1212
    %v1514 = vmul.f32 %v1504, %v1512
    %v1515 = vmul.f32 %v1505, %v1513
    %v1516 = vadd.f32 %v1514, %v1515
    %v1517 = vrot.slane %v1516, 4
    %v1518 = vadd.f32 %v1516, %v1517
    %v1519 = vrot.slane %v1518, 2
    %v1520 = vadd.f32 %v1518, %v1519
    %v1521 = vrot.slane %v1520, 1
    %v1522 = vadd.f32 %v1520, %v1521
    %v1523 = vlaneseq
    %v1524 = vshrl.u32 %v1523, 7
    %v1525 = vsub.s32 0, %v1524
    %v1526 = vrot.slane %v1512, %v1525
    %v1527 = vmul.f32 %v1174, %v1526
    %v1528 = vmul.f32 %v1175, %v1526
    %v1529 = vlaneseq
    %v1530 = vshrl.u32 %v1529, 7
    %v1531 = vsub.s32 1, %v1530
    %v1532 = vrot.slane %v1512, %v1531
    %v1533 = vmul.f32 %v1176, %v1532
    %v1534 = vmul.f32 %v1177, %v1532
    %v1535 = vlaneseq
    %v1536 = vshrl.u32 %v1535, 7
    %v1537 = vsub.s32 2, %v1536
    %v1538 = vrot.slane %v1512, %v1537
    %v1539 = vmul.f32 %v1178, %v1538
    %v1540 = vmul.f32 %v1179, %v1538
    %v1541 = vlaneseq
    %v1542 = vshrl.u32 %v1541, 7
    %v1543 = vsub.s32 3, %v1542
    %v1544 = vrot.slane %v1512, %v1543
    %v1545 = vmul.f32 %v1180, %v1544
    %v1546 = vmul.f32 %v1181, %v1544
    %v1547 = vlaneseq
    %v1548 = vshrl.u32 %v1547, 7
    %v1549 = vsub.s32 4, %v1548
    %v1550 = vrot.slane %v1512, %v1549
    %v1551 = vmul.f32 %v1182, %v1550
    %v1552 = vmul.f32 %v1183, %v1550
    %v1553 = vadd.f32 %v1527, %v1551
    %v1554 = vadd.f32 %v1528, %v1552
    %v1555 = vlaneseq
    %v1556 = vshrl.u32 %v1555, 7
    %v1557 = vsub.s32 5, %v1556
    %v1558 = vrot.slane %v1512, %v1557
    %v1559 = vmul.f32 %v1184, %v1558
    %v1560 = vmul.f32 %v1185, %v1558
    %v1561 = vadd.f32 %v1533, %v1559
    %v1562 = vadd.f32 %v1534, %v1560
    %v1563 = vlaneseq
    %v1564 = vshrl.u32 %v1563, 7
    %v1565 = vsub.s32 6, %v1564
    %v1566 = vrot.slane %v1512, %v1565
    %v1567 = vmul.f32 %v1186, %v1566
    %v1568 = vmul.f32 %v1187, %v1566
    %v1569 = vadd.f32 %v1539, %v1567
    %v1570 = vadd.f32 %v1540, %v1568
    %v1571 = vlaneseq
    %v1572 = vshrl.u32 %v1571, 7
    %v1573 = vsub.s32 7, %v1572
    %v1574 = vrot.slane %v1512, %v1573
    %v1575 = vmul.f32 %v1188, %v1574
    %v1576 = vmul.f32 %v1189, %v1574
    %v1577 = vadd.f32 %v1545, %v1575
    %v1578 = vadd.f32 %v1546, %v1576
    %v1579 = vlaneseq
    %v1580 = vshrl.u32 %v1579, 7
    %v1581 = vsub.s32 0, %v1580
    %v1582 = vrot.slane %v1513, %v1581
    %v1583 = vmul.f32 %v1190, %v1582
    %v1584 = vmul.f32 %v1191, %v1582
    %v1585 = vadd.f32 %v1553, %v1583
    %v1586 = vadd.f32 %v1554, %v1584
    %v1587 = vlaneseq
    %v1588 = vshrl.u32 %v1587, 7
    %v1589 = vsub.s32 1, %v1588
    %v1590 = vrot.slane %v1513, %v1589
    %v1591 = vmul.f32 %v1192, %v1590
    %v1592 = vmul.f32 %v1193, %v1590
    %v1593 = vadd.f32 %v1561, %v1591
    %v1594 = vadd.f32 %v1562, %v1592
    %v1595 = vlaneseq
    %v1596 = vshrl.u32 %v1595, 7
    %v1597 = vsub.s32 2, %v1596
    %v1598 = vrot.slane %v1513, %v1597
    %v1599 = vmul.f32 %v1194, %v1598
    %v1600 = vmul.f32 %v1195, %v1598
    %v1601 = vadd.f32 %v1569, %v1599
    %v1602 = vadd.f32 %v1570, %v1600
    %v1603 = vlaneseq
    %v1604 = vshrl.u32 %v1603, 7
    %v1605 = vsub.s32 3, %v1604
    %v1606 = vrot.slane %v1513, %v1605
    %v1607 = vmul.f32 %v1196, %v1606
    %v1608 = vmul.f32 %v1197, %v1606
    %v1609 = vadd.f32 %v1577, %v1607
    %v1610 = vadd.f32 %v1578, %v1608
    %v1611 = vlaneseq
    %v1612 = vshrl.u32 %v1611, 7
    %v1613 = vsub.s32 4, %v1612
    %v1614 = vrot.slane %v1513, %v1613
    %v1615 = vmul.f32 %v1198, %v1614
    %v1616 = vmul.f32 %v1199, %v1614
    %v1617 = vadd.f32 %v1585, %v1615
    %v1618 = vadd.f32 %v1586, %v1616
    %v1619 = vlaneseq
    %v1620 = vshrl.u32 %v1619, 7
    %v1621 = vsub.s32 5, %v1620
    %v1622 = vrot.slane %v1513, %v1621
    %v1623 = vmul.f32 %v1200, %v1622
    %v1624 = vmul.f32 %v1201, %v1622
    %v1625 = vadd.f32 %v1593, %v1623
    %v1626 = vadd.f32 %v1594, %v1624
    %v1627 = vlaneseq
    %v1628 = vshrl.u32 %v1627, 7
    %v1629 = vsub.s32 6, %v1628
    %v1630 = vrot.slane %v1513, %v1629
    %v1631 = vmul.f32 %v1202, %v1630
    %v1632 = vmul.f32 %v1203, %v1630
    %v1633 = vadd.f32 %v1601, %v1631
    %v1634 = vadd.f32 %v1602, %v1632
    %v1635 = vlaneseq
    %v1636 = vshrl.u32 %v1635, 7
    %v1637 = vsub.s32 7, %v1636
    %v1638 = vrot.slane %v1513, %v1637
    %v1639 = vmul.f32 %v1204, %v1638
    %v1640 = vmul.f32 %v1205, %v1638
    %v1641 = vadd.f32 %v1609, %v1639
    %v1642 = vadd.f32 %v1610, %v1640
    %v1643 = vadd.f32 %v1617, %v1625
    %v1644 = vadd.f32 %v1618, %v1626
    %v1645 = vadd.f32 %v1643, %v1633
    %v1646 = vadd.f32 %v1644, %v1634
    %v1647 = vadd.f32 %v1645, %v1641
    %v1648 = vadd.f32 %v1646, %v1642
    %v1649 = vmul.f32 %v1512, %v1647
    %v1650 = vmul.f32 %v1513, %v1648
    %v1651 = vadd.f32 %v1649, %v1650
    %v1652 = vrot.slane %v1651, 4
    %v1653 = vadd.f32 %v1651, %v1652
    %v1654 = vrot.slane %v1653, 2
    %v1655 = vadd.f32 %v1653, %v1654
    %v1656 = vrot.slane %v1655, 1
    %v1657 = vadd.f32 %v1655, %v1656
    %vm1658 = vcmp.ne.f32.partialorder %v1522, 0.0
    %v1659 = vsel %vm1658, %v1522, 1.0
    %v1660 = vrcp.pop %v1659
    %v1661 = vmul.f32 1.0, %v1660
    %v1662 = vsel %vm1658, %v1661, 0.0
    %v1663 = vadd.f32 %v1522, %v1657
    %v1664 = vmul.f32 %v1663, %v1662
    %v1665 = vmul.f32 %v1664, %v1662
    %v1666 = vmul.f32 %v1665, %v1504
    %v1667 = vmul.f32 %v1665, %v1505
    %v1668 = vmul.f32 %v1662, %v1647
    %v1669 = vmul.f32 %v1662, %v1648
    %v1670 = vsub.f32 %v1666, %v1668
    %v1671 = vsub.f32 %v1667, %v1669
    %v1674 = vcombine.high %v1504, %v1504
    %v1676 = vunpack.c.l.s4 1966171168
    %v1677 = vunpack.c.0.s8 %v1676
    %v1678 = vlaneseq
    %v1679 = vshrl.u32 %v1678, 7
    %v1680 = vsub.s32 %v1677, %v1679
    %v1681 = vrot.slane %v1504, %v1680
    %v1683 = vunpack.c.l.s4 1966171168
    %v1684 = vunpack.c.0.s8 %v1683
    %v1685 = vlaneseq
    %v1686 = vshrl.u32 %v1685, 7
    %v1687 = vsub.s32 %v1684, %v1686
    %v1688 = vrot.slane %v1674, %v1687
    %v1689 = vcombine.high %v1681, %v1681
    %v1690 = vcombine.high %v1688, %v1688
    %v1692 = vunpack.c.l.s4 1966171168
    %v1693 = vunpack.c.0.s8 %v1692
    %v1694 = vlaneseq
    %v1695 = vshrl.u32 %v1694, 7
    %v1696 = vsub.s32 %v1693, %v1695
    %v1697 = vrot.slane %v1681, %v1696
    %v1699 = vunpack.c.l.s4 1966171168
    %v1700 = vunpack.c.0.s8 %v1699
    %v1701 = vlaneseq
    %v1702 = vshrl.u32 %v1701, 7
    %v1703 = vsub.s32 %v1700, %v1702
    %v1704 = vrot.slane %v1688, %v1703
    %v1706 = vunpack.c.l.s4 1966171168
    %v1707 = vunpack.c.0.s8 %v1706
    %v1708 = vlaneseq
    %v1709 = vshrl.u32 %v1708, 7
    %v1710 = vsub.s32 %v1707, %v1709
    %v1711 = vrot.slane %v1689, %v1710
    %v1713 = vunpack.c.l.s4 1966171168
    %v1714 = vunpack.c.0.s8 %v1713
    %v1715 = vlaneseq
    %v1716 = vshrl.u32 %v1715, 7
    %v1717 = vsub.s32 %v1714, %v1716
    %v1718 = vrot.slane %v1690, %v1717
    %v1719 = vcombine.high %v1697, %v1697
    %v1720 = vcombine.high %v1704, %v1704
    %v1721 = vcombine.high %v1711, %v1711
    %v1722 = vcombine.high %v1718, %v1718
    %v1723 = vcombine.high %v1505, %v1505
    %v1725 = vunpack.c.l.s4 1966171168
    %v1726 = vunpack.c.0.s8 %v1725
    %v1727 = vlaneseq
    %v1728 = vshrl.u32 %v1727, 7
    %v1729 = vsub.s32 %v1726, %v1728
    %v1730 = vrot.slane %v1505, %v1729
    %v1732 = vunpack.c.l.s4 1966171168
    %v1733 = vunpack.c.0.s8 %v1732
    %v1734 = vlaneseq
    %v1735 = vshrl.u32 %v1734, 7
    %v1736 = vsub.s32 %v1733, %v1735
    %v1737 = vrot.slane %v1723, %v1736
    %v1738 = vcombine.high %v1730, %v1730
    %v1739 = vcombine.high %v1737, %v1737
    %v1741 = vunpack.c.l.s4 1966171168
    %v1742 = vunpack.c.0.s8 %v1741
    %v1743 = vlaneseq
    %v1744 = vshrl.u32 %v1743, 7
    %v1745 = vsub.s32 %v1742, %v1744
    %v1746 = vrot.slane %v1730, %v1745
    %v1748 = vunpack.c.l.s4 1966171168
    %v1749 = vunpack.c.0.s8 %v1748
    %v1750 = vlaneseq
    %v1751 = vshrl.u32 %v1750, 7
    %v1752 = vsub.s32 %v1749, %v1751
    %v1753 = vrot.slane %v1737, %v1752
    %v1755 = vunpack.c.l.s4 1966171168
    %v1756 = vunpack.c.0.s8 %v1755
    %v1757 = vlaneseq
    %v1758 = vshrl.u32 %v1757, 7
    %v1759 = vsub.s32 %v1756, %v1758
    %v1760 = vrot.slane %v1738, %v1759
    %v1762 = vunpack.c.l.s4 1966171168
    %v1763 = vunpack.c.0.s8 %v1762
    %v1764 = vlaneseq
    %v1765 = vshrl.u32 %v1764, 7
    %v1766 = vsub.s32 %v1763, %v1765
    %v1767 = vrot.slane %v1739, %v1766
    %v1768 = vcombine.high %v1746, %v1746
    %v1769 = vcombine.high %v1753, %v1753
    %v1770 = vcombine.high %v1760, %v1760
    %v1771 = vcombine.high %v1767, %v1767
    %v1772 = vlaneseq
    %v1773 = vshrl.u32 %v1772, 7
    %v1774 = vsub.s32 0, %v1773
    %v1775 = vrot.slane %v1697, %v1774
    %v1776 = vlaneseq
    %v1777 = vshrl.u32 %v1776, 7
    %v1778 = vsub.s32 0, %v1777
    %v1779 = vrot.slane %v1711, %v1778
    %v1780 = vlaneseq
    %v1781 = vshrl.u32 %v1780, 7
    %v1782 = vsub.s32 0, %v1781
    %v1783 = vrot.slane %v1719, %v1782
    %v1784 = vlaneseq
    %v1785 = vshrl.u32 %v1784, 7
    %v1786 = vsub.s32 0, %v1785
    %v1787 = vrot.slane %v1721, %v1786
    %v1788 = vlaneseq
    %v1789 = vshrl.u32 %v1788, 7
    %v1790 = vsub.s32 0, %v1789
    %v1791 = vrot.slane %v1704, %v1790
    %v1792 = vlaneseq
    %v1793 = vshrl.u32 %v1792, 7
    %v1794 = vsub.s32 0, %v1793
    %v1795 = vrot.slane %v1718, %v1794
    %v1796 = vlaneseq
    %v1797 = vshrl.u32 %v1796, 7
    %v1798 = vsub.s32 0, %v1797
    %v1799 = vrot.slane %v1720, %v1798
    %v1800 = vlaneseq
    %v1801 = vshrl.u32 %v1800, 7
    %v1802 = vsub.s32 0, %v1801
    %v1803 = vrot.slane %v1722, %v1802
    %v1804 = vlaneseq
    %v1805 = vshrl.u32 %v1804, 7
    %v1806 = vsub.s32 0, %v1805
    %v1807 = vrot.slane %v1746, %v1806
    %v1808 = vlaneseq
    %v1809 = vshrl.u32 %v1808, 7
    %v1810 = vsub.s32 0, %v1809
    %v1811 = vrot.slane %v1760, %v1810
    %v1812 = vlaneseq
    %v1813 = vshrl.u32 %v1812, 7
    %v1814 = vsub.s32 0, %v1813
    %v1815 = vrot.slane %v1768, %v1814
    %v1816 = vlaneseq
    %v1817 = vshrl.u32 %v1816, 7
    %v1818 = vsub.s32 0, %v1817
    %v1819 = vrot.slane %v1770, %v1818
    %v1820 = vlaneseq
    %v1821 = vshrl.u32 %v1820, 7
    %v1822 = vsub.s32 0, %v1821
    %v1823 = vrot.slane %v1753, %v1822
    %v1824 = vlaneseq
    %v1825 = vshrl.u32 %v1824, 7
    %v1826 = vsub.s32 0, %v1825
    %v1827 = vrot.slane %v1767, %v1826
    %v1828 = vlaneseq
    %v1829 = vshrl.u32 %v1828, 7
    %v1830 = vsub.s32 0, %v1829
    %v1831 = vrot.slane %v1769, %v1830
    %v1832 = vlaneseq
    %v1833 = vshrl.u32 %v1832, 7
    %v1834 = vsub.s32 0, %v1833
    %v1835 = vrot.slane %v1771, %v1834
    %v1852 = vmul.f32 %v1775, %v1670
    %v1853 = vmul.f32 %v1775, %v1671
    %v1854 = vmul.f32 %v1779, %v1670
    %v1855 = vmul.f32 %v1779, %v1671
    %v1856 = vmul.f32 %v1783, %v1670
    %v1857 = vmul.f32 %v1783, %v1671
    %v1858 = vmul.f32 %v1787, %v1670
    %v1859 = vmul.f32 %v1787, %v1671
    %v1860 = vmul.f32 %v1791, %v1670
    %v1861 = vmul.f32 %v1791, %v1671
    %v1862 = vmul.f32 %v1795, %v1670
    %v1863 = vmul.f32 %v1795, %v1671
    %v1864 = vmul.f32 %v1799, %v1670
    %v1865 = vmul.f32 %v1799, %v1671
    %v1866 = vmul.f32 %v1803, %v1670
    %v1867 = vmul.f32 %v1803, %v1671
    %v1868 = vmul.f32 %v1807, %v1670
    %v1869 = vmul.f32 %v1807, %v1671
    %v1870 = vmul.f32 %v1811, %v1670
    %v1871 = vmul.f32 %v1811, %v1671
    %v1872 = vmul.f32 %v1815, %v1670
    %v1873 = vmul.f32 %v1815, %v1671
    %v1874 = vmul.f32 %v1819, %v1670
    %v1875 = vmul.f32 %v1819, %v1671
    %v1876 = vmul.f32 %v1823, %v1670
    %v1877 = vmul.f32 %v1823, %v1671
    %v1878 = vmul.f32 %v1827, %v1670
    %v1879 = vmul.f32 %v1827, %v1671
    %v1880 = vmul.f32 %v1831, %v1670
    %v1881 = vmul.f32 %v1831, %v1671
    %v1882 = vmul.f32 %v1835, %v1670
    %v1883 = vmul.f32 %v1835, %v1671
    %v1886 = vcombine.high %v1668, %v1668
    %v1888 = vunpack.c.l.s4 1966171168
    %v1889 = vunpack.c.0.s8 %v1888
    %v1890 = vlaneseq
    %v1891 = vshrl.u32 %v1890, 7
    %v1892 = vsub.s32 %v1889, %v1891
    %v1893 = vrot.slane %v1668, %v1892
    %v1895 = vunpack.c.l.s4 1966171168
    %v1896 = vunpack.c.0.s8 %v1895
    %v1897 = vlaneseq
    %v1898 = vshrl.u32 %v1897, 7
    %v1899 = vsub.s32 %v1896, %v1898
    %v1900 = vrot.slane %v1886, %v1899
    %v1901 = vcombine.high %v1893, %v1893
    %v1902 = vcombine.high %v1900, %v1900
    %v1904 = vunpack.c.l.s4 1966171168
    %v1905 = vunpack.c.0.s8 %v1904
    %v1906 = vlaneseq
    %v1907 = vshrl.u32 %v1906, 7
    %v1908 = vsub.s32 %v1905, %v1907
    %v1909 = vrot.slane %v1893, %v1908
    %v1911 = vunpack.c.l.s4 1966171168
    %v1912 = vunpack.c.0.s8 %v1911
    %v1913 = vlaneseq
    %v1914 = vshrl.u32 %v1913, 7
    %v1915 = vsub.s32 %v1912, %v1914
    %v1916 = vrot.slane %v1900, %v1915
    %v1918 = vunpack.c.l.s4 1966171168
    %v1919 = vunpack.c.0.s8 %v1918
    %v1920 = vlaneseq
    %v1921 = vshrl.u32 %v1920, 7
    %v1922 = vsub.s32 %v1919, %v1921
    %v1923 = vrot.slane %v1901, %v1922
    %v1925 = vunpack.c.l.s4 1966171168
    %v1926 = vunpack.c.0.s8 %v1925
    %v1927 = vlaneseq
    %v1928 = vshrl.u32 %v1927, 7
    %v1929 = vsub.s32 %v1926, %v1928
    %v1930 = vrot.slane %v1902, %v1929
    %v1931 = vcombine.high %v1909, %v1909
    %v1932 = vcombine.high %v1916, %v1916
    %v1933 = vcombine.high %v1923, %v1923
    %v1934 = vcombine.high %v1930, %v1930
    %v1935 = vcombine.high %v1669, %v1669
    %v1937 = vunpack.c.l.s4 1966171168
    %v1938 = vunpack.c.0.s8 %v1937
    %v1939 = vlaneseq
    %v1940 = vshrl.u32 %v1939, 7
    %v1941 = vsub.s32 %v1938, %v1940
    %v1942 = vrot.slane %v1669, %v1941
    %v1944 = vunpack.c.l.s4 1966171168
    %v1945 = vunpack.c.0.s8 %v1944
    %v1946 = vlaneseq
    %v1947 = vshrl.u32 %v1946, 7
    %v1948 = vsub.s32 %v1945, %v1947
    %v1949 = vrot.slane %v1935, %v1948
    %v1950 = vcombine.high %v1942, %v1942
    %v1951 = vcombine.high %v1949, %v1949
    %v1953 = vunpack.c.l.s4 1966171168
    %v1954 = vunpack.c.0.s8 %v1953
    %v1955 = vlaneseq
    %v1956 = vshrl.u32 %v1955, 7
    %v1957 = vsub.s32 %v1954, %v1956
    %v1958 = vrot.slane %v1942, %v1957
    %v1960 = vunpack.c.l.s4 1966171168
    %v1961 = vunpack.c.0.s8 %v1960
    %v1962 = vlaneseq
    %v1963 = vshrl.u32 %v1962, 7
    %v1964 = vsub.s32 %v1961, %v1963
    %v1965 = vrot.slane %v1949, %v1964
    %v1967 = vunpack.c.l.s4 1966171168
    %v1968 = vunpack.c.0.s8 %v1967
    %v1969 = vlaneseq
    %v1970 = vshrl.u32 %v1969, 7
    %v1971 = vsub.s32 %v1968, %v1970
    %v1972 = vrot.slane %v1950, %v1971
    %v1974 = vunpack.c.l.s4 1966171168
    %v1975 = vunpack.c.0.s8 %v1974
    %v1976 = vlaneseq
    %v1977 = vshrl.u32 %v1976, 7
    %v1978 = vsub.s32 %v1975, %v1977
    %v1979 = vrot.slane %v1951, %v1978
    %v1980 = vcombine.high %v1958, %v1958
    %v1981 = vcombine.high %v1965, %v1965
    %v1982 = vcombine.high %v1972, %v1972
    %v1983 = vcombine.high %v1979, %v1979
    %v1984 = vlaneseq
    %v1985 = vshrl.u32 %v1984, 7
    %v1986 = vsub.s32 0, %v1985
    %v1987 = vrot.slane %v1909, %v1986
    %v1988 = vlaneseq
    %v1989 = vshrl.u32 %v1988, 7
    %v1990 = vsub.s32 0, %v1989
    %v1991 = vrot.slane %v1923, %v1990
    %v1992 = vlaneseq
    %v1993 = vshrl.u32 %v1992, 7
    %v1994 = vsub.s32 0, %v1993
    %v1995 = vrot.slane %v1931, %v1994
    %v1996 = vlaneseq
    %v1997 = vshrl.u32 %v1996, 7
    %v1998 = vsub.s32 0, %v1997
    %v1999 = vrot.slane %v1933, %v1998
    %v2000 = vlaneseq
    %v2001 = vshrl.u32 %v2000, 7
    %v2002 = vsub.s32 0, %v2001
    %v2003 = vrot.slane %v1916, %v2002
    %v2004 = vlaneseq
    %v2005 = vshrl.u32 %v2004, 7
    %v2006 = vsub.s32 0, %v2005
    %v2007 = vrot.slane %v1930, %v2006
    %v2008 = vlaneseq
    %v2009 = vshrl.u32 %v2008, 7
    %v2010 = vsub.s32 0, %v2009
    %v2011 = vrot.slane %v1932, %v2010
    %v2012 = vlaneseq
    %v2013 = vshrl.u32 %v2012, 7
    %v2014 = vsub.s32 0, %v2013
    %v2015 = vrot.slane %v1934, %v2014
    %v2016 = vlaneseq
    %v2017 = vshrl.u32 %v2016, 7
    %v2018 = vsub.s32 0, %v2017
    %v2019 = vrot.slane %v1958, %v2018
    %v2020 = vlaneseq
    %v2021 = vshrl.u32 %v2020, 7
    %v2022 = vsub.s32 0, %v2021
    %v2023 = vrot.slane %v1972, %v2022
    %v2024 = vlaneseq
    %v2025 = vshrl.u32 %v2024, 7
    %v2026 = vsub.s32 0, %v2025
    %v2027 = vrot.slane %v1980, %v2026
    %v2028 = vlaneseq
    %v2029 = vshrl.u32 %v2028, 7
    %v2030 = vsub.s32 0, %v2029
    %v2031 = vrot.slane %v1982, %v2030
    %v2032 = vlaneseq
    %v2033 = vshrl.u32 %v2032, 7
    %v2034 = vsub.s32 0, %v2033
    %v2035 = vrot.slane %v1965, %v2034
    %v2036 = vlaneseq
    %v2037 = vshrl.u32 %v2036, 7
    %v2038 = vsub.s32 0, %v2037
    %v2039 = vrot.slane %v1979, %v2038
    %v2040 = vlaneseq
    %v2041 = vshrl.u32 %v2040, 7
    %v2042 = vsub.s32 0, %v2041
    %v2043 = vrot.slane %v1981, %v2042
    %v2044 = vlaneseq
    %v2045 = vshrl.u32 %v2044, 7
    %v2046 = vsub.s32 0, %v2045
    %v2047 = vrot.slane %v1983, %v2046
    %v2064 = vmul.f32 %v1987, %v1504
    %v2065 = vmul.f32 %v1987, %v1505
    %v2066 = vmul.f32 %v1991, %v1504
    %v2067 = vmul.f32 %v1991, %v1505
    %v2068 = vmul.f32 %v1995, %v1504
    %v2069 = vmul.f32 %v1995, %v1505
    %v2070 = vmul.f32 %v1999, %v1504
    %v2071 = vmul.f32 %v1999, %v1505
    %v2072 = vmul.f32 %v2003, %v1504
    %v2073 = vmul.f32 %v2003, %v1505
    %v2074 = vmul.f32 %v2007, %v1504
    %v2075 = vmul.f32 %v2007, %v1505
    %v2076 = vmul.f32 %v2011, %v1504
    %v2077 = vmul.f32 %v2011, %v1505
    %v2078 = vmul.f32 %v2015, %v1504
    %v2079 = vmul.f32 %v2015, %v1505
    %v2080 = vmul.f32 %v2019, %v1504
    %v2081 = vmul.f32 %v2019, %v1505
    %v2082 = vmul.f32 %v2023, %v1504
    %v2083 = vmul.f32 %v2023, %v1505
    %v2084 = vmul.f32 %v2027, %v1504
    %v2085 = vmul.f32 %v2027, %v1505
    %v2086 = vmul.f32 %v2031, %v1504
    %v2087 = vmul.f32 %v2031, %v1505
    %v2088 = vmul.f32 %v2035, %v1504
    %v2089 = vmul.f32 %v2035, %v1505
    %v2090 = vmul.f32 %v2039, %v1504
    %v2091 = vmul.f32 %v2039, %v1505
    %v2092 = vmul.f32 %v2043, %v1504
    %v2093 = vmul.f32 %v2043, %v1505
    %v2094 = vmul.f32 %v2047, %v1504
    %v2095 = vmul.f32 %v2047, %v1505
    %v2096 = vsub.f32 %v1852, %v2064
    %v2097 = vsub.f32 %v1853, %v2065
    %v2098 = vsub.f32 %v1854, %v2066
    %v2099 = vsub.f32 %v1855, %v2067
    %v2100 = vsub.f32 %v1856, %v2068
    %v2101 = vsub.f32 %v1857, %v2069
    %v2102 = vsub.f32 %v1858, %v2070
    %v2103 = vsub.f32 %v1859, %v2071
    %v2104 = vsub.f32 %v1860, %v2072
    %v2105 = vsub.f32 %v1861, %v2073
    %v2106 = vsub.f32 %v1862, %v2074
    %v2107 = vsub.f32 %v1863, %v2075
    %v2108 = vsub.f32 %v1864, %v2076
    %v2109 = vsub.f32 %v1865, %v2077
    %v2110 = vsub.f32 %v1866, %v2078
    %v2111 = vsub.f32 %v1867, %v2079
    %v2112 = vsub.f32 %v1868, %v2080
    %v2113 = vsub.f32 %v1869, %v2081
    %v2114 = vsub.f32 %v1870, %v2082
    %v2115 = vsub.f32 %v1871, %v2083
    %v2116 = vsub.f32 %v1872, %v2084
    %v2117 = vsub.f32 %v1873, %v2085
    %v2118 = vsub.f32 %v1874, %v2086
    %v2119 = vsub.f32 %v1875, %v2087
    %v2120 = vsub.f32 %v1876, %v2088
    %v2121 = vsub.f32 %v1877, %v2089
    %v2122 = vsub.f32 %v1878, %v2090
    %v2123 = vsub.f32 %v1879, %v2091
    %v2124 = vsub.f32 %v1880, %v2092
    %v2125 = vsub.f32 %v1881, %v2093
    %v2126 = vsub.f32 %v1882, %v2094
    %v2127 = vsub.f32 %v1883, %v2095
    %v2128 = vadd.f32 %v1174, %v2096
    %v2129 = vadd.f32 %v1175, %v2097
    %v2130 = vadd.f32 %v1176, %v2098
    %v2131 = vadd.f32 %v1177, %v2099
    %v2132 = vadd.f32 %v1178, %v2100
    %v2133 = vadd.f32 %v1179, %v2101
    %v2134 = vadd.f32 %v1180, %v2102
    %v2135 = vadd.f32 %v1181, %v2103
    %v2136 = vadd.f32 %v1182, %v2104
    %v2137 = vadd.f32 %v1183, %v2105
    %v2138 = vadd.f32 %v1184, %v2106
    %v2139 = vadd.f32 %v1185, %v2107
    %v2140 = vadd.f32 %v1186, %v2108
    %v2141 = vadd.f32 %v1187, %v2109
    %v2142 = vadd.f32 %v1188, %v2110
    %v2143 = vadd.f32 %v1189, %v2111
    %v2144 = vadd.f32 %v1190, %v2112
    %v2145 = vadd.f32 %v1191, %v2113
    %v2146 = vadd.f32 %v1192, %v2114
    %v2147 = vadd.f32 %v1193, %v2115
    %v2148 = vadd.f32 %v1194, %v2116
    %v2149 = vadd.f32 %v1195, %v2117
    %v2150 = vadd.f32 %v1196, %v2118
    %v2151 = vadd.f32 %v1197, %v2119
    %v2152 = vadd.f32 %v1198, %v2120
    %v2153 = vadd.f32 %v1199, %v2121
    %v2154 = vadd.f32 %v1200, %v2122
    %v2155 = vadd.f32 %v1201, %v2123
    %v2156 = vadd.f32 %v1202, %v2124
    %v2157 = vadd.f32 %v1203, %v2125
    %v2158 = vadd.f32 %v1204, %v2126
    %v2159 = vadd.f32 %v1205, %v2127
    %vm2160 = vcmp.gt.f32.partialorder %v1225, 0.5
    %v2161 = vsel %vm2160, 1, 0
    %vm2162 = vcmp.eq.s32.totalorder %v2161, 1
    %v2163 = vsel %vm2162, %v1506, %v1209
    %v2164 = vsel %vm2162, %v1507, %v1210
    %v2165 = vsel %vm2162, %v1510, %v1211
    %v2166 = vsel %vm2162, %v1511, %v1212
    %v2167 = vmul.f32 %v2165, %v2165
    %v2168 = vmul.f32 %v2166, %v2166
    %v2169 = vadd.f32 %v2167, %v2168
    %v2170 = vrot.slane %v2169, 4
    %v2171 = vadd.f32 %v2169, %v2170
    %v2172 = vrot.slane %v2171, 2
    %v2173 = vadd.f32 %v2171, %v2172
    %v2174 = vrot.slane %v2173, 1
    %v2175 = vadd.f32 %v2173, %v2174
    %vm2176 = vcmp.gt.f32.partialorder %v2175, 1e-06
    %vm2177 = vmand %vm2160, %vm2176
    %v2178 = vsel %vm2177, 1, 0
    %v2179 = vcvt.s32.f32 %v2178
    %v2180 = vlaneseq
    %v2181 = vshrl.u32 %v2180, 7
    %v2182 = vsub.s32 0, %v2181
    %v2183 = vrot.slane %v2165, %v2182
    %v2184 = vmul.f32 %v2128, %v2183
    %v2185 = vmul.f32 %v2129, %v2183
    %v2186 = vlaneseq
    %v2187 = vshrl.u32 %v2186, 7
    %v2188 = vsub.s32 1, %v2187
    %v2189 = vrot.slane %v2165, %v2188
    %v2190 = vmul.f32 %v2130, %v2189
    %v2191 = vmul.f32 %v2131, %v2189
    %v2192 = vlaneseq
    %v2193 = vshrl.u32 %v2192, 7
    %v2194 = vsub.s32 2, %v2193
    %v2195 = vrot.slane %v2165, %v2194
    %v2196 = vmul.f32 %v2132, %v2195
    %v2197 = vmul.f32 %v2133, %v2195
    %v2198 = vlaneseq
    %v2199 = vshrl.u32 %v2198, 7
    %v2200 = vsub.s32 3, %v2199
    %v2201 = vrot.slane %v2165, %v2200
    %v2202 = vmul.f32 %v2134, %v2201
    %v2203 = vmul.f32 %v2135, %v2201
    %v2204 = vlaneseq
    %v2205 = vshrl.u32 %v2204, 7
    %v2206 = vsub.s32 4, %v2205
    %v2207 = vrot.slane %v2165, %v2206
    %v2208 = vmul.f32 %v2136, %v2207
    %v2209 = vmul.f32 %v2137, %v2207
    %v2210 = vadd.f32 %v2184, %v2208
    %v2211 = vadd.f32 %v2185, %v2209
    %v2212 = vlaneseq
    %v2213 = vshrl.u32 %v2212, 7
    %v2214 = vsub.s32 5, %v2213
    %v2215 = vrot.slane %v2165, %v2214
    %v2216 = vmul.f32 %v2138, %v2215
    %v2217 = vmul.f32 %v2139, %v2215
    %v2218 = vadd.f32 %v2190, %v2216
    %v2219 = vadd.f32 %v2191, %v2217
    %v2220 = vlaneseq
    %v2221 = vshrl.u32 %v2220, 7
    %v2222 = vsub.s32 6, %v2221
    %v2223 = vrot.slane %v2165, %v2222
    %v2224 = vmul.f32 %v2140, %v2223
    %v2225 = vmul.f32 %v2141, %v2223
    %v2226 = vadd.f32 %v2196, %v2224
    %v2227 = vadd.f32 %v2197, %v2225
    %v2228 = vlaneseq
    %v2229 = vshrl.u32 %v2228, 7
    %v2230 = vsub.s32 7, %v2229
    %v2231 = vrot.slane %v2165, %v2230
    %v2232 = vmul.f32 %v2142, %v2231
    %v2233 = vmul.f32 %v2143, %v2231
    %v2234 = vadd.f32 %v2202, %v2232
    %v2235 = vadd.f32 %v2203, %v2233
    %v2236 = vlaneseq
    %v2237 = vshrl.u32 %v2236, 7
    %v2238 = vsub.s32 0, %v2237
    %v2239 = vrot.slane %v2166, %v2238
    %v2240 = vmul.f32 %v2144, %v2239
    %v2241 = vmul.f32 %v2145, %v2239
    %v2242 = vadd.f32 %v2210, %v2240
    %v2243 = vadd.f32 %v2211, %v2241
    %v2244 = vlaneseq
    %v2245 = vshrl.u32 %v2244, 7
    %v2246 = vsub.s32 1, %v2245
    %v2247 = vrot.slane %v2166, %v2246
    %v2248 = vmul.f32 %v2146, %v2247
    %v2249 = vmul.f32 %v2147, %v2247
    %v2250 = vadd.f32 %v2218, %v2248
    %v2251 = vadd.f32 %v2219, %v2249
    %v2252 = vlaneseq
    %v2253 = vshrl.u32 %v2252, 7
    %v2254 = vsub.s32 2, %v2253
    %v2255 = vrot.slane %v2166, %v2254
    %v2256 = vmul.f32 %v2148, %v2255
    %v2257 = vmul.f32 %v2149, %v2255
    %v2258 = vadd.f32 %v2226, %v2256
    %v2259 = vadd.f32 %v2227, %v2257
    %v2260 = vlaneseq
    %v2261 = vshrl.u32 %v2260, 7
    %v2262 = vsub.s32 3, %v2261
    %v2263 = vrot.slane %v2166, %v2262
    %v2264 = vmul.f32 %v2150, %v2263
    %v2265 = vmul.f32 %v2151, %v2263
    %v2266 = vadd.f32 %v2234, %v2264
    %v2267 = vadd.f32 %v2235, %v2265
    %v2268 = vlaneseq
    %v2269 = vshrl.u32 %v2268, 7
    %v2270 = vsub.s32 4, %v2269
    %v2271 = vrot.slane %v2166, %v2270
    %v2272 = vmul.f32 %v2152, %v2271
    %v2273 = vmul.f32 %v2153, %v2271
    %v2274 = vadd.f32 %v2242, %v2272
    %v2275 = vadd.f32 %v2243, %v2273
    %v2276 = vlaneseq
    %v2277 = vshrl.u32 %v2276, 7
    %v2278 = vsub.s32 5, %v2277
    %v2279 = vrot.slane %v2166, %v2278
    %v2280 = vmul.f32 %v2154, %v2279
    %v2281 = vmul.f32 %v2155, %v2279
    %v2282 = vadd.f32 %v2250, %v2280
    %v2283 = vadd.f32 %v2251, %v2281
    %v2284 = vlaneseq
    %v2285 = vshrl.u32 %v2284, 7
    %v2286 = vsub.s32 6, %v2285
    %v2287 = vrot.slane %v2166, %v2286
    %v2288 = vmul.f32 %v2156, %v2287
    %v2289 = vmul.f32 %v2157, %v2287
    %v2290 = vadd.f32 %v2258, %v2288
    %v2291 = vadd.f32 %v2259, %v2289
    %v2292 = vlaneseq
    %v2293 = vshrl.u32 %v2292, 7
    %v2294 = vsub.s32 7, %v2293
    %v2295 = vrot.slane %v2166, %v2294
    %v2296 = vmul.f32 %v2158, %v2295
    %v2297 = vmul.f32 %v2159, %v2295
    %v2298 = vadd.f32 %v2266, %v2296
    %v2299 = vadd.f32 %v2267, %v2297
    %v2300 = vadd.f32 %v2274, %v2282
    %v2301 = vadd.f32 %v2275, %v2283
    %v2302 = vadd.f32 %v2300, %v2290
    %v2303 = vadd.f32 %v2301, %v2291
    %v2304 = vadd.f32 %v2302, %v2298
    %v2305 = vadd.f32 %v2303, %v2299
    %v2306 = vsub.f32 0.0, %v2304
    %v2307 = vsub.f32 0.0, %v2305
    %v2308 = vlaneseq
    %v2309 = vshrl.u32 %v2308, 7
    %v2310 = vsub.s32 0, %v2309
    %v2311 = vrot.slane %v2306, %v2310
    %v2312 = vmul.f32 %v76, %v2311
    %v2313 = vmul.f32 %v77, %v2311
    %v2314 = vlaneseq
    %v2315 = vshrl.u32 %v2314, 7
    %v2316 = vsub.s32 1, %v2315
    %v2317 = vrot.slane %v2306, %v2316
    %v2318 = vmul.f32 %v78, %v2317
    %v2319 = vmul.f32 %v79, %v2317
    %v2320 = vlaneseq
    %v2321 = vshrl.u32 %v2320, 7
    %v2322 = vsub.s32 2, %v2321
    %v2323 = vrot.slane %v2306, %v2322
    %v2324 = vmul.f32 %v80, %v2323
    %v2325 = vmul.f32 %v81, %v2323
    %v2326 = vlaneseq
    %v2327 = vshrl.u32 %v2326, 7
    %v2328 = vsub.s32 3, %v2327
    %v2329 = vrot.slane %v2306, %v2328
    %v2330 = vmul.f32 %v82, %v2329
    %v2331 = vmul.f32 %v83, %v2329
    %v2332 = vlaneseq
    %v2333 = vshrl.u32 %v2332, 7
    %v2334 = vsub.s32 4, %v2333
    %v2335 = vrot.slane %v2306, %v2334
    %v2336 = vmul.f32 %v84, %v2335
    %v2337 = vmul.f32 %v85, %v2335
    %v2338 = vadd.f32 %v2312, %v2336
    %v2339 = vadd.f32 %v2313, %v2337
    %v2340 = vlaneseq
    %v2341 = vshrl.u32 %v2340, 7
    %v2342 = vsub.s32 5, %v2341
    %v2343 = vrot.slane %v2306, %v2342
    %v2344 = vmul.f32 %v86, %v2343
    %v2345 = vmul.f32 %v87, %v2343
    %v2346 = vadd.f32 %v2318, %v2344
    %v2347 = vadd.f32 %v2319, %v2345
    %v2348 = vlaneseq
    %v2349 = vshrl.u32 %v2348, 7
    %v2350 = vsub.s32 6, %v2349
    %v2351 = vrot.slane %v2306, %v2350
    %v2352 = vmul.f32 %v88, %v2351
    %v2353 = vmul.f32 %v89, %v2351
    %v2354 = vadd.f32 %v2324, %v2352
    %v2355 = vadd.f32 %v2325, %v2353
    %v2356 = vlaneseq
    %v2357 = vshrl.u32 %v2356, 7
    %v2358 = vsub.s32 7, %v2357
    %v2359 = vrot.slane %v2306, %v2358
    %v2360 = vmul.f32 %v90, %v2359
    %v2361 = vmul.f32 %v91, %v2359
    %v2362 = vadd.f32 %v2330, %v2360
    %v2363 = vadd.f32 %v2331, %v2361
    %v2364 = vlaneseq
    %v2365 = vshrl.u32 %v2364, 7
    %v2366 = vsub.s32 0, %v2365
    %v2367 = vrot.slane %v2307, %v2366
    %v2368 = vmul.f32 %v92, %v2367
    %v2369 = vmul.f32 %v93, %v2367
    %v2370 = vadd.f32 %v2338, %v2368
    %v2371 = vadd.f32 %v2339, %v2369
    %v2372 = vlaneseq
    %v2373 = vshrl.u32 %v2372, 7
    %v2374 = vsub.s32 1, %v2373
    %v2375 = vrot.slane %v2307, %v2374
    %v2376 = vmul.f32 %v94, %v2375
    %v2377 = vmul.f32 %v95, %v2375
    %v2378 = vadd.f32 %v2346, %v2376
    %v2379 = vadd.f32 %v2347, %v2377
    %v2380 = vlaneseq
    %v2381 = vshrl.u32 %v2380, 7
    %v2382 = vsub.s32 2, %v2381
    %v2383 = vrot.slane %v2307, %v2382
    %v2384 = vmul.f32 %v96, %v2383
    %v2385 = vmul.f32 %v97, %v2383
    %v2386 = vadd.f32 %v2354, %v2384
    %v2387 = vadd.f32 %v2355, %v2385
    %v2388 = vlaneseq
    %v2389 = vshrl.u32 %v2388, 7
    %v2390 = vsub.s32 3, %v2389
    %v2391 = vrot.slane %v2307, %v2390
    %v2392 = vmul.f32 %v98, %v2391
    %v2393 = vmul.f32 %v99, %v2391
    %v2394 = vadd.f32 %v2362, %v2392
    %v2395 = vadd.f32 %v2363, %v2393
    %v2396 = vlaneseq
    %v2397 = vshrl.u32 %v2396, 7
    %v2398 = vsub.s32 4, %v2397
    %v2399 = vrot.slane %v2307, %v2398
    %v2400 = vmul.f32 %v100, %v2399
    %v2401 = vmul.f32 %v101, %v2399
    %v2402 = vadd.f32 %v2370, %v2400
    %v2403 = vadd.f32 %v2371, %v2401
    %v2404 = vlaneseq
    %v2405 = vshrl.u32 %v2404, 7
    %v2406 = vsub.s32 5, %v2405
    %v2407 = vrot.slane %v2307, %v2406
    %v2408 = vmul.f32 %v102, %v2407
    %v2409 = vmul.f32 %v103, %v2407
    %v2410 = vadd.f32 %v2378, %v2408
    %v2411 = vadd.f32 %v2379, %v2409
    %v2412 = vlaneseq
    %v2413 = vshrl.u32 %v2412, 7
    %v2414 = vsub.s32 6, %v2413
    %v2415 = vrot.slane %v2307, %v2414
    %v2416 = vmul.f32 %v104, %v2415
    %v2417 = vmul.f32 %v105, %v2415
    %v2418 = vadd.f32 %v2386, %v2416
    %v2419 = vadd.f32 %v2387, %v2417
    %v2420 = vlaneseq
    %v2421 = vshrl.u32 %v2420, 7
    %v2422 = vsub.s32 7, %v2421
    %v2423 = vrot.slane %v2307, %v2422
    %v2424 = vmul.f32 %v106, %v2423
    %v2425 = vmul.f32 %v107, %v2423
    %v2426 = vadd.f32 %v2394, %v2424
    %v2427 = vadd.f32 %v2395, %v2425
    %v2428 = vadd.f32 %v2402, %v2410
    %v2429 = vadd.f32 %v2403, %v2411
    %v2430 = vadd.f32 %v2428, %v2418
    %v2431 = vadd.f32 %v2429, %v2419
    %v2432 = vadd.f32 %v2430, %v2426
    %v2433 = vadd.f32 %v2431, %v2427
    %v2434 = vmul.f32 %v2306, %v2432
    %v2435 = vmul.f32 %v2307, %v2433
    %v2436 = vadd.f32 %v2434, %v2435
    %v2437 = vrot.slane %v2436, 4
    %v2438 = vadd.f32 %v2436, %v2437
    %v2439 = vrot.slane %v2438, 2
    %v2440 = vadd.f32 %v2438, %v2439
    %v2441 = vrot.slane %v2440, 1
    %v2442 = vadd.f32 %v2440, %v2441
    %v2443 = vmul.f32 %v2165, %v2306
    %v2444 = vmul.f32 %v2166, %v2307
    %v2445 = vadd.f32 %v2443, %v2444
    %v2446 = vrot.slane %v2445, 4
    %v2447 = vadd.f32 %v2445, %v2446
    %v2448 = vrot.slane %v2447, 2
    %v2449 = vadd.f32 %v2447, %v2448
    %v2450 = vrot.slane %v2449, 1
    %v2451 = vadd.f32 %v2449, %v2450
    %vm2452 = vcmp.gt.f32.partialorder %v2442, 1e-30
    %v2453 = vsub.f32 0.0, %v2451
    %v2454 = vsel %vm2452, %v2442, 1.0
    %v2455 = vrcp.pop %v2454
    %v2456 = vmul.f32 %v2453, %v2455
    %v2457 = vsel %vm2452, %v2456, 0.0
    %v2458 = vmul.f32 %v2457, %v2306
    %v2459 = vmul.f32 %v2457, %v2307
    %v2460 = vadd.f32 %v2163, %v2458
    %v2461 = vadd.f32 %v2164, %v2459
    %v2462 = vmul.f32 %v2457, %v2432
    %v2463 = vmul.f32 %v2457, %v2433
    %v2464 = vadd.f32 %v2165, %v2462
    %v2465 = vadd.f32 %v2166, %v2463
    %v2466 = vsub.f32 %v2464, %v2165
    %v2467 = vsub.f32 %v2465, %v2166
    %v2468 = vmul.f32 %v2458, %v2466
    %v2469 = vmul.f32 %v2459, %v2467
    %v2470 = vadd.f32 %v2468, %v2469
    %v2471 = vrot.slane %v2470, 4
    %v2472 = vadd.f32 %v2470, %v2471
    %v2473 = vrot.slane %v2472, 2
    %v2474 = vadd.f32 %v2472, %v2473
    %v2475 = vrot.slane %v2474, 1
    %v2476 = vadd.f32 %v2474, %v2475
    %v2477 = vlaneseq
    %v2478 = vshrl.u32 %v2477, 7
    %v2479 = vsub.s32 0, %v2478
    %v2480 = vrot.slane %v2466, %v2479
    %v2481 = vmul.f32 %v2128, %v2480
    %v2482 = vmul.f32 %v2129, %v2480
    %v2483 = vlaneseq
    %v2484 = vshrl.u32 %v2483, 7
    %v2485 = vsub.s32 1, %v2484
    %v2486 = vrot.slane %v2466, %v2485
    %v2487 = vmul.f32 %v2130, %v2486
    %v2488 = vmul.f32 %v2131, %v2486
    %v2489 = vlaneseq
    %v2490 = vshrl.u32 %v2489, 7
    %v2491 = vsub.s32 2, %v2490
    %v2492 = vrot.slane %v2466, %v2491
    %v2493 = vmul.f32 %v2132, %v2492
    %v2494 = vmul.f32 %v2133, %v2492
    %v2495 = vlaneseq
    %v2496 = vshrl.u32 %v2495, 7
    %v2497 = vsub.s32 3, %v2496
    %v2498 = vrot.slane %v2466, %v2497
    %v2499 = vmul.f32 %v2134, %v2498
    %v2500 = vmul.f32 %v2135, %v2498
    %v2501 = vlaneseq
    %v2502 = vshrl.u32 %v2501, 7
    %v2503 = vsub.s32 4, %v2502
    %v2504 = vrot.slane %v2466, %v2503
    %v2505 = vmul.f32 %v2136, %v2504
    %v2506 = vmul.f32 %v2137, %v2504
    %v2507 = vadd.f32 %v2481, %v2505
    %v2508 = vadd.f32 %v2482, %v2506
    %v2509 = vlaneseq
    %v2510 = vshrl.u32 %v2509, 7
    %v2511 = vsub.s32 5, %v2510
    %v2512 = vrot.slane %v2466, %v2511
    %v2513 = vmul.f32 %v2138, %v2512
    %v2514 = vmul.f32 %v2139, %v2512
    %v2515 = vadd.f32 %v2487, %v2513
    %v2516 = vadd.f32 %v2488, %v2514
    %v2517 = vlaneseq
    %v2518 = vshrl.u32 %v2517, 7
    %v2519 = vsub.s32 6, %v2518
    %v2520 = vrot.slane %v2466, %v2519
    %v2521 = vmul.f32 %v2140, %v2520
    %v2522 = vmul.f32 %v2141, %v2520
    %v2523 = vadd.f32 %v2493, %v2521
    %v2524 = vadd.f32 %v2494, %v2522
    %v2525 = vlaneseq
    %v2526 = vshrl.u32 %v2525, 7
    %v2527 = vsub.s32 7, %v2526
    %v2528 = vrot.slane %v2466, %v2527
    %v2529 = vmul.f32 %v2142, %v2528
    %v2530 = vmul.f32 %v2143, %v2528
    %v2531 = vadd.f32 %v2499, %v2529
    %v2532 = vadd.f32 %v2500, %v2530
    %v2533 = vlaneseq
    %v2534 = vshrl.u32 %v2533, 7
    %v2535 = vsub.s32 0, %v2534
    %v2536 = vrot.slane %v2467, %v2535
    %v2537 = vmul.f32 %v2144, %v2536
    %v2538 = vmul.f32 %v2145, %v2536
    %v2539 = vadd.f32 %v2507, %v2537
    %v2540 = vadd.f32 %v2508, %v2538
    %v2541 = vlaneseq
    %v2542 = vshrl.u32 %v2541, 7
    %v2543 = vsub.s32 1, %v2542
    %v2544 = vrot.slane %v2467, %v2543
    %v2545 = vmul.f32 %v2146, %v2544
    %v2546 = vmul.f32 %v2147, %v2544
    %v2547 = vadd.f32 %v2515, %v2545
    %v2548 = vadd.f32 %v2516, %v2546
    %v2549 = vlaneseq
    %v2550 = vshrl.u32 %v2549, 7
    %v2551 = vsub.s32 2, %v2550
    %v2552 = vrot.slane %v2467, %v2551
    %v2553 = vmul.f32 %v2148, %v2552
    %v2554 = vmul.f32 %v2149, %v2552
    %v2555 = vadd.f32 %v2523, %v2553
    %v2556 = vadd.f32 %v2524, %v2554
    %v2557 = vlaneseq
    %v2558 = vshrl.u32 %v2557, 7
    %v2559 = vsub.s32 3, %v2558
    %v2560 = vrot.slane %v2467, %v2559
    %v2561 = vmul.f32 %v2150, %v2560
    %v2562 = vmul.f32 %v2151, %v2560
    %v2563 = vadd.f32 %v2531, %v2561
    %v2564 = vadd.f32 %v2532, %v2562
    %v2565 = vlaneseq
    %v2566 = vshrl.u32 %v2565, 7
    %v2567 = vsub.s32 4, %v2566
    %v2568 = vrot.slane %v2467, %v2567
    %v2569 = vmul.f32 %v2152, %v2568
    %v2570 = vmul.f32 %v2153, %v2568
    %v2571 = vadd.f32 %v2539, %v2569
    %v2572 = vadd.f32 %v2540, %v2570
    %v2573 = vlaneseq
    %v2574 = vshrl.u32 %v2573, 7
    %v2575 = vsub.s32 5, %v2574
    %v2576 = vrot.slane %v2467, %v2575
    %v2577 = vmul.f32 %v2154, %v2576
    %v2578 = vmul.f32 %v2155, %v2576
    %v2579 = vadd.f32 %v2547, %v2577
    %v2580 = vadd.f32 %v2548, %v2578
    %v2581 = vlaneseq
    %v2582 = vshrl.u32 %v2581, 7
    %v2583 = vsub.s32 6, %v2582
    %v2584 = vrot.slane %v2467, %v2583
    %v2585 = vmul.f32 %v2156, %v2584
    %v2586 = vmul.f32 %v2157, %v2584
    %v2587 = vadd.f32 %v2555, %v2585
    %v2588 = vadd.f32 %v2556, %v2586
    %v2589 = vlaneseq
    %v2590 = vshrl.u32 %v2589, 7
    %v2591 = vsub.s32 7, %v2590
    %v2592 = vrot.slane %v2467, %v2591
    %v2593 = vmul.f32 %v2158, %v2592
    %v2594 = vmul.f32 %v2159, %v2592
    %v2595 = vadd.f32 %v2563, %v2593
    %v2596 = vadd.f32 %v2564, %v2594
    %v2597 = vadd.f32 %v2571, %v2579
    %v2598 = vadd.f32 %v2572, %v2580
    %v2599 = vadd.f32 %v2597, %v2587
    %v2600 = vadd.f32 %v2598, %v2588
    %v2601 = vadd.f32 %v2599, %v2595
    %v2602 = vadd.f32 %v2600, %v2596
    %v2603 = vmul.f32 %v2466, %v2601
    %v2604 = vmul.f32 %v2467, %v2602
    %v2605 = vadd.f32 %v2603, %v2604
    %v2606 = vrot.slane %v2605, 4
    %v2607 = vadd.f32 %v2605, %v2606
    %v2608 = vrot.slane %v2607, 2
    %v2609 = vadd.f32 %v2607, %v2608
    %v2610 = vrot.slane %v2609, 1
    %v2611 = vadd.f32 %v2609, %v2610
    %vm2612 = vcmp.ne.f32.partialorder %v2476, 0.0
    %v2613 = vsel %vm2612, %v2476, 1.0
    %v2614 = vrcp.pop %v2613
    %v2615 = vmul.f32 1.0, %v2614
    %v2616 = vsel %vm2612, %v2615, 0.0
    %v2617 = vadd.f32 %v2476, %v2611
    %v2618 = vmul.f32 %v2617, %v2616
    %v2619 = vmul.f32 %v2618, %v2616
    %v2620 = vmul.f32 %v2619, %v2458
    %v2621 = vmul.f32 %v2619, %v2459
    %v2622 = vmul.f32 %v2616, %v2601
    %v2623 = vmul.f32 %v2616, %v2602
    %v2624 = vsub.f32 %v2620, %v2622
    %v2625 = vsub.f32 %v2621, %v2623
    %v2628 = vcombine.high %v2458, %v2458
    %v2630 = vunpack.c.l.s4 1966171168
    %v2631 = vunpack.c.0.s8 %v2630
    %v2632 = vlaneseq
    %v2633 = vshrl.u32 %v2632, 7
    %v2634 = vsub.s32 %v2631, %v2633
    %v2635 = vrot.slane %v2458, %v2634
    %v2637 = vunpack.c.l.s4 1966171168
    %v2638 = vunpack.c.0.s8 %v2637
    %v2639 = vlaneseq
    %v2640 = vshrl.u32 %v2639, 7
    %v2641 = vsub.s32 %v2638, %v2640
    %v2642 = vrot.slane %v2628, %v2641
    %v2643 = vcombine.high %v2635, %v2635
    %v2644 = vcombine.high %v2642, %v2642
    %v2646 = vunpack.c.l.s4 1966171168
    %v2647 = vunpack.c.0.s8 %v2646
    %v2648 = vlaneseq
    %v2649 = vshrl.u32 %v2648, 7
    %v2650 = vsub.s32 %v2647, %v2649
    %v2651 = vrot.slane %v2635, %v2650
    %v2653 = vunpack.c.l.s4 1966171168
    %v2654 = vunpack.c.0.s8 %v2653
    %v2655 = vlaneseq
    %v2656 = vshrl.u32 %v2655, 7
    %v2657 = vsub.s32 %v2654, %v2656
    %v2658 = vrot.slane %v2642, %v2657
    %v2660 = vunpack.c.l.s4 1966171168
    %v2661 = vunpack.c.0.s8 %v2660
    %v2662 = vlaneseq
    %v2663 = vshrl.u32 %v2662, 7
    %v2664 = vsub.s32 %v2661, %v2663
    %v2665 = vrot.slane %v2643, %v2664
    %v2667 = vunpack.c.l.s4 1966171168
    %v2668 = vunpack.c.0.s8 %v2667
    %v2669 = vlaneseq
    %v2670 = vshrl.u32 %v2669, 7
    %v2671 = vsub.s32 %v2668, %v2670
    %v2672 = vrot.slane %v2644, %v2671
    %v2673 = vcombine.high %v2651, %v2651
    %v2674 = vcombine.high %v2658, %v2658
    %v2675 = vcombine.high %v2665, %v2665
    %v2676 = vcombine.high %v2672, %v2672
    %v2677 = vcombine.high %v2459, %v2459
    %v2679 = vunpack.c.l.s4 1966171168
    %v2680 = vunpack.c.0.s8 %v2679
    %v2681 = vlaneseq
    %v2682 = vshrl.u32 %v2681, 7
    %v2683 = vsub.s32 %v2680, %v2682
    %v2684 = vrot.slane %v2459, %v2683
    %v2686 = vunpack.c.l.s4 1966171168
    %v2687 = vunpack.c.0.s8 %v2686
    %v2688 = vlaneseq
    %v2689 = vshrl.u32 %v2688, 7
    %v2690 = vsub.s32 %v2687, %v2689
    %v2691 = vrot.slane %v2677, %v2690
    %v2692 = vcombine.high %v2684, %v2684
    %v2693 = vcombine.high %v2691, %v2691
    %v2695 = vunpack.c.l.s4 1966171168
    %v2696 = vunpack.c.0.s8 %v2695
    %v2697 = vlaneseq
    %v2698 = vshrl.u32 %v2697, 7
    %v2699 = vsub.s32 %v2696, %v2698
    %v2700 = vrot.slane %v2684, %v2699
    %v2702 = vunpack.c.l.s4 1966171168
    %v2703 = vunpack.c.0.s8 %v2702
    %v2704 = vlaneseq
    %v2705 = vshrl.u32 %v2704, 7
    %v2706 = vsub.s32 %v2703, %v2705
    %v2707 = vrot.slane %v2691, %v2706
    %v2709 = vunpack.c.l.s4 1966171168
    %v2710 = vunpack.c.0.s8 %v2709
    %v2711 = vlaneseq
    %v2712 = vshrl.u32 %v2711, 7
    %v2713 = vsub.s32 %v2710, %v2712
    %v2714 = vrot.slane %v2692, %v2713
    %v2716 = vunpack.c.l.s4 1966171168
    %v2717 = vunpack.c.0.s8 %v2716
    %v2718 = vlaneseq
    %v2719 = vshrl.u32 %v2718, 7
    %v2720 = vsub.s32 %v2717, %v2719
    %v2721 = vrot.slane %v2693, %v2720
    %v2722 = vcombine.high %v2700, %v2700
    %v2723 = vcombine.high %v2707, %v2707
    %v2724 = vcombine.high %v2714, %v2714
    %v2725 = vcombine.high %v2721, %v2721
    %v2726 = vlaneseq
    %v2727 = vshrl.u32 %v2726, 7
    %v2728 = vsub.s32 0, %v2727
    %v2729 = vrot.slane %v2651, %v2728
    %v2730 = vlaneseq
    %v2731 = vshrl.u32 %v2730, 7
    %v2732 = vsub.s32 0, %v2731
    %v2733 = vrot.slane %v2665, %v2732
    %v2734 = vlaneseq
    %v2735 = vshrl.u32 %v2734, 7
    %v2736 = vsub.s32 0, %v2735
    %v2737 = vrot.slane %v2673, %v2736
    %v2738 = vlaneseq
    %v2739 = vshrl.u32 %v2738, 7
    %v2740 = vsub.s32 0, %v2739
    %v2741 = vrot.slane %v2675, %v2740
    %v2742 = vlaneseq
    %v2743 = vshrl.u32 %v2742, 7
    %v2744 = vsub.s32 0, %v2743
    %v2745 = vrot.slane %v2658, %v2744
    %v2746 = vlaneseq
    %v2747 = vshrl.u32 %v2746, 7
    %v2748 = vsub.s32 0, %v2747
    %v2749 = vrot.slane %v2672, %v2748
    %v2750 = vlaneseq
    %v2751 = vshrl.u32 %v2750, 7
    %v2752 = vsub.s32 0, %v2751
    %v2753 = vrot.slane %v2674, %v2752
    %v2754 = vlaneseq
    %v2755 = vshrl.u32 %v2754, 7
    %v2756 = vsub.s32 0, %v2755
    %v2757 = vrot.slane %v2676, %v2756
    %v2758 = vlaneseq
    %v2759 = vshrl.u32 %v2758, 7
    %v2760 = vsub.s32 0, %v2759
    %v2761 = vrot.slane %v2700, %v2760
    %v2762 = vlaneseq
    %v2763 = vshrl.u32 %v2762, 7
    %v2764 = vsub.s32 0, %v2763
    %v2765 = vrot.slane %v2714, %v2764
    %v2766 = vlaneseq
    %v2767 = vshrl.u32 %v2766, 7
    %v2768 = vsub.s32 0, %v2767
    %v2769 = vrot.slane %v2722, %v2768
    %v2770 = vlaneseq
    %v2771 = vshrl.u32 %v2770, 7
    %v2772 = vsub.s32 0, %v2771
    %v2773 = vrot.slane %v2724, %v2772
    %v2774 = vlaneseq
    %v2775 = vshrl.u32 %v2774, 7
    %v2776 = vsub.s32 0, %v2775
    %v2777 = vrot.slane %v2707, %v2776
    %v2778 = vlaneseq
    %v2779 = vshrl.u32 %v2778, 7
    %v2780 = vsub.s32 0, %v2779
    %v2781 = vrot.slane %v2721, %v2780
    %v2782 = vlaneseq
    %v2783 = vshrl.u32 %v2782, 7
    %v2784 = vsub.s32 0, %v2783
    %v2785 = vrot.slane %v2723, %v2784
    %v2786 = vlaneseq
    %v2787 = vshrl.u32 %v2786, 7
    %v2788 = vsub.s32 0, %v2787
    %v2789 = vrot.slane %v2725, %v2788
    %v2806 = vmul.f32 %v2729, %v2624
    %v2807 = vmul.f32 %v2729, %v2625
    %v2808 = vmul.f32 %v2733, %v2624
    %v2809 = vmul.f32 %v2733, %v2625
    %v2810 = vmul.f32 %v2737, %v2624
    %v2811 = vmul.f32 %v2737, %v2625
    %v2812 = vmul.f32 %v2741, %v2624
    %v2813 = vmul.f32 %v2741, %v2625
    %v2814 = vmul.f32 %v2745, %v2624
    %v2815 = vmul.f32 %v2745, %v2625
    %v2816 = vmul.f32 %v2749, %v2624
    %v2817 = vmul.f32 %v2749, %v2625
    %v2818 = vmul.f32 %v2753, %v2624
    %v2819 = vmul.f32 %v2753, %v2625
    %v2820 = vmul.f32 %v2757, %v2624
    %v2821 = vmul.f32 %v2757, %v2625
    %v2822 = vmul.f32 %v2761, %v2624
    %v2823 = vmul.f32 %v2761, %v2625
    %v2824 = vmul.f32 %v2765, %v2624
    %v2825 = vmul.f32 %v2765, %v2625
    %v2826 = vmul.f32 %v2769, %v2624
    %v2827 = vmul.f32 %v2769, %v2625
    %v2828 = vmul.f32 %v2773, %v2624
    %v2829 = vmul.f32 %v2773, %v2625
    %v2830 = vmul.f32 %v2777, %v2624
    %v2831 = vmul.f32 %v2777, %v2625
    %v2832 = vmul.f32 %v2781, %v2624
    %v2833 = vmul.f32 %v2781, %v2625
    %v2834 = vmul.f32 %v2785, %v2624
    %v2835 = vmul.f32 %v2785, %v2625
    %v2836 = vmul.f32 %v2789, %v2624
    %v2837 = vmul.f32 %v2789, %v2625
    %v2840 = vcombine.high %v2622, %v2622
    %v2842 = vunpack.c.l.s4 1966171168
    %v2843 = vunpack.c.0.s8 %v2842
    %v2844 = vlaneseq
    %v2845 = vshrl.u32 %v2844, 7
    %v2846 = vsub.s32 %v2843, %v2845
    %v2847 = vrot.slane %v2622, %v2846
    %v2849 = vunpack.c.l.s4 1966171168
    %v2850 = vunpack.c.0.s8 %v2849
    %v2851 = vlaneseq
    %v2852 = vshrl.u32 %v2851, 7
    %v2853 = vsub.s32 %v2850, %v2852
    %v2854 = vrot.slane %v2840, %v2853
    %v2855 = vcombine.high %v2847, %v2847
    %v2856 = vcombine.high %v2854, %v2854
    %v2858 = vunpack.c.l.s4 1966171168
    %v2859 = vunpack.c.0.s8 %v2858
    %v2860 = vlaneseq
    %v2861 = vshrl.u32 %v2860, 7
    %v2862 = vsub.s32 %v2859, %v2861
    %v2863 = vrot.slane %v2847, %v2862
    %v2865 = vunpack.c.l.s4 1966171168
    %v2866 = vunpack.c.0.s8 %v2865
    %v2867 = vlaneseq
    %v2868 = vshrl.u32 %v2867, 7
    %v2869 = vsub.s32 %v2866, %v2868
    %v2870 = vrot.slane %v2854, %v2869
    %v2872 = vunpack.c.l.s4 1966171168
    %v2873 = vunpack.c.0.s8 %v2872
    %v2874 = vlaneseq
    %v2875 = vshrl.u32 %v2874, 7
    %v2876 = vsub.s32 %v2873, %v2875
    %v2877 = vrot.slane %v2855, %v2876
    %v2879 = vunpack.c.l.s4 1966171168
    %v2880 = vunpack.c.0.s8 %v2879
    %v2881 = vlaneseq
    %v2882 = vshrl.u32 %v2881, 7
    %v2883 = vsub.s32 %v2880, %v2882
    %v2884 = vrot.slane %v2856, %v2883
    %v2885 = vcombine.high %v2863, %v2863
    %v2886 = vcombine.high %v2870, %v2870
    %v2887 = vcombine.high %v2877, %v2877
    %v2888 = vcombine.high %v2884, %v2884
    %v2889 = vcombine.high %v2623, %v2623
    %v2891 = vunpack.c.l.s4 1966171168
    %v2892 = vunpack.c.0.s8 %v2891
    %v2893 = vlaneseq
    %v2894 = vshrl.u32 %v2893, 7
    %v2895 = vsub.s32 %v2892, %v2894
    %v2896 = vrot.slane %v2623, %v2895
    %v2898 = vunpack.c.l.s4 1966171168
    %v2899 = vunpack.c.0.s8 %v2898
    %v2900 = vlaneseq
    %v2901 = vshrl.u32 %v2900, 7
    %v2902 = vsub.s32 %v2899, %v2901
    %v2903 = vrot.slane %v2889, %v2902
    %v2904 = vcombine.high %v2896, %v2896
    %v2905 = vcombine.high %v2903, %v2903
    %v2907 = vunpack.c.l.s4 1966171168
    %v2908 = vunpack.c.0.s8 %v2907
    %v2909 = vlaneseq
    %v2910 = vshrl.u32 %v2909, 7
    %v2911 = vsub.s32 %v2908, %v2910
    %v2912 = vrot.slane %v2896, %v2911
    %v2914 = vunpack.c.l.s4 1966171168
    %v2915 = vunpack.c.0.s8 %v2914
    %v2916 = vlaneseq
    %v2917 = vshrl.u32 %v2916, 7
    %v2918 = vsub.s32 %v2915, %v2917
    %v2919 = vrot.slane %v2903, %v2918
    %v2921 = vunpack.c.l.s4 1966171168
    %v2922 = vunpack.c.0.s8 %v2921
    %v2923 = vlaneseq
    %v2924 = vshrl.u32 %v2923, 7
    %v2925 = vsub.s32 %v2922, %v2924
    %v2926 = vrot.slane %v2904, %v2925
    %v2928 = vunpack.c.l.s4 1966171168
    %v2929 = vunpack.c.0.s8 %v2928
    %v2930 = vlaneseq
    %v2931 = vshrl.u32 %v2930, 7
    %v2932 = vsub.s32 %v2929, %v2931
    %v2933 = vrot.slane %v2905, %v2932
    %v2934 = vcombine.high %v2912, %v2912
    %v2935 = vcombine.high %v2919, %v2919
    %v2936 = vcombine.high %v2926, %v2926
    %v2937 = vcombine.high %v2933, %v2933
    %v2938 = vlaneseq
    %v2939 = vshrl.u32 %v2938, 7
    %v2940 = vsub.s32 0, %v2939
    %v2941 = vrot.slane %v2863, %v2940
    %v2942 = vlaneseq
    %v2943 = vshrl.u32 %v2942, 7
    %v2944 = vsub.s32 0, %v2943
    %v2945 = vrot.slane %v2877, %v2944
    %v2946 = vlaneseq
    %v2947 = vshrl.u32 %v2946, 7
    %v2948 = vsub.s32 0, %v2947
    %v2949 = vrot.slane %v2885, %v2948
    %v2950 = vlaneseq
    %v2951 = vshrl.u32 %v2950, 7
    %v2952 = vsub.s32 0, %v2951
    %v2953 = vrot.slane %v2887, %v2952
    %v2954 = vlaneseq
    %v2955 = vshrl.u32 %v2954, 7
    %v2956 = vsub.s32 0, %v2955
    %v2957 = vrot.slane %v2870, %v2956
    %v2958 = vlaneseq
    %v2959 = vshrl.u32 %v2958, 7
    %v2960 = vsub.s32 0, %v2959
    %v2961 = vrot.slane %v2884, %v2960
    %v2962 = vlaneseq
    %v2963 = vshrl.u32 %v2962, 7
    %v2964 = vsub.s32 0, %v2963
    %v2965 = vrot.slane %v2886, %v2964
    %v2966 = vlaneseq
    %v2967 = vshrl.u32 %v2966, 7
    %v2968 = vsub.s32 0, %v2967
    %v2969 = vrot.slane %v2888, %v2968
    %v2970 = vlaneseq
    %v2971 = vshrl.u32 %v2970, 7
    %v2972 = vsub.s32 0, %v2971
    %v2973 = vrot.slane %v2912, %v2972
    %v2974 = vlaneseq
    %v2975 = vshrl.u32 %v2974, 7
    %v2976 = vsub.s32 0, %v2975
    %v2977 = vrot.slane %v2926, %v2976
    %v2978 = vlaneseq
    %v2979 = vshrl.u32 %v2978, 7
    %v2980 = vsub.s32 0, %v2979
    %v2981 = vrot.slane %v2934, %v2980
    %v2982 = vlaneseq
    %v2983 = vshrl.u32 %v2982, 7
    %v2984 = vsub.s32 0, %v2983
    %v2985 = vrot.slane %v2936, %v2984
    %v2986 = vlaneseq
    %v2987 = vshrl.u32 %v2986, 7
    %v2988 = vsub.s32 0, %v2987
    %v2989 = vrot.slane %v2919, %v2988
    %v2990 = vlaneseq
    %v2991 = vshrl.u32 %v2990, 7
    %v2992 = vsub.s32 0, %v2991
    %v2993 = vrot.slane %v2933, %v2992
    %v2994 = vlaneseq
    %v2995 = vshrl.u32 %v2994, 7
    %v2996 = vsub.s32 0, %v2995
    %v2997 = vrot.slane %v2935, %v2996
    %v2998 = vlaneseq
    %v2999 = vshrl.u32 %v2998, 7
    %v3000 = vsub.s32 0, %v2999
    %v3001 = vrot.slane %v2937, %v3000
    %v3018 = vmul.f32 %v2941, %v2458
    %v3019 = vmul.f32 %v2941, %v2459
    %v3020 = vmul.f32 %v2945, %v2458
    %v3021 = vmul.f32 %v2945, %v2459
    %v3022 = vmul.f32 %v2949, %v2458
    %v3023 = vmul.f32 %v2949, %v2459
    %v3024 = vmul.f32 %v2953, %v2458
    %v3025 = vmul.f32 %v2953, %v2459
    %v3026 = vmul.f32 %v2957, %v2458
    %v3027 = vmul.f32 %v2957, %v2459
    %v3028 = vmul.f32 %v2961, %v2458
    %v3029 = vmul.f32 %v2961, %v2459
    %v3030 = vmul.f32 %v2965, %v2458
    %v3031 = vmul.f32 %v2965, %v2459
    %v3032 = vmul.f32 %v2969, %v2458
    %v3033 = vmul.f32 %v2969, %v2459
    %v3034 = vmul.f32 %v2973, %v2458
    %v3035 = vmul.f32 %v2973, %v2459
    %v3036 = vmul.f32 %v2977, %v2458
    %v3037 = vmul.f32 %v2977, %v2459
    %v3038 = vmul.f32 %v2981, %v2458
    %v3039 = vmul.f32 %v2981, %v2459
    %v3040 = vmul.f32 %v2985, %v2458
    %v3041 = vmul.f32 %v2985, %v2459
    %v3042 = vmul.f32 %v2989, %v2458
    %v3043 = vmul.f32 %v2989, %v2459
    %v3044 = vmul.f32 %v2993, %v2458
    %v3045 = vmul.f32 %v2993, %v2459
    %v3046 = vmul.f32 %v2997, %v2458
    %v3047 = vmul.f32 %v2997, %v2459
    %v3048 = vmul.f32 %v3001, %v2458
    %v3049 = vmul.f32 %v3001, %v2459
    %v3050 = vsub.f32 %v2806, %v3018
    %v3051 = vsub.f32 %v2807, %v3019
    %v3052 = vsub.f32 %v2808, %v3020
    %v3053 = vsub.f32 %v2809, %v3021
    %v3054 = vsub.f32 %v2810, %v3022
    %v3055 = vsub.f32 %v2811, %v3023
    %v3056 = vsub.f32 %v2812, %v3024
    %v3057 = vsub.f32 %v2813, %v3025
    %v3058 = vsub.f32 %v2814, %v3026
    %v3059 = vsub.f32 %v2815, %v3027
    %v3060 = vsub.f32 %v2816, %v3028
    %v3061 = vsub.f32 %v2817, %v3029
    %v3062 = vsub.f32 %v2818, %v3030
    %v3063 = vsub.f32 %v2819, %v3031
    %v3064 = vsub.f32 %v2820, %v3032
    %v3065 = vsub.f32 %v2821, %v3033
    %v3066 = vsub.f32 %v2822, %v3034
    %v3067 = vsub.f32 %v2823, %v3035
    %v3068 = vsub.f32 %v2824, %v3036
    %v3069 = vsub.f32 %v2825, %v3037
    %v3070 = vsub.f32 %v2826, %v3038
    %v3071 = vsub.f32 %v2827, %v3039
    %v3072 = vsub.f32 %v2828, %v3040
    %v3073 = vsub.f32 %v2829, %v3041
    %v3074 = vsub.f32 %v2830, %v3042
    %v3075 = vsub.f32 %v2831, %v3043
    %v3076 = vsub.f32 %v2832, %v3044
    %v3077 = vsub.f32 %v2833, %v3045
    %v3078 = vsub.f32 %v2834, %v3046
    %v3079 = vsub.f32 %v2835, %v3047
    %v3080 = vsub.f32 %v2836, %v3048
    %v3081 = vsub.f32 %v2837, %v3049
    %v3082 = vadd.f32 %v2128, %v3050
    %v3083 = vadd.f32 %v2129, %v3051
    %v3084 = vadd.f32 %v2130, %v3052
    %v3085 = vadd.f32 %v2131, %v3053
    %v3086 = vadd.f32 %v2132, %v3054
    %v3087 = vadd.f32 %v2133, %v3055
    %v3088 = vadd.f32 %v2134, %v3056
    %v3089 = vadd.f32 %v2135, %v3057
    %v3090 = vadd.f32 %v2136, %v3058
    %v3091 = vadd.f32 %v2137, %v3059
    %v3092 = vadd.f32 %v2138, %v3060
    %v3093 = vadd.f32 %v2139, %v3061
    %v3094 = vadd.f32 %v2140, %v3062
    %v3095 = vadd.f32 %v2141, %v3063
    %v3096 = vadd.f32 %v2142, %v3064
    %v3097 = vadd.f32 %v2143, %v3065
    %v3098 = vadd.f32 %v2144, %v3066
    %v3099 = vadd.f32 %v2145, %v3067
    %v3100 = vadd.f32 %v2146, %v3068
    %v3101 = vadd.f32 %v2147, %v3069
    %v3102 = vadd.f32 %v2148, %v3070
    %v3103 = vadd.f32 %v2149, %v3071
    %v3104 = vadd.f32 %v2150, %v3072
    %v3105 = vadd.f32 %v2151, %v3073
    %v3106 = vadd.f32 %v2152, %v3074
    %v3107 = vadd.f32 %v2153, %v3075
    %v3108 = vadd.f32 %v2154, %v3076
    %v3109 = vadd.f32 %v2155, %v3077
    %v3110 = vadd.f32 %v2156, %v3078
    %v3111 = vadd.f32 %v2157, %v3079
    %v3112 = vadd.f32 %v2158, %v3080
    %v3113 = vadd.f32 %v2159, %v3081
    %vm3114 = vcmp.gt.f32.partialorder %v2179, 0.5
    %v3115 = vsel %vm3114, 1, 0
    %vm3116 = vcmp.eq.s32.totalorder %v3115, 1
    %v3117 = vsel %vm3116, %v2460, %v2163
    %v3118 = vsel %vm3116, %v2461, %v2164
    %v3119 = vsel %vm3116, %v2464, %v2165
    %v3120 = vsel %vm3116, %v2465, %v2166
    %v3121 = vmul.f32 %v3119, %v3119
    %v3122 = vmul.f32 %v3120, %v3120
    %v3123 = vadd.f32 %v3121, %v3122
    %v3124 = vrot.slane %v3123, 4
    %v3125 = vadd.f32 %v3123, %v3124
    %v3126 = vrot.slane %v3125, 2
    %v3127 = vadd.f32 %v3125, %v3126
    %v3128 = vrot.slane %v3127, 1
    %v3129 = vadd.f32 %v3127, %v3128
    %vm3130 = vcmp.gt.f32.partialorder %v3129, 1e-06
    %vm3131 = vmand %vm3114, %vm3130
    %v3132 = vsel %vm3131, 1, 0
    %v3133 = vcvt.s32.f32 %v3132
    %v3134 = vlaneseq
    %v3135 = vshrl.u32 %v3134, 7
    %v3136 = vsub.s32 0, %v3135
    %v3137 = vrot.slane %v3119, %v3136
    %v3138 = vmul.f32 %v3082, %v3137
    %v3139 = vmul.f32 %v3083, %v3137
    %v3140 = vlaneseq
    %v3141 = vshrl.u32 %v3140, 7
    %v3142 = vsub.s32 1, %v3141
    %v3143 = vrot.slane %v3119, %v3142
    %v3144 = vmul.f32 %v3084, %v3143
    %v3145 = vmul.f32 %v3085, %v3143
    %v3146 = vlaneseq
    %v3147 = vshrl.u32 %v3146, 7
    %v3148 = vsub.s32 2, %v3147
    %v3149 = vrot.slane %v3119, %v3148
    %v3150 = vmul.f32 %v3086, %v3149
    %v3151 = vmul.f32 %v3087, %v3149
    %v3152 = vlaneseq
    %v3153 = vshrl.u32 %v3152, 7
    %v3154 = vsub.s32 3, %v3153
    %v3155 = vrot.slane %v3119, %v3154
    %v3156 = vmul.f32 %v3088, %v3155
    %v3157 = vmul.f32 %v3089, %v3155
    %v3158 = vlaneseq
    %v3159 = vshrl.u32 %v3158, 7
    %v3160 = vsub.s32 4, %v3159
    %v3161 = vrot.slane %v3119, %v3160
    %v3162 = vmul.f32 %v3090, %v3161
    %v3163 = vmul.f32 %v3091, %v3161
    %v3164 = vadd.f32 %v3138, %v3162
    %v3165 = vadd.f32 %v3139, %v3163
    %v3166 = vlaneseq
    %v3167 = vshrl.u32 %v3166, 7
    %v3168 = vsub.s32 5, %v3167
    %v3169 = vrot.slane %v3119, %v3168
    %v3170 = vmul.f32 %v3092, %v3169
    %v3171 = vmul.f32 %v3093, %v3169
    %v3172 = vadd.f32 %v3144, %v3170
    %v3173 = vadd.f32 %v3145, %v3171
    %v3174 = vlaneseq
    %v3175 = vshrl.u32 %v3174, 7
    %v3176 = vsub.s32 6, %v3175
    %v3177 = vrot.slane %v3119, %v3176
    %v3178 = vmul.f32 %v3094, %v3177
    %v3179 = vmul.f32 %v3095, %v3177
    %v3180 = vadd.f32 %v3150, %v3178
    %v3181 = vadd.f32 %v3151, %v3179
    %v3182 = vlaneseq
    %v3183 = vshrl.u32 %v3182, 7
    %v3184 = vsub.s32 7, %v3183
    %v3185 = vrot.slane %v3119, %v3184
    %v3186 = vmul.f32 %v3096, %v3185
    %v3187 = vmul.f32 %v3097, %v3185
    %v3188 = vadd.f32 %v3156, %v3186
    %v3189 = vadd.f32 %v3157, %v3187
    %v3190 = vlaneseq
    %v3191 = vshrl.u32 %v3190, 7
    %v3192 = vsub.s32 0, %v3191
    %v3193 = vrot.slane %v3120, %v3192
    %v3194 = vmul.f32 %v3098, %v3193
    %v3195 = vmul.f32 %v3099, %v3193
    %v3196 = vadd.f32 %v3164, %v3194
    %v3197 = vadd.f32 %v3165, %v3195
    %v3198 = vlaneseq
    %v3199 = vshrl.u32 %v3198, 7
    %v3200 = vsub.s32 1, %v3199
    %v3201 = vrot.slane %v3120, %v3200
    %v3202 = vmul.f32 %v3100, %v3201
    %v3203 = vmul.f32 %v3101, %v3201
    %v3204 = vadd.f32 %v3172, %v3202
    %v3205 = vadd.f32 %v3173, %v3203
    %v3206 = vlaneseq
    %v3207 = vshrl.u32 %v3206, 7
    %v3208 = vsub.s32 2, %v3207
    %v3209 = vrot.slane %v3120, %v3208
    %v3210 = vmul.f32 %v3102, %v3209
    %v3211 = vmul.f32 %v3103, %v3209
    %v3212 = vadd.f32 %v3180, %v3210
    %v3213 = vadd.f32 %v3181, %v3211
    %v3214 = vlaneseq
    %v3215 = vshrl.u32 %v3214, 7
    %v3216 = vsub.s32 3, %v3215
    %v3217 = vrot.slane %v3120, %v3216
    %v3218 = vmul.f32 %v3104, %v3217
    %v3219 = vmul.f32 %v3105, %v3217
    %v3220 = vadd.f32 %v3188, %v3218
    %v3221 = vadd.f32 %v3189, %v3219
    %v3222 = vlaneseq
    %v3223 = vshrl.u32 %v3222, 7
    %v3224 = vsub.s32 4, %v3223
    %v3225 = vrot.slane %v3120, %v3224
    %v3226 = vmul.f32 %v3106, %v3225
    %v3227 = vmul.f32 %v3107, %v3225
    %v3228 = vadd.f32 %v3196, %v3226
    %v3229 = vadd.f32 %v3197, %v3227
    %v3230 = vlaneseq
    %v3231 = vshrl.u32 %v3230, 7
    %v3232 = vsub.s32 5, %v3231
    %v3233 = vrot.slane %v3120, %v3232
    %v3234 = vmul.f32 %v3108, %v3233
    %v3235 = vmul.f32 %v3109, %v3233
    %v3236 = vadd.f32 %v3204, %v3234
    %v3237 = vadd.f32 %v3205, %v3235
    %v3238 = vlaneseq
    %v3239 = vshrl.u32 %v3238, 7
    %v3240 = vsub.s32 6, %v3239
    %v3241 = vrot.slane %v3120, %v3240
    %v3242 = vmul.f32 %v3110, %v3241
    %v3243 = vmul.f32 %v3111, %v3241
    %v3244 = vadd.f32 %v3212, %v3242
    %v3245 = vadd.f32 %v3213, %v3243
    %v3246 = vlaneseq
    %v3247 = vshrl.u32 %v3246, 7
    %v3248 = vsub.s32 7, %v3247
    %v3249 = vrot.slane %v3120, %v3248
    %v3250 = vmul.f32 %v3112, %v3249
    %v3251 = vmul.f32 %v3113, %v3249
    %v3252 = vadd.f32 %v3220, %v3250
    %v3253 = vadd.f32 %v3221, %v3251
    %v3254 = vadd.f32 %v3228, %v3236
    %v3255 = vadd.f32 %v3229, %v3237
    %v3256 = vadd.f32 %v3254, %v3244
    %v3257 = vadd.f32 %v3255, %v3245
    %v3258 = vadd.f32 %v3256, %v3252
    %v3259 = vadd.f32 %v3257, %v3253
    %v3260 = vsub.f32 0.0, %v3258
    %v3261 = vsub.f32 0.0, %v3259
    %v3262 = vlaneseq
    %v3263 = vshrl.u32 %v3262, 7
    %v3264 = vsub.s32 0, %v3263
    %v3265 = vrot.slane %v3260, %v3264
    %v3266 = vmul.f32 %v76, %v3265
    %v3267 = vmul.f32 %v77, %v3265
    %v3268 = vlaneseq
    %v3269 = vshrl.u32 %v3268, 7
    %v3270 = vsub.s32 1, %v3269
    %v3271 = vrot.slane %v3260, %v3270
    %v3272 = vmul.f32 %v78, %v3271
    %v3273 = vmul.f32 %v79, %v3271
    %v3274 = vlaneseq
    %v3275 = vshrl.u32 %v3274, 7
    %v3276 = vsub.s32 2, %v3275
    %v3277 = vrot.slane %v3260, %v3276
    %v3278 = vmul.f32 %v80, %v3277
    %v3279 = vmul.f32 %v81, %v3277
    %v3280 = vlaneseq
    %v3281 = vshrl.u32 %v3280, 7
    %v3282 = vsub.s32 3, %v3281
    %v3283 = vrot.slane %v3260, %v3282
    %v3284 = vmul.f32 %v82, %v3283
    %v3285 = vmul.f32 %v83, %v3283
    %v3286 = vlaneseq
    %v3287 = vshrl.u32 %v3286, 7
    %v3288 = vsub.s32 4, %v3287
    %v3289 = vrot.slane %v3260, %v3288
    %v3290 = vmul.f32 %v84, %v3289
    %v3291 = vmul.f32 %v85, %v3289
    %v3292 = vadd.f32 %v3266, %v3290
    %v3293 = vadd.f32 %v3267, %v3291
    %v3294 = vlaneseq
    %v3295 = vshrl.u32 %v3294, 7
    %v3296 = vsub.s32 5, %v3295
    %v3297 = vrot.slane %v3260, %v3296
    %v3298 = vmul.f32 %v86, %v3297
    %v3299 = vmul.f32 %v87, %v3297
    %v3300 = vadd.f32 %v3272, %v3298
    %v3301 = vadd.f32 %v3273, %v3299
    %v3302 = vlaneseq
    %v3303 = vshrl.u32 %v3302, 7
    %v3304 = vsub.s32 6, %v3303
    %v3305 = vrot.slane %v3260, %v3304
    %v3306 = vmul.f32 %v88, %v3305
    %v3307 = vmul.f32 %v89, %v3305
    %v3308 = vadd.f32 %v3278, %v3306
    %v3309 = vadd.f32 %v3279, %v3307
    %v3310 = vlaneseq
    %v3311 = vshrl.u32 %v3310, 7
    %v3312 = vsub.s32 7, %v3311
    %v3313 = vrot.slane %v3260, %v3312
    %v3314 = vmul.f32 %v90, %v3313
    %v3315 = vmul.f32 %v91, %v3313
    %v3316 = vadd.f32 %v3284, %v3314
    %v3317 = vadd.f32 %v3285, %v3315
    %v3318 = vlaneseq
    %v3319 = vshrl.u32 %v3318, 7
    %v3320 = vsub.s32 0, %v3319
    %v3321 = vrot.slane %v3261, %v3320
    %v3322 = vmul.f32 %v92, %v3321
    %v3323 = vmul.f32 %v93, %v3321
    %v3324 = vadd.f32 %v3292, %v3322
    %v3325 = vadd.f32 %v3293, %v3323
    %v3326 = vlaneseq
    %v3327 = vshrl.u32 %v3326, 7
    %v3328 = vsub.s32 1, %v3327
    %v3329 = vrot.slane %v3261, %v3328
    %v3330 = vmul.f32 %v94, %v3329
    %v3331 = vmul.f32 %v95, %v3329
    %v3332 = vadd.f32 %v3300, %v3330
    %v3333 = vadd.f32 %v3301, %v3331
    %v3334 = vlaneseq
    %v3335 = vshrl.u32 %v3334, 7
    %v3336 = vsub.s32 2, %v3335
    %v3337 = vrot.slane %v3261, %v3336
    %v3338 = vmul.f32 %v96, %v3337
    %v3339 = vmul.f32 %v97, %v3337
    %v3340 = vadd.f32 %v3308, %v3338
    %v3341 = vadd.f32 %v3309, %v3339
    %v3342 = vlaneseq
    %v3343 = vshrl.u32 %v3342, 7
    %v3344 = vsub.s32 3, %v3343
    %v3345 = vrot.slane %v3261, %v3344
    %v3346 = vmul.f32 %v98, %v3345
    %v3347 = vmul.f32 %v99, %v3345
    %v3348 = vadd.f32 %v3316, %v3346
    %v3349 = vadd.f32 %v3317, %v3347
    %v3350 = vlaneseq
    %v3351 = vshrl.u32 %v3350, 7
    %v3352 = vsub.s32 4, %v3351
    %v3353 = vrot.slane %v3261, %v3352
    %v3354 = vmul.f32 %v100, %v3353
    %v3355 = vmul.f32 %v101, %v3353
    %v3356 = vadd.f32 %v3324, %v3354
    %v3357 = vadd.f32 %v3325, %v3355
    %v3358 = vlaneseq
    %v3359 = vshrl.u32 %v3358, 7
    %v3360 = vsub.s32 5, %v3359
    %v3361 = vrot.slane %v3261, %v3360
    %v3362 = vmul.f32 %v102, %v3361
    %v3363 = vmul.f32 %v103, %v3361
    %v3364 = vadd.f32 %v3332, %v3362
    %v3365 = vadd.f32 %v3333, %v3363
    %v3366 = vlaneseq
    %v3367 = vshrl.u32 %v3366, 7
    %v3368 = vsub.s32 6, %v3367
    %v3369 = vrot.slane %v3261, %v3368
    %v3370 = vmul.f32 %v104, %v3369
    %v3371 = vmul.f32 %v105, %v3369
    %v3372 = vadd.f32 %v3340, %v3370
    %v3373 = vadd.f32 %v3341, %v3371
    %v3374 = vlaneseq
    %v3375 = vshrl.u32 %v3374, 7
    %v3376 = vsub.s32 7, %v3375
    %v3377 = vrot.slane %v3261, %v3376
    %v3378 = vmul.f32 %v106, %v3377
    %v3379 = vmul.f32 %v107, %v3377
    %v3380 = vadd.f32 %v3348, %v3378
    %v3381 = vadd.f32 %v3349, %v3379
    %v3382 = vadd.f32 %v3356, %v3364
    %v3383 = vadd.f32 %v3357, %v3365
    %v3384 = vadd.f32 %v3382, %v3372
    %v3385 = vadd.f32 %v3383, %v3373
    %v3386 = vadd.f32 %v3384, %v3380
    %v3387 = vadd.f32 %v3385, %v3381
    %v3388 = vmul.f32 %v3260, %v3386
    %v3389 = vmul.f32 %v3261, %v3387
    %v3390 = vadd.f32 %v3388, %v3389
    %v3391 = vrot.slane %v3390, 4
    %v3392 = vadd.f32 %v3390, %v3391
    %v3393 = vrot.slane %v3392, 2
    %v3394 = vadd.f32 %v3392, %v3393
    %v3395 = vrot.slane %v3394, 1
    %v3396 = vadd.f32 %v3394, %v3395
    %v3397 = vmul.f32 %v3119, %v3260
    %v3398 = vmul.f32 %v3120, %v3261
    %v3399 = vadd.f32 %v3397, %v3398
    %v3400 = vrot.slane %v3399, 4
    %v3401 = vadd.f32 %v3399, %v3400
    %v3402 = vrot.slane %v3401, 2
    %v3403 = vadd.f32 %v3401, %v3402
    %v3404 = vrot.slane %v3403, 1
    %v3405 = vadd.f32 %v3403, %v3404
    %vm3406 = vcmp.gt.f32.partialorder %v3396, 1e-30
    %v3407 = vsub.f32 0.0, %v3405
    %v3408 = vsel %vm3406, %v3396, 1.0
    %v3409 = vrcp.pop %v3408
    %v3410 = vmul.f32 %v3407, %v3409
    %v3411 = vsel %vm3406, %v3410, 0.0
    %v3412 = vmul.f32 %v3411, %v3260
    %v3413 = vmul.f32 %v3411, %v3261
    %v3414 = vadd.f32 %v3117, %v3412
    %v3415 = vadd.f32 %v3118, %v3413
    %v3416 = vmul.f32 %v3411, %v3386
    %v3417 = vmul.f32 %v3411, %v3387
    %v3418 = vadd.f32 %v3119, %v3416
    %v3419 = vadd.f32 %v3120, %v3417
    %v3420 = vsub.f32 %v3418, %v3119
    %v3421 = vsub.f32 %v3419, %v3120
    %v3422 = vmul.f32 %v3412, %v3420
    %v3423 = vmul.f32 %v3413, %v3421
    %v3424 = vadd.f32 %v3422, %v3423
    %v3425 = vrot.slane %v3424, 4
    %v3426 = vadd.f32 %v3424, %v3425
    %v3427 = vrot.slane %v3426, 2
    %v3428 = vadd.f32 %v3426, %v3427
    %v3429 = vrot.slane %v3428, 1
    %v3430 = vadd.f32 %v3428, %v3429
    %v3431 = vlaneseq
    %v3432 = vshrl.u32 %v3431, 7
    %v3433 = vsub.s32 0, %v3432
    %v3434 = vrot.slane %v3420, %v3433
    %v3435 = vmul.f32 %v3082, %v3434
    %v3436 = vmul.f32 %v3083, %v3434
    %v3437 = vlaneseq
    %v3438 = vshrl.u32 %v3437, 7
    %v3439 = vsub.s32 1, %v3438
    %v3440 = vrot.slane %v3420, %v3439
    %v3441 = vmul.f32 %v3084, %v3440
    %v3442 = vmul.f32 %v3085, %v3440
    %v3443 = vlaneseq
    %v3444 = vshrl.u32 %v3443, 7
    %v3445 = vsub.s32 2, %v3444
    %v3446 = vrot.slane %v3420, %v3445
    %v3447 = vmul.f32 %v3086, %v3446
    %v3448 = vmul.f32 %v3087, %v3446
    %v3449 = vlaneseq
    %v3450 = vshrl.u32 %v3449, 7
    %v3451 = vsub.s32 3, %v3450
    %v3452 = vrot.slane %v3420, %v3451
    %v3453 = vmul.f32 %v3088, %v3452
    %v3454 = vmul.f32 %v3089, %v3452
    %v3455 = vlaneseq
    %v3456 = vshrl.u32 %v3455, 7
    %v3457 = vsub.s32 4, %v3456
    %v3458 = vrot.slane %v3420, %v3457
    %v3459 = vmul.f32 %v3090, %v3458
    %v3460 = vmul.f32 %v3091, %v3458
    %v3461 = vadd.f32 %v3435, %v3459
    %v3462 = vadd.f32 %v3436, %v3460
    %v3463 = vlaneseq
    %v3464 = vshrl.u32 %v3463, 7
    %v3465 = vsub.s32 5, %v3464
    %v3466 = vrot.slane %v3420, %v3465
    %v3467 = vmul.f32 %v3092, %v3466
    %v3468 = vmul.f32 %v3093, %v3466
    %v3469 = vadd.f32 %v3441, %v3467
    %v3470 = vadd.f32 %v3442, %v3468
    %v3471 = vlaneseq
    %v3472 = vshrl.u32 %v3471, 7
    %v3473 = vsub.s32 6, %v3472
    %v3474 = vrot.slane %v3420, %v3473
    %v3475 = vmul.f32 %v3094, %v3474
    %v3476 = vmul.f32 %v3095, %v3474
    %v3477 = vadd.f32 %v3447, %v3475
    %v3478 = vadd.f32 %v3448, %v3476
    %v3479 = vlaneseq
    %v3480 = vshrl.u32 %v3479, 7
    %v3481 = vsub.s32 7, %v3480
    %v3482 = vrot.slane %v3420, %v3481
    %v3483 = vmul.f32 %v3096, %v3482
    %v3484 = vmul.f32 %v3097, %v3482
    %v3485 = vadd.f32 %v3453, %v3483
    %v3486 = vadd.f32 %v3454, %v3484
    %v3487 = vlaneseq
    %v3488 = vshrl.u32 %v3487, 7
    %v3489 = vsub.s32 0, %v3488
    %v3490 = vrot.slane %v3421, %v3489
    %v3491 = vmul.f32 %v3098, %v3490
    %v3492 = vmul.f32 %v3099, %v3490
    %v3493 = vadd.f32 %v3461, %v3491
    %v3494 = vadd.f32 %v3462, %v3492
    %v3495 = vlaneseq
    %v3496 = vshrl.u32 %v3495, 7
    %v3497 = vsub.s32 1, %v3496
    %v3498 = vrot.slane %v3421, %v3497
    %v3499 = vmul.f32 %v3100, %v3498
    %v3500 = vmul.f32 %v3101, %v3498
    %v3501 = vadd.f32 %v3469, %v3499
    %v3502 = vadd.f32 %v3470, %v3500
    %v3503 = vlaneseq
    %v3504 = vshrl.u32 %v3503, 7
    %v3505 = vsub.s32 2, %v3504
    %v3506 = vrot.slane %v3421, %v3505
    %v3507 = vmul.f32 %v3102, %v3506
    %v3508 = vmul.f32 %v3103, %v3506
    %v3509 = vadd.f32 %v3477, %v3507
    %v3510 = vadd.f32 %v3478, %v3508
    %v3511 = vlaneseq
    %v3512 = vshrl.u32 %v3511, 7
    %v3513 = vsub.s32 3, %v3512
    %v3514 = vrot.slane %v3421, %v3513
    %v3515 = vmul.f32 %v3104, %v3514
    %v3516 = vmul.f32 %v3105, %v3514
    %v3517 = vadd.f32 %v3485, %v3515
    %v3518 = vadd.f32 %v3486, %v3516
    %v3519 = vlaneseq
    %v3520 = vshrl.u32 %v3519, 7
    %v3521 = vsub.s32 4, %v3520
    %v3522 = vrot.slane %v3421, %v3521
    %v3523 = vmul.f32 %v3106, %v3522
    %v3524 = vmul.f32 %v3107, %v3522
    %v3525 = vadd.f32 %v3493, %v3523
    %v3526 = vadd.f32 %v3494, %v3524
    %v3527 = vlaneseq
    %v3528 = vshrl.u32 %v3527, 7
    %v3529 = vsub.s32 5, %v3528
    %v3530 = vrot.slane %v3421, %v3529
    %v3531 = vmul.f32 %v3108, %v3530
    %v3532 = vmul.f32 %v3109, %v3530
    %v3533 = vadd.f32 %v3501, %v3531
    %v3534 = vadd.f32 %v3502, %v3532
    %v3535 = vlaneseq
    %v3536 = vshrl.u32 %v3535, 7
    %v3537 = vsub.s32 6, %v3536
    %v3538 = vrot.slane %v3421, %v3537
    %v3539 = vmul.f32 %v3110, %v3538
    %v3540 = vmul.f32 %v3111, %v3538
    %v3541 = vadd.f32 %v3509, %v3539
    %v3542 = vadd.f32 %v3510, %v3540
    %v3543 = vlaneseq
    %v3544 = vshrl.u32 %v3543, 7
    %v3545 = vsub.s32 7, %v3544
    %v3546 = vrot.slane %v3421, %v3545
    %v3547 = vmul.f32 %v3112, %v3546
    %v3548 = vmul.f32 %v3113, %v3546
    %v3549 = vadd.f32 %v3517, %v3547
    %v3550 = vadd.f32 %v3518, %v3548
    %v3551 = vadd.f32 %v3525, %v3533
    %v3552 = vadd.f32 %v3526, %v3534
    %v3553 = vadd.f32 %v3551, %v3541
    %v3554 = vadd.f32 %v3552, %v3542
    %v3555 = vadd.f32 %v3553, %v3549
    %v3556 = vadd.f32 %v3554, %v3550
    %v3557 = vmul.f32 %v3420, %v3555
    %v3558 = vmul.f32 %v3421, %v3556
    %v3559 = vadd.f32 %v3557, %v3558
    %v3560 = vrot.slane %v3559, 4
    %v3561 = vadd.f32 %v3559, %v3560
    %v3562 = vrot.slane %v3561, 2
    %v3563 = vadd.f32 %v3561, %v3562
    %v3564 = vrot.slane %v3563, 1
    %v3565 = vadd.f32 %v3563, %v3564
    %vm3566 = vcmp.ne.f32.partialorder %v3430, 0.0
    %v3567 = vsel %vm3566, %v3430, 1.0
    %v3568 = vrcp.pop %v3567
    %v3569 = vmul.f32 1.0, %v3568
    %v3570 = vsel %vm3566, %v3569, 0.0
    %v3571 = vadd.f32 %v3430, %v3565
    %v3572 = vmul.f32 %v3571, %v3570
    %v3573 = vmul.f32 %v3572, %v3570
    %v3574 = vmul.f32 %v3573, %v3412
    %v3575 = vmul.f32 %v3573, %v3413
    %v3576 = vmul.f32 %v3570, %v3555
    %v3577 = vmul.f32 %v3570, %v3556
    %v3578 = vsub.f32 %v3574, %v3576
    %v3579 = vsub.f32 %v3575, %v3577
    %v3582 = vcombine.high %v3412, %v3412
    %v3584 = vunpack.c.l.s4 1966171168
    %v3585 = vunpack.c.0.s8 %v3584
    %v3586 = vlaneseq
    %v3587 = vshrl.u32 %v3586, 7
    %v3588 = vsub.s32 %v3585, %v3587
    %v3589 = vrot.slane %v3412, %v3588
    %v3591 = vunpack.c.l.s4 1966171168
    %v3592 = vunpack.c.0.s8 %v3591
    %v3593 = vlaneseq
    %v3594 = vshrl.u32 %v3593, 7
    %v3595 = vsub.s32 %v3592, %v3594
    %v3596 = vrot.slane %v3582, %v3595
    %v3597 = vcombine.high %v3589, %v3589
    %v3598 = vcombine.high %v3596, %v3596
    %v3600 = vunpack.c.l.s4 1966171168
    %v3601 = vunpack.c.0.s8 %v3600
    %v3602 = vlaneseq
    %v3603 = vshrl.u32 %v3602, 7
    %v3604 = vsub.s32 %v3601, %v3603
    %v3605 = vrot.slane %v3589, %v3604
    %v3607 = vunpack.c.l.s4 1966171168
    %v3608 = vunpack.c.0.s8 %v3607
    %v3609 = vlaneseq
    %v3610 = vshrl.u32 %v3609, 7
    %v3611 = vsub.s32 %v3608, %v3610
    %v3612 = vrot.slane %v3596, %v3611
    %v3614 = vunpack.c.l.s4 1966171168
    %v3615 = vunpack.c.0.s8 %v3614
    %v3616 = vlaneseq
    %v3617 = vshrl.u32 %v3616, 7
    %v3618 = vsub.s32 %v3615, %v3617
    %v3619 = vrot.slane %v3597, %v3618
    %v3621 = vunpack.c.l.s4 1966171168
    %v3622 = vunpack.c.0.s8 %v3621
    %v3623 = vlaneseq
    %v3624 = vshrl.u32 %v3623, 7
    %v3625 = vsub.s32 %v3622, %v3624
    %v3626 = vrot.slane %v3598, %v3625
    %v3627 = vcombine.high %v3605, %v3605
    %v3628 = vcombine.high %v3612, %v3612
    %v3629 = vcombine.high %v3619, %v3619
    %v3630 = vcombine.high %v3626, %v3626
    %v3631 = vcombine.high %v3413, %v3413
    %v3633 = vunpack.c.l.s4 1966171168
    %v3634 = vunpack.c.0.s8 %v3633
    %v3635 = vlaneseq
    %v3636 = vshrl.u32 %v3635, 7
    %v3637 = vsub.s32 %v3634, %v3636
    %v3638 = vrot.slane %v3413, %v3637
    %v3640 = vunpack.c.l.s4 1966171168
    %v3641 = vunpack.c.0.s8 %v3640
    %v3642 = vlaneseq
    %v3643 = vshrl.u32 %v3642, 7
    %v3644 = vsub.s32 %v3641, %v3643
    %v3645 = vrot.slane %v3631, %v3644
    %v3646 = vcombine.high %v3638, %v3638
    %v3647 = vcombine.high %v3645, %v3645
    %v3649 = vunpack.c.l.s4 1966171168
    %v3650 = vunpack.c.0.s8 %v3649
    %v3651 = vlaneseq
    %v3652 = vshrl.u32 %v3651, 7
    %v3653 = vsub.s32 %v3650, %v3652
    %v3654 = vrot.slane %v3638, %v3653
    %v3656 = vunpack.c.l.s4 1966171168
    %v3657 = vunpack.c.0.s8 %v3656
    %v3658 = vlaneseq
    %v3659 = vshrl.u32 %v3658, 7
    %v3660 = vsub.s32 %v3657, %v3659
    %v3661 = vrot.slane %v3645, %v3660
    %v3663 = vunpack.c.l.s4 1966171168
    %v3664 = vunpack.c.0.s8 %v3663
    %v3665 = vlaneseq
    %v3666 = vshrl.u32 %v3665, 7
    %v3667 = vsub.s32 %v3664, %v3666
    %v3668 = vrot.slane %v3646, %v3667
    %v3670 = vunpack.c.l.s4 1966171168
    %v3671 = vunpack.c.0.s8 %v3670
    %v3672 = vlaneseq
    %v3673 = vshrl.u32 %v3672, 7
    %v3674 = vsub.s32 %v3671, %v3673
    %v3675 = vrot.slane %v3647, %v3674
    %v3676 = vcombine.high %v3654, %v3654
    %v3677 = vcombine.high %v3661, %v3661
    %v3678 = vcombine.high %v3668, %v3668
    %v3679 = vcombine.high %v3675, %v3675
    %v3680 = vlaneseq
    %v3681 = vshrl.u32 %v3680, 7
    %v3682 = vsub.s32 0, %v3681
    %v3683 = vrot.slane %v3605, %v3682
    %v3684 = vlaneseq
    %v3685 = vshrl.u32 %v3684, 7
    %v3686 = vsub.s32 0, %v3685
    %v3687 = vrot.slane %v3619, %v3686
    %v3688 = vlaneseq
    %v3689 = vshrl.u32 %v3688, 7
    %v3690 = vsub.s32 0, %v3689
    %v3691 = vrot.slane %v3627, %v3690
    %v3692 = vlaneseq
    %v3693 = vshrl.u32 %v3692, 7
    %v3694 = vsub.s32 0, %v3693
    %v3695 = vrot.slane %v3629, %v3694
    %v3696 = vlaneseq
    %v3697 = vshrl.u32 %v3696, 7
    %v3698 = vsub.s32 0, %v3697
    %v3699 = vrot.slane %v3612, %v3698
    %v3700 = vlaneseq
    %v3701 = vshrl.u32 %v3700, 7
    %v3702 = vsub.s32 0, %v3701
    %v3703 = vrot.slane %v3626, %v3702
    %v3704 = vlaneseq
    %v3705 = vshrl.u32 %v3704, 7
    %v3706 = vsub.s32 0, %v3705
    %v3707 = vrot.slane %v3628, %v3706
    %v3708 = vlaneseq
    %v3709 = vshrl.u32 %v3708, 7
    %v3710 = vsub.s32 0, %v3709
    %v3711 = vrot.slane %v3630, %v3710
    %v3712 = vlaneseq
    %v3713 = vshrl.u32 %v3712, 7
    %v3714 = vsub.s32 0, %v3713
    %v3715 = vrot.slane %v3654, %v3714
    %v3716 = vlaneseq
    %v3717 = vshrl.u32 %v3716, 7
    %v3718 = vsub.s32 0, %v3717
    %v3719 = vrot.slane %v3668, %v3718
    %v3720 = vlaneseq
    %v3721 = vshrl.u32 %v3720, 7
    %v3722 = vsub.s32 0, %v3721
    %v3723 = vrot.slane %v3676, %v3722
    %v3724 = vlaneseq
    %v3725 = vshrl.u32 %v3724, 7
    %v3726 = vsub.s32 0, %v3725
    %v3727 = vrot.slane %v3678, %v3726
    %v3728 = vlaneseq
    %v3729 = vshrl.u32 %v3728, 7
    %v3730 = vsub.s32 0, %v3729
    %v3731 = vrot.slane %v3661, %v3730
    %v3732 = vlaneseq
    %v3733 = vshrl.u32 %v3732, 7
    %v3734 = vsub.s32 0, %v3733
    %v3735 = vrot.slane %v3675, %v3734
    %v3736 = vlaneseq
    %v3737 = vshrl.u32 %v3736, 7
    %v3738 = vsub.s32 0, %v3737
    %v3739 = vrot.slane %v3677, %v3738
    %v3740 = vlaneseq
    %v3741 = vshrl.u32 %v3740, 7
    %v3742 = vsub.s32 0, %v3741
    %v3743 = vrot.slane %v3679, %v3742
    %v3760 = vmul.f32 %v3683, %v3578
    %v3761 = vmul.f32 %v3683, %v3579
    %v3762 = vmul.f32 %v3687, %v3578
    %v3763 = vmul.f32 %v3687, %v3579
    %v3764 = vmul.f32 %v3691, %v3578
    %v3765 = vmul.f32 %v3691, %v3579
    %v3766 = vmul.f32 %v3695, %v3578
    %v3767 = vmul.f32 %v3695, %v3579
    %v3768 = vmul.f32 %v3699, %v3578
    %v3769 = vmul.f32 %v3699, %v3579
    %v3770 = vmul.f32 %v3703, %v3578
    %v3771 = vmul.f32 %v3703, %v3579
    %v3772 = vmul.f32 %v3707, %v3578
    %v3773 = vmul.f32 %v3707, %v3579
    %v3774 = vmul.f32 %v3711, %v3578
    %v3775 = vmul.f32 %v3711, %v3579
    %v3776 = vmul.f32 %v3715, %v3578
    %v3777 = vmul.f32 %v3715, %v3579
    %v3778 = vmul.f32 %v3719, %v3578
    %v3779 = vmul.f32 %v3719, %v3579
    %v3780 = vmul.f32 %v3723, %v3578
    %v3781 = vmul.f32 %v3723, %v3579
    %v3782 = vmul.f32 %v3727, %v3578
    %v3783 = vmul.f32 %v3727, %v3579
    %v3784 = vmul.f32 %v3731, %v3578
    %v3785 = vmul.f32 %v3731, %v3579
    %v3786 = vmul.f32 %v3735, %v3578
    %v3787 = vmul.f32 %v3735, %v3579
    %v3788 = vmul.f32 %v3739, %v3578
    %v3789 = vmul.f32 %v3739, %v3579
    %v3790 = vmul.f32 %v3743, %v3578
    %v3791 = vmul.f32 %v3743, %v3579
    %v3794 = vcombine.high %v3576, %v3576
    %v3796 = vunpack.c.l.s4 1966171168
    %v3797 = vunpack.c.0.s8 %v3796
    %v3798 = vlaneseq
    %v3799 = vshrl.u32 %v3798, 7
    %v3800 = vsub.s32 %v3797, %v3799
    %v3801 = vrot.slane %v3576, %v3800
    %v3803 = vunpack.c.l.s4 1966171168
    %v3804 = vunpack.c.0.s8 %v3803
    %v3805 = vlaneseq
    %v3806 = vshrl.u32 %v3805, 7
    %v3807 = vsub.s32 %v3804, %v3806
    %v3808 = vrot.slane %v3794, %v3807
    %v3809 = vcombine.high %v3801, %v3801
    %v3810 = vcombine.high %v3808, %v3808
    %v3812 = vunpack.c.l.s4 1966171168
    %v3813 = vunpack.c.0.s8 %v3812
    %v3814 = vlaneseq
    %v3815 = vshrl.u32 %v3814, 7
    %v3816 = vsub.s32 %v3813, %v3815
    %v3817 = vrot.slane %v3801, %v3816
    %v3819 = vunpack.c.l.s4 1966171168
    %v3820 = vunpack.c.0.s8 %v3819
    %v3821 = vlaneseq
    %v3822 = vshrl.u32 %v3821, 7
    %v3823 = vsub.s32 %v3820, %v3822
    %v3824 = vrot.slane %v3808, %v3823
    %v3826 = vunpack.c.l.s4 1966171168
    %v3827 = vunpack.c.0.s8 %v3826
    %v3828 = vlaneseq
    %v3829 = vshrl.u32 %v3828, 7
    %v3830 = vsub.s32 %v3827, %v3829
    %v3831 = vrot.slane %v3809, %v3830
    %v3833 = vunpack.c.l.s4 1966171168
    %v3834 = vunpack.c.0.s8 %v3833
    %v3835 = vlaneseq
    %v3836 = vshrl.u32 %v3835, 7
    %v3837 = vsub.s32 %v3834, %v3836
    %v3838 = vrot.slane %v3810, %v3837
    %v3839 = vcombine.high %v3817, %v3817
    %v3840 = vcombine.high %v3824, %v3824
    %v3841 = vcombine.high %v3831, %v3831
    %v3842 = vcombine.high %v3838, %v3838
    %v3843 = vcombine.high %v3577, %v3577
    %v3845 = vunpack.c.l.s4 1966171168
    %v3846 = vunpack.c.0.s8 %v3845
    %v3847 = vlaneseq
    %v3848 = vshrl.u32 %v3847, 7
    %v3849 = vsub.s32 %v3846, %v3848
    %v3850 = vrot.slane %v3577, %v3849
    %v3852 = vunpack.c.l.s4 1966171168
    %v3853 = vunpack.c.0.s8 %v3852
    %v3854 = vlaneseq
    %v3855 = vshrl.u32 %v3854, 7
    %v3856 = vsub.s32 %v3853, %v3855
    %v3857 = vrot.slane %v3843, %v3856
    %v3858 = vcombine.high %v3850, %v3850
    %v3859 = vcombine.high %v3857, %v3857
    %v3861 = vunpack.c.l.s4 1966171168
    %v3862 = vunpack.c.0.s8 %v3861
    %v3863 = vlaneseq
    %v3864 = vshrl.u32 %v3863, 7
    %v3865 = vsub.s32 %v3862, %v3864
    %v3866 = vrot.slane %v3850, %v3865
    %v3868 = vunpack.c.l.s4 1966171168
    %v3869 = vunpack.c.0.s8 %v3868
    %v3870 = vlaneseq
    %v3871 = vshrl.u32 %v3870, 7
    %v3872 = vsub.s32 %v3869, %v3871
    %v3873 = vrot.slane %v3857, %v3872
    %v3875 = vunpack.c.l.s4 1966171168
    %v3876 = vunpack.c.0.s8 %v3875
    %v3877 = vlaneseq
    %v3878 = vshrl.u32 %v3877, 7
    %v3879 = vsub.s32 %v3876, %v3878
    %v3880 = vrot.slane %v3858, %v3879
    %v3882 = vunpack.c.l.s4 1966171168
    %v3883 = vunpack.c.0.s8 %v3882
    %v3884 = vlaneseq
    %v3885 = vshrl.u32 %v3884, 7
    %v3886 = vsub.s32 %v3883, %v3885
    %v3887 = vrot.slane %v3859, %v3886
    %v3888 = vcombine.high %v3866, %v3866
    %v3889 = vcombine.high %v3873, %v3873
    %v3890 = vcombine.high %v3880, %v3880
    %v3891 = vcombine.high %v3887, %v3887
    %v3892 = vlaneseq
    %v3893 = vshrl.u32 %v3892, 7
    %v3894 = vsub.s32 0, %v3893
    %v3895 = vrot.slane %v3817, %v3894
    %v3896 = vlaneseq
    %v3897 = vshrl.u32 %v3896, 7
    %v3898 = vsub.s32 0, %v3897
    %v3899 = vrot.slane %v3831, %v3898
    %v3900 = vlaneseq
    %v3901 = vshrl.u32 %v3900, 7
    %v3902 = vsub.s32 0, %v3901
    %v3903 = vrot.slane %v3839, %v3902
    %v3904 = vlaneseq
    %v3905 = vshrl.u32 %v3904, 7
    %v3906 = vsub.s32 0, %v3905
    %v3907 = vrot.slane %v3841, %v3906
    %v3908 = vlaneseq
    %v3909 = vshrl.u32 %v3908, 7
    %v3910 = vsub.s32 0, %v3909
    %v3911 = vrot.slane %v3824, %v3910
    %v3912 = vlaneseq
    %v3913 = vshrl.u32 %v3912, 7
    %v3914 = vsub.s32 0, %v3913
    %v3915 = vrot.slane %v3838, %v3914
    %v3916 = vlaneseq
    %v3917 = vshrl.u32 %v3916, 7
    %v3918 = vsub.s32 0, %v3917
    %v3919 = vrot.slane %v3840, %v3918
    %v3920 = vlaneseq
    %v3921 = vshrl.u32 %v3920, 7
    %v3922 = vsub.s32 0, %v3921
    %v3923 = vrot.slane %v3842, %v3922
    %v3924 = vlaneseq
    %v3925 = vshrl.u32 %v3924, 7
    %v3926 = vsub.s32 0, %v3925
    %v3927 = vrot.slane %v3866, %v3926
    %v3928 = vlaneseq
    %v3929 = vshrl.u32 %v3928, 7
    %v3930 = vsub.s32 0, %v3929
    %v3931 = vrot.slane %v3880, %v3930
    %v3932 = vlaneseq
    %v3933 = vshrl.u32 %v3932, 7
    %v3934 = vsub.s32 0, %v3933
    %v3935 = vrot.slane %v3888, %v3934
    %v3936 = vlaneseq
    %v3937 = vshrl.u32 %v3936, 7
    %v3938 = vsub.s32 0, %v3937
    %v3939 = vrot.slane %v3890, %v3938
    %v3940 = vlaneseq
    %v3941 = vshrl.u32 %v3940, 7
    %v3942 = vsub.s32 0, %v3941
    %v3943 = vrot.slane %v3873, %v3942
    %v3944 = vlaneseq
    %v3945 = vshrl.u32 %v3944, 7
    %v3946 = vsub.s32 0, %v3945
    %v3947 = vrot.slane %v3887, %v3946
    %v3948 = vlaneseq
    %v3949 = vshrl.u32 %v3948, 7
    %v3950 = vsub.s32 0, %v3949
    %v3951 = vrot.slane %v3889, %v3950
    %v3952 = vlaneseq
    %v3953 = vshrl.u32 %v3952, 7
    %v3954 = vsub.s32 0, %v3953
    %v3955 = vrot.slane %v3891, %v3954
    %v3972 = vmul.f32 %v3895, %v3412
    %v3973 = vmul.f32 %v3895, %v3413
    %v3974 = vmul.f32 %v3899, %v3412
    %v3975 = vmul.f32 %v3899, %v3413
    %v3976 = vmul.f32 %v3903, %v3412
    %v3977 = vmul.f32 %v3903, %v3413
    %v3978 = vmul.f32 %v3907, %v3412
    %v3979 = vmul.f32 %v3907, %v3413
    %v3980 = vmul.f32 %v3911, %v3412
    %v3981 = vmul.f32 %v3911, %v3413
    %v3982 = vmul.f32 %v3915, %v3412
    %v3983 = vmul.f32 %v3915, %v3413
    %v3984 = vmul.f32 %v3919, %v3412
    %v3985 = vmul.f32 %v3919, %v3413
    %v3986 = vmul.f32 %v3923, %v3412
    %v3987 = vmul.f32 %v3923, %v3413
    %v3988 = vmul.f32 %v3927, %v3412
    %v3989 = vmul.f32 %v3927, %v3413
    %v3990 = vmul.f32 %v3931, %v3412
    %v3991 = vmul.f32 %v3931, %v3413
    %v3992 = vmul.f32 %v3935, %v3412
    %v3993 = vmul.f32 %v3935, %v3413
    %v3994 = vmul.f32 %v3939, %v3412
    %v3995 = vmul.f32 %v3939, %v3413
    %v3996 = vmul.f32 %v3943, %v3412
    %v3997 = vmul.f32 %v3943, %v3413
    %v3998 = vmul.f32 %v3947, %v3412
    %v3999 = vmul.f32 %v3947, %v3413
    %v4000 = vmul.f32 %v3951, %v3412
    %v4001 = vmul.f32 %v3951, %v3413
    %v4002 = vmul.f32 %v3955, %v3412
    %v4003 = vmul.f32 %v3955, %v3413
    %v4004 = vsub.f32 %v3760, %v3972
    %v4005 = vsub.f32 %v3761, %v3973
    %v4006 = vsub.f32 %v3762, %v3974
    %v4007 = vsub.f32 %v3763, %v3975
    %v4008 = vsub.f32 %v3764, %v3976
    %v4009 = vsub.f32 %v3765, %v3977
    %v4010 = vsub.f32 %v3766, %v3978
    %v4011 = vsub.f32 %v3767, %v3979
    %v4012 = vsub.f32 %v3768, %v3980
    %v4013 = vsub.f32 %v3769, %v3981
    %v4014 = vsub.f32 %v3770, %v3982
    %v4015 = vsub.f32 %v3771, %v3983
    %v4016 = vsub.f32 %v3772, %v3984
    %v4017 = vsub.f32 %v3773, %v3985
    %v4018 = vsub.f32 %v3774, %v3986
    %v4019 = vsub.f32 %v3775, %v3987
    %v4020 = vsub.f32 %v3776, %v3988
    %v4021 = vsub.f32 %v3777, %v3989
    %v4022 = vsub.f32 %v3778, %v3990
    %v4023 = vsub.f32 %v3779, %v3991
    %v4024 = vsub.f32 %v3780, %v3992
    %v4025 = vsub.f32 %v3781, %v3993
    %v4026 = vsub.f32 %v3782, %v3994
    %v4027 = vsub.f32 %v3783, %v3995
    %v4028 = vsub.f32 %v3784, %v3996
    %v4029 = vsub.f32 %v3785, %v3997
    %v4030 = vsub.f32 %v3786, %v3998
    %v4031 = vsub.f32 %v3787, %v3999
    %v4032 = vsub.f32 %v3788, %v4000
    %v4033 = vsub.f32 %v3789, %v4001
    %v4034 = vsub.f32 %v3790, %v4002
    %v4035 = vsub.f32 %v3791, %v4003
    %v4036 = vadd.f32 %v3082, %v4004
    %v4037 = vadd.f32 %v3083, %v4005
    %v4038 = vadd.f32 %v3084, %v4006
    %v4039 = vadd.f32 %v3085, %v4007
    %v4040 = vadd.f32 %v3086, %v4008
    %v4041 = vadd.f32 %v3087, %v4009
    %v4042 = vadd.f32 %v3088, %v4010
    %v4043 = vadd.f32 %v3089, %v4011
    %v4044 = vadd.f32 %v3090, %v4012
    %v4045 = vadd.f32 %v3091, %v4013
    %v4046 = vadd.f32 %v3092, %v4014
    %v4047 = vadd.f32 %v3093, %v4015
    %v4048 = vadd.f32 %v3094, %v4016
    %v4049 = vadd.f32 %v3095, %v4017
    %v4050 = vadd.f32 %v3096, %v4018
    %v4051 = vadd.f32 %v3097, %v4019
    %v4052 = vadd.f32 %v3098, %v4020
    %v4053 = vadd.f32 %v3099, %v4021
    %v4054 = vadd.f32 %v3100, %v4022
    %v4055 = vadd.f32 %v3101, %v4023
    %v4056 = vadd.f32 %v3102, %v4024
    %v4057 = vadd.f32 %v3103, %v4025
    %v4058 = vadd.f32 %v3104, %v4026
    %v4059 = vadd.f32 %v3105, %v4027
    %v4060 = vadd.f32 %v3106, %v4028
    %v4061 = vadd.f32 %v3107, %v4029
    %v4062 = vadd.f32 %v3108, %v4030
    %v4063 = vadd.f32 %v3109, %v4031
    %v4064 = vadd.f32 %v3110, %v4032
    %v4065 = vadd.f32 %v3111, %v4033
    %v4066 = vadd.f32 %v3112, %v4034
    %v4067 = vadd.f32 %v3113, %v4035
    %vm4068 = vcmp.gt.f32.partialorder %v3133, 0.5
    %v4069 = vsel %vm4068, 1, 0
    %vm4070 = vcmp.eq.s32.totalorder %v4069, 1
    %v4071 = vsel %vm4070, %v3414, %v3117
    %v4072 = vsel %vm4070, %v3415, %v3118
    %v4073 = vsel %vm4070, %v3418, %v3119
    %v4074 = vsel %vm4070, %v3419, %v3120
    %v4075 = vmul.f32 %v4073, %v4073
    %v4076 = vmul.f32 %v4074, %v4074
    %v4077 = vadd.f32 %v4075, %v4076
    %v4078 = vrot.slane %v4077, 4
    %v4079 = vadd.f32 %v4077, %v4078
    %v4080 = vrot.slane %v4079, 2
    %v4081 = vadd.f32 %v4079, %v4080
    %v4082 = vrot.slane %v4081, 1
    %v4083 = vadd.f32 %v4081, %v4082
    %vm4084 = vcmp.gt.f32.partialorder %v4083, 1e-06
    %vm4085 = vmand %vm4068, %vm4084
    %v4086 = vsel %vm4085, 1, 0
    %v4087 = vcvt.s32.f32 %v4086
    %v4088 = vlaneseq
    %v4089 = vshrl.u32 %v4088, 7
    %v4090 = vsub.s32 0, %v4089
    %v4091 = vrot.slane %v4073, %v4090
    %v4092 = vmul.f32 %v4036, %v4091
    %v4093 = vmul.f32 %v4037, %v4091
    %v4094 = vlaneseq
    %v4095 = vshrl.u32 %v4094, 7
    %v4096 = vsub.s32 1, %v4095
    %v4097 = vrot.slane %v4073, %v4096
    %v4098 = vmul.f32 %v4038, %v4097
    %v4099 = vmul.f32 %v4039, %v4097
    %v4100 = vlaneseq
    %v4101 = vshrl.u32 %v4100, 7
    %v4102 = vsub.s32 2, %v4101
    %v4103 = vrot.slane %v4073, %v4102
    %v4104 = vmul.f32 %v4040, %v4103
    %v4105 = vmul.f32 %v4041, %v4103
    %v4106 = vlaneseq
    %v4107 = vshrl.u32 %v4106, 7
    %v4108 = vsub.s32 3, %v4107
    %v4109 = vrot.slane %v4073, %v4108
    %v4110 = vmul.f32 %v4042, %v4109
    %v4111 = vmul.f32 %v4043, %v4109
    %v4112 = vlaneseq
    %v4113 = vshrl.u32 %v4112, 7
    %v4114 = vsub.s32 4, %v4113
    %v4115 = vrot.slane %v4073, %v4114
    %v4116 = vmul.f32 %v4044, %v4115
    %v4117 = vmul.f32 %v4045, %v4115
    %v4118 = vadd.f32 %v4092, %v4116
    %v4119 = vadd.f32 %v4093, %v4117
    %v4120 = vlaneseq
    %v4121 = vshrl.u32 %v4120, 7
    %v4122 = vsub.s32 5, %v4121
    %v4123 = vrot.slane %v4073, %v4122
    %v4124 = vmul.f32 %v4046, %v4123
    %v4125 = vmul.f32 %v4047, %v4123
    %v4126 = vadd.f32 %v4098, %v4124
    %v4127 = vadd.f32 %v4099, %v4125
    %v4128 = vlaneseq
    %v4129 = vshrl.u32 %v4128, 7
    %v4130 = vsub.s32 6, %v4129
    %v4131 = vrot.slane %v4073, %v4130
    %v4132 = vmul.f32 %v4048, %v4131
    %v4133 = vmul.f32 %v4049, %v4131
    %v4134 = vadd.f32 %v4104, %v4132
    %v4135 = vadd.f32 %v4105, %v4133
    %v4136 = vlaneseq
    %v4137 = vshrl.u32 %v4136, 7
    %v4138 = vsub.s32 7, %v4137
    %v4139 = vrot.slane %v4073, %v4138
    %v4140 = vmul.f32 %v4050, %v4139
    %v4141 = vmul.f32 %v4051, %v4139
    %v4142 = vadd.f32 %v4110, %v4140
    %v4143 = vadd.f32 %v4111, %v4141
    %v4144 = vlaneseq
    %v4145 = vshrl.u32 %v4144, 7
    %v4146 = vsub.s32 0, %v4145
    %v4147 = vrot.slane %v4074, %v4146
    %v4148 = vmul.f32 %v4052, %v4147
    %v4149 = vmul.f32 %v4053, %v4147
    %v4150 = vadd.f32 %v4118, %v4148
    %v4151 = vadd.f32 %v4119, %v4149
    %v4152 = vlaneseq
    %v4153 = vshrl.u32 %v4152, 7
    %v4154 = vsub.s32 1, %v4153
    %v4155 = vrot.slane %v4074, %v4154
    %v4156 = vmul.f32 %v4054, %v4155
    %v4157 = vmul.f32 %v4055, %v4155
    %v4158 = vadd.f32 %v4126, %v4156
    %v4159 = vadd.f32 %v4127, %v4157
    %v4160 = vlaneseq
    %v4161 = vshrl.u32 %v4160, 7
    %v4162 = vsub.s32 2, %v4161
    %v4163 = vrot.slane %v4074, %v4162
    %v4164 = vmul.f32 %v4056, %v4163
    %v4165 = vmul.f32 %v4057, %v4163
    %v4166 = vadd.f32 %v4134, %v4164
    %v4167 = vadd.f32 %v4135, %v4165
    %v4168 = vlaneseq
    %v4169 = vshrl.u32 %v4168, 7
    %v4170 = vsub.s32 3, %v4169
    %v4171 = vrot.slane %v4074, %v4170
    %v4172 = vmul.f32 %v4058, %v4171
    %v4173 = vmul.f32 %v4059, %v4171
    %v4174 = vadd.f32 %v4142, %v4172
    %v4175 = vadd.f32 %v4143, %v4173
    %v4176 = vlaneseq
    %v4177 = vshrl.u32 %v4176, 7
    %v4178 = vsub.s32 4, %v4177
    %v4179 = vrot.slane %v4074, %v4178
    %v4180 = vmul.f32 %v4060, %v4179
    %v4181 = vmul.f32 %v4061, %v4179
    %v4182 = vadd.f32 %v4150, %v4180
    %v4183 = vadd.f32 %v4151, %v4181
    %v4184 = vlaneseq
    %v4185 = vshrl.u32 %v4184, 7
    %v4186 = vsub.s32 5, %v4185
    %v4187 = vrot.slane %v4074, %v4186
    %v4188 = vmul.f32 %v4062, %v4187
    %v4189 = vmul.f32 %v4063, %v4187
    %v4190 = vadd.f32 %v4158, %v4188
    %v4191 = vadd.f32 %v4159, %v4189
    %v4192 = vlaneseq
    %v4193 = vshrl.u32 %v4192, 7
    %v4194 = vsub.s32 6, %v4193
    %v4195 = vrot.slane %v4074, %v4194
    %v4196 = vmul.f32 %v4064, %v4195
    %v4197 = vmul.f32 %v4065, %v4195
    %v4198 = vadd.f32 %v4166, %v4196
    %v4199 = vadd.f32 %v4167, %v4197
    %v4200 = vlaneseq
    %v4201 = vshrl.u32 %v4200, 7
    %v4202 = vsub.s32 7, %v4201
    %v4203 = vrot.slane %v4074, %v4202
    %v4204 = vmul.f32 %v4066, %v4203
    %v4205 = vmul.f32 %v4067, %v4203
    %v4206 = vadd.f32 %v4174, %v4204
    %v4207 = vadd.f32 %v4175, %v4205
    %v4208 = vadd.f32 %v4182, %v4190
    %v4209 = vadd.f32 %v4183, %v4191
    %v4210 = vadd.f32 %v4208, %v4198
    %v4211 = vadd.f32 %v4209, %v4199
    %v4212 = vadd.f32 %v4210, %v4206
    %v4213 = vadd.f32 %v4211, %v4207
    %v4214 = vsub.f32 0.0, %v4212
    %v4215 = vsub.f32 0.0, %v4213
    %v4216 = vlaneseq
    %v4217 = vshrl.u32 %v4216, 7
    %v4218 = vsub.s32 0, %v4217
    %v4219 = vrot.slane %v4214, %v4218
    %v4220 = vmul.f32 %v76, %v4219
    %v4221 = vmul.f32 %v77, %v4219
    %v4222 = vlaneseq
    %v4223 = vshrl.u32 %v4222, 7
    %v4224 = vsub.s32 1, %v4223
    %v4225 = vrot.slane %v4214, %v4224
    %v4226 = vmul.f32 %v78, %v4225
    %v4227 = vmul.f32 %v79, %v4225
    %v4228 = vlaneseq
    %v4229 = vshrl.u32 %v4228, 7
    %v4230 = vsub.s32 2, %v4229
    %v4231 = vrot.slane %v4214, %v4230
    %v4232 = vmul.f32 %v80, %v4231
    %v4233 = vmul.f32 %v81, %v4231
    %v4234 = vlaneseq
    %v4235 = vshrl.u32 %v4234, 7
    %v4236 = vsub.s32 3, %v4235
    %v4237 = vrot.slane %v4214, %v4236
    %v4238 = vmul.f32 %v82, %v4237
    %v4239 = vmul.f32 %v83, %v4237
    %v4240 = vlaneseq
    %v4241 = vshrl.u32 %v4240, 7
    %v4242 = vsub.s32 4, %v4241
    %v4243 = vrot.slane %v4214, %v4242
    %v4244 = vmul.f32 %v84, %v4243
    %v4245 = vmul.f32 %v85, %v4243
    %v4246 = vadd.f32 %v4220, %v4244
    %v4247 = vadd.f32 %v4221, %v4245
    %v4248 = vlaneseq
    %v4249 = vshrl.u32 %v4248, 7
    %v4250 = vsub.s32 5, %v4249
    %v4251 = vrot.slane %v4214, %v4250
    %v4252 = vmul.f32 %v86, %v4251
    %v4253 = vmul.f32 %v87, %v4251
    %v4254 = vadd.f32 %v4226, %v4252
    %v4255 = vadd.f32 %v4227, %v4253
    %v4256 = vlaneseq
    %v4257 = vshrl.u32 %v4256, 7
    %v4258 = vsub.s32 6, %v4257
    %v4259 = vrot.slane %v4214, %v4258
    %v4260 = vmul.f32 %v88, %v4259
    %v4261 = vmul.f32 %v89, %v4259
    %v4262 = vadd.f32 %v4232, %v4260
    %v4263 = vadd.f32 %v4233, %v4261
    %v4264 = vlaneseq
    %v4265 = vshrl.u32 %v4264, 7
    %v4266 = vsub.s32 7, %v4265
    %v4267 = vrot.slane %v4214, %v4266
    %v4268 = vmul.f32 %v90, %v4267
    %v4269 = vmul.f32 %v91, %v4267
    %v4270 = vadd.f32 %v4238, %v4268
    %v4271 = vadd.f32 %v4239, %v4269
    %v4272 = vlaneseq
    %v4273 = vshrl.u32 %v4272, 7
    %v4274 = vsub.s32 0, %v4273
    %v4275 = vrot.slane %v4215, %v4274
    %v4276 = vmul.f32 %v92, %v4275
    %v4277 = vmul.f32 %v93, %v4275
    %v4278 = vadd.f32 %v4246, %v4276
    %v4279 = vadd.f32 %v4247, %v4277
    %v4280 = vlaneseq
    %v4281 = vshrl.u32 %v4280, 7
    %v4282 = vsub.s32 1, %v4281
    %v4283 = vrot.slane %v4215, %v4282
    %v4284 = vmul.f32 %v94, %v4283
    %v4285 = vmul.f32 %v95, %v4283
    %v4286 = vadd.f32 %v4254, %v4284
    %v4287 = vadd.f32 %v4255, %v4285
    %v4288 = vlaneseq
    %v4289 = vshrl.u32 %v4288, 7
    %v4290 = vsub.s32 2, %v4289
    %v4291 = vrot.slane %v4215, %v4290
    %v4292 = vmul.f32 %v96, %v4291
    %v4293 = vmul.f32 %v97, %v4291
    %v4294 = vadd.f32 %v4262, %v4292
    %v4295 = vadd.f32 %v4263, %v4293
    %v4296 = vlaneseq
    %v4297 = vshrl.u32 %v4296, 7
    %v4298 = vsub.s32 3, %v4297
    %v4299 = vrot.slane %v4215, %v4298
    %v4300 = vmul.f32 %v98, %v4299
    %v4301 = vmul.f32 %v99, %v4299
    %v4302 = vadd.f32 %v4270, %v4300
    %v4303 = vadd.f32 %v4271, %v4301
    %v4304 = vlaneseq
    %v4305 = vshrl.u32 %v4304, 7
    %v4306 = vsub.s32 4, %v4305
    %v4307 = vrot.slane %v4215, %v4306
    %v4308 = vmul.f32 %v100, %v4307
    %v4309 = vmul.f32 %v101, %v4307
    %v4310 = vadd.f32 %v4278, %v4308
    %v4311 = vadd.f32 %v4279, %v4309
    %v4312 = vlaneseq
    %v4313 = vshrl.u32 %v4312, 7
    %v4314 = vsub.s32 5, %v4313
    %v4315 = vrot.slane %v4215, %v4314
    %v4316 = vmul.f32 %v102, %v4315
    %v4317 = vmul.f32 %v103, %v4315
    %v4318 = vadd.f32 %v4286, %v4316
    %v4319 = vadd.f32 %v4287, %v4317
    %v4320 = vlaneseq
    %v4321 = vshrl.u32 %v4320, 7
    %v4322 = vsub.s32 6, %v4321
    %v4323 = vrot.slane %v4215, %v4322
    %v4324 = vmul.f32 %v104, %v4323
    %v4325 = vmul.f32 %v105, %v4323
    %v4326 = vadd.f32 %v4294, %v4324
    %v4327 = vadd.f32 %v4295, %v4325
    %v4328 = vlaneseq
    %v4329 = vshrl.u32 %v4328, 7
    %v4330 = vsub.s32 7, %v4329
    %v4331 = vrot.slane %v4215, %v4330
    %v4332 = vmul.f32 %v106, %v4331
    %v4333 = vmul.f32 %v107, %v4331
    %v4334 = vadd.f32 %v4302, %v4332
    %v4335 = vadd.f32 %v4303, %v4333
    %v4336 = vadd.f32 %v4310, %v4318
    %v4337 = vadd.f32 %v4311, %v4319
    %v4338 = vadd.f32 %v4336, %v4326
    %v4339 = vadd.f32 %v4337, %v4327
    %v4340 = vadd.f32 %v4338, %v4334
    %v4341 = vadd.f32 %v4339, %v4335
    %v4342 = vmul.f32 %v4214, %v4340
    %v4343 = vmul.f32 %v4215, %v4341
    %v4344 = vadd.f32 %v4342, %v4343
    %v4345 = vrot.slane %v4344, 4
    %v4346 = vadd.f32 %v4344, %v4345
    %v4347 = vrot.slane %v4346, 2
    %v4348 = vadd.f32 %v4346, %v4347
    %v4349 = vrot.slane %v4348, 1
    %v4350 = vadd.f32 %v4348, %v4349
    %v4351 = vmul.f32 %v4073, %v4214
    %v4352 = vmul.f32 %v4074, %v4215
    %v4353 = vadd.f32 %v4351, %v4352
    %v4354 = vrot.slane %v4353, 4
    %v4355 = vadd.f32 %v4353, %v4354
    %v4356 = vrot.slane %v4355, 2
    %v4357 = vadd.f32 %v4355, %v4356
    %v4358 = vrot.slane %v4357, 1
    %v4359 = vadd.f32 %v4357, %v4358
    %vm4360 = vcmp.gt.f32.partialorder %v4350, 1e-30
    %v4361 = vsub.f32 0.0, %v4359
    %v4362 = vsel %vm4360, %v4350, 1.0
    %v4363 = vrcp.pop %v4362
    %v4364 = vmul.f32 %v4361, %v4363
    %v4365 = vsel %vm4360, %v4364, 0.0
    %v4366 = vmul.f32 %v4365, %v4214
    %v4367 = vmul.f32 %v4365, %v4215
    %v4368 = vadd.f32 %v4071, %v4366
    %v4369 = vadd.f32 %v4072, %v4367
    %v4370 = vmul.f32 %v4365, %v4340
    %v4371 = vmul.f32 %v4365, %v4341
    %v4372 = vadd.f32 %v4073, %v4370
    %v4373 = vadd.f32 %v4074, %v4371
    %v4374 = vsub.f32 %v4372, %v4073
    %v4375 = vsub.f32 %v4373, %v4074
    %v4376 = vmul.f32 %v4366, %v4374
    %v4377 = vmul.f32 %v4367, %v4375
    %v4378 = vadd.f32 %v4376, %v4377
    %v4379 = vrot.slane %v4378, 4
    %v4380 = vadd.f32 %v4378, %v4379
    %v4381 = vrot.slane %v4380, 2
    %v4382 = vadd.f32 %v4380, %v4381
    %v4383 = vrot.slane %v4382, 1
    %v4384 = vadd.f32 %v4382, %v4383
    %v4385 = vlaneseq
    %v4386 = vshrl.u32 %v4385, 7
    %v4387 = vsub.s32 0, %v4386
    %v4388 = vrot.slane %v4374, %v4387
    %v4389 = vmul.f32 %v4036, %v4388
    %v4390 = vmul.f32 %v4037, %v4388
    %v4391 = vlaneseq
    %v4392 = vshrl.u32 %v4391, 7
    %v4393 = vsub.s32 1, %v4392
    %v4394 = vrot.slane %v4374, %v4393
    %v4395 = vmul.f32 %v4038, %v4394
    %v4396 = vmul.f32 %v4039, %v4394
    %v4397 = vlaneseq
    %v4398 = vshrl.u32 %v4397, 7
    %v4399 = vsub.s32 2, %v4398
    %v4400 = vrot.slane %v4374, %v4399
    %v4401 = vmul.f32 %v4040, %v4400
    %v4402 = vmul.f32 %v4041, %v4400
    %v4403 = vlaneseq
    %v4404 = vshrl.u32 %v4403, 7
    %v4405 = vsub.s32 3, %v4404
    %v4406 = vrot.slane %v4374, %v4405
    %v4407 = vmul.f32 %v4042, %v4406
    %v4408 = vmul.f32 %v4043, %v4406
    %v4409 = vlaneseq
    %v4410 = vshrl.u32 %v4409, 7
    %v4411 = vsub.s32 4, %v4410
    %v4412 = vrot.slane %v4374, %v4411
    %v4413 = vmul.f32 %v4044, %v4412
    %v4414 = vmul.f32 %v4045, %v4412
    %v4415 = vadd.f32 %v4389, %v4413
    %v4416 = vadd.f32 %v4390, %v4414
    %v4417 = vlaneseq
    %v4418 = vshrl.u32 %v4417, 7
    %v4419 = vsub.s32 5, %v4418
    %v4420 = vrot.slane %v4374, %v4419
    %v4421 = vmul.f32 %v4046, %v4420
    %v4422 = vmul.f32 %v4047, %v4420
    %v4423 = vadd.f32 %v4395, %v4421
    %v4424 = vadd.f32 %v4396, %v4422
    %v4425 = vlaneseq
    %v4426 = vshrl.u32 %v4425, 7
    %v4427 = vsub.s32 6, %v4426
    %v4428 = vrot.slane %v4374, %v4427
    %v4429 = vmul.f32 %v4048, %v4428
    %v4430 = vmul.f32 %v4049, %v4428
    %v4431 = vadd.f32 %v4401, %v4429
    %v4432 = vadd.f32 %v4402, %v4430
    %v4433 = vlaneseq
    %v4434 = vshrl.u32 %v4433, 7
    %v4435 = vsub.s32 7, %v4434
    %v4436 = vrot.slane %v4374, %v4435
    %v4437 = vmul.f32 %v4050, %v4436
    %v4438 = vmul.f32 %v4051, %v4436
    %v4439 = vadd.f32 %v4407, %v4437
    %v4440 = vadd.f32 %v4408, %v4438
    %v4441 = vlaneseq
    %v4442 = vshrl.u32 %v4441, 7
    %v4443 = vsub.s32 0, %v4442
    %v4444 = vrot.slane %v4375, %v4443
    %v4445 = vmul.f32 %v4052, %v4444
    %v4446 = vmul.f32 %v4053, %v4444
    %v4447 = vadd.f32 %v4415, %v4445
    %v4448 = vadd.f32 %v4416, %v4446
    %v4449 = vlaneseq
    %v4450 = vshrl.u32 %v4449, 7
    %v4451 = vsub.s32 1, %v4450
    %v4452 = vrot.slane %v4375, %v4451
    %v4453 = vmul.f32 %v4054, %v4452
    %v4454 = vmul.f32 %v4055, %v4452
    %v4455 = vadd.f32 %v4423, %v4453
    %v4456 = vadd.f32 %v4424, %v4454
    %v4457 = vlaneseq
    %v4458 = vshrl.u32 %v4457, 7
    %v4459 = vsub.s32 2, %v4458
    %v4460 = vrot.slane %v4375, %v4459
    %v4461 = vmul.f32 %v4056, %v4460
    %v4462 = vmul.f32 %v4057, %v4460
    %v4463 = vadd.f32 %v4431, %v4461
    %v4464 = vadd.f32 %v4432, %v4462
    %v4465 = vlaneseq
    %v4466 = vshrl.u32 %v4465, 7
    %v4467 = vsub.s32 3, %v4466
    %v4468 = vrot.slane %v4375, %v4467
    %v4469 = vmul.f32 %v4058, %v4468
    %v4470 = vmul.f32 %v4059, %v4468
    %v4471 = vadd.f32 %v4439, %v4469
    %v4472 = vadd.f32 %v4440, %v4470
    %v4473 = vlaneseq
    %v4474 = vshrl.u32 %v4473, 7
    %v4475 = vsub.s32 4, %v4474
    %v4476 = vrot.slane %v4375, %v4475
    %v4477 = vmul.f32 %v4060, %v4476
    %v4478 = vmul.f32 %v4061, %v4476
    %v4479 = vadd.f32 %v4447, %v4477
    %v4480 = vadd.f32 %v4448, %v4478
    %v4481 = vlaneseq
    %v4482 = vshrl.u32 %v4481, 7
    %v4483 = vsub.s32 5, %v4482
    %v4484 = vrot.slane %v4375, %v4483
    %v4485 = vmul.f32 %v4062, %v4484
    %v4486 = vmul.f32 %v4063, %v4484
    %v4487 = vadd.f32 %v4455, %v4485
    %v4488 = vadd.f32 %v4456, %v4486
    %v4489 = vlaneseq
    %v4490 = vshrl.u32 %v4489, 7
    %v4491 = vsub.s32 6, %v4490
    %v4492 = vrot.slane %v4375, %v4491
    %v4493 = vmul.f32 %v4064, %v4492
    %v4494 = vmul.f32 %v4065, %v4492
    %v4495 = vadd.f32 %v4463, %v4493
    %v4496 = vadd.f32 %v4464, %v4494
    %v4497 = vlaneseq
    %v4498 = vshrl.u32 %v4497, 7
    %v4499 = vsub.s32 7, %v4498
    %v4500 = vrot.slane %v4375, %v4499
    %v4501 = vmul.f32 %v4066, %v4500
    %v4502 = vmul.f32 %v4067, %v4500
    %v4503 = vadd.f32 %v4471, %v4501
    %v4504 = vadd.f32 %v4472, %v4502
    %v4505 = vadd.f32 %v4479, %v4487
    %v4506 = vadd.f32 %v4480, %v4488
    %v4507 = vadd.f32 %v4505, %v4495
    %v4508 = vadd.f32 %v4506, %v4496
    %v4509 = vadd.f32 %v4507, %v4503
    %v4510 = vadd.f32 %v4508, %v4504
    %v4511 = vmul.f32 %v4374, %v4509
    %v4512 = vmul.f32 %v4375, %v4510
    %v4513 = vadd.f32 %v4511, %v4512
    %v4514 = vrot.slane %v4513, 4
    %v4515 = vadd.f32 %v4513, %v4514
    %v4516 = vrot.slane %v4515, 2
    %v4517 = vadd.f32 %v4515, %v4516
    %v4518 = vrot.slane %v4517, 1
    %v4519 = vadd.f32 %v4517, %v4518
    %vm4520 = vcmp.ne.f32.partialorder %v4384, 0.0
    %v4521 = vsel %vm4520, %v4384, 1.0
    %v4522 = vrcp.pop %v4521
    %v4523 = vmul.f32 1.0, %v4522
    %v4524 = vsel %vm4520, %v4523, 0.0
    %v4525 = vadd.f32 %v4384, %v4519
    %v4526 = vmul.f32 %v4525, %v4524
    %v4527 = vmul.f32 %v4526, %v4524
    %v4528 = vmul.f32 %v4527, %v4366
    %v4529 = vmul.f32 %v4527, %v4367
    %v4530 = vmul.f32 %v4524, %v4509
    %v4531 = vmul.f32 %v4524, %v4510
    %v4532 = vsub.f32 %v4528, %v4530
    %v4533 = vsub.f32 %v4529, %v4531
    %v4536 = vcombine.high %v4366, %v4366
    %v4538 = vunpack.c.l.s4 1966171168
    %v4539 = vunpack.c.0.s8 %v4538
    %v4540 = vlaneseq
    %v4541 = vshrl.u32 %v4540, 7
    %v4542 = vsub.s32 %v4539, %v4541
    %v4543 = vrot.slane %v4366, %v4542
    %v4545 = vunpack.c.l.s4 1966171168
    %v4546 = vunpack.c.0.s8 %v4545
    %v4547 = vlaneseq
    %v4548 = vshrl.u32 %v4547, 7
    %v4549 = vsub.s32 %v4546, %v4548
    %v4550 = vrot.slane %v4536, %v4549
    %v4551 = vcombine.high %v4543, %v4543
    %v4552 = vcombine.high %v4550, %v4550
    %v4554 = vunpack.c.l.s4 1966171168
    %v4555 = vunpack.c.0.s8 %v4554
    %v4556 = vlaneseq
    %v4557 = vshrl.u32 %v4556, 7
    %v4558 = vsub.s32 %v4555, %v4557
    %v4559 = vrot.slane %v4543, %v4558
    %v4561 = vunpack.c.l.s4 1966171168
    %v4562 = vunpack.c.0.s8 %v4561
    %v4563 = vlaneseq
    %v4564 = vshrl.u32 %v4563, 7
    %v4565 = vsub.s32 %v4562, %v4564
    %v4566 = vrot.slane %v4550, %v4565
    %v4568 = vunpack.c.l.s4 1966171168
    %v4569 = vunpack.c.0.s8 %v4568
    %v4570 = vlaneseq
    %v4571 = vshrl.u32 %v4570, 7
    %v4572 = vsub.s32 %v4569, %v4571
    %v4573 = vrot.slane %v4551, %v4572
    %v4575 = vunpack.c.l.s4 1966171168
    %v4576 = vunpack.c.0.s8 %v4575
    %v4577 = vlaneseq
    %v4578 = vshrl.u32 %v4577, 7
    %v4579 = vsub.s32 %v4576, %v4578
    %v4580 = vrot.slane %v4552, %v4579
    %v4581 = vcombine.high %v4559, %v4559
    %v4582 = vcombine.high %v4566, %v4566
    %v4583 = vcombine.high %v4573, %v4573
    %v4584 = vcombine.high %v4580, %v4580
    %v4585 = vcombine.high %v4367, %v4367
    %v4587 = vunpack.c.l.s4 1966171168
    %v4588 = vunpack.c.0.s8 %v4587
    %v4589 = vlaneseq
    %v4590 = vshrl.u32 %v4589, 7
    %v4591 = vsub.s32 %v4588, %v4590
    %v4592 = vrot.slane %v4367, %v4591
    %v4594 = vunpack.c.l.s4 1966171168
    %v4595 = vunpack.c.0.s8 %v4594
    %v4596 = vlaneseq
    %v4597 = vshrl.u32 %v4596, 7
    %v4598 = vsub.s32 %v4595, %v4597
    %v4599 = vrot.slane %v4585, %v4598
    %v4600 = vcombine.high %v4592, %v4592
    %v4601 = vcombine.high %v4599, %v4599
    %v4603 = vunpack.c.l.s4 1966171168
    %v4604 = vunpack.c.0.s8 %v4603
    %v4605 = vlaneseq
    %v4606 = vshrl.u32 %v4605, 7
    %v4607 = vsub.s32 %v4604, %v4606
    %v4608 = vrot.slane %v4592, %v4607
    %v4610 = vunpack.c.l.s4 1966171168
    %v4611 = vunpack.c.0.s8 %v4610
    %v4612 = vlaneseq
    %v4613 = vshrl.u32 %v4612, 7
    %v4614 = vsub.s32 %v4611, %v4613
    %v4615 = vrot.slane %v4599, %v4614
    %v4617 = vunpack.c.l.s4 1966171168
    %v4618 = vunpack.c.0.s8 %v4617
    %v4619 = vlaneseq
    %v4620 = vshrl.u32 %v4619, 7
    %v4621 = vsub.s32 %v4618, %v4620
    %v4622 = vrot.slane %v4600, %v4621
    %v4624 = vunpack.c.l.s4 1966171168
    %v4625 = vunpack.c.0.s8 %v4624
    %v4626 = vlaneseq
    %v4627 = vshrl.u32 %v4626, 7
    %v4628 = vsub.s32 %v4625, %v4627
    %v4629 = vrot.slane %v4601, %v4628
    %v4630 = vcombine.high %v4608, %v4608
    %v4631 = vcombine.high %v4615, %v4615
    %v4632 = vcombine.high %v4622, %v4622
    %v4633 = vcombine.high %v4629, %v4629
    %v4634 = vlaneseq
    %v4635 = vshrl.u32 %v4634, 7
    %v4636 = vsub.s32 0, %v4635
    %v4637 = vrot.slane %v4559, %v4636
    %v4638 = vlaneseq
    %v4639 = vshrl.u32 %v4638, 7
    %v4640 = vsub.s32 0, %v4639
    %v4641 = vrot.slane %v4573, %v4640
    %v4642 = vlaneseq
    %v4643 = vshrl.u32 %v4642, 7
    %v4644 = vsub.s32 0, %v4643
    %v4645 = vrot.slane %v4581, %v4644
    %v4646 = vlaneseq
    %v4647 = vshrl.u32 %v4646, 7
    %v4648 = vsub.s32 0, %v4647
    %v4649 = vrot.slane %v4583, %v4648
    %v4650 = vlaneseq
    %v4651 = vshrl.u32 %v4650, 7
    %v4652 = vsub.s32 0, %v4651
    %v4653 = vrot.slane %v4566, %v4652
    %v4654 = vlaneseq
    %v4655 = vshrl.u32 %v4654, 7
    %v4656 = vsub.s32 0, %v4655
    %v4657 = vrot.slane %v4580, %v4656
    %v4658 = vlaneseq
    %v4659 = vshrl.u32 %v4658, 7
    %v4660 = vsub.s32 0, %v4659
    %v4661 = vrot.slane %v4582, %v4660
    %v4662 = vlaneseq
    %v4663 = vshrl.u32 %v4662, 7
    %v4664 = vsub.s32 0, %v4663
    %v4665 = vrot.slane %v4584, %v4664
    %v4666 = vlaneseq
    %v4667 = vshrl.u32 %v4666, 7
    %v4668 = vsub.s32 0, %v4667
    %v4669 = vrot.slane %v4608, %v4668
    %v4670 = vlaneseq
    %v4671 = vshrl.u32 %v4670, 7
    %v4672 = vsub.s32 0, %v4671
    %v4673 = vrot.slane %v4622, %v4672
    %v4674 = vlaneseq
    %v4675 = vshrl.u32 %v4674, 7
    %v4676 = vsub.s32 0, %v4675
    %v4677 = vrot.slane %v4630, %v4676
    %v4678 = vlaneseq
    %v4679 = vshrl.u32 %v4678, 7
    %v4680 = vsub.s32 0, %v4679
    %v4681 = vrot.slane %v4632, %v4680
    %v4682 = vlaneseq
    %v4683 = vshrl.u32 %v4682, 7
    %v4684 = vsub.s32 0, %v4683
    %v4685 = vrot.slane %v4615, %v4684
    %v4686 = vlaneseq
    %v4687 = vshrl.u32 %v4686, 7
    %v4688 = vsub.s32 0, %v4687
    %v4689 = vrot.slane %v4629, %v4688
    %v4690 = vlaneseq
    %v4691 = vshrl.u32 %v4690, 7
    %v4692 = vsub.s32 0, %v4691
    %v4693 = vrot.slane %v4631, %v4692
    %v4694 = vlaneseq
    %v4695 = vshrl.u32 %v4694, 7
    %v4696 = vsub.s32 0, %v4695
    %v4697 = vrot.slane %v4633, %v4696
    %v4714 = vmul.f32 %v4637, %v4532
    %v4715 = vmul.f32 %v4637, %v4533
    %v4716 = vmul.f32 %v4641, %v4532
    %v4717 = vmul.f32 %v4641, %v4533
    %v4718 = vmul.f32 %v4645, %v4532
    %v4719 = vmul.f32 %v4645, %v4533
    %v4720 = vmul.f32 %v4649, %v4532
    %v4721 = vmul.f32 %v4649, %v4533
    %v4722 = vmul.f32 %v4653, %v4532
    %v4723 = vmul.f32 %v4653, %v4533
    %v4724 = vmul.f32 %v4657, %v4532
    %v4725 = vmul.f32 %v4657, %v4533
    %v4726 = vmul.f32 %v4661, %v4532
    %v4727 = vmul.f32 %v4661, %v4533
    %v4728 = vmul.f32 %v4665, %v4532
    %v4729 = vmul.f32 %v4665, %v4533
    %v4730 = vmul.f32 %v4669, %v4532
    %v4731 = vmul.f32 %v4669, %v4533
    %v4732 = vmul.f32 %v4673, %v4532
    %v4733 = vmul.f32 %v4673, %v4533
    %v4734 = vmul.f32 %v4677, %v4532
    %v4735 = vmul.f32 %v4677, %v4533
    %v4736 = vmul.f32 %v4681, %v4532
    %v4737 = vmul.f32 %v4681, %v4533
    %v4738 = vmul.f32 %v4685, %v4532
    %v4739 = vmul.f32 %v4685, %v4533
    %v4740 = vmul.f32 %v4689, %v4532
    %v4741 = vmul.f32 %v4689, %v4533
    %v4742 = vmul.f32 %v4693, %v4532
    %v4743 = vmul.f32 %v4693, %v4533
    %v4744 = vmul.f32 %v4697, %v4532
    %v4745 = vmul.f32 %v4697, %v4533
    %v4748 = vcombine.high %v4530, %v4530
    %v4750 = vunpack.c.l.s4 1966171168
    %v4751 = vunpack.c.0.s8 %v4750
    %v4752 = vlaneseq
    %v4753 = vshrl.u32 %v4752, 7
    %v4754 = vsub.s32 %v4751, %v4753
    %v4755 = vrot.slane %v4530, %v4754
    %v4757 = vunpack.c.l.s4 1966171168
    %v4758 = vunpack.c.0.s8 %v4757
    %v4759 = vlaneseq
    %v4760 = vshrl.u32 %v4759, 7
    %v4761 = vsub.s32 %v4758, %v4760
    %v4762 = vrot.slane %v4748, %v4761
    %v4763 = vcombine.high %v4755, %v4755
    %v4764 = vcombine.high %v4762, %v4762
    %v4766 = vunpack.c.l.s4 1966171168
    %v4767 = vunpack.c.0.s8 %v4766
    %v4768 = vlaneseq
    %v4769 = vshrl.u32 %v4768, 7
    %v4770 = vsub.s32 %v4767, %v4769
    %v4771 = vrot.slane %v4755, %v4770
    %v4773 = vunpack.c.l.s4 1966171168
    %v4774 = vunpack.c.0.s8 %v4773
    %v4775 = vlaneseq
    %v4776 = vshrl.u32 %v4775, 7
    %v4777 = vsub.s32 %v4774, %v4776
    %v4778 = vrot.slane %v4762, %v4777
    %v4780 = vunpack.c.l.s4 1966171168
    %v4781 = vunpack.c.0.s8 %v4780
    %v4782 = vlaneseq
    %v4783 = vshrl.u32 %v4782, 7
    %v4784 = vsub.s32 %v4781, %v4783
    %v4785 = vrot.slane %v4763, %v4784
    %v4787 = vunpack.c.l.s4 1966171168
    %v4788 = vunpack.c.0.s8 %v4787
    %v4789 = vlaneseq
    %v4790 = vshrl.u32 %v4789, 7
    %v4791 = vsub.s32 %v4788, %v4790
    %v4792 = vrot.slane %v4764, %v4791
    %v4793 = vcombine.high %v4771, %v4771
    %v4794 = vcombine.high %v4778, %v4778
    %v4795 = vcombine.high %v4785, %v4785
    %v4796 = vcombine.high %v4792, %v4792
    %v4797 = vcombine.high %v4531, %v4531
    %v4799 = vunpack.c.l.s4 1966171168
    %v4800 = vunpack.c.0.s8 %v4799
    %v4801 = vlaneseq
    %v4802 = vshrl.u32 %v4801, 7
    %v4803 = vsub.s32 %v4800, %v4802
    %v4804 = vrot.slane %v4531, %v4803
    %v4806 = vunpack.c.l.s4 1966171168
    %v4807 = vunpack.c.0.s8 %v4806
    %v4808 = vlaneseq
    %v4809 = vshrl.u32 %v4808, 7
    %v4810 = vsub.s32 %v4807, %v4809
    %v4811 = vrot.slane %v4797, %v4810
    %v4812 = vcombine.high %v4804, %v4804
    %v4813 = vcombine.high %v4811, %v4811
    %v4815 = vunpack.c.l.s4 1966171168
    %v4816 = vunpack.c.0.s8 %v4815
    %v4817 = vlaneseq
    %v4818 = vshrl.u32 %v4817, 7
    %v4819 = vsub.s32 %v4816, %v4818
    %v4820 = vrot.slane %v4804, %v4819
    %v4822 = vunpack.c.l.s4 1966171168
    %v4823 = vunpack.c.0.s8 %v4822
    %v4824 = vlaneseq
    %v4825 = vshrl.u32 %v4824, 7
    %v4826 = vsub.s32 %v4823, %v4825
    %v4827 = vrot.slane %v4811, %v4826
    %v4829 = vunpack.c.l.s4 1966171168
    %v4830 = vunpack.c.0.s8 %v4829
    %v4831 = vlaneseq
    %v4832 = vshrl.u32 %v4831, 7
    %v4833 = vsub.s32 %v4830, %v4832
    %v4834 = vrot.slane %v4812, %v4833
    %v4836 = vunpack.c.l.s4 1966171168
    %v4837 = vunpack.c.0.s8 %v4836
    %v4838 = vlaneseq
    %v4839 = vshrl.u32 %v4838, 7
    %v4840 = vsub.s32 %v4837, %v4839
    %v4841 = vrot.slane %v4813, %v4840
    %v4842 = vcombine.high %v4820, %v4820
    %v4843 = vcombine.high %v4827, %v4827
    %v4844 = vcombine.high %v4834, %v4834
    %v4845 = vcombine.high %v4841, %v4841
    %v4846 = vlaneseq
    %v4847 = vshrl.u32 %v4846, 7
    %v4848 = vsub.s32 0, %v4847
    %v4849 = vrot.slane %v4771, %v4848
    %v4850 = vlaneseq
    %v4851 = vshrl.u32 %v4850, 7
    %v4852 = vsub.s32 0, %v4851
    %v4853 = vrot.slane %v4785, %v4852
    %v4854 = vlaneseq
    %v4855 = vshrl.u32 %v4854, 7
    %v4856 = vsub.s32 0, %v4855
    %v4857 = vrot.slane %v4793, %v4856
    %v4858 = vlaneseq
    %v4859 = vshrl.u32 %v4858, 7
    %v4860 = vsub.s32 0, %v4859
    %v4861 = vrot.slane %v4795, %v4860
    %v4862 = vlaneseq
    %v4863 = vshrl.u32 %v4862, 7
    %v4864 = vsub.s32 0, %v4863
    %v4865 = vrot.slane %v4778, %v4864
    %v4866 = vlaneseq
    %v4867 = vshrl.u32 %v4866, 7
    %v4868 = vsub.s32 0, %v4867
    %v4869 = vrot.slane %v4792, %v4868
    %v4870 = vlaneseq
    %v4871 = vshrl.u32 %v4870, 7
    %v4872 = vsub.s32 0, %v4871
    %v4873 = vrot.slane %v4794, %v4872
    %v4874 = vlaneseq
    %v4875 = vshrl.u32 %v4874, 7
    %v4876 = vsub.s32 0, %v4875
    %v4877 = vrot.slane %v4796, %v4876
    %v4878 = vlaneseq
    %v4879 = vshrl.u32 %v4878, 7
    %v4880 = vsub.s32 0, %v4879
    %v4881 = vrot.slane %v4820, %v4880
    %v4882 = vlaneseq
    %v4883 = vshrl.u32 %v4882, 7
    %v4884 = vsub.s32 0, %v4883
    %v4885 = vrot.slane %v4834, %v4884
    %v4886 = vlaneseq
    %v4887 = vshrl.u32 %v4886, 7
    %v4888 = vsub.s32 0, %v4887
    %v4889 = vrot.slane %v4842, %v4888
    %v4890 = vlaneseq
    %v4891 = vshrl.u32 %v4890, 7
    %v4892 = vsub.s32 0, %v4891
    %v4893 = vrot.slane %v4844, %v4892
    %v4894 = vlaneseq
    %v4895 = vshrl.u32 %v4894, 7
    %v4896 = vsub.s32 0, %v4895
    %v4897 = vrot.slane %v4827, %v4896
    %v4898 = vlaneseq
    %v4899 = vshrl.u32 %v4898, 7
    %v4900 = vsub.s32 0, %v4899
    %v4901 = vrot.slane %v4841, %v4900
    %v4902 = vlaneseq
    %v4903 = vshrl.u32 %v4902, 7
    %v4904 = vsub.s32 0, %v4903
    %v4905 = vrot.slane %v4843, %v4904
    %v4906 = vlaneseq
    %v4907 = vshrl.u32 %v4906, 7
    %v4908 = vsub.s32 0, %v4907
    %v4909 = vrot.slane %v4845, %v4908
    %v4926 = vmul.f32 %v4849, %v4366
    %v4927 = vmul.f32 %v4849, %v4367
    %v4928 = vmul.f32 %v4853, %v4366
    %v4929 = vmul.f32 %v4853, %v4367
    %v4930 = vmul.f32 %v4857, %v4366
    %v4931 = vmul.f32 %v4857, %v4367
    %v4932 = vmul.f32 %v4861, %v4366
    %v4933 = vmul.f32 %v4861, %v4367
    %v4934 = vmul.f32 %v4865, %v4366
    %v4935 = vmul.f32 %v4865, %v4367
    %v4936 = vmul.f32 %v4869, %v4366
    %v4937 = vmul.f32 %v4869, %v4367
    %v4938 = vmul.f32 %v4873, %v4366
    %v4939 = vmul.f32 %v4873, %v4367
    %v4940 = vmul.f32 %v4877, %v4366
    %v4941 = vmul.f32 %v4877, %v4367
    %v4942 = vmul.f32 %v4881, %v4366
    %v4943 = vmul.f32 %v4881, %v4367
    %v4944 = vmul.f32 %v4885, %v4366
    %v4945 = vmul.f32 %v4885, %v4367
    %v4946 = vmul.f32 %v4889, %v4366
    %v4947 = vmul.f32 %v4889, %v4367
    %v4948 = vmul.f32 %v4893, %v4366
    %v4949 = vmul.f32 %v4893, %v4367
    %v4950 = vmul.f32 %v4897, %v4366
    %v4951 = vmul.f32 %v4897, %v4367
    %v4952 = vmul.f32 %v4901, %v4366
    %v4953 = vmul.f32 %v4901, %v4367
    %v4954 = vmul.f32 %v4905, %v4366
    %v4955 = vmul.f32 %v4905, %v4367
    %v4956 = vmul.f32 %v4909, %v4366
    %v4957 = vmul.f32 %v4909, %v4367
    %v4958 = vsub.f32 %v4714, %v4926
    %v4959 = vsub.f32 %v4715, %v4927
    %v4960 = vsub.f32 %v4716, %v4928
    %v4961 = vsub.f32 %v4717, %v4929
    %v4962 = vsub.f32 %v4718, %v4930
    %v4963 = vsub.f32 %v4719, %v4931
    %v4964 = vsub.f32 %v4720, %v4932
    %v4965 = vsub.f32 %v4721, %v4933
    %v4966 = vsub.f32 %v4722, %v4934
    %v4967 = vsub.f32 %v4723, %v4935
    %v4968 = vsub.f32 %v4724, %v4936
    %v4969 = vsub.f32 %v4725, %v4937
    %v4970 = vsub.f32 %v4726, %v4938
    %v4971 = vsub.f32 %v4727, %v4939
    %v4972 = vsub.f32 %v4728, %v4940
    %v4973 = vsub.f32 %v4729, %v4941
    %v4974 = vsub.f32 %v4730, %v4942
    %v4975 = vsub.f32 %v4731, %v4943
    %v4976 = vsub.f32 %v4732, %v4944
    %v4977 = vsub.f32 %v4733, %v4945
    %v4978 = vsub.f32 %v4734, %v4946
    %v4979 = vsub.f32 %v4735, %v4947
    %v4980 = vsub.f32 %v4736, %v4948
    %v4981 = vsub.f32 %v4737, %v4949
    %v4982 = vsub.f32 %v4738, %v4950
    %v4983 = vsub.f32 %v4739, %v4951
    %v4984 = vsub.f32 %v4740, %v4952
    %v4985 = vsub.f32 %v4741, %v4953
    %v4986 = vsub.f32 %v4742, %v4954
    %v4987 = vsub.f32 %v4743, %v4955
    %v4988 = vsub.f32 %v4744, %v4956
    %v4989 = vsub.f32 %v4745, %v4957
    %v4990 = vadd.f32 %v4036, %v4958
    %v4991 = vadd.f32 %v4037, %v4959
    %v4992 = vadd.f32 %v4038, %v4960
    %v4993 = vadd.f32 %v4039, %v4961
    %v4994 = vadd.f32 %v4040, %v4962
    %v4995 = vadd.f32 %v4041, %v4963
    %v4996 = vadd.f32 %v4042, %v4964
    %v4997 = vadd.f32 %v4043, %v4965
    %v4998 = vadd.f32 %v4044, %v4966
    %v4999 = vadd.f32 %v4045, %v4967
    %v5000 = vadd.f32 %v4046, %v4968
    %v5001 = vadd.f32 %v4047, %v4969
    %v5002 = vadd.f32 %v4048, %v4970
    %v5003 = vadd.f32 %v4049, %v4971
    %v5004 = vadd.f32 %v4050, %v4972
    %v5005 = vadd.f32 %v4051, %v4973
    %v5006 = vadd.f32 %v4052, %v4974
    %v5007 = vadd.f32 %v4053, %v4975
    %v5008 = vadd.f32 %v4054, %v4976
    %v5009 = vadd.f32 %v4055, %v4977
    %v5010 = vadd.f32 %v4056, %v4978
    %v5011 = vadd.f32 %v4057, %v4979
    %v5012 = vadd.f32 %v4058, %v4980
    %v5013 = vadd.f32 %v4059, %v4981
    %v5014 = vadd.f32 %v4060, %v4982
    %v5015 = vadd.f32 %v4061, %v4983
    %v5016 = vadd.f32 %v4062, %v4984
    %v5017 = vadd.f32 %v4063, %v4985
    %v5018 = vadd.f32 %v4064, %v4986
    %v5019 = vadd.f32 %v4065, %v4987
    %v5020 = vadd.f32 %v4066, %v4988
    %v5021 = vadd.f32 %v4067, %v4989
    %vm5022 = vcmp.gt.f32.partialorder %v4087, 0.5
    %v5023 = vsel %vm5022, 1, 0
    %vm5024 = vcmp.eq.s32.totalorder %v5023, 1
    %v5025 = vsel %vm5024, %v4368, %v4071
    %v5026 = vsel %vm5024, %v4369, %v4072
    %v5027 = vsel %vm5024, %v4372, %v4073
    %v5028 = vsel %vm5024, %v4373, %v4074
    %v5029 = vmul.f32 %v5027, %v5027
    %v5030 = vmul.f32 %v5028, %v5028
    %v5031 = vadd.f32 %v5029, %v5030
    %v5032 = vrot.slane %v5031, 4
    %v5033 = vadd.f32 %v5031, %v5032
    %v5034 = vrot.slane %v5033, 2
    %v5035 = vadd.f32 %v5033, %v5034
    %v5036 = vrot.slane %v5035, 1
    %v5037 = vadd.f32 %v5035, %v5036
    %vm5038 = vcmp.gt.f32.partialorder %v5037, 1e-06
    %vm5039 = vmand %vm5022, %vm5038
    %v5040 = vsel %vm5039, 1, 0
    %v5041 = vcvt.s32.f32 %v5040
    %v5042 = vlaneseq
    %v5043 = vshrl.u32 %v5042, 7
    %v5044 = vsub.s32 0, %v5043
    %v5045 = vrot.slane %v5027, %v5044
    %v5046 = vmul.f32 %v4990, %v5045
    %v5047 = vmul.f32 %v4991, %v5045
    %v5048 = vlaneseq
    %v5049 = vshrl.u32 %v5048, 7
    %v5050 = vsub.s32 1, %v5049
    %v5051 = vrot.slane %v5027, %v5050
    %v5052 = vmul.f32 %v4992, %v5051
    %v5053 = vmul.f32 %v4993, %v5051
    %v5054 = vlaneseq
    %v5055 = vshrl.u32 %v5054, 7
    %v5056 = vsub.s32 2, %v5055
    %v5057 = vrot.slane %v5027, %v5056
    %v5058 = vmul.f32 %v4994, %v5057
    %v5059 = vmul.f32 %v4995, %v5057
    %v5060 = vlaneseq
    %v5061 = vshrl.u32 %v5060, 7
    %v5062 = vsub.s32 3, %v5061
    %v5063 = vrot.slane %v5027, %v5062
    %v5064 = vmul.f32 %v4996, %v5063
    %v5065 = vmul.f32 %v4997, %v5063
    %v5066 = vlaneseq
    %v5067 = vshrl.u32 %v5066, 7
    %v5068 = vsub.s32 4, %v5067
    %v5069 = vrot.slane %v5027, %v5068
    %v5070 = vmul.f32 %v4998, %v5069
    %v5071 = vmul.f32 %v4999, %v5069
    %v5072 = vadd.f32 %v5046, %v5070
    %v5073 = vadd.f32 %v5047, %v5071
    %v5074 = vlaneseq
    %v5075 = vshrl.u32 %v5074, 7
    %v5076 = vsub.s32 5, %v5075
    %v5077 = vrot.slane %v5027, %v5076
    %v5078 = vmul.f32 %v5000, %v5077
    %v5079 = vmul.f32 %v5001, %v5077
    %v5080 = vadd.f32 %v5052, %v5078
    %v5081 = vadd.f32 %v5053, %v5079
    %v5082 = vlaneseq
    %v5083 = vshrl.u32 %v5082, 7
    %v5084 = vsub.s32 6, %v5083
    %v5085 = vrot.slane %v5027, %v5084
    %v5086 = vmul.f32 %v5002, %v5085
    %v5087 = vmul.f32 %v5003, %v5085
    %v5088 = vadd.f32 %v5058, %v5086
    %v5089 = vadd.f32 %v5059, %v5087
    %v5090 = vlaneseq
    %v5091 = vshrl.u32 %v5090, 7
    %v5092 = vsub.s32 7, %v5091
    %v5093 = vrot.slane %v5027, %v5092
    %v5094 = vmul.f32 %v5004, %v5093
    %v5095 = vmul.f32 %v5005, %v5093
    %v5096 = vadd.f32 %v5064, %v5094
    %v5097 = vadd.f32 %v5065, %v5095
    %v5098 = vlaneseq
    %v5099 = vshrl.u32 %v5098, 7
    %v5100 = vsub.s32 0, %v5099
    %v5101 = vrot.slane %v5028, %v5100
    %v5102 = vmul.f32 %v5006, %v5101
    %v5103 = vmul.f32 %v5007, %v5101
    %v5104 = vadd.f32 %v5072, %v5102
    %v5105 = vadd.f32 %v5073, %v5103
    %v5106 = vlaneseq
    %v5107 = vshrl.u32 %v5106, 7
    %v5108 = vsub.s32 1, %v5107
    %v5109 = vrot.slane %v5028, %v5108
    %v5110 = vmul.f32 %v5008, %v5109
    %v5111 = vmul.f32 %v5009, %v5109
    %v5112 = vadd.f32 %v5080, %v5110
    %v5113 = vadd.f32 %v5081, %v5111
    %v5114 = vlaneseq
    %v5115 = vshrl.u32 %v5114, 7
    %v5116 = vsub.s32 2, %v5115
    %v5117 = vrot.slane %v5028, %v5116
    %v5118 = vmul.f32 %v5010, %v5117
    %v5119 = vmul.f32 %v5011, %v5117
    %v5120 = vadd.f32 %v5088, %v5118
    %v5121 = vadd.f32 %v5089, %v5119
    %v5122 = vlaneseq
    %v5123 = vshrl.u32 %v5122, 7
    %v5124 = vsub.s32 3, %v5123
    %v5125 = vrot.slane %v5028, %v5124
    %v5126 = vmul.f32 %v5012, %v5125
    %v5127 = vmul.f32 %v5013, %v5125
    %v5128 = vadd.f32 %v5096, %v5126
    %v5129 = vadd.f32 %v5097, %v5127
    %v5130 = vlaneseq
    %v5131 = vshrl.u32 %v5130, 7
    %v5132 = vsub.s32 4, %v5131
    %v5133 = vrot.slane %v5028, %v5132
    %v5134 = vmul.f32 %v5014, %v5133
    %v5135 = vmul.f32 %v5015, %v5133
    %v5136 = vadd.f32 %v5104, %v5134
    %v5137 = vadd.f32 %v5105, %v5135
    %v5138 = vlaneseq
    %v5139 = vshrl.u32 %v5138, 7
    %v5140 = vsub.s32 5, %v5139
    %v5141 = vrot.slane %v5028, %v5140
    %v5142 = vmul.f32 %v5016, %v5141
    %v5143 = vmul.f32 %v5017, %v5141
    %v5144 = vadd.f32 %v5112, %v5142
    %v5145 = vadd.f32 %v5113, %v5143
    %v5146 = vlaneseq
    %v5147 = vshrl.u32 %v5146, 7
    %v5148 = vsub.s32 6, %v5147
    %v5149 = vrot.slane %v5028, %v5148
    %v5150 = vmul.f32 %v5018, %v5149
    %v5151 = vmul.f32 %v5019, %v5149
    %v5152 = vadd.f32 %v5120, %v5150
    %v5153 = vadd.f32 %v5121, %v5151
    %v5154 = vlaneseq
    %v5155 = vshrl.u32 %v5154, 7
    %v5156 = vsub.s32 7, %v5155
    %v5157 = vrot.slane %v5028, %v5156
    %v5158 = vmul.f32 %v5020, %v5157
    %v5159 = vmul.f32 %v5021, %v5157
    %v5160 = vadd.f32 %v5128, %v5158
    %v5161 = vadd.f32 %v5129, %v5159
    %v5162 = vadd.f32 %v5136, %v5144
    %v5163 = vadd.f32 %v5137, %v5145
    %v5164 = vadd.f32 %v5162, %v5152
    %v5165 = vadd.f32 %v5163, %v5153
    %v5166 = vadd.f32 %v5164, %v5160
    %v5167 = vadd.f32 %v5165, %v5161
    %v5168 = vsub.f32 0.0, %v5166
    %v5169 = vsub.f32 0.0, %v5167
    %v5170 = vlaneseq
    %v5171 = vshrl.u32 %v5170, 7
    %v5172 = vsub.s32 0, %v5171
    %v5173 = vrot.slane %v5168, %v5172
    %v5174 = vmul.f32 %v76, %v5173
    %v5175 = vmul.f32 %v77, %v5173
    %v5176 = vlaneseq
    %v5177 = vshrl.u32 %v5176, 7
    %v5178 = vsub.s32 1, %v5177
    %v5179 = vrot.slane %v5168, %v5178
    %v5180 = vmul.f32 %v78, %v5179
    %v5181 = vmul.f32 %v79, %v5179
    %v5182 = vlaneseq
    %v5183 = vshrl.u32 %v5182, 7
    %v5184 = vsub.s32 2, %v5183
    %v5185 = vrot.slane %v5168, %v5184
    %v5186 = vmul.f32 %v80, %v5185
    %v5187 = vmul.f32 %v81, %v5185
    %v5188 = vlaneseq
    %v5189 = vshrl.u32 %v5188, 7
    %v5190 = vsub.s32 3, %v5189
    %v5191 = vrot.slane %v5168, %v5190
    %v5192 = vmul.f32 %v82, %v5191
    %v5193 = vmul.f32 %v83, %v5191
    %v5194 = vlaneseq
    %v5195 = vshrl.u32 %v5194, 7
    %v5196 = vsub.s32 4, %v5195
    %v5197 = vrot.slane %v5168, %v5196
    %v5198 = vmul.f32 %v84, %v5197
    %v5199 = vmul.f32 %v85, %v5197
    %v5200 = vadd.f32 %v5174, %v5198
    %v5201 = vadd.f32 %v5175, %v5199
    %v5202 = vlaneseq
    %v5203 = vshrl.u32 %v5202, 7
    %v5204 = vsub.s32 5, %v5203
    %v5205 = vrot.slane %v5168, %v5204
    %v5206 = vmul.f32 %v86, %v5205
    %v5207 = vmul.f32 %v87, %v5205
    %v5208 = vadd.f32 %v5180, %v5206
    %v5209 = vadd.f32 %v5181, %v5207
    %v5210 = vlaneseq
    %v5211 = vshrl.u32 %v5210, 7
    %v5212 = vsub.s32 6, %v5211
    %v5213 = vrot.slane %v5168, %v5212
    %v5214 = vmul.f32 %v88, %v5213
    %v5215 = vmul.f32 %v89, %v5213
    %v5216 = vadd.f32 %v5186, %v5214
    %v5217 = vadd.f32 %v5187, %v5215
    %v5218 = vlaneseq
    %v5219 = vshrl.u32 %v5218, 7
    %v5220 = vsub.s32 7, %v5219
    %v5221 = vrot.slane %v5168, %v5220
    %v5222 = vmul.f32 %v90, %v5221
    %v5223 = vmul.f32 %v91, %v5221
    %v5224 = vadd.f32 %v5192, %v5222
    %v5225 = vadd.f32 %v5193, %v5223
    %v5226 = vlaneseq
    %v5227 = vshrl.u32 %v5226, 7
    %v5228 = vsub.s32 0, %v5227
    %v5229 = vrot.slane %v5169, %v5228
    %v5230 = vmul.f32 %v92, %v5229
    %v5231 = vmul.f32 %v93, %v5229
    %v5232 = vadd.f32 %v5200, %v5230
    %v5233 = vadd.f32 %v5201, %v5231
    %v5234 = vlaneseq
    %v5235 = vshrl.u32 %v5234, 7
    %v5236 = vsub.s32 1, %v5235
    %v5237 = vrot.slane %v5169, %v5236
    %v5238 = vmul.f32 %v94, %v5237
    %v5239 = vmul.f32 %v95, %v5237
    %v5240 = vadd.f32 %v5208, %v5238
    %v5241 = vadd.f32 %v5209, %v5239
    %v5242 = vlaneseq
    %v5243 = vshrl.u32 %v5242, 7
    %v5244 = vsub.s32 2, %v5243
    %v5245 = vrot.slane %v5169, %v5244
    %v5246 = vmul.f32 %v96, %v5245
    %v5247 = vmul.f32 %v97, %v5245
    %v5248 = vadd.f32 %v5216, %v5246
    %v5249 = vadd.f32 %v5217, %v5247
    %v5250 = vlaneseq
    %v5251 = vshrl.u32 %v5250, 7
    %v5252 = vsub.s32 3, %v5251
    %v5253 = vrot.slane %v5169, %v5252
    %v5254 = vmul.f32 %v98, %v5253
    %v5255 = vmul.f32 %v99, %v5253
    %v5256 = vadd.f32 %v5224, %v5254
    %v5257 = vadd.f32 %v5225, %v5255
    %v5258 = vlaneseq
    %v5259 = vshrl.u32 %v5258, 7
    %v5260 = vsub.s32 4, %v5259
    %v5261 = vrot.slane %v5169, %v5260
    %v5262 = vmul.f32 %v100, %v5261
    %v5263 = vmul.f32 %v101, %v5261
    %v5264 = vadd.f32 %v5232, %v5262
    %v5265 = vadd.f32 %v5233, %v5263
    %v5266 = vlaneseq
    %v5267 = vshrl.u32 %v5266, 7
    %v5268 = vsub.s32 5, %v5267
    %v5269 = vrot.slane %v5169, %v5268
    %v5270 = vmul.f32 %v102, %v5269
    %v5271 = vmul.f32 %v103, %v5269
    %v5272 = vadd.f32 %v5240, %v5270
    %v5273 = vadd.f32 %v5241, %v5271
    %v5274 = vlaneseq
    %v5275 = vshrl.u32 %v5274, 7
    %v5276 = vsub.s32 6, %v5275
    %v5277 = vrot.slane %v5169, %v5276
    %v5278 = vmul.f32 %v104, %v5277
    %v5279 = vmul.f32 %v105, %v5277
    %v5280 = vadd.f32 %v5248, %v5278
    %v5281 = vadd.f32 %v5249, %v5279
    %v5282 = vlaneseq
    %v5283 = vshrl.u32 %v5282, 7
    %v5284 = vsub.s32 7, %v5283
    %v5285 = vrot.slane %v5169, %v5284
    %v5286 = vmul.f32 %v106, %v5285
    %v5287 = vmul.f32 %v107, %v5285
    %v5288 = vadd.f32 %v5256, %v5286
    %v5289 = vadd.f32 %v5257, %v5287
    %v5290 = vadd.f32 %v5264, %v5272
    %v5291 = vadd.f32 %v5265, %v5273
    %v5292 = vadd.f32 %v5290, %v5280
    %v5293 = vadd.f32 %v5291, %v5281
    %v5294 = vadd.f32 %v5292, %v5288
    %v5295 = vadd.f32 %v5293, %v5289
    %v5296 = vmul.f32 %v5168, %v5294
    %v5297 = vmul.f32 %v5169, %v5295
    %v5298 = vadd.f32 %v5296, %v5297
    %v5299 = vrot.slane %v5298, 4
    %v5300 = vadd.f32 %v5298, %v5299
    %v5301 = vrot.slane %v5300, 2
    %v5302 = vadd.f32 %v5300, %v5301
    %v5303 = vrot.slane %v5302, 1
    %v5304 = vadd.f32 %v5302, %v5303
    %v5305 = vmul.f32 %v5027, %v5168
    %v5306 = vmul.f32 %v5028, %v5169
    %v5307 = vadd.f32 %v5305, %v5306
    %v5308 = vrot.slane %v5307, 4
    %v5309 = vadd.f32 %v5307, %v5308
    %v5310 = vrot.slane %v5309, 2
    %v5311 = vadd.f32 %v5309, %v5310
    %v5312 = vrot.slane %v5311, 1
    %v5313 = vadd.f32 %v5311, %v5312
    %vm5314 = vcmp.gt.f32.partialorder %v5304, 1e-30
    %v5315 = vsub.f32 0.0, %v5313
    %v5316 = vsel %vm5314, %v5304, 1.0
    %v5317 = vrcp.pop %v5316
    %v5318 = vmul.f32 %v5315, %v5317
    %v5319 = vsel %vm5314, %v5318, 0.0
    %v5320 = vmul.f32 %v5319, %v5168
    %v5321 = vmul.f32 %v5319, %v5169
    %v5322 = vadd.f32 %v5025, %v5320
    %v5323 = vadd.f32 %v5026, %v5321
    %v5324 = vmul.f32 %v5319, %v5294
    %v5325 = vmul.f32 %v5319, %v5295
    %v5326 = vadd.f32 %v5027, %v5324
    %v5327 = vadd.f32 %v5028, %v5325
    %vm5328 = vcmp.gt.f32.partialorder %v5041, 0.5
    %v5329 = vsel %vm5328, 1, 0
    %vm5330 = vcmp.eq.s32.totalorder %v5329, 1
    %v5331 = vsel %vm5330, %v5322, %v5025
    %v5332 = vsel %vm5330, %v5323, %v5026
    %v5333 = vsel %vm5330, %v5326, %v5027
    %v5334 = vsel %vm5330, %v5327, %v5028
    %v5335 = vmul.f32 %v5333, %v5333
    %v5336 = vmul.f32 %v5334, %v5334
    %v5337 = vadd.f32 %v5335, %v5336
    %v5338 = vrot.slane %v5337, 4
    %v5339 = vadd.f32 %v5337, %v5338
    %v5340 = vrot.slane %v5339, 2
    %v5341 = vadd.f32 %v5339, %v5340
    %v5342 = vrot.slane %v5341, 1
    %v5343 = vadd.f32 %v5341, %v5342
    %5344 = vst [vmem:[#allocation10] sm:$0xff] %v5331
    %5345 = vst [vmem:[#allocation10 + $0x8] sm:$0xff] %v5332
    %5346 = vst [vmem:[#allocation11] sm:$0x1] %v5343
    // Predicated region
    $region34: #{tpu_custom_call.1} parent=1 // pred_check
      _
    $region35: #{tpu_custom_call.1} parent=1 // pred_check_branch
      %5348 = sbr.rel (0) target = $region37
    $region36: #{tpu_custom_call.1} parent=1 // pred_region
      %s5350 = ssub.s32 256, 256
      %5351 = vsyncadd [#allocation4], %s5350
      %s5352 = sshll.u32 [#allocation10], 4
      %s5353 = int_to_ptr.vmem [resolvable:$true] %s5352
      %5358 = dma.vmem_to_hbm [thread:$0]  %s5353, 256, %s4, [#allocation4], 128, 128, 8
    $region37: #{tpu_custom_call.1} parent=1 // pred_fallthru
      _
    // Predicated region
    $region38: #{tpu_custom_call.1} parent=1 // pred_check
      _
    $region39: #{tpu_custom_call.1} parent=1 // pred_check_branch
      %5360 = sbr.rel (0) target = $region41
    $region40: #{tpu_custom_call.1} parent=1 // pred_region
      %s5362 = ssub.s32 16, 16
      %5363 = vsyncadd [#allocation12], %s5362
      %s5365 = sshll.u32 [#allocation11], 4
      %s5366 = int_to_ptr.vmem [resolvable:$true] %s5365
      %5368 = dma.vmem_to_hbm [thread:$0]  %s5366, 16, %s5, [#allocation12]
    $region41: #{tpu_custom_call.1} parent=1 // pred_fallthru
      _
    // Predicated region
    $region42: #{tpu_custom_call.1} parent=1 // pred_check
      _
    $region43: #{tpu_custom_call.1} parent=1 // pred_check_branch
      %5370 = sbr.rel (0) target = $region45
    $region44: #{tpu_custom_call.1} parent=1 // pred_region
      %5371 = dma.done [#allocation4], 256
    $region45: #{tpu_custom_call.1} parent=1 // pred_fallthru
      _
    // Predicated region
    $region46: #{tpu_custom_call.1} parent=1 // pred_check
      _
    $region47: #{tpu_custom_call.1} parent=1 // pred_check_branch
      %5373 = sbr.rel (0) target = $region49
    $region48: #{tpu_custom_call.1} parent=1 // pred_region
      %5374 = dma.done [#allocation12], 16
    $region49: #{tpu_custom_call.1} parent=1 // pred_fallthru
      _
    %5375 = vsyncpa [#allocation3], 1
    %5376 = vsyncpa [#allocation6], 1
    %5377 = vsyncpa [#allocation9], 1
    %5378 = vsyncpa [#allocation4], 1
    %5379 = vsyncpa [#allocation12], 1

</llo_original>
